<compile_context>
chip_gen: v7x
topology: tpu7x:2x2x1
jax: 0.10.0
libtpu: 0.0.40
codegen_flags: <defaults>
</compile_context>

<pallas_src>
import jax
import jax.numpy as jnp
from jax.experimental import pallas as pl
from jax.experimental.pallas import tpu as pltpu

_EPS = 1e-5
_LANE = 128


def _round_up(a, b):
    return (a + b - 1) // b * b


def _vmem_limit_bytes():
    # Generation-aware VMEM budget: ~3/4 of capacity, capped at 96 MiB (v5e/v6e have
    # 128 MiB, v7x only 64 MiB per TensorCore).
    cap = 0
    try:
        cap = int(pltpu.get_tpu_info().vmem_capacity_bytes)
    except Exception:
        cap = 0
    if cap < 32 * 1024 * 1024:
        cap = 64 * 1024 * 1024          # conservative fallback (v7x per-TC size)
    return min((cap * 3) // 4, 96 * 1024 * 1024)


_VMEM_LIMIT = _vmem_limit_bytes()


def _compiler_params():
    return pltpu.CompilerParams(
        dimension_semantics=("parallel",),
        vmem_limit_bytes=_VMEM_LIMIT,
    )


# ----------------------------- Pallas kernels --------------------------------

def _make_conv3x3_s1_kernel(pitch, with_proj):
    """3x3 stride-1 conv over a zero-padded, row-major-flattened NHWC image.

    x_ref:   (LF, Cin)  bf16   flattened padded image, row pitch = `pitch` = Wo + 2
    w_ref:   (9, Cin, Cp) bf16 per-tap weights
    mask_ref:(P, 1) f32        1.0 for valid output columns, 0.0 for the 2 pad columns
    y_ref:   (P, Cp) bf16      pre-BN conv output (garbage in masked columns)
    stats:   (2, Cp) f32       masked per-channel (sum, sum of squares)
    Optional projection shortcut (1x1 conv): xs_ref (P, Cs), ws_ref (Cs, Cp) -> stats_s.
    """
    offs = [kh * pitch + kw for kh in range(3) for kw in range(3)]

    def body(x_ref, w_ref, mask_ref, y_ref, stats_ref,
             xs_ref=None, ws_ref=None, stats_s_ref=None):
        p = y_ref.shape[0]
        # 9 shifted, accumulating MXU matmuls (f32 accumulation) -- no im2col slab.
        acc = jnp.dot(x_ref[pl.ds(offs[0], p), :], w_ref[0],
                      preferred_element_type=jnp.float32)
        for t in range(1, 9):
            acc += jnp.dot(x_ref[pl.ds(offs[t], p), :], w_ref[t],
                           preferred_element_type=jnp.float32)
        y_ref[...] = acc.astype(y_ref.dtype)

        msk = mask_ref[...]                       # (P, 1), broadcasts over lanes
        accm = acc * msk
        stats_ref[...] = jnp.concatenate(
            [jnp.sum(accm, axis=0, keepdims=True),
             jnp.sum(accm * acc, axis=0, keepdims=True)], axis=0)

        if with_proj:
            sc = jnp.dot(xs_ref[...], ws_ref[...],
                         preferred_element_type=jnp.float32)
            scm = sc * msk
            stats_s_ref[...] = jnp.concatenate(
                [jnp.sum(scm, axis=0, keepdims=True),
                 jnp.sum(scm * sc, axis=0, keepdims=True)], axis=0)

    if with_proj:
        def kernel(x_ref, w_ref, xs_ref, ws_ref, mask_ref,
                   y_ref, stats_ref, stats_s_ref):
            body(x_ref, w_ref, mask_ref, y_ref, stats_ref,
                 xs_ref, ws_ref, stats_s_ref)
    else:
        def kernel(x_ref, w_ref, mask_ref, y_ref, stats_ref):
            body(x_ref, w_ref, mask_ref, y_ref, stats_ref)
    return kernel


def _matmul_stats_kernel(taps_ref, w_ref, y_ref, stats_ref):
    # im2col path (only used for the strided conv1): y = taps @ w + per-tile BN partials.
    acc = jnp.dot(taps_ref[...], w_ref[...], preferred_element_type=jnp.float32)
    y_ref[...] = acc.astype(y_ref.dtype)
    stats_ref[...] = jnp.concatenate(
        [jnp.sum(acc, axis=0, keepdims=True),
         jnp.sum(acc * acc, axis=0, keepdims=True)], axis=0)[None]


def _finalize_ident_kernel(y_ref, res_ref, sc2_ref, sh2_ref, o_ref):
    # out = relu(bn2(conv2) + x)   (identity residual kept in f32: exact add)
    o_ref[...] = jnp.maximum(
        y_ref[...].astype(jnp.float32) * sc2_ref[...] + sh2_ref[...] + res_ref[...],
        0.0)


def _finalize_proj_kernel(y_ref, xs_ref, ws_ref, sc2_ref, sh2_ref,
                          scs_ref, shs_ref, o_ref):
    # out = relu(bn2(conv2) + bn_s(conv1x1_s(x)))  -- shortcut matmul recomputed here.
    main = y_ref[...].astype(jnp.float32) * sc2_ref[...] + sh2_ref[...]
    sc = jnp.dot(xs_ref[...], ws_ref[...], preferred_element_type=jnp.float32)
    o_ref[...] = jnp.maximum(main + sc * scs_ref[...] + shs_ref[...], 0.0)


# ------------------------------ pallas_call wrappers --------------------------

def _conv3x3_s1(xflat, w_taps, mask, pitch, cp, p_rows, proj=None):
    n, lf, c = xflat.shape
    kernel = _make_conv3x3_s1_kernel(pitch, with_proj=proj is not None)

    st_spec = pl.BlockSpec((None, 2, cp), lambda i: (i, 0, 0))
    in_specs = [
        pl.BlockSpec((None, lf, c), lambda i: (i, 0, 0)),
        pl.BlockSpec((9, c, cp), lambda i: (0, 0, 0)),       # weights grid-invariant
    ]
    args = [xflat, w_taps]
    out_specs = [pl.BlockSpec((None, p_rows, cp), lambda i: (i, 0, 0)), st_spec]
    out_shape = [jax.ShapeDtypeStruct((n, p_rows, cp), jnp.bfloat16),
                 jax.ShapeDtypeStruct((n, 2, cp), jnp.float32)]

    if proj is not None:
        xs, ws = proj
        cs = xs.shape[-1]
        in_specs += [pl.BlockSpec((None, p_rows, cs), lambda i: (i, 0, 0)),
                     pl.BlockSpec((cs, cp), lambda i: (0, 0))]
        args += [xs, ws]
        out_specs.append(st_spec)
        out_shape.append(jax.ShapeDtypeStruct((n, 2, cp), jnp.float32))

    in_specs.append(pl.BlockSpec((p_rows, 1), lambda i: (0, 0)))
    args.append(mask)

    return pl.pallas_call(
        kernel,
        grid=(n,),
        in_specs=in_specs,
        out_specs=out_specs,
        out_shape=out_shape,
        compiler_params=_compiler_params(),
    )(*args)


def _conv_matmul_stats(taps, w, tile_m):
    mp, k = taps.shape
    cp = w.shape[1]
    nt = mp // tile_m
    return pl.pallas_call(
        _matmul_stats_kernel,
        grid=(nt,),
        in_specs=[
            pl.BlockSpec((tile_m, k), lambda i: (i, 0)),
            pl.BlockSpec((k, cp), lambda i: (0, 0)),          # weights stay resident
        ],
        out_specs=[
            pl.BlockSpec((tile_m, cp), lambda i: (i, 0)),
            pl.BlockSpec((1, 2, cp), lambda i: (i, 0, 0)),
        ],
        out_shape=[
            jax.ShapeDtypeStruct((mp, cp), jnp.bfloat16),     # bf16 intermediate
            jax.ShapeDtypeStruct((nt, 2, cp), jnp.float32),
        ],
        compiler_params=_compiler_params(),
    )(taps, w)


def _finalize_ident(y2, res, sc2, sh2):
    n, p_rows, cp = y2.shape
    vec = pl.BlockSpec((1, cp), lambda i: (0, 0))
    blk = pl.BlockSpec((None, p_rows, cp), lambda i: (i, 0, 0))
    return pl.pallas_call(
        _finalize_ident_kernel,
        grid=(n,),
        in_specs=[blk, blk, vec, vec],
        out_specs=blk,
        out_shape=jax.ShapeDtypeStruct((n, p_rows, cp), jnp.float32),
        compiler_params=_compiler_params(),
    )(y2, res, sc2, sh2)


def _finalize_proj(y2, xs, ws, sc2, sh2, scs, shs):
    n, p_rows, cp = y2.shape
    cs = xs.shape[-1]
    vec = pl.BlockSpec((1, cp), lambda i: (0, 0))
    blk = pl.BlockSpec((None, p_rows, cp), lambda i: (i, 0, 0))
    return pl.pallas_call(
        _finalize_proj_kernel,
        grid=(n,),
        in_specs=[blk,
                  pl.BlockSpec((None, p_rows, cs), lambda i: (i, 0, 0)),
                  pl.BlockSpec((cs, cp), lambda i: (0, 0)),
                  vec, vec, vec, vec],
        out_specs=blk,
        out_shape=jax.ShapeDtypeStruct((n, p_rows, cp), jnp.float32),
        compiler_params=_compiler_params(),
    )(y2, xs, ws, sc2, sh2, scs, shs)


# ------------------------------ JAX-side glue ---------------------------------

def _im2col_3x3(x_nhwc, stride, dtype):
    """3x3, padding=1 im2col -> (M, 9*C) slab (only used for the strided conv1)."""
    x_nhwc = x_nhwc.astype(dtype)          # cast BEFORE pad/slice/concat (half the glue)
    n, h, w, c = x_nhwc.shape
    ho = (h + 2 - 3) // stride + 1
    wo = (w + 2 - 3) // stride + 1
    xp = jnp.pad(x_nhwc, ((0, 0), (1, 1), (1, 1), (0, 0)))
    taps = []
    for kh in range(3):
        for kw in range(3):
            slab = xp[:, kh:kh + (ho - 1) * stride + 1:stride,
                         kw:kw + (wo - 1) * stride + 1:stride, :]
            taps.append(slab.reshape(n * ho * wo, c))
    return jnp.concatenate(taps, axis=1), ho, wo


def _reshape_w3x3_flat(w_oihw, cp, dtype):
    # (Cout, Cin, 3, 3) -> (9*Cin, Cp) zero-padded out channels (im2col path).
    co, ci = w_oihw.shape[0], w_oihw.shape[1]
    w = jnp.transpose(w_oihw, (2, 3, 1, 0)).reshape(9 * ci, co)
    return jnp.pad(w, ((0, 0), (0, cp - co))).astype(dtype)


def _reshape_w3x3_taps(w_oihw, cp, dtype):
    # (Cout, Cin, 3, 3) -> (9, Cin, Cp) per-tap weights (shifted-matmul path).
    co, ci = w_oihw.shape[0], w_oihw.shape[1]
    w = jnp.transpose(w_oihw, (2, 3, 1, 0)).reshape(9, ci, co)
    return jnp.pad(w, ((0, 0), (0, 0), (0, cp - co))).astype(dtype)


def _flat_conv_input(img_nhwc, dtype):
    """(N,H,W,C) -> zero-pad [(1,2),(1,1)] -> (N, (H+3)*(W+2), C), row-major flat.

    One top / left pad row+col for the conv, two bottom pad rows so the shifted
    in-kernel slices (offset up to 2*(W+2)+2) never leave the block."""
    n, h, w, c = img_nhwc.shape
    xp = jnp.pad(img_nhwc.astype(dtype), ((0, 0), (1, 2), (1, 1), (0, 0)))
    return xp.reshape(n, (h + 3) * (w + 2), c)


def _flat_out_layout(img_nhwc, dtype, cpad=None):
    """(N,H,W,C) -> pad width to W+2 (and channels to cpad) -> (N, H*(W+2), C')."""
    n, h, w, c = img_nhwc.shape
    cp = c if cpad is None else cpad
    xp = jnp.pad(img_nhwc.astype(dtype), ((0, 0), (0, 0), (0, 2), (0, cp - c)))
    return xp.reshape(n, h * (w + 2), cp)


def _col_mask(ho, wo):
    pitch = wo + 2
    col = jnp.arange(ho * pitch, dtype=jnp.int32) % pitch
    return (col < wo).astype(jnp.float32).reshape(ho * pitch, 1)


def _bn_scale_shift(stats, gamma_p, beta_p, m_actual, eps=_EPS):
    """Reduce per-image/per-tile (sum, sumsq) partials to per-channel scale/shift."""
    tot = jnp.sum(stats, axis=0)                      # (2, Cp)
    mean = tot[0] / m_actual
    var = jnp.maximum(tot[1] / m_actual - mean * mean, 0.0)
    inv = jax.lax.rsqrt(var + eps)
    scale = gamma_p * inv
    shift = beta_p - mean * scale
    return (scale.reshape(1, -1).astype(jnp.float32),
            shift.reshape(1, -1).astype(jnp.float32))


def init_basic_block_params(key, in_channels, out_channels, stride):
    ks = jax.random.split(key, 9)
    p = {
        "w1": 0.1 * jax.random.normal(ks[0], (out_channels, in_channels, 3, 3), jnp.float32),
        "g1": 1.0 + 0.1 * jax.random.normal(ks[1], (out_channels,), jnp.float32),
        "b1": 0.1 * jax.random.normal(ks[2], (out_channels,), jnp.float32),
        "w2": 0.1 * jax.random.normal(ks[3], (out_channels, out_channels, 3, 3), jnp.float32),
        "g2": 1.0 + 0.1 * jax.random.normal(ks[4], (out_channels,), jnp.float32),
        "b2": 0.1 * jax.random.normal(ks[5], (out_channels,), jnp.float32),
    }
    if stride != 1 or in_channels != out_channels:
        p["ws"] = 0.1 * jax.random.normal(ks[6], (out_channels, in_channels, 1, 1), jnp.float32)
        p["gs"] = 1.0 + 0.1 * jax.random.normal(ks[7], (out_channels,), jnp.float32)
        p["bs"] = 0.1 * jax.random.normal(ks[8], (out_channels,), jnp.float32)
    return p


def basic_block_forward(x_nchw, params, stride):
    n, cin, h, w = x_nchw.shape
    cout = params["w1"].shape[0]
    cp = _round_up(cout, _LANE)
    x_nhwc = jnp.transpose(x_nchw, (0, 2, 3, 1))

    g1 = jnp.pad(params["g1"], (0, cp - cout))
    b1 = jnp.pad(params["b1"], (0, cp - cout))
    g2 = jnp.pad(params["g2"], (0, cp - cout))
    b2 = jnp.pad(params["b2"], (0, cp - cout))

    # ---------------- conv1 + bn1 statistics ----------------
    if stride == 1:
        ho, wo = h, w
        m = n * ho * wo
        pitch = wo + 2
        p1 = ho * pitch
        mask1 = _col_mask(ho, wo)
        xflat1 = _flat_conv_input(x_nhwc, jnp.bfloat16)
        w1 = _reshape_w3x3_taps(params["w1"], cp, jnp.bfloat16)
        y1, st1 = _conv3x3_s1(xflat1, w1, mask1, pitch, cp, p1)
        sc1, sh1 = _bn_scale_shift(st1, g1, b1, m)
        # bn1 affine + ReLU: fused by XLA into the relayout that builds conv2's input
        # (no standalone affine pallas_call, no extra full-tensor HBM round trip).
        h1 = jnp.maximum(y1.astype(jnp.float32) * sc1 + sh1, 0.0)
        h1 = h1.reshape(n, ho, pitch, cp)[:, :, :wo, :cout]
    else:
        taps1, ho, wo = _im2col_3x3(x_nhwc, stride, jnp.bfloat16)   # (M, 9*Cin) bf16
        m = n * ho * wo
        tile_m = 512 if m >= 2048 else 256      # >=256-row MXU tiles (pad inside)
        mp = _round_up(m, tile_m)
        taps1 = jnp.pad(taps1, ((0, mp - m), (0, 0)))
        w1 = _reshape_w3x3_flat(params["w1"], cp, jnp.bfloat16)
        y1, st1 = _conv_matmul_stats(taps1, w1, tile_m)
        sc1, sh1 = _bn_scale_shift(st1, g1, b1, m)
        h1 = jnp.maximum(y1[:m].astype(jnp.float32) * sc1 + sh1, 0.0)
        h1 = h1[:, :cout].reshape(n, ho, wo, cout)

    # ---------------- conv2 (+ shortcut stats), always stride 1 ----------------
    pitch = wo + 2
    p2 = ho * pitch
    mask2 = _col_mask(ho, wo)
    xflat2 = _flat_conv_input(h1, jnp.bfloat16)
    w2 = _reshape_w3x3_taps(params["w2"], cp, jnp.bfloat16)

    if "ws" in params:
        # Projection shortcut: 1x1 conv (stride) + BN, fused into the tail kernels.
        xs_img = x_nhwc[:, ::stride, ::stride, :][:, :ho, :wo, :]
        xs = _flat_out_layout(xs_img, jnp.bfloat16)                  # (N, P2, Cin)
        ws = jnp.pad(params["ws"].reshape(cout, cin).T,
                     ((0, 0), (0, cp - cout))).astype(jnp.bfloat16)  # (Cin, Cp)
        gs = jnp.pad(params["gs"], (0, cp - cout))
        bs = jnp.pad(params["bs"], (0, cp - cout))

        y2, st2, sts = _conv3x3_s1(xflat2, w2, mask2, pitch, cp, p2, proj=(xs, ws))
        sc2, sh2 = _bn_scale_shift(st2, g2, b2, m)
        scs, shs = _bn_scale_shift(sts, gs, bs, m)
        out = _finalize_proj(y2, xs, ws, sc2, sh2, scs, shs)
    else:
        y2, st2 = _conv3x3_s1(xflat2, w2, mask2, pitch, cp, p2)
        sc2, sh2 = _bn_scale_shift(st2, g2, b2, m)
        # Identity residual kept in f32 (exact add, matches PyTorch).
        res = _flat_out_layout(x_nhwc, jnp.float32, cpad=cp)         # (N, P2, Cp)
        out = _finalize_ident(y2, res, sc2, sh2)

    out = out.reshape(n, ho, pitch, cp)[:, :, :wo, :cout]
    return jnp.transpose(out, (0, 3, 1, 2))


# ------------------------------ pure-JAX reference ----------------------------

def _ref_forward(x, p, stride):
    # bf16-quantization-aware reference (matmul operands are bf16 on the TPU path,
    # accumulation in f32) with PyTorch BasicBlock train-mode semantics.
    bf = lambda a: a.astype(jnp.bfloat16).astype(jnp.float32)

    def conv(inp, wgt, s, pad):
        return jax.lax.conv_general_dilated(
            bf(inp), bf(wgt), (s, s), ((pad, pad), (pad, pad)),
            dimension_numbers=("NCHW", "OIHW", "NCHW"),
            precision=jax.lax.Precision.HIGHEST)

    def bn(inp, g, b, eps=_EPS):
        mean = jnp.mean(inp, axis=(0, 2, 3), keepdims=True)
        var = jnp.mean((inp - mean) ** 2, axis=(0, 2, 3), keepdims=True)
        return (inp - mean) * jax.lax.rsqrt(var + eps) * g.reshape(1, -1, 1, 1) \
            + b.reshape(1, -1, 1, 1)

    h = jax.nn.relu(bn(conv(x, p["w1"], stride, 1), p["g1"], p["b1"]))
    out = bn(conv(h, p["w2"], 1, 1), p["g2"], p["b2"])
    if "ws" in p:
        sc = bn(conv(x, p["ws"], stride, 0), p["gs"], p["bs"])
    else:
        sc = x
    return jax.nn.relu(out + sc)


# ----------------------------------- main --------------------------------------

if __name__ == "__main__":
    fwd = jax.jit(basic_block_forward, static_argnames=("stride",))
    root = jax.random.PRNGKey(0)
    configs = [
        dict(n=2, cin=4, cout=8, hw=16, stride=1),  # projection shortcut (cin != cout)
        dict(n=2, cin=4, cout=8, hw=16, stride=2),  # projection shortcut, strided
        dict(n=2, cin=8, cout=8, hw=16, stride=1),  # identity shortcut
    ]
    for i, cfg in enumerate(configs):
        kx, kp = jax.random.split(jax.random.fold_in(root, i))
        x = jax.random.normal(kx, (cfg["n"], cfg["cin"], cfg["hw"], cfg["hw"]), jnp.float32)
        params = init_basic_block_params(kp, cfg["cin"], cfg["cout"], cfg["stride"])

        y = fwd(x, params, stride=cfg["stride"])
        y = jax.block_until_ready(y)

        y_ref = _ref_forward(x, params, cfg["stride"])
        assert y.shape == y_ref.shape, (y.shape, y_ref.shape)
        err = float(jnp.max(jnp.abs(y - y_ref)))
        # bf16 storage of the pre-BN conv intermediates (a deliberate HBM-traffic
        # optimization) adds ~1e-2 of quantization noise on top of the bf16-matmul
        # reference; 3e-2 bounds the combined effect.
        assert err < 3e-2, f"max abs err too large: {err}"

    print("KERNEL_OK")
</pallas_src>

<mosaic_0001>
module attributes {stable_mosaic.version = 11 : i64} {
  func.func @kernel(%arg0: i32, %arg1: memref<1x342x4xbf16, #tpu.memory_space<vmem>>, %arg2: memref<9x4x128xbf16, #tpu.memory_space<vmem>>, %arg3: memref<288x1xf32, #tpu.memory_space<vmem>>, %arg4: memref<1x288x128xbf16, #tpu.memory_space<vmem>>, %arg5: memref<1x2x128xf32, #tpu.memory_space<vmem>>) attributes {dimension_semantics = [#tpu.dimension_semantics<parallel>], iteration_bounds = array<i64: 2>, scalar_prefetch = 0 : i64, scratch_operands = 0 : i64, tpu.core_type = #tpu.core_type<tc>, window_params = [{transform_indices = @transform_0, window_bounds = array<i64: 1, 342, 4>}, {pipeline_mode = #tpu.pipeline_mode<synchronous>, transform_indices = @transform_1, window_bounds = array<i64: 9, 4, 128>}, {pipeline_mode = #tpu.pipeline_mode<synchronous>, transform_indices = @transform_2, window_bounds = array<i64: 288, 1>}, {transform_indices = @transform_3, window_bounds = array<i64: 1, 288, 128>}, {transform_indices = @transform_4, window_bounds = array<i64: 1, 2, 128>}]} {
    %c0 = arith.constant 0 : index
    %c0_0 = arith.constant 0 : index
    %c0_1 = arith.constant 0 : index
    %0 = vector.load %arg1[%c0, %c0_0, %c0_1] : memref<1x342x4xbf16, #tpu.memory_space<vmem>>, vector<1x288x4xbf16>
    %1 = vector.shape_cast %0 : vector<1x288x4xbf16> to vector<288x4xbf16>
    %c0_2 = arith.constant 0 : index
    %c0_3 = arith.constant 0 : index
    %c0_4 = arith.constant 0 : index
    %2 = vector.load %arg2[%c0_2, %c0_3, %c0_4] : memref<9x4x128xbf16, #tpu.memory_space<vmem>>, vector<1x4x128xbf16>
    %3 = vector.shape_cast %2 : vector<1x4x128xbf16> to vector<4x128xbf16>
    %cst = arith.constant dense<0.000000e+00> : vector<288x128xf32>
    %4 = tpu.matmul %1, %3, %cst {dimension_numbers = #tpu.dot_dimension_numbers<[1], [0], [0], [1], [0, 0, 1, 1], [], []>} : vector<288x4xbf16>, vector<4x128xbf16>, vector<288x128xf32> -> vector<288x128xf32>
    %c0_5 = arith.constant 0 : index
    %c1 = arith.constant 1 : index
    %c0_6 = arith.constant 0 : index
    %5 = vector.load %arg1[%c0_5, %c1, %c0_6] : memref<1x342x4xbf16, #tpu.memory_space<vmem>>, vector<1x288x4xbf16>
    %6 = vector.shape_cast %5 : vector<1x288x4xbf16> to vector<288x4xbf16>
    %c1_7 = arith.constant 1 : index
    %c0_8 = arith.constant 0 : index
    %c0_9 = arith.constant 0 : index
    %7 = vector.load %arg2[%c1_7, %c0_8, %c0_9] : memref<9x4x128xbf16, #tpu.memory_space<vmem>>, vector<1x4x128xbf16>
    %8 = vector.shape_cast %7 : vector<1x4x128xbf16> to vector<4x128xbf16>
    %cst_10 = arith.constant dense<0.000000e+00> : vector<288x128xf32>
    %9 = tpu.matmul %6, %8, %cst_10 {dimension_numbers = #tpu.dot_dimension_numbers<[1], [0], [0], [1], [0, 0, 1, 1], [], []>} : vector<288x4xbf16>, vector<4x128xbf16>, vector<288x128xf32> -> vector<288x128xf32>
    %10 = arith.addf %4, %9 : vector<288x128xf32>
    %c0_11 = arith.constant 0 : index
    %c2 = arith.constant 2 : index
    %c0_12 = arith.constant 0 : index
    %11 = vector.load %arg1[%c0_11, %c2, %c0_12] : memref<1x342x4xbf16, #tpu.memory_space<vmem>>, vector<1x288x4xbf16>
    %12 = vector.shape_cast %11 : vector<1x288x4xbf16> to vector<288x4xbf16>
    %c2_13 = arith.constant 2 : index
    %c0_14 = arith.constant 0 : index
    %c0_15 = arith.constant 0 : index
    %13 = vector.load %arg2[%c2_13, %c0_14, %c0_15] : memref<9x4x128xbf16, #tpu.memory_space<vmem>>, vector<1x4x128xbf16>
    %14 = vector.shape_cast %13 : vector<1x4x128xbf16> to vector<4x128xbf16>
    %cst_16 = arith.constant dense<0.000000e+00> : vector<288x128xf32>
    %15 = tpu.matmul %12, %14, %cst_16 {dimension_numbers = #tpu.dot_dimension_numbers<[1], [0], [0], [1], [0, 0, 1, 1], [], []>} : vector<288x4xbf16>, vector<4x128xbf16>, vector<288x128xf32> -> vector<288x128xf32>
    %16 = arith.addf %10, %15 : vector<288x128xf32>
    %c0_17 = arith.constant 0 : index
    %c18 = arith.constant 18 : index
    %c0_18 = arith.constant 0 : index
    %17 = vector.load %arg1[%c0_17, %c18, %c0_18] : memref<1x342x4xbf16, #tpu.memory_space<vmem>>, vector<1x288x4xbf16>
    %18 = vector.shape_cast %17 : vector<1x288x4xbf16> to vector<288x4xbf16>
    %c3 = arith.constant 3 : index
    %c0_19 = arith.constant 0 : index
    %c0_20 = arith.constant 0 : index
    %19 = vector.load %arg2[%c3, %c0_19, %c0_20] : memref<9x4x128xbf16, #tpu.memory_space<vmem>>, vector<1x4x128xbf16>
    %20 = vector.shape_cast %19 : vector<1x4x128xbf16> to vector<4x128xbf16>
    %cst_21 = arith.constant dense<0.000000e+00> : vector<288x128xf32>
    %21 = tpu.matmul %18, %20, %cst_21 {dimension_numbers = #tpu.dot_dimension_numbers<[1], [0], [0], [1], [0, 0, 1, 1], [], []>} : vector<288x4xbf16>, vector<4x128xbf16>, vector<288x128xf32> -> vector<288x128xf32>
    %22 = arith.addf %16, %21 : vector<288x128xf32>
    %c0_22 = arith.constant 0 : index
    %c19 = arith.constant 19 : index
    %c0_23 = arith.constant 0 : index
    %23 = vector.load %arg1[%c0_22, %c19, %c0_23] : memref<1x342x4xbf16, #tpu.memory_space<vmem>>, vector<1x288x4xbf16>
    %24 = vector.shape_cast %23 : vector<1x288x4xbf16> to vector<288x4xbf16>
    %c4 = arith.constant 4 : index
    %c0_24 = arith.constant 0 : index
    %c0_25 = arith.constant 0 : index
    %25 = vector.load %arg2[%c4, %c0_24, %c0_25] : memref<9x4x128xbf16, #tpu.memory_space<vmem>>, vector<1x4x128xbf16>
    %26 = vector.shape_cast %25 : vector<1x4x128xbf16> to vector<4x128xbf16>
    %cst_26 = arith.constant dense<0.000000e+00> : vector<288x128xf32>
    %27 = tpu.matmul %24, %26, %cst_26 {dimension_numbers = #tpu.dot_dimension_numbers<[1], [0], [0], [1], [0, 0, 1, 1], [], []>} : vector<288x4xbf16>, vector<4x128xbf16>, vector<288x128xf32> -> vector<288x128xf32>
    %28 = arith.addf %22, %27 : vector<288x128xf32>
    %c0_27 = arith.constant 0 : index
    %c20 = arith.constant 20 : index
    %c0_28 = arith.constant 0 : index
    %29 = vector.load %arg1[%c0_27, %c20, %c0_28] : memref<1x342x4xbf16, #tpu.memory_space<vmem>>, vector<1x288x4xbf16>
    %30 = vector.shape_cast %29 : vector<1x288x4xbf16> to vector<288x4xbf16>
    %c5 = arith.constant 5 : index
    %c0_29 = arith.constant 0 : index
    %c0_30 = arith.constant 0 : index
    %31 = vector.load %arg2[%c5, %c0_29, %c0_30] : memref<9x4x128xbf16, #tpu.memory_space<vmem>>, vector<1x4x128xbf16>
    %32 = vector.shape_cast %31 : vector<1x4x128xbf16> to vector<4x128xbf16>
    %cst_31 = arith.constant dense<0.000000e+00> : vector<288x128xf32>
    %33 = tpu.matmul %30, %32, %cst_31 {dimension_numbers = #tpu.dot_dimension_numbers<[1], [0], [0], [1], [0, 0, 1, 1], [], []>} : vector<288x4xbf16>, vector<4x128xbf16>, vector<288x128xf32> -> vector<288x128xf32>
    %34 = arith.addf %28, %33 : vector<288x128xf32>
    %c0_32 = arith.constant 0 : index
    %c36 = arith.constant 36 : index
    %c0_33 = arith.constant 0 : index
    %35 = vector.load %arg1[%c0_32, %c36, %c0_33] : memref<1x342x4xbf16, #tpu.memory_space<vmem>>, vector<1x288x4xbf16>
    %36 = vector.shape_cast %35 : vector<1x288x4xbf16> to vector<288x4xbf16>
    %c6 = arith.constant 6 : index
    %c0_34 = arith.constant 0 : index
    %c0_35 = arith.constant 0 : index
    %37 = vector.load %arg2[%c6, %c0_34, %c0_35] : memref<9x4x128xbf16, #tpu.memory_space<vmem>>, vector<1x4x128xbf16>
    %38 = vector.shape_cast %37 : vector<1x4x128xbf16> to vector<4x128xbf16>
    %cst_36 = arith.constant dense<0.000000e+00> : vector<288x128xf32>
    %39 = tpu.matmul %36, %38, %cst_36 {dimension_numbers = #tpu.dot_dimension_numbers<[1], [0], [0], [1], [0, 0, 1, 1], [], []>} : vector<288x4xbf16>, vector<4x128xbf16>, vector<288x128xf32> -> vector<288x128xf32>
    %40 = arith.addf %34, %39 : vector<288x128xf32>
    %c0_37 = arith.constant 0 : index
    %c37 = arith.constant 37 : index
    %c0_38 = arith.constant 0 : index
    %41 = vector.load %arg1[%c0_37, %c37, %c0_38] : memref<1x342x4xbf16, #tpu.memory_space<vmem>>, vector<1x288x4xbf16>
    %42 = vector.shape_cast %41 : vector<1x288x4xbf16> to vector<288x4xbf16>
    %c7 = arith.constant 7 : index
    %c0_39 = arith.constant 0 : index
    %c0_40 = arith.constant 0 : index
    %43 = vector.load %arg2[%c7, %c0_39, %c0_40] : memref<9x4x128xbf16, #tpu.memory_space<vmem>>, vector<1x4x128xbf16>
    %44 = vector.shape_cast %43 : vector<1x4x128xbf16> to vector<4x128xbf16>
    %cst_41 = arith.constant dense<0.000000e+00> : vector<288x128xf32>
    %45 = tpu.matmul %42, %44, %cst_41 {dimension_numbers = #tpu.dot_dimension_numbers<[1], [0], [0], [1], [0, 0, 1, 1], [], []>} : vector<288x4xbf16>, vector<4x128xbf16>, vector<288x128xf32> -> vector<288x128xf32>
    %46 = arith.addf %40, %45 : vector<288x128xf32>
    %c0_42 = arith.constant 0 : index
    %c38 = arith.constant 38 : index
    %c0_43 = arith.constant 0 : index
    %47 = vector.load %arg1[%c0_42, %c38, %c0_43] : memref<1x342x4xbf16, #tpu.memory_space<vmem>>, vector<1x288x4xbf16>
    %48 = vector.shape_cast %47 : vector<1x288x4xbf16> to vector<288x4xbf16>
    %c8 = arith.constant 8 : index
    %c0_44 = arith.constant 0 : index
    %c0_45 = arith.constant 0 : index
    %49 = vector.load %arg2[%c8, %c0_44, %c0_45] : memref<9x4x128xbf16, #tpu.memory_space<vmem>>, vector<1x4x128xbf16>
    %50 = vector.shape_cast %49 : vector<1x4x128xbf16> to vector<4x128xbf16>
    %cst_46 = arith.constant dense<0.000000e+00> : vector<288x128xf32>
    %51 = tpu.matmul %48, %50, %cst_46 {dimension_numbers = #tpu.dot_dimension_numbers<[1], [0], [0], [1], [0, 0, 1, 1], [], []>} : vector<288x4xbf16>, vector<4x128xbf16>, vector<288x128xf32> -> vector<288x128xf32>
    %52 = arith.addf %46, %51 : vector<288x128xf32>
    %53 = arith.truncf %52 : vector<288x128xf32> to vector<288x128xbf16>
    %c0_47 = arith.constant 0 : index
    %c0_48 = arith.constant 0 : index
    %c0_49 = arith.constant 0 : index
    %54 = vector.load %arg4[%c0_47, %c0_48, %c0_49] : memref<1x288x128xbf16, #tpu.memory_space<vmem>>, vector<1x288x128xbf16>
    %55 = vector.shape_cast %54 : vector<1x288x128xbf16> to vector<288x128xbf16>
    %56 = vector.shape_cast %53 : vector<288x128xbf16> to vector<1x288x128xbf16>
    tpu.vector_store %arg4[%c0_47, %c0_48, %c0_49], %56 {strides = array<i32>} : memref<1x288x128xbf16, #tpu.memory_space<vmem>>, vector<1x288x128xbf16>,
    %c0_50 = arith.constant 0 : index
    %c0_51 = arith.constant 0 : index
    %57 = vector.load %arg3[%c0_50, %c0_51] : memref<288x1xf32, #tpu.memory_space<vmem>>, vector<288x1xf32>
    %58 = vector.broadcast %57 : vector<288x1xf32> to vector<288x128xf32>
    %59 = arith.mulf %52, %58 : vector<288x128xf32>
    %cst_52 = arith.constant dense<0.000000e+00> : vector<128xf32>
    %60 = vector.multi_reduction <add>, %59, %cst_52 [0] : vector<288x128xf32> to vector<128xf32>
    %61 = vector.shape_cast %60 : vector<128xf32> to vector<1x128xf32>
    %62 = arith.mulf %59, %52 : vector<288x128xf32>
    %cst_53 = arith.constant dense<0.000000e+00> : vector<128xf32>
    %63 = vector.multi_reduction <add>, %62, %cst_53 [0] : vector<288x128xf32> to vector<128xf32>
    %64 = vector.shape_cast %63 : vector<128xf32> to vector<1x128xf32>
    %65 = tpu.concatenate %61, %64 in 0 : vector<1x128xf32>, vector<1x128xf32> -> vector<2x128xf32>
    %c0_54 = arith.constant 0 : index
    %c0_55 = arith.constant 0 : index
    %c0_56 = arith.constant 0 : index
    %66 = vector.load %arg5[%c0_54, %c0_55, %c0_56] : memref<1x2x128xf32, #tpu.memory_space<vmem>>, vector<1x2x128xf32>
    %67 = vector.shape_cast %66 : vector<1x2x128xf32> to vector<2x128xf32>
    %68 = vector.shape_cast %65 : vector<2x128xf32> to vector<1x2x128xf32>
    tpu.vector_store %arg5[%c0_54, %c0_55, %c0_56], %68 {strides = array<i32>} : memref<1x2x128xf32, #tpu.memory_space<vmem>>, vector<1x2x128xf32>,
    return
  }
  func.func @transform_0(%arg0: i32) -> (i32, i32, i32) {
    %c0_i32 = arith.constant 0 : i32
    %c0_i32_0 = arith.constant 0 : i32
    %c0_i32_1 = arith.constant 0 : i32
    return %arg0, %c0_i32, %c0_i32_0 : i32, i32, i32
  }
  func.func @transform_1(%arg0: i32) -> (i32, i32, i32) {
    %c0_i32 = arith.constant 0 : i32
    %c0_i32_0 = arith.constant 0 : i32
    %c0_i32_1 = arith.constant 0 : i32
    %c0_i32_2 = arith.constant 0 : i32
    return %c0_i32, %c0_i32_0, %c0_i32_1 : i32, i32, i32
  }
  func.func @transform_2(%arg0: i32) -> (i32, i32) {
    %c0_i32 = arith.constant 0 : i32
    %c0_i32_0 = arith.constant 0 : i32
    %c0_i32_1 = arith.constant 0 : i32
    return %c0_i32, %c0_i32_0 : i32, i32
  }
  func.func @transform_3(%arg0: i32) -> (i32, i32, i32) {
    %c0_i32 = arith.constant 0 : i32
    %c0_i32_0 = arith.constant 0 : i32
    %c0_i32_1 = arith.constant 0 : i32
    return %arg0, %c0_i32, %c0_i32_0 : i32, i32, i32
  }
  func.func @transform_4(%arg0: i32) -> (i32, i32, i32) {
    %c0_i32 = arith.constant 0 : i32
    %c0_i32_0 = arith.constant 0 : i32
    %c0_i32_1 = arith.constant 0 : i32
    return %arg0, %c0_i32, %c0_i32_0 : i32, i32, i32
  }
}

module attributes {stable_mosaic.version = 11 : i64} {
  func.func @_finalize_proj_kernel(%arg0: i32, %arg1: memref<1x288x128xbf16, #tpu.memory_space<vmem>>, %arg2: memref<1x288x4xbf16, #tpu.memory_space<vmem>>, %arg3: memref<4x128xbf16, #tpu.memory_space<vmem>>, %arg4: memref<1x128xf32, #tpu.memory_space<vmem>>, %arg5: memref<1x128xf32, #tpu.memory_space<vmem>>, %arg6: memref<1x128xf32, #tpu.memory_space<vmem>>, %arg7: memref<1x128xf32, #tpu.memory_space<vmem>>, %arg8: memref<1x288x128xf32, #tpu.memory_space<vmem>>) attributes {dimension_semantics = [#tpu.dimension_semantics<parallel>], iteration_bounds = array<i64: 2>, scalar_prefetch = 0 : i64, scratch_operands = 0 : i64, tpu.core_type = #tpu.core_type<tc>, window_params = [{transform_indices = @transform_0, window_bounds = array<i64: 1, 288, 128>}, {transform_indices = @transform_1, window_bounds = array<i64: 1, 288, 4>}, {pipeline_mode = #tpu.pipeline_mode<synchronous>, transform_indices = @transform_2, window_bounds = array<i64: 4, 128>}, {pipeline_mode = #tpu.pipeline_mode<synchronous>, transform_indices = @transform_3, window_bounds = array<i64: 1, 128>}, {pipeline_mode = #tpu.pipeline_mode<synchronous>, transform_indices = @transform_4, window_bounds = array<i64: 1, 128>}, {pipeline_mode = #tpu.pipeline_mode<synchronous>, transform_indices = @transform_5, window_bounds = array<i64: 1, 128>}, {pipeline_mode = #tpu.pipeline_mode<synchronous>, transform_indices = @transform_6, window_bounds = array<i64: 1, 128>}, {transform_indices = @transform_7, window_bounds = array<i64: 1, 288, 128>}]} {
    %c0 = arith.constant 0 : index
    %c0_0 = arith.constant 0 : index
    %c0_1 = arith.constant 0 : index
    %0 = vector.load %arg1[%c0, %c0_0, %c0_1] : memref<1x288x128xbf16, #tpu.memory_space<vmem>>, vector<1x288x128xbf16>
    %1 = vector.shape_cast %0 : vector<1x288x128xbf16> to vector<288x128xbf16>
    %2 = arith.extf %1 : vector<288x128xbf16> to vector<288x128xf32>
    %c0_2 = arith.constant 0 : index
    %c0_3 = arith.constant 0 : index
    %3 = vector.load %arg4[%c0_2, %c0_3] : memref<1x128xf32, #tpu.memory_space<vmem>>, vector<1x128xf32>
    %4 = vector.broadcast %3 : vector<1x128xf32> to vector<288x128xf32>
    %5 = arith.mulf %2, %4 : vector<288x128xf32>
    %c0_4 = arith.constant 0 : index
    %c0_5 = arith.constant 0 : index
    %6 = vector.load %arg5[%c0_4, %c0_5] : memref<1x128xf32, #tpu.memory_space<vmem>>, vector<1x128xf32>
    %7 = vector.broadcast %6 : vector<1x128xf32> to vector<288x128xf32>
    %8 = arith.addf %5, %7 : vector<288x128xf32>
    %c0_6 = arith.constant 0 : index
    %c0_7 = arith.constant 0 : index
    %c0_8 = arith.constant 0 : index
    %9 = vector.load %arg2[%c0_6, %c0_7, %c0_8] : memref<1x288x4xbf16, #tpu.memory_space<vmem>>, vector<1x288x4xbf16>
    %10 = vector.shape_cast %9 : vector<1x288x4xbf16> to vector<288x4xbf16>
    %c0_9 = arith.constant 0 : index
    %c0_10 = arith.constant 0 : index
    %11 = vector.load %arg3[%c0_9, %c0_10] : memref<4x128xbf16, #tpu.memory_space<vmem>>, vector<4x128xbf16>
    %cst = arith.constant dense<0.000000e+00> : vector<288x128xf32>
    %12 = tpu.matmul %10, %11, %cst {dimension_numbers = #tpu.dot_dimension_numbers<[1], [0], [0], [1], [0, 0, 1, 1], [], []>} : vector<288x4xbf16>, vector<4x128xbf16>, vector<288x128xf32> -> vector<288x128xf32>
    %c0_11 = arith.constant 0 : index
    %c0_12 = arith.constant 0 : index
    %13 = vector.load %arg6[%c0_11, %c0_12] : memref<1x128xf32, #tpu.memory_space<vmem>>, vector<1x128xf32>
    %14 = vector.broadcast %13 : vector<1x128xf32> to vector<288x128xf32>
    %15 = arith.mulf %12, %14 : vector<288x128xf32>
    %16 = arith.addf %8, %15 : vector<288x128xf32>
    %c0_13 = arith.constant 0 : index
    %c0_14 = arith.constant 0 : index
    %17 = vector.load %arg7[%c0_13, %c0_14] : memref<1x128xf32, #tpu.memory_space<vmem>>, vector<1x128xf32>
    %18 = vector.broadcast %17 : vector<1x128xf32> to vector<288x128xf32>
    %19 = arith.addf %16, %18 : vector<288x128xf32>
    %cst_15 = arith.constant 0.000000e+00 : f32
    %20 = vector.broadcast %cst_15 : f32 to vector<288x128xf32>
    %21 = arith.maximumf %19, %20 : vector<288x128xf32>
    %c0_16 = arith.constant 0 : index
    %c0_17 = arith.constant 0 : index
    %c0_18 = arith.constant 0 : index
    %22 = vector.load %arg8[%c0_16, %c0_17, %c0_18] : memref<1x288x128xf32, #tpu.memory_space<vmem>>, vector<1x288x128xf32>
    %23 = vector.shape_cast %22 : vector<1x288x128xf32> to vector<288x128xf32>
    %24 = vector.shape_cast %21 : vector<288x128xf32> to vector<1x288x128xf32>
    tpu.vector_store %arg8[%c0_16, %c0_17, %c0_18], %24 {strides = array<i32>} : memref<1x288x128xf32, #tpu.memory_space<vmem>>, vector<1x288x128xf32>,
    return
  }
  func.func @transform_0(%arg0: i32) -> (i32, i32, i32) {
    %c0_i32 = arith.constant 0 : i32
    %c0_i32_0 = arith.constant 0 : i32
    %c0_i32_1 = arith.constant 0 : i32
    return %arg0, %c0_i32, %c0_i32_0 : i32, i32, i32
  }
  func.func @transform_1(%arg0: i32) -> (i32, i32, i32) {
    %c0_i32 = arith.constant 0 : i32
    %c0_i32_0 = arith.constant 0 : i32
    %c0_i32_1 = arith.constant 0 : i32
    return %arg0, %c0_i32, %c0_i32_0 : i32, i32, i32
  }
  func.func @transform_2(%arg0: i32) -> (i32, i32) {
    %c0_i32 = arith.constant 0 : i32
    %c0_i32_0 = arith.constant 0 : i32
    %c0_i32_1 = arith.constant 0 : i32
    return %c0_i32, %c0_i32_0 : i32, i32
  }
  func.func @transform_3(%arg0: i32) -> (i32, i32) {
    %c0_i32 = arith.constant 0 : i32
    %c0_i32_0 = arith.constant 0 : i32
    %c0_i32_1 = arith.constant 0 : i32
    return %c0_i32, %c0_i32_0 : i32, i32
  }
  func.func @transform_4(%arg0: i32) -> (i32, i32) {
    %c0_i32 = arith.constant 0 : i32
    %c0_i32_0 = arith.constant 0 : i32
    %c0_i32_1 = arith.constant 0 : i32
    return %c0_i32, %c0_i32_0 : i32, i32
  }
  func.func @transform_5(%arg0: i32) -> (i32, i32) {
    %c0_i32 = arith.constant 0 : i32
    %c0_i32_0 = arith.constant 0 : i32
    %c0_i32_1 = arith.constant 0 : i32
    return %c0_i32, %c0_i32_0 : i32, i32
  }
  func.func @transform_6(%arg0: i32) -> (i32, i32) {
    %c0_i32 = arith.constant 0 : i32
    %c0_i32_0 = arith.constant 0 : i32
    %c0_i32_1 = arith.constant 0 : i32
    return %c0_i32, %c0_i32_0 : i32, i32
  }
  func.func @transform_7(%arg0: i32) -> (i32, i32, i32) {
    %c0_i32 = arith.constant 0 : i32
    %c0_i32_0 = arith.constant 0 : i32
    %c0_i32_1 = arith.constant 0 : i32
    return %arg0, %c0_i32, %c0_i32_0 : i32, i32, i32
  }
}

module attributes {stable_mosaic.version = 11 : i64} {
  func.func @kernel(%arg0: i32, %arg1: memref<1x342x8xbf16, #tpu.memory_space<vmem>>, %arg2: memref<9x8x128xbf16, #tpu.memory_space<vmem>>, %arg3: memref<1x288x4xbf16, #tpu.memory_space<vmem>>, %arg4: memref<4x128xbf16, #tpu.memory_space<vmem>>, %arg5: memref<288x1xf32, #tpu.memory_space<vmem>>, %arg6: memref<1x288x128xbf16, #tpu.memory_space<vmem>>, %arg7: memref<1x2x128xf32, #tpu.memory_space<vmem>>, %arg8: memref<1x2x128xf32, #tpu.memory_space<vmem>>) attributes {dimension_semantics = [#tpu.dimension_semantics<parallel>], iteration_bounds = array<i64: 2>, scalar_prefetch = 0 : i64, scratch_operands = 0 : i64, tpu.core_type = #tpu.core_type<tc>, window_params = [{transform_indices = @transform_0, window_bounds = array<i64: 1, 342, 8>}, {pipeline_mode = #tpu.pipeline_mode<synchronous>, transform_indices = @transform_1, window_bounds = array<i64: 9, 8, 128>}, {transform_indices = @transform_2, window_bounds = array<i64: 1, 288, 4>}, {pipeline_mode = #tpu.pipeline_mode<synchronous>, transform_indices = @transform_3, window_bounds = array<i64: 4, 128>}, {pipeline_mode = #tpu.pipeline_mode<synchronous>, transform_indices = @transform_4, window_bounds = array<i64: 288, 1>}, {transform_indices = @transform_5, window_bounds = array<i64: 1, 288, 128>}, {transform_indices = @transform_6, window_bounds = array<i64: 1, 2, 128>}, {transform_indices = @transform_7, window_bounds = array<i64: 1, 2, 128>}]} {
    %c0 = arith.constant 0 : index
    %c0_0 = arith.constant 0 : index
    %c0_1 = arith.constant 0 : index
    %0 = vector.load %arg1[%c0, %c0_0, %c0_1] : memref<1x342x8xbf16, #tpu.memory_space<vmem>>, vector<1x288x8xbf16>
    %1 = vector.shape_cast %0 : vector<1x288x8xbf16> to vector<288x8xbf16>
    %c0_2 = arith.constant 0 : index
    %c0_3 = arith.constant 0 : index
    %c0_4 = arith.constant 0 : index
    %2 = vector.load %arg2[%c0_2, %c0_3, %c0_4] : memref<9x8x128xbf16, #tpu.memory_space<vmem>>, vector<1x8x128xbf16>
    %3 = vector.shape_cast %2 : vector<1x8x128xbf16> to vector<8x128xbf16>
    %cst = arith.constant dense<0.000000e+00> : vector<288x128xf32>
    %4 = tpu.matmul %1, %3, %cst {dimension_numbers = #tpu.dot_dimension_numbers<[1], [0], [0], [1], [0, 0, 1, 1], [], []>} : vector<288x8xbf16>, vector<8x128xbf16>, vector<288x128xf32> -> vector<288x128xf32>
    %c0_5 = arith.constant 0 : index
    %c1 = arith.constant 1 : index
    %c0_6 = arith.constant 0 : index
    %5 = vector.load %arg1[%c0_5, %c1, %c0_6] : memref<1x342x8xbf16, #tpu.memory_space<vmem>>, vector<1x288x8xbf16>
    %6 = vector.shape_cast %5 : vector<1x288x8xbf16> to vector<288x8xbf16>
    %c1_7 = arith.constant 1 : index
    %c0_8 = arith.constant 0 : index
    %c0_9 = arith.constant 0 : index
    %7 = vector.load %arg2[%c1_7, %c0_8, %c0_9] : memref<9x8x128xbf16, #tpu.memory_space<vmem>>, vector<1x8x128xbf16>
    %8 = vector.shape_cast %7 : vector<1x8x128xbf16> to vector<8x128xbf16>
    %cst_10 = arith.constant dense<0.000000e+00> : vector<288x128xf32>
    %9 = tpu.matmul %6, %8, %cst_10 {dimension_numbers = #tpu.dot_dimension_numbers<[1], [0], [0], [1], [0, 0, 1, 1], [], []>} : vector<288x8xbf16>, vector<8x128xbf16>, vector<288x128xf32> -> vector<288x128xf32>
    %10 = arith.addf %4, %9 : vector<288x128xf32>
    %c0_11 = arith.constant 0 : index
    %c2 = arith.constant 2 : index
    %c0_12 = arith.constant 0 : index
    %11 = vector.load %arg1[%c0_11, %c2, %c0_12] : memref<1x342x8xbf16, #tpu.memory_space<vmem>>, vector<1x288x8xbf16>
    %12 = vector.shape_cast %11 : vector<1x288x8xbf16> to vector<288x8xbf16>
    %c2_13 = arith.constant 2 : index
    %c0_14 = arith.constant 0 : index
    %c0_15 = arith.constant 0 : index
    %13 = vector.load %arg2[%c2_13, %c0_14, %c0_15] : memref<9x8x128xbf16, #tpu.memory_space<vmem>>, vector<1x8x128xbf16>
    %14 = vector.shape_cast %13 : vector<1x8x128xbf16> to vector<8x128xbf16>
    %cst_16 = arith.constant dense<0.000000e+00> : vector<288x128xf32>
    %15 = tpu.matmul %12, %14, %cst_16 {dimension_numbers = #tpu.dot_dimension_numbers<[1], [0], [0], [1], [0, 0, 1, 1], [], []>} : vector<288x8xbf16>, vector<8x128xbf16>, vector<288x128xf32> -> vector<288x128xf32>
    %16 = arith.addf %10, %15 : vector<288x128xf32>
    %c0_17 = arith.constant 0 : index
    %c18 = arith.constant 18 : index
    %c0_18 = arith.constant 0 : index
    %17 = vector.load %arg1[%c0_17, %c18, %c0_18] : memref<1x342x8xbf16, #tpu.memory_space<vmem>>, vector<1x288x8xbf16>
    %18 = vector.shape_cast %17 : vector<1x288x8xbf16> to vector<288x8xbf16>
    %c3 = arith.constant 3 : index
    %c0_19 = arith.constant 0 : index
    %c0_20 = arith.constant 0 : index
    %19 = vector.load %arg2[%c3, %c0_19, %c0_20] : memref<9x8x128xbf16, #tpu.memory_space<vmem>>, vector<1x8x128xbf16>
    %20 = vector.shape_cast %19 : vector<1x8x128xbf16> to vector<8x128xbf16>
    %cst_21 = arith.constant dense<0.000000e+00> : vector<288x128xf32>
    %21 = tpu.matmul %18, %20, %cst_21 {dimension_numbers = #tpu.dot_dimension_numbers<[1], [0], [0], [1], [0, 0, 1, 1], [], []>} : vector<288x8xbf16>, vector<8x128xbf16>, vector<288x128xf32> -> vector<288x128xf32>
    %22 = arith.addf %16, %21 : vector<288x128xf32>
    %c0_22 = arith.constant 0 : index
    %c19 = arith.constant 19 : index
    %c0_23 = arith.constant 0 : index
    %23 = vector.load %arg1[%c0_22, %c19, %c0_23] : memref<1x342x8xbf16, #tpu.memory_space<vmem>>, vector<1x288x8xbf16>
    %24 = vector.shape_cast %23 : vector<1x288x8xbf16> to vector<288x8xbf16>
    %c4 = arith.constant 4 : index
    %c0_24 = arith.constant 0 : index
    %c0_25 = arith.constant 0 : index
    %25 = vector.load %arg2[%c4, %c0_24, %c0_25] : memref<9x8x128xbf16, #tpu.memory_space<vmem>>, vector<1x8x128xbf16>
    %26 = vector.shape_cast %25 : vector<1x8x128xbf16> to vector<8x128xbf16>
    %cst_26 = arith.constant dense<0.000000e+00> : vector<288x128xf32>
    %27 = tpu.matmul %24, %26, %cst_26 {dimension_numbers = #tpu.dot_dimension_numbers<[1], [0], [0], [1], [0, 0, 1, 1], [], []>} : vector<288x8xbf16>, vector<8x128xbf16>, vector<288x128xf32> -> vector<288x128xf32>
    %28 = arith.addf %22, %27 : vector<288x128xf32>
    %c0_27 = arith.constant 0 : index
    %c20 = arith.constant 20 : index
    %c0_28 = arith.constant 0 : index
    %29 = vector.load %arg1[%c0_27, %c20, %c0_28] : memref<1x342x8xbf16, #tpu.memory_space<vmem>>, vector<1x288x8xbf16>
    %30 = vector.shape_cast %29 : vector<1x288x8xbf16> to vector<288x8xbf16>
    %c5 = arith.constant 5 : index
    %c0_29 = arith.constant 0 : index
    %c0_30 = arith.constant 0 : index
    %31 = vector.load %arg2[%c5, %c0_29, %c0_30] : memref<9x8x128xbf16, #tpu.memory_space<vmem>>, vector<1x8x128xbf16>
    %32 = vector.shape_cast %31 : vector<1x8x128xbf16> to vector<8x128xbf16>
    %cst_31 = arith.constant dense<0.000000e+00> : vector<288x128xf32>
    %33 = tpu.matmul %30, %32, %cst_31 {dimension_numbers = #tpu.dot_dimension_numbers<[1], [0], [0], [1], [0, 0, 1, 1], [], []>} : vector<288x8xbf16>, vector<8x128xbf16>, vector<288x128xf32> -> vector<288x128xf32>
    %34 = arith.addf %28, %33 : vector<288x128xf32>
    %c0_32 = arith.constant 0 : index
    %c36 = arith.constant 36 : index
    %c0_33 = arith.constant 0 : index
    %35 = vector.load %arg1[%c0_32, %c36, %c0_33] : memref<1x342x8xbf16, #tpu.memory_space<vmem>>, vector<1x288x8xbf16>
    %36 = vector.shape_cast %35 : vector<1x288x8xbf16> to vector<288x8xbf16>
    %c6 = arith.constant 6 : index
    %c0_34 = arith.constant 0 : index
    %c0_35 = arith.constant 0 : index
    %37 = vector.load %arg2[%c6, %c0_34, %c0_35] : memref<9x8x128xbf16, #tpu.memory_space<vmem>>, vector<1x8x128xbf16>
    %38 = vector.shape_cast %37 : vector<1x8x128xbf16> to vector<8x128xbf16>
    %cst_36 = arith.constant dense<0.000000e+00> : vector<288x128xf32>
    %39 = tpu.matmul %36, %38, %cst_36 {dimension_numbers = #tpu.dot_dimension_numbers<[1], [0], [0], [1], [0, 0, 1, 1], [], []>} : vector<288x8xbf16>, vector<8x128xbf16>, vector<288x128xf32> -> vector<288x128xf32>
    %40 = arith.addf %34, %39 : vector<288x128xf32>
    %c0_37 = arith.constant 0 : index
    %c37 = arith.constant 37 : index
    %c0_38 = arith.constant 0 : index
    %41 = vector.load %arg1[%c0_37, %c37, %c0_38] : memref<1x342x8xbf16, #tpu.memory_space<vmem>>, vector<1x288x8xbf16>
    %42 = vector.shape_cast %41 : vector<1x288x8xbf16> to vector<288x8xbf16>
    %c7 = arith.constant 7 : index
    %c0_39 = arith.constant 0 : index
    %c0_40 = arith.constant 0 : index
    %43 = vector.load %arg2[%c7, %c0_39, %c0_40] : memref<9x8x128xbf16, #tpu.memory_space<vmem>>, vector<1x8x128xbf16>
    %44 = vector.shape_cast %43 : vector<1x8x128xbf16> to vector<8x128xbf16>
    %cst_41 = arith.constant dense<0.000000e+00> : vector<288x128xf32>
    %45 = tpu.matmul %42, %44, %cst_41 {dimension_numbers = #tpu.dot_dimension_numbers<[1], [0], [0], [1], [0, 0, 1, 1], [], []>} : vector<288x8xbf16>, vector<8x128xbf16>, vector<288x128xf32> -> vector<288x128xf32>
    %46 = arith.addf %40, %45 : vector<288x128xf32>
    %c0_42 = arith.constant 0 : index
    %c38 = arith.constant 38 : index
    %c0_43 = arith.constant 0 : index
    %47 = vector.load %arg1[%c0_42, %c38, %c0_43] : memref<1x342x8xbf16, #tpu.memory_space<vmem>>, vector<1x288x8xbf16>
    %48 = vector.shape_cast %47 : vector<1x288x8xbf16> to vector<288x8xbf16>
    %c8 = arith.constant 8 : index
    %c0_44 = arith.constant 0 : index
    %c0_45 = arith.constant 0 : index
    %49 = vector.load %arg2[%c8, %c0_44, %c0_45] : memref<9x8x128xbf16, #tpu.memory_space<vmem>>, vector<1x8x128xbf16>
    %50 = vector.shape_cast %49 : vector<1x8x128xbf16> to vector<8x128xbf16>
    %cst_46 = arith.constant dense<0.000000e+00> : vector<288x128xf32>
    %51 = tpu.matmul %48, %50, %cst_46 {dimension_numbers = #tpu.dot_dimension_numbers<[1], [0], [0], [1], [0, 0, 1, 1], [], []>} : vector<288x8xbf16>, vector<8x128xbf16>, vector<288x128xf32> -> vector<288x128xf32>
    %52 = arith.addf %46, %51 : vector<288x128xf32>
    %53 = arith.truncf %52 : vector<288x128xf32> to vector<288x128xbf16>
    %c0_47 = arith.constant 0 : index
    %c0_48 = arith.constant 0 : index
    %c0_49 = arith.constant 0 : index
    %54 = vector.load %arg6[%c0_47, %c0_48, %c0_49] : memref<1x288x128xbf16, #tpu.memory_space<vmem>>, vector<1x288x128xbf16>
    %55 = vector.shape_cast %54 : vector<1x288x128xbf16> to vector<288x128xbf16>
    %56 = vector.shape_cast %53 : vector<288x128xbf16> to vector<1x288x128xbf16>
    tpu.vector_store %arg6[%c0_47, %c0_48, %c0_49], %56 {strides = array<i32>} : memref<1x288x128xbf16, #tpu.memory_space<vmem>>, vector<1x288x128xbf16>,
    %c0_50 = arith.constant 0 : index
    %c0_51 = arith.constant 0 : index
    %57 = vector.load %arg5[%c0_50, %c0_51] : memref<288x1xf32, #tpu.memory_space<vmem>>, vector<288x1xf32>
    %58 = vector.broadcast %57 : vector<288x1xf32> to vector<288x128xf32>
    %59 = arith.mulf %52, %58 : vector<288x128xf32>
    %cst_52 = arith.constant dense<0.000000e+00> : vector<128xf32>
    %60 = vector.multi_reduction <add>, %59, %cst_52 [0] : vector<288x128xf32> to vector<128xf32>
    %61 = vector.shape_cast %60 : vector<128xf32> to vector<1x128xf32>
    %62 = arith.mulf %59, %52 : vector<288x128xf32>
    %cst_53 = arith.constant dense<0.000000e+00> : vector<128xf32>
    %63 = vector.multi_reduction <add>, %62, %cst_53 [0] : vector<288x128xf32> to vector<128xf32>
    %64 = vector.shape_cast %63 : vector<128xf32> to vector<1x128xf32>
    %65 = tpu.concatenate %61, %64 in 0 : vector<1x128xf32>, vector<1x128xf32> -> vector<2x128xf32>
    %c0_54 = arith.constant 0 : index
    %c0_55 = arith.constant 0 : index
    %c0_56 = arith.constant 0 : index
    %66 = vector.load %arg7[%c0_54, %c0_55, %c0_56] : memref<1x2x128xf32, #tpu.memory_space<vmem>>, vector<1x2x128xf32>
    %67 = vector.shape_cast %66 : vector<1x2x128xf32> to vector<2x128xf32>
    %68 = vector.shape_cast %65 : vector<2x128xf32> to vector<1x2x128xf32>
    tpu.vector_store %arg7[%c0_54, %c0_55, %c0_56], %68 {strides = array<i32>} : memref<1x2x128xf32, #tpu.memory_space<vmem>>, vector<1x2x128xf32>,
    %c0_57 = arith.constant 0 : index
    %c0_58 = arith.constant 0 : index
    %c0_59 = arith.constant 0 : index
    %69 = vector.load %arg3[%c0_57, %c0_58, %c0_59] : memref<1x288x4xbf16, #tpu.memory_space<vmem>>, vector<1x288x4xbf16>
    %70 = vector.shape_cast %69 : vector<1x288x4xbf16> to vector<288x4xbf16>
    %c0_60 = arith.constant 0 : index
    %c0_61 = arith.constant 0 : index
    %71 = vector.load %arg4[%c0_60, %c0_61] : memref<4x128xbf16, #tpu.memory_space<vmem>>, vector<4x128xbf16>
    %cst_62 = arith.constant dense<0.000000e+00> : vector<288x128xf32>
    %72 = tpu.matmul %70, %71, %cst_62 {dimension_numbers = #tpu.dot_dimension_numbers<[1], [0], [0], [1], [0, 0, 1, 1], [], []>} : vector<288x4xbf16>, vector<4x128xbf16>, vector<288x128xf32> -> vector<288x128xf32>
    %73 = vector.broadcast %57 : vector<288x1xf32> to vector<288x128xf32>
    %74 = arith.mulf %72, %73 : vector<288x128xf32>
    %cst_63 = arith.constant dense<0.000000e+00> : vector<128xf32>
    %75 = vector.multi_reduction <add>, %74, %cst_63 [0] : vector<288x128xf32> to vector<128xf32>
    %76 = vector.shape_cast %75 : vector<128xf32> to vector<1x128xf32>
    %77 = arith.mulf %74, %72 : vector<288x128xf32>
    %cst_64 = arith.constant dense<0.000000e+00> : vector<128xf32>
    %78 = vector.multi_reduction <add>, %77, %cst_64 [0] : vector<288x128xf32> to vector<128xf32>
    %79 = vector.shape_cast %78 : vector<128xf32> to vector<1x128xf32>
    %80 = tpu.concatenate %76, %79 in 0 : vector<1x128xf32>, vector<1x128xf32> -> vector<2x128xf32>
    %c0_65 = arith.constant 0 : index
    %c0_66 = arith.constant 0 : index
    %c0_67 = arith.constant 0 : index
    %81 = vector.load %arg8[%c0_65, %c0_66, %c0_67] : memref<1x2x128xf32, #tpu.memory_space<vmem>>, vector<1x2x128xf32>
    %82 = vector.shape_cast %81 : vector<1x2x128xf32> to vector<2x128xf32>
    %83 = vector.shape_cast %80 : vector<2x128xf32> to vector<1x2x128xf32>
    tpu.vector_store %arg8[%c0_65, %c0_66, %c0_67], %83 {strides = array<i32>} : memref<1x2x128xf32, #tpu.memory_space<vmem>>, vector<1x2x128xf32>,
    return
  }
  func.func @transform_0(%arg0: i32) -> (i32, i32, i32) {
    %c0_i32 = arith.constant 0 : i32
    %c0_i32_0 = arith.constant 0 : i32
    %c0_i32_1 = arith.constant 0 : i32
    return %arg0, %c0_i32, %c0_i32_0 : i32, i32, i32
  }
  func.func @transform_1(%arg0: i32) -> (i32, i32, i32) {
    %c0_i32 = arith.constant 0 : i32
    %c0_i32_0 = arith.constant 0 : i32
    %c0_i32_1 = arith.constant 0 : i32
    %c0_i32_2 = arith.constant 0 : i32
    return %c0_i32, %c0_i32_0, %c0_i32_1 : i32, i32, i32
  }
  func.func @transform_2(%arg0: i32) -> (i32, i32, i32) {
    %c0_i32 = arith.constant 0 : i32
    %c0_i32_0 = arith.constant 0 : i32
    %c0_i32_1 = arith.constant 0 : i32
    return %arg0, %c0_i32, %c0_i32_0 : i32, i32, i32
  }
  func.func @transform_3(%arg0: i32) -> (i32, i32) {
    %c0_i32 = arith.constant 0 : i32
    %c0_i32_0 = arith.constant 0 : i32
    %c0_i32_1 = arith.constant 0 : i32
    return %c0_i32, %c0_i32_0 : i32, i32
  }
  func.func @transform_4(%arg0: i32) -> (i32, i32) {
    %c0_i32 = arith.constant 0 : i32
    %c0_i32_0 = arith.constant 0 : i32
    %c0_i32_1 = arith.constant 0 : i32
    return %c0_i32, %c0_i32_0 : i32, i32
  }
  func.func @transform_5(%arg0: i32) -> (i32, i32, i32) {
    %c0_i32 = arith.constant 0 : i32
    %c0_i32_0 = arith.constant 0 : i32
    %c0_i32_1 = arith.constant 0 : i32
    return %arg0, %c0_i32, %c0_i32_0 : i32, i32, i32
  }
  func.func @transform_6(%arg0: i32) -> (i32, i32, i32) {
    %c0_i32 = arith.constant 0 : i32
    %c0_i32_0 = arith.constant 0 : i32
    %c0_i32_1 = arith.constant 0 : i32
    return %arg0, %c0_i32, %c0_i32_0 : i32, i32, i32
  }
  func.func @transform_7(%arg0: i32) -> (i32, i32, i32) {
    %c0_i32 = arith.constant 0 : i32
    %c0_i32_0 = arith.constant 0 : i32
    %c0_i32_1 = arith.constant 0 : i32
    return %arg0, %c0_i32, %c0_i32_0 : i32, i32, i32
  }
}

</mosaic_0001>

<llo_original>
// kernel: basic_block_forward.5
$region0: #{basic_block_forward.5}
  #allocation0 [shape = 'u32[]', space=smem, size = 0x4, offset = 0x4, fixed_abs, tag = 'smem constant byte address 0x4 - core index']
  #allocation1 [shape = 'u32[144,128]{1,0:T(1,128)}', space=vmem, size = 0x12000, scoped, tag = 'internal scratch']
  %s0 = inlined_call_operand.vmem [shape: bf16[2,288,128], index: 0, kind: input, shape index: {}]
  %s1 = inlined_call_operand.vmem [shape: bf16[2,288,4], index: 1, kind: input, shape index: {}]
  %s2 = inlined_call_operand.vmem [shape: bf16[4,128], index: 2, kind: input, shape index: {}]
  %s3 = inlined_call_operand.vmem [shape: f32[1,128], index: 3, kind: input, shape index: {}]
  %s4 = inlined_call_operand.vmem [shape: f32[1,128], index: 4, kind: input, shape index: {}]
  %s5 = inlined_call_operand.vmem [shape: f32[1,128], index: 5, kind: input, shape index: {}]
  %s6 = inlined_call_operand.vmem [shape: f32[1,128], index: 6, kind: input, shape index: {}]
  %s7 = inlined_call_operand.vmem [shape: f32[2,288,128], index: 7, kind: output, shape index: {}]
  %s8 = sld [smem:[#allocation0]]
  $region61: #{basic_block_forward.5} parent=0
    _
  %s10 = ssub.s32 1, %s8
  %s11 = scalar_select 0, %s10, %s8
  loop: start=0, step=1, limit=4
  $region2: #{basic_block_forward.5} parent=0 // loop_pre_header
    _
  $region3: #{basic_block_forward.5} parent=0 // loop_header
    %s13 = sphi 0, %s17
    %p14 = scmp.ge.s32.totalorder %s13, 4
    %s23 = sphi 0, %s25
    %s26 = sphi 0, %s23
    %s27 = sphi 0, %s26
    %s43 = sphi 0, %s27
    %s49 = sphi 0, %s51
    %s52 = sphi 0, %s49
    %s53 = sphi 0, %s52
    %s69 = sphi 0, %s53
    %s73 = sphi 0, %s73
    %s75 = sphi 0, %s73
    %s76 = sphi 0, %s75
    %s90 = sphi 0, %s76
    %s94 = sphi 0, %s94
    %s96 = sphi 0, %s94
    %s97 = sphi 0, %s96
    %s111 = sphi 0, %s97
    %s115 = sphi 0, %s115
    %s117 = sphi 0, %s115
    %s118 = sphi 0, %s117
    %s132 = sphi 0, %s118
    %s136 = sphi 0, %s136
    %s138 = sphi 0, %s136
    %s139 = sphi 0, %s138
    %s153 = sphi 0, %s139
    %s157 = sphi 0, %s157
    %s159 = sphi 0, %s157
    %s160 = sphi 0, %s159
    %s174 = sphi 0, %s160
    %s180 = sphi 0, %s182
    %s183 = sphi 0, %s180
    %s184 = sphi 0, %s183
    %s200 = sphi 0, %s184
  $region4: #{basic_block_forward.5} parent=0 // loop_header_branch
    %16 = sbr.rel (%p14) target = $region8
  $region5: #{basic_block_forward.5} parent=0 // loop_body
    %s18 = ssub.s32 %s13, 1
    %s19 = ssub.s32 %s13, 2
    %s20 = sadd.s32 %s13, 1
    %s21 = ssub.s32 %s13, %s20
    %p22 = scmp.eq.s32.totalorder %s21, 0
    %s24 = sadd.s32 %s23, 1
    %s25 = scalar_select %p22, %s23, %s24
    %p28 = pneg %p22
    %p29 = scmp.eq.s32.totalorder %s13, 1
    %p30 = por %p28, %p29
    %p31 = scmp.ne.s32.totalorder %s23, %s26
    %p32 = scmp.eq.s32.totalorder %s13, 0
    %p33 = por %p31, %p32
    %p34 = scmp.ne.s32.totalorder %s23, %s26
    %p35 = scmp.eq.s32.totalorder %s18, 1
    %p36 = por %p34, %p35
    %p37 = scmp.ne.s32.totalorder %s26, %s27
    %p38 = scmp.eq.s32.totalorder %s18, 0
    %p39 = por %p37, %p38
    %p40 = scmp.ne.s32.totalorder %s26, %s27
    %p41 = scmp.eq.s32.totalorder %s19, 1
    %p42 = por %p40, %p41
    %p44 = scmp.ne.s32.totalorder %s27, %s43
    %p45 = scmp.eq.s32.totalorder %s19, 0
    %p46 = por %p44, %p45
    %s47 = ssub.s32 %s13, %s20
    %p48 = scmp.eq.s32.totalorder %s47, 0
    %s50 = sadd.s32 %s49, 1
    %s51 = scalar_select %p48, %s49, %s50
    %p54 = pneg %p48
    %p55 = scmp.eq.s32.totalorder %s13, 1
    %p56 = por %p54, %p55
    %p57 = scmp.ne.s32.totalorder %s49, %s52
    %p58 = scmp.eq.s32.totalorder %s13, 0
    %p59 = por %p57, %p58
    %p60 = scmp.ne.s32.totalorder %s49, %s52
    %p61 = scmp.eq.s32.totalorder %s18, 1
    %p62 = por %p60, %p61
    %p63 = scmp.ne.s32.totalorder %s52, %s53
    %p64 = scmp.eq.s32.totalorder %s18, 0
    %p65 = por %p63, %p64
    %p66 = scmp.ne.s32.totalorder %s52, %s53
    %p67 = scmp.eq.s32.totalorder %s19, 1
    %p68 = por %p66, %p67
    %p70 = scmp.ne.s32.totalorder %s53, %s69
    %p71 = scmp.eq.s32.totalorder %s19, 0
    %p72 = por %p70, %p71
    %s74 = sadd.s32 %s73, 1
    %p77 = scmp.eq.s32.totalorder %s13, 1
    %p78 = scmp.ne.s32.totalorder %s73, %s75
    %p79 = scmp.eq.s32.totalorder %s13, 0
    %p80 = por %p78, %p79
    %p81 = scmp.ne.s32.totalorder %s73, %s75
    %p82 = scmp.eq.s32.totalorder %s18, 1
    %p83 = por %p81, %p82
    %p84 = scmp.ne.s32.totalorder %s75, %s76
    %p85 = scmp.eq.s32.totalorder %s18, 0
    %p86 = por %p84, %p85
    %p87 = scmp.ne.s32.totalorder %s75, %s76
    %p88 = scmp.eq.s32.totalorder %s19, 1
    %p89 = por %p87, %p88
    %p91 = scmp.ne.s32.totalorder %s76, %s90
    %p92 = scmp.eq.s32.totalorder %s19, 0
    %p93 = por %p91, %p92
    %s95 = sadd.s32 %s94, 1
    %p98 = scmp.eq.s32.totalorder %s13, 1
    %p99 = scmp.ne.s32.totalorder %s94, %s96
    %p100 = scmp.eq.s32.totalorder %s13, 0
    %p101 = por %p99, %p100
    %p102 = scmp.ne.s32.totalorder %s94, %s96
    %p103 = scmp.eq.s32.totalorder %s18, 1
    %p104 = por %p102, %p103
    %p105 = scmp.ne.s32.totalorder %s96, %s97
    %p106 = scmp.eq.s32.totalorder %s18, 0
    %p107 = por %p105, %p106
    %p108 = scmp.ne.s32.totalorder %s96, %s97
    %p109 = scmp.eq.s32.totalorder %s19, 1
    %p110 = por %p108, %p109
    %p112 = scmp.ne.s32.totalorder %s97, %s111
    %p113 = scmp.eq.s32.totalorder %s19, 0
    %p114 = por %p112, %p113
    %s116 = sadd.s32 %s115, 1
    %p119 = scmp.eq.s32.totalorder %s13, 1
    %p120 = scmp.ne.s32.totalorder %s115, %s117
    %p121 = scmp.eq.s32.totalorder %s13, 0
    %p122 = por %p120, %p121
    %p123 = scmp.ne.s32.totalorder %s115, %s117
    %p124 = scmp.eq.s32.totalorder %s18, 1
    %p125 = por %p123, %p124
    %p126 = scmp.ne.s32.totalorder %s117, %s118
    %p127 = scmp.eq.s32.totalorder %s18, 0
    %p128 = por %p126, %p127
    %p129 = scmp.ne.s32.totalorder %s117, %s118
    %p130 = scmp.eq.s32.totalorder %s19, 1
    %p131 = por %p129, %p130
    %p133 = scmp.ne.s32.totalorder %s118, %s132
    %p134 = scmp.eq.s32.totalorder %s19, 0
    %p135 = por %p133, %p134
    %s137 = sadd.s32 %s136, 1
    %p140 = scmp.eq.s32.totalorder %s13, 1
    %p141 = scmp.ne.s32.totalorder %s136, %s138
    %p142 = scmp.eq.s32.totalorder %s13, 0
    %p143 = por %p141, %p142
    %p144 = scmp.ne.s32.totalorder %s136, %s138
    %p145 = scmp.eq.s32.totalorder %s18, 1
    %p146 = por %p144, %p145
    %p147 = scmp.ne.s32.totalorder %s138, %s139
    %p148 = scmp.eq.s32.totalorder %s18, 0
    %p149 = por %p147, %p148
    %p150 = scmp.ne.s32.totalorder %s138, %s139
    %p151 = scmp.eq.s32.totalorder %s19, 1
    %p152 = por %p150, %p151
    %p154 = scmp.ne.s32.totalorder %s139, %s153
    %p155 = scmp.eq.s32.totalorder %s19, 0
    %p156 = por %p154, %p155
    %s158 = sadd.s32 %s157, 1
    %p161 = scmp.eq.s32.totalorder %s13, 1
    %p162 = scmp.ne.s32.totalorder %s157, %s159
    %p163 = scmp.eq.s32.totalorder %s13, 0
    %p164 = por %p162, %p163
    %p165 = scmp.ne.s32.totalorder %s157, %s159
    %p166 = scmp.eq.s32.totalorder %s18, 1
    %p167 = por %p165, %p166
    %p168 = scmp.ne.s32.totalorder %s159, %s160
    %p169 = scmp.eq.s32.totalorder %s18, 0
    %p170 = por %p168, %p169
    %p171 = scmp.ne.s32.totalorder %s159, %s160
    %p172 = scmp.eq.s32.totalorder %s19, 1
    %p173 = por %p171, %p172
    %p175 = scmp.ne.s32.totalorder %s160, %s174
    %p176 = scmp.eq.s32.totalorder %s19, 0
    %p177 = por %p175, %p176
    %s178 = ssub.s32 %s13, %s20
    %p179 = scmp.eq.s32.totalorder %s178, 0
    %s181 = sadd.s32 %s180, 1
    %s182 = scalar_select %p179, %s180, %s181
    %p185 = pneg %p179
    %p186 = scmp.eq.s32.totalorder %s13, 1
    %p187 = por %p185, %p186
    %p188 = scmp.ne.s32.totalorder %s180, %s183
    %p189 = scmp.eq.s32.totalorder %s13, 0
    %p190 = por %p188, %p189
    %p191 = scmp.ne.s32.totalorder %s180, %s183
    %p192 = scmp.eq.s32.totalorder %s18, 1
    %p193 = por %p191, %p192
    %p194 = scmp.ne.s32.totalorder %s183, %s184
    %p195 = scmp.eq.s32.totalorder %s18, 0
    %p196 = por %p194, %p195
    %p197 = scmp.ne.s32.totalorder %s183, %s184
    %p198 = scmp.eq.s32.totalorder %s19, 1
    %p199 = por %p197, %p198
    %p201 = scmp.ne.s32.totalorder %s184, %s200
    %p202 = scmp.eq.s32.totalorder %s19, 0
    %p203 = por %p201, %p202
    %p204 = scmp.le.s32.totalorder 1, %s13
    %p205 = scmp.lt.s32.totalorder %s13, 3
    %p206 = pnand %p204, %p205
    %p207 = pneg %p206
    // Predicated region
    $region9: #{basic_block_forward.5} parent=5 // pred_check
      _
    $region10: #{basic_block_forward.5} parent=5 // pred_check_branch
      %209 = sbr.rel (%p206) target = $region12
    $region11: #{basic_block_forward.5} parent=5 // pred_region
      %s210 = ssub.s32 %s13, 1
      // Predicated region
      $region13: #{basic_block_forward.5} parent=11 // pred_check
        %p211 = pneg %p86
      $region14: #{basic_block_forward.5} parent=11 // pred_check_branch
        %213 = sbr.rel (%p211) target = $region16
      $region15: #{basic_block_forward.5} parent=11 // pred_region
        _
      $region16: #{basic_block_forward.5} parent=11 // pred_fallthru
        _
      // Predicated region
      $region17: #{basic_block_forward.5} parent=11 // pred_check
        %p214 = pneg %p107
      $region18: #{basic_block_forward.5} parent=11 // pred_check_branch
        %216 = sbr.rel (%p214) target = $region20
      $region19: #{basic_block_forward.5} parent=11 // pred_region
        _
      $region20: #{basic_block_forward.5} parent=11 // pred_fallthru
        _
      // Predicated region
      $region21: #{basic_block_forward.5} parent=11 // pred_check
        %p217 = pneg %p128
      $region22: #{basic_block_forward.5} parent=11 // pred_check_branch
        %219 = sbr.rel (%p217) target = $region24
      $region23: #{basic_block_forward.5} parent=11 // pred_region
        _
      $region24: #{basic_block_forward.5} parent=11 // pred_fallthru
        _
      // Predicated region
      $region25: #{basic_block_forward.5} parent=11 // pred_check
        %p220 = pneg %p149
      $region26: #{basic_block_forward.5} parent=11 // pred_check_branch
        %222 = sbr.rel (%p220) target = $region28
      $region27: #{basic_block_forward.5} parent=11 // pred_region
        _
      $region28: #{basic_block_forward.5} parent=11 // pred_fallthru
        _
      // Predicated region
      $region29: #{basic_block_forward.5} parent=11 // pred_check
        %p223 = pneg %p170
      $region30: #{basic_block_forward.5} parent=11 // pred_check_branch
        %225 = sbr.rel (%p223) target = $region32
      $region31: #{basic_block_forward.5} parent=11 // pred_region
        _
      $region32: #{basic_block_forward.5} parent=11 // pred_fallthru
        _
    $region12: #{basic_block_forward.5} parent=5 // pred_fallthru
      _
    %p226 = scmp.lt.s32.totalorder %s13, 2
    // Predicated region
    $region33: #{basic_block_forward.5} parent=5 // pred_check
      %p227 = pneg %p226
    $region34: #{basic_block_forward.5} parent=5 // pred_check_branch
      %229 = sbr.rel (%p227) target = $region36
    $region35: #{basic_block_forward.5} parent=5 // pred_region
      // Predicated region
      $region37: #{basic_block_forward.5} parent=35 // pred_check
        %p230 = pneg %p33
      $region38: #{basic_block_forward.5} parent=35 // pred_check_branch
        %232 = sbr.rel (%p230) target = $region40
      $region39: #{basic_block_forward.5} parent=35 // pred_region
        %p233 = scmp.lt.s32.totalorder %s13, 1
        %s234 = scalar_select %p233, %s13, 1
        %s235 = smul.addr %s234, 36
        %s236 = smul.addr %s235, 4
        %s237 = scalar_lea.vmem %s0, %s236
      $region40: #{basic_block_forward.5} parent=35 // pred_fallthru
        _
      // Predicated region
      $region41: #{basic_block_forward.5} parent=35 // pred_check
        %p238 = pneg %p59
      $region42: #{basic_block_forward.5} parent=35 // pred_check_branch
        %240 = sbr.rel (%p238) target = $region44
      $region43: #{basic_block_forward.5} parent=35 // pred_region
        %p241 = scmp.lt.s32.totalorder %s13, 1
        %s242 = scalar_select %p241, %s13, 1
        %s243 = smul.addr %s242, 36
        %s244 = smul.addr %s243, 4
        %s245 = scalar_lea.vmem %s1, %s244
      $region44: #{basic_block_forward.5} parent=35 // pred_fallthru
        _
    $region36: #{basic_block_forward.5} parent=5 // pred_fallthru
      _
    %p246 = scmp.le.s32.totalorder 1, %s13
    %p247 = scmp.lt.s32.totalorder %s13, 3
    %p248 = pnand %p246, %p247
    %p249 = pneg %p248
    // Predicated region
    $region45: #{basic_block_forward.5} parent=5 // pred_check
      _
    $region46: #{basic_block_forward.5} parent=5 // pred_check_branch
      %251 = sbr.rel (%p248) target = $region48
    $region47: #{basic_block_forward.5} parent=5 // pred_region
      %s252 = ssub.s32 %s13, 1
      %p253 = scmp.lt.s32.totalorder %s18, 1
      %s254 = scalar_select %p253, %s18, 1
      %s255 = smul.addr %s254, 36
      %s256 = smul.addr %s255, 4
      %s257 = scalar_lea.vmem %s0, %s256
      %p258 = pneg %p39
      %p259 = pneg %p36
      %p260 = scmp.lt.s32.totalorder %s18, 1
      %s261 = scalar_select %p260, %s18, 1
      %s262 = smul.addr %s261, 36
      %s263 = smul.addr %s262, 4
      %s264 = scalar_lea.vmem %s1, %s263
      %p265 = pneg %p65
      %p266 = pneg %p62
      %p267 = pneg %p86
      %p268 = pneg %p83
      %p269 = pneg %p107
      %p270 = pneg %p104
      %p271 = pneg %p128
      %p272 = pneg %p125
      %p273 = pneg %p149
      %p274 = pneg %p146
      %p275 = pneg %p170
      %p276 = pneg %p167
      %p277 = pneg %p196
      %p278 = pneg %p193
      %p279 = scmp.lt.s32.totalorder %s18, 1
      %s280 = scalar_select %p279, %s18, 1
      %s281 = smul.addr %s280, 36
      %s282 = smul.addr %s281, 8
      %s283 = scalar_lea.vmem %s7, %s282
      %p284 = scmp.lt.s32.totalorder %s18, 1
      %s285 = scalar_select %p284, %s18, 1
      %s286 = smul.addr %s285, 36
      %s287 = smul.addr %s286, 4
      %s288 = scalar_lea.vmem %s0, %s287
      %p289 = scmp.lt.s32.totalorder %s18, 1
      %s290 = scalar_select %p289, %s18, 1
      %s291 = smul.addr %s290, 36
      %s292 = smul.addr %s291, 4
      %s293 = scalar_lea.vmem %s1, %s292
      %p294 = scmp.lt.s32.totalorder %s18, 1
      %s295 = scalar_select %p294, %s18, 1
      %s296 = smul.addr %s295, 36
      %s297 = smul.addr %s296, 8
      %s298 = scalar_lea.vmem %s7, %s297
      %v300 = vld [vmem:[%s288] sm:$0xf]
      %v301 = vld [vmem:[%s288 + $0x4] sm:$0xf]
      %v302 = vld [vmem:[%s288 + $0x8] sm:$0xf]
      %v303 = vld [vmem:[%s288 + $0xc] sm:$0xf]
      %v304 = vld [vmem:[%s288 + $0x10] sm:$0xf]
      %v305 = vld [vmem:[%s288 + $0x14] sm:$0xf]
      %v306 = vld [vmem:[%s288 + $0x18] sm:$0xf]
      %v307 = vld [vmem:[%s288 + $0x1c] sm:$0xf]
      %v308 = vld [vmem:[%s288 + $0x20] sm:$0xf]
      %v309 = vld [vmem:[%s288 + $0x24] sm:$0xf]
      %v310 = vld [vmem:[%s288 + $0x28] sm:$0xf]
      %v311 = vld [vmem:[%s288 + $0x2c] sm:$0xf]
      %v312 = vld [vmem:[%s288 + $0x30] sm:$0xf]
      %v313 = vld [vmem:[%s288 + $0x34] sm:$0xf]
      %v314 = vld [vmem:[%s288 + $0x38] sm:$0xf]
      %v315 = vld [vmem:[%s288 + $0x3c] sm:$0xf]
      %v316 = vld [vmem:[%s288 + $0x40] sm:$0xf]
      %v317 = vld [vmem:[%s288 + $0x44] sm:$0xf]
      %v318 = vld [vmem:[%s288 + $0x48] sm:$0xf]
      %v319 = vld [vmem:[%s288 + $0x4c] sm:$0xf]
      %v320 = vld [vmem:[%s288 + $0x50] sm:$0xf]
      %v321 = vld [vmem:[%s288 + $0x54] sm:$0xf]
      %v322 = vld [vmem:[%s288 + $0x58] sm:$0xf]
      %v323 = vld [vmem:[%s288 + $0x5c] sm:$0xf]
      %v324 = vld [vmem:[%s288 + $0x60] sm:$0xf]
      %v325 = vld [vmem:[%s288 + $0x64] sm:$0xf]
      %v326 = vld [vmem:[%s288 + $0x68] sm:$0xf]
      %v327 = vld [vmem:[%s288 + $0x6c] sm:$0xf]
      %v328 = vld [vmem:[%s288 + $0x70] sm:$0xf]
      %v329 = vld [vmem:[%s288 + $0x74] sm:$0xf]
      %v330 = vld [vmem:[%s288 + $0x78] sm:$0xf]
      %v331 = vld [vmem:[%s288 + $0x7c] sm:$0xf]
      %v332 = vld [vmem:[%s288 + $0x80] sm:$0xf]
      %v333 = vld [vmem:[%s288 + $0x84] sm:$0xf]
      %v334 = vld [vmem:[%s288 + $0x88] sm:$0xf]
      %v335 = vld [vmem:[%s288 + $0x8c] sm:$0xf]
      %v336 = vunpack.c.l.bf16 %v300
      %v337 = vunpack.c.l.bf16 %v301
      %v338 = vunpack.c.l.bf16 %v302
      %v339 = vunpack.c.l.bf16 %v303
      %v340 = vunpack.c.l.bf16 %v304
      %v341 = vunpack.c.l.bf16 %v305
      %v342 = vunpack.c.l.bf16 %v306
      %v343 = vunpack.c.l.bf16 %v307
      %v344 = vunpack.c.l.bf16 %v308
      %v345 = vunpack.c.l.bf16 %v309
      %v346 = vunpack.c.l.bf16 %v310
      %v347 = vunpack.c.l.bf16 %v311
      %v348 = vunpack.c.l.bf16 %v312
      %v349 = vunpack.c.l.bf16 %v313
      %v350 = vunpack.c.l.bf16 %v314
      %v351 = vunpack.c.l.bf16 %v315
      %v352 = vunpack.c.l.bf16 %v316
      %v353 = vunpack.c.l.bf16 %v317
      %v354 = vunpack.c.l.bf16 %v318
      %v355 = vunpack.c.l.bf16 %v319
      %v356 = vunpack.c.l.bf16 %v320
      %v357 = vunpack.c.l.bf16 %v321
      %v358 = vunpack.c.l.bf16 %v322
      %v359 = vunpack.c.l.bf16 %v323
      %v360 = vunpack.c.l.bf16 %v324
      %v361 = vunpack.c.l.bf16 %v325
      %v362 = vunpack.c.l.bf16 %v326
      %v363 = vunpack.c.l.bf16 %v327
      %v364 = vunpack.c.l.bf16 %v328
      %v365 = vunpack.c.l.bf16 %v329
      %v366 = vunpack.c.l.bf16 %v330
      %v367 = vunpack.c.l.bf16 %v331
      %v368 = vunpack.c.l.bf16 %v332
      %v369 = vunpack.c.l.bf16 %v333
      %v370 = vunpack.c.l.bf16 %v334
      %v371 = vunpack.c.l.bf16 %v335
      %v372 = vld [vmem:[%s3] sm:$0x1]
      %v374 = vlaneseq
      %v375 = vshrl.u32 %v374, 7
      %v376 = vsub.s32 0, %v375
      %v377 = vrot.slane %v372, %v376
      %v379 = vmul.f32 %v336, %v377
      %v380 = vmul.f32 %v337, %v377
      %v381 = vmul.f32 %v338, %v377
      %v382 = vmul.f32 %v339, %v377
      %v383 = vmul.f32 %v340, %v377
      %v384 = vmul.f32 %v341, %v377
      %v385 = vmul.f32 %v342, %v377
      %v386 = vmul.f32 %v343, %v377
      %v387 = vmul.f32 %v344, %v377
      %v388 = vmul.f32 %v345, %v377
      %v389 = vmul.f32 %v346, %v377
      %v390 = vmul.f32 %v347, %v377
      %v391 = vmul.f32 %v348, %v377
      %v392 = vmul.f32 %v349, %v377
      %v393 = vmul.f32 %v350, %v377
      %v394 = vmul.f32 %v351, %v377
      %v395 = vmul.f32 %v352, %v377
      %v396 = vmul.f32 %v353, %v377
      %v397 = vmul.f32 %v354, %v377
      %v398 = vmul.f32 %v355, %v377
      %v399 = vmul.f32 %v356, %v377
      %v400 = vmul.f32 %v357, %v377
      %v401 = vmul.f32 %v358, %v377
      %v402 = vmul.f32 %v359, %v377
      %v403 = vmul.f32 %v360, %v377
      %v404 = vmul.f32 %v361, %v377
      %v405 = vmul.f32 %v362, %v377
      %v406 = vmul.f32 %v363, %v377
      %v407 = vmul.f32 %v364, %v377
      %v408 = vmul.f32 %v365, %v377
      %v409 = vmul.f32 %v366, %v377
      %v410 = vmul.f32 %v367, %v377
      %v411 = vmul.f32 %v368, %v377
      %v412 = vmul.f32 %v369, %v377
      %v413 = vmul.f32 %v370, %v377
      %v414 = vmul.f32 %v371, %v377
      %v415 = vld [vmem:[%s4] sm:$0x1]
      %v417 = vlaneseq
      %v418 = vshrl.u32 %v417, 7
      %v419 = vsub.s32 0, %v418
      %v420 = vrot.slane %v415, %v419
      %v422 = vadd.f32 %v379, %v420
      %v423 = vadd.f32 %v380, %v420
      %v424 = vadd.f32 %v381, %v420
      %v425 = vadd.f32 %v382, %v420
      %v426 = vadd.f32 %v383, %v420
      %v427 = vadd.f32 %v384, %v420
      %v428 = vadd.f32 %v385, %v420
      %v429 = vadd.f32 %v386, %v420
      %v430 = vadd.f32 %v387, %v420
      %v431 = vadd.f32 %v388, %v420
      %v432 = vadd.f32 %v389, %v420
      %v433 = vadd.f32 %v390, %v420
      %v434 = vadd.f32 %v391, %v420
      %v435 = vadd.f32 %v392, %v420
      %v436 = vadd.f32 %v393, %v420
      %v437 = vadd.f32 %v394, %v420
      %v438 = vadd.f32 %v395, %v420
      %v439 = vadd.f32 %v396, %v420
      %v440 = vadd.f32 %v397, %v420
      %v441 = vadd.f32 %v398, %v420
      %v442 = vadd.f32 %v399, %v420
      %v443 = vadd.f32 %v400, %v420
      %v444 = vadd.f32 %v401, %v420
      %v445 = vadd.f32 %v402, %v420
      %v446 = vadd.f32 %v403, %v420
      %v447 = vadd.f32 %v404, %v420
      %v448 = vadd.f32 %v405, %v420
      %v449 = vadd.f32 %v406, %v420
      %v450 = vadd.f32 %v407, %v420
      %v451 = vadd.f32 %v408, %v420
      %v452 = vadd.f32 %v409, %v420
      %v453 = vadd.f32 %v410, %v420
      %v454 = vadd.f32 %v411, %v420
      %v455 = vadd.f32 %v412, %v420
      %v456 = vadd.f32 %v413, %v420
      %v457 = vadd.f32 %v414, %v420
      %v458 = vld [vmem:[%s293] sm:$0xf]
      %v459 = vld [vmem:[%s293 + $0x4] sm:$0xf]
      %v460 = vld [vmem:[%s293 + $0x8] sm:$0xf]
      %v461 = vld [vmem:[%s293 + $0xc] sm:$0xf]
      %v462 = vld [vmem:[%s293 + $0x10] sm:$0xf]
      %v463 = vld [vmem:[%s293 + $0x14] sm:$0xf]
      %v464 = vld [vmem:[%s293 + $0x18] sm:$0xf]
      %v465 = vld [vmem:[%s293 + $0x1c] sm:$0xf]
      %v466 = vld [vmem:[%s293 + $0x20] sm:$0xf]
      %v467 = vld [vmem:[%s293 + $0x24] sm:$0xf]
      %v468 = vld [vmem:[%s293 + $0x28] sm:$0xf]
      %v469 = vld [vmem:[%s293 + $0x2c] sm:$0xf]
      %v470 = vld [vmem:[%s293 + $0x30] sm:$0xf]
      %v471 = vld [vmem:[%s293 + $0x34] sm:$0xf]
      %v472 = vld [vmem:[%s293 + $0x38] sm:$0xf]
      %v473 = vld [vmem:[%s293 + $0x3c] sm:$0xf]
      %v474 = vld [vmem:[%s293 + $0x40] sm:$0xf]
      %v475 = vld [vmem:[%s293 + $0x44] sm:$0xf]
      %v476 = vld [vmem:[%s293 + $0x48] sm:$0xf]
      %v477 = vld [vmem:[%s293 + $0x4c] sm:$0xf]
      %v478 = vld [vmem:[%s293 + $0x50] sm:$0xf]
      %v479 = vld [vmem:[%s293 + $0x54] sm:$0xf]
      %v480 = vld [vmem:[%s293 + $0x58] sm:$0xf]
      %v481 = vld [vmem:[%s293 + $0x5c] sm:$0xf]
      %v482 = vld [vmem:[%s293 + $0x60] sm:$0xf]
      %v483 = vld [vmem:[%s293 + $0x64] sm:$0xf]
      %v484 = vld [vmem:[%s293 + $0x68] sm:$0xf]
      %v485 = vld [vmem:[%s293 + $0x6c] sm:$0xf]
      %v486 = vld [vmem:[%s293 + $0x70] sm:$0xf]
      %v487 = vld [vmem:[%s293 + $0x74] sm:$0xf]
      %v488 = vld [vmem:[%s293 + $0x78] sm:$0xf]
      %v489 = vld [vmem:[%s293 + $0x7c] sm:$0xf]
      %v490 = vld [vmem:[%s293 + $0x80] sm:$0xf]
      %v491 = vld [vmem:[%s293 + $0x84] sm:$0xf]
      %v492 = vld [vmem:[%s293 + $0x88] sm:$0xf]
      %v493 = vld [vmem:[%s293 + $0x8c] sm:$0xf]
      %v494 = vld [vmem:[%s2] sm:$0x3]
      %v531 = vunpack.c.l.b16 %v458
      %v532 = vunpack.c.l.b16 %v459
      %v533 = vunpack.c.l.b16 %v460
      %v534 = vunpack.c.l.b16 %v461
      %v535 = vunpack.c.l.b16 %v462
      %v536 = vunpack.c.l.b16 %v463
      %v537 = vunpack.c.l.b16 %v464
      %v538 = vunpack.c.l.b16 %v465
      %v539 = vunpack.c.l.b16 %v466
      %v540 = vunpack.c.l.b16 %v467
      %v541 = vunpack.c.l.b16 %v468
      %v542 = vunpack.c.l.b16 %v469
      %v543 = vunpack.c.l.b16 %v470
      %v544 = vunpack.c.l.b16 %v471
      %v545 = vunpack.c.l.b16 %v472
      %v546 = vunpack.c.l.b16 %v473
      %v547 = vunpack.c.l.b16 %v474
      %v548 = vunpack.c.l.b16 %v475
      %v549 = vunpack.c.l.b16 %v476
      %v550 = vunpack.c.l.b16 %v477
      %v551 = vunpack.c.l.b16 %v478
      %v552 = vunpack.c.l.b16 %v479
      %v553 = vunpack.c.l.b16 %v480
      %v554 = vunpack.c.l.b16 %v481
      %v555 = vunpack.c.l.b16 %v482
      %v556 = vunpack.c.l.b16 %v483
      %v557 = vunpack.c.l.b16 %v484
      %v558 = vunpack.c.l.b16 %v485
      %v559 = vunpack.c.l.b16 %v486
      %v560 = vunpack.c.l.b16 %v487
      %v561 = vunpack.c.l.b16 %v488
      %v562 = vunpack.c.l.b16 %v489
      %v563 = vunpack.c.l.b16 %v490
      %v564 = vunpack.c.l.b16 %v491
      %v565 = vunpack.c.l.b16 %v492
      %v566 = vunpack.c.l.b16 %v493
      %v567 = vpack.c.b16 %v532, %v531
      %v568 = vpack.c.b16 %v534, %v533
      %v569 = vpack.c.b16 %v536, %v535
      %v570 = vpack.c.b16 %v538, %v537
      %v571 = vpack.c.b16 %v540, %v539
      %v572 = vpack.c.b16 %v542, %v541
      %v573 = vpack.c.b16 %v544, %v543
      %v574 = vpack.c.b16 %v546, %v545
      %v575 = vpack.c.b16 %v548, %v547
      %v576 = vpack.c.b16 %v550, %v549
      %v577 = vpack.c.b16 %v552, %v551
      %v578 = vpack.c.b16 %v554, %v553
      %v579 = vpack.c.b16 %v556, %v555
      %v580 = vpack.c.b16 %v558, %v557
      %v581 = vpack.c.b16 %v560, %v559
      %v582 = vpack.c.b16 %v562, %v561
      %v583 = vpack.c.b16 %v564, %v563
      %v584 = vpack.c.b16 %v566, %v565
      %vm585 = vcmask 31744
      %v587 = vsel %vm585, %v567, 0
      %v590 = vsel %vm585, %v568, 0
      %v593 = vsel %vm585, %v569, 0
      %v596 = vsel %vm585, %v570, 0
      %v599 = vsel %vm585, %v571, 0
      %v602 = vsel %vm585, %v572, 0
      %v605 = vsel %vm585, %v573, 0
      %v608 = vsel %vm585, %v574, 0
      %v611 = vsel %vm585, %v575, 0
      %v614 = vsel %vm585, %v576, 0
      %v617 = vsel %vm585, %v577, 0
      %v620 = vsel %vm585, %v578, 0
      %v623 = vsel %vm585, %v579, 0
      %v626 = vsel %vm585, %v580, 0
      %v629 = vsel %vm585, %v581, 0
      %v632 = vsel %vm585, %v582, 0
      %v635 = vsel %vm585, %v583, 0
      %v638 = vsel %vm585, %v584, 0
      %vm640 = vcmask 1041408
      %v642 = vsel %vm640, %v494, 0
      %644 = vmatprep.subr.bf16.mxu0 0
      %645 = vmatpush1.bf16.msra.mxu0 %v642
      %646 = vmatprep.subr.bf16.mxu0 0
      %647 = vmatpush1.bf16.msra.mxu0 0
      %648 = vmatprep.subr.bf16.mxu0 0
      %649 = vmatpush1.bf16.msra.mxu0 0
      %650 = vmatprep.subr.bf16.mxu0 0
      %651 = vmatpush1.bf16.msra.mxu0 0
      %652 = vmatprep.subr.bf16.mxu0 0
      %653 = vmatpush1.bf16.msra.mxu0 0
      %654 = vmatprep.subr.bf16.mxu0 0
      %655 = vmatpush1.bf16.msra.mxu0 0
      %656 = vmatprep.subr.bf16.mxu0 0
      %657 = vmatpush1.bf16.msra.mxu0 0
      %658 = vmatprep.subr.bf16.mxu0 0
      %659 = vmatpush1.bf16.msra.mxu0 0
      %660 = vmatprep.subr.bf16.mxu0 0
      %661 = vmatpush1.bf16.msra.mxu0 0
      %662 = vmatprep.subr.bf16.mxu0 0
      %663 = vmatpush1.bf16.msra.mxu0 0
      %664 = vmatprep.subr.bf16.mxu0 0
      %665 = vmatpush1.bf16.msra.mxu0 0
      %666 = vmatprep.subr.bf16.mxu0 0
      %667 = vmatpush1.bf16.msra.mxu0 0
      %668 = vmatprep.subr.bf16.mxu0 0
      %669 = vmatpush1.bf16.msra.mxu0 0
      %670 = vmatprep.subr.bf16.mxu0 0
      %671 = vmatpush1.bf16.msra.mxu0 0
      %672 = vmatprep.subr.bf16.mxu0 0
      %673 = vmatpush1.bf16.msra.mxu0 0
      %674 = vmatprep.subr.bf16.mxu0 0
      %675 = vmatpush1.bf16.msra.mxu0 0
      %676 = vmatprep.mubr.bf16.mxu0 0
      %677 = vmatmul.mubr.bf16.gmra.mrb[0].mxu0 %v587
      %v678 = vpop.f32.mrb[0].mxu0
      %v679 = vadd.f32 0.0, %v678
      %v680 = vpop.f32.mrb[0].mxu0
      %v681 = vpop.f32.mrb[0].mxu0
      %v682 = vadd.f32 0.0, %v681
      %v683 = vpop.f32.mrb[0].mxu0
      %684 = vmatprep.mubr.bf16.mxu0 0
      %685 = vmatmul.mubr.bf16.gmra.mrb[0].mxu0 %v590
      %v686 = vpop.f32.mrb[0].mxu0
      %v687 = vadd.f32 0.0, %v686
      %v688 = vpop.f32.mrb[0].mxu0
      %v689 = vpop.f32.mrb[0].mxu0
      %v690 = vadd.f32 0.0, %v689
      %v691 = vpop.f32.mrb[0].mxu0
      %692 = vmatprep.mubr.bf16.mxu0 0
      %693 = vmatmul.mubr.bf16.gmra.mrb[0].mxu0 %v593
      %v694 = vpop.f32.mrb[0].mxu0
      %v695 = vadd.f32 0.0, %v694
      %v696 = vpop.f32.mrb[0].mxu0
      %v697 = vpop.f32.mrb[0].mxu0
      %v698 = vadd.f32 0.0, %v697
      %v699 = vpop.f32.mrb[0].mxu0
      %700 = vmatprep.mubr.bf16.mxu0 0
      %701 = vmatmul.mubr.bf16.gmra.mrb[0].mxu0 %v596
      %v702 = vpop.f32.mrb[0].mxu0
      %v703 = vadd.f32 0.0, %v702
      %v704 = vpop.f32.mrb[0].mxu0
      %v705 = vpop.f32.mrb[0].mxu0
      %v706 = vadd.f32 0.0, %v705
      %v707 = vpop.f32.mrb[0].mxu0
      %708 = vmatprep.mubr.bf16.mxu0 0
      %709 = vmatmul.mubr.bf16.gmra.mrb[0].mxu0 %v599
      %v710 = vpop.f32.mrb[0].mxu0
      %v711 = vadd.f32 0.0, %v710
      %v712 = vpop.f32.mrb[0].mxu0
      %v713 = vpop.f32.mrb[0].mxu0
      %v714 = vadd.f32 0.0, %v713
      %v715 = vpop.f32.mrb[0].mxu0
      %716 = vmatprep.mubr.bf16.mxu0 0
      %717 = vmatmul.mubr.bf16.gmra.mrb[0].mxu0 %v602
      %v718 = vpop.f32.mrb[0].mxu0
      %v719 = vadd.f32 0.0, %v718
      %v720 = vpop.f32.mrb[0].mxu0
      %v721 = vpop.f32.mrb[0].mxu0
      %v722 = vadd.f32 0.0, %v721
      %v723 = vpop.f32.mrb[0].mxu0
      %724 = vmatprep.mubr.bf16.mxu0 0
      %725 = vmatmul.mubr.bf16.gmra.mrb[0].mxu0 %v605
      %v726 = vpop.f32.mrb[0].mxu0
      %v727 = vadd.f32 0.0, %v726
      %v728 = vpop.f32.mrb[0].mxu0
      %v729 = vpop.f32.mrb[0].mxu0
      %v730 = vadd.f32 0.0, %v729
      %v731 = vpop.f32.mrb[0].mxu0
      %732 = vmatprep.mubr.bf16.mxu0 0
      %733 = vmatmul.mubr.bf16.gmra.mrb[0].mxu0 %v608
      %v734 = vpop.f32.mrb[0].mxu0
      %v735 = vadd.f32 0.0, %v734
      %v736 = vpop.f32.mrb[0].mxu0
      %v737 = vpop.f32.mrb[0].mxu0
      %v738 = vadd.f32 0.0, %v737
      %v739 = vpop.f32.mrb[0].mxu0
      %740 = vmatprep.mubr.bf16.mxu0 0
      %741 = vmatmul.mubr.bf16.gmra.mrb[0].mxu0 %v611
      %v742 = vpop.f32.mrb[0].mxu0
      %v743 = vadd.f32 0.0, %v742
      %v744 = vpop.f32.mrb[0].mxu0
      %v745 = vpop.f32.mrb[0].mxu0
      %v746 = vadd.f32 0.0, %v745
      %v747 = vpop.f32.mrb[0].mxu0
      %748 = vmatprep.mubr.bf16.mxu0 0
      %749 = vmatmul.mubr.bf16.gmra.mrb[0].mxu0 %v614
      %v750 = vpop.f32.mrb[0].mxu0
      %v751 = vadd.f32 0.0, %v750
      %v752 = vpop.f32.mrb[0].mxu0
      %v753 = vpop.f32.mrb[0].mxu0
      %v754 = vadd.f32 0.0, %v753
      %v755 = vpop.f32.mrb[0].mxu0
      %756 = vmatprep.mubr.bf16.mxu0 0
      %757 = vmatmul.mubr.bf16.gmra.mrb[0].mxu0 %v617
      %v758 = vpop.f32.mrb[0].mxu0
      %v759 = vadd.f32 0.0, %v758
      %v760 = vpop.f32.mrb[0].mxu0
      %v761 = vpop.f32.mrb[0].mxu0
      %v762 = vadd.f32 0.0, %v761
      %v763 = vpop.f32.mrb[0].mxu0
      %764 = vmatprep.mubr.bf16.mxu0 0
      %765 = vmatmul.mubr.bf16.gmra.mrb[0].mxu0 %v620
      %v766 = vpop.f32.mrb[0].mxu0
      %v767 = vadd.f32 0.0, %v766
      %v768 = vpop.f32.mrb[0].mxu0
      %v769 = vpop.f32.mrb[0].mxu0
      %v770 = vadd.f32 0.0, %v769
      %v771 = vpop.f32.mrb[0].mxu0
      %772 = vmatprep.mubr.bf16.mxu0 0
      %773 = vmatmul.mubr.bf16.gmra.mrb[0].mxu0 %v623
      %v774 = vpop.f32.mrb[0].mxu0
      %v775 = vadd.f32 0.0, %v774
      %v776 = vpop.f32.mrb[0].mxu0
      %v777 = vpop.f32.mrb[0].mxu0
      %v778 = vadd.f32 0.0, %v777
      %v779 = vpop.f32.mrb[0].mxu0
      %780 = vmatprep.mubr.bf16.mxu0 0
      %781 = vmatmul.mubr.bf16.gmra.mrb[0].mxu0 %v626
      %v782 = vpop.f32.mrb[0].mxu0
      %v783 = vadd.f32 0.0, %v782
      %v784 = vpop.f32.mrb[0].mxu0
      %v785 = vpop.f32.mrb[0].mxu0
      %v786 = vadd.f32 0.0, %v785
      %v787 = vpop.f32.mrb[0].mxu0
      %788 = vmatprep.mubr.bf16.mxu0 0
      %789 = vmatmul.mubr.bf16.gmra.mrb[0].mxu0 %v629
      %v790 = vpop.f32.mrb[0].mxu0
      %v791 = vadd.f32 0.0, %v790
      %v792 = vpop.f32.mrb[0].mxu0
      %v793 = vpop.f32.mrb[0].mxu0
      %v794 = vadd.f32 0.0, %v793
      %v795 = vpop.f32.mrb[0].mxu0
      %796 = vmatprep.mubr.bf16.mxu0 0
      %797 = vmatmul.mubr.bf16.gmra.mrb[0].mxu0 %v632
      %v798 = vpop.f32.mrb[0].mxu0
      %v799 = vadd.f32 0.0, %v798
      %v800 = vpop.f32.mrb[0].mxu0
      %v801 = vpop.f32.mrb[0].mxu0
      %v802 = vadd.f32 0.0, %v801
      %v803 = vpop.f32.mrb[0].mxu0
      %804 = vmatprep.mubr.bf16.mxu0 0
      %805 = vmatmul.mubr.bf16.gmra.mrb[0].mxu0 %v635
      %v806 = vpop.f32.mrb[0].mxu0
      %v807 = vadd.f32 0.0, %v806
      %v808 = vpop.f32.mrb[0].mxu0
      %v809 = vpop.f32.mrb[0].mxu0
      %v810 = vadd.f32 0.0, %v809
      %v811 = vpop.f32.mrb[0].mxu0
      %812 = vmatprep.mubr.bf16.mxu0 0
      %813 = vmatmul.mubr.bf16.gmra.mrb[0].mxu0 %v638
      %v814 = vpop.f32.mrb[0].mxu0
      %v815 = vadd.f32 0.0, %v814
      %v816 = vpop.f32.mrb[0].mxu0
      %v817 = vpop.f32.mrb[0].mxu0
      %v818 = vadd.f32 0.0, %v817
      %v819 = vpop.f32.mrb[0].mxu0
      %820 = vdwg.mxu0
      %v821 = vld [vmem:[%s5] sm:$0x1]
      %v823 = vlaneseq
      %v824 = vshrl.u32 %v823, 7
      %v825 = vsub.s32 0, %v824
      %v826 = vrot.slane %v821, %v825
      %v828 = vmul.f32 %v679, %v826
      %v829 = vmul.f32 %v682, %v826
      %v830 = vmul.f32 %v687, %v826
      %v831 = vmul.f32 %v690, %v826
      %v832 = vmul.f32 %v695, %v826
      %v833 = vmul.f32 %v698, %v826
      %v834 = vmul.f32 %v703, %v826
      %v835 = vmul.f32 %v706, %v826
      %v836 = vmul.f32 %v711, %v826
      %v837 = vmul.f32 %v714, %v826
      %v838 = vmul.f32 %v719, %v826
      %v839 = vmul.f32 %v722, %v826
      %v840 = vmul.f32 %v727, %v826
      %v841 = vmul.f32 %v730, %v826
      %v842 = vmul.f32 %v735, %v826
      %v843 = vmul.f32 %v738, %v826
      %v844 = vmul.f32 %v743, %v826
      %v845 = vmul.f32 %v746, %v826
      %v846 = vmul.f32 %v751, %v826
      %v847 = vmul.f32 %v754, %v826
      %v848 = vmul.f32 %v759, %v826
      %v849 = vmul.f32 %v762, %v826
      %v850 = vmul.f32 %v767, %v826
      %v851 = vmul.f32 %v770, %v826
      %v852 = vmul.f32 %v775, %v826
      %v853 = vmul.f32 %v778, %v826
      %v854 = vmul.f32 %v783, %v826
      %v855 = vmul.f32 %v786, %v826
      %v856 = vmul.f32 %v791, %v826
      %v857 = vmul.f32 %v794, %v826
      %v858 = vmul.f32 %v799, %v826
      %v859 = vmul.f32 %v802, %v826
      %v860 = vmul.f32 %v807, %v826
      %v861 = vmul.f32 %v810, %v826
      %v862 = vmul.f32 %v815, %v826
      %v863 = vmul.f32 %v818, %v826
      %v864 = vadd.f32 %v422, %v828
      %v865 = vadd.f32 %v423, %v829
      %v866 = vadd.f32 %v424, %v830
      %v867 = vadd.f32 %v425, %v831
      %v868 = vadd.f32 %v426, %v832
      %v869 = vadd.f32 %v427, %v833
      %v870 = vadd.f32 %v428, %v834
      %v871 = vadd.f32 %v429, %v835
      %v872 = vadd.f32 %v430, %v836
      %v873 = vadd.f32 %v431, %v837
      %v874 = vadd.f32 %v432, %v838
      %v875 = vadd.f32 %v433, %v839
      %v876 = vadd.f32 %v434, %v840
      %v877 = vadd.f32 %v435, %v841
      %v878 = vadd.f32 %v436, %v842
      %v879 = vadd.f32 %v437, %v843
      %v880 = vadd.f32 %v438, %v844
      %v881 = vadd.f32 %v439, %v845
      %v882 = vadd.f32 %v440, %v846
      %v883 = vadd.f32 %v441, %v847
      %v884 = vadd.f32 %v442, %v848
      %v885 = vadd.f32 %v443, %v849
      %v886 = vadd.f32 %v444, %v850
      %v887 = vadd.f32 %v445, %v851
      %v888 = vadd.f32 %v446, %v852
      %v889 = vadd.f32 %v447, %v853
      %v890 = vadd.f32 %v448, %v854
      %v891 = vadd.f32 %v449, %v855
      %v892 = vadd.f32 %v450, %v856
      %v893 = vadd.f32 %v451, %v857
      %v894 = vadd.f32 %v452, %v858
      %v895 = vadd.f32 %v453, %v859
      %v896 = vadd.f32 %v454, %v860
      %v897 = vadd.f32 %v455, %v861
      %v898 = vadd.f32 %v456, %v862
      %v899 = vadd.f32 %v457, %v863
      %v900 = vld [vmem:[%s6] sm:$0x1]
      %v902 = vlaneseq
      %v903 = vshrl.u32 %v902, 7
      %v904 = vsub.s32 0, %v903
      %v905 = vrot.slane %v900, %v904
      %v907 = vadd.f32 %v864, %v905
      %v908 = vadd.f32 %v865, %v905
      %v909 = vadd.f32 %v866, %v905
      %v910 = vadd.f32 %v867, %v905
      %v911 = vadd.f32 %v868, %v905
      %v912 = vadd.f32 %v869, %v905
      %v913 = vadd.f32 %v870, %v905
      %v914 = vadd.f32 %v871, %v905
      %v915 = vadd.f32 %v872, %v905
      %v916 = vadd.f32 %v873, %v905
      %v917 = vadd.f32 %v874, %v905
      %v918 = vadd.f32 %v875, %v905
      %v919 = vadd.f32 %v876, %v905
      %v920 = vadd.f32 %v877, %v905
      %v921 = vadd.f32 %v878, %v905
      %v922 = vadd.f32 %v879, %v905
      %v923 = vadd.f32 %v880, %v905
      %v924 = vadd.f32 %v881, %v905
      %v925 = vadd.f32 %v882, %v905
      %v926 = vadd.f32 %v883, %v905
      %v927 = vadd.f32 %v884, %v905
      %v928 = vadd.f32 %v885, %v905
      %v929 = vadd.f32 %v886, %v905
      %v930 = vadd.f32 %v887, %v905
      %v931 = vadd.f32 %v888, %v905
      %v932 = vadd.f32 %v889, %v905
      %v933 = vadd.f32 %v890, %v905
      %v934 = vadd.f32 %v891, %v905
      %v935 = vadd.f32 %v892, %v905
      %v936 = vadd.f32 %v893, %v905
      %v937 = vadd.f32 %v894, %v905
      %v938 = vadd.f32 %v895, %v905
      %v939 = vadd.f32 %v896, %v905
      %v940 = vadd.f32 %v897, %v905
      %v941 = vadd.f32 %v898, %v905
      %v942 = vadd.f32 %v899, %v905
      %v943 = vmax.f32 %v907, 0.0
      %v944 = vmax.f32 %v908, 0.0
      %v945 = vmax.f32 %v909, 0.0
      %v946 = vmax.f32 %v910, 0.0
      %v947 = vmax.f32 %v911, 0.0
      %v948 = vmax.f32 %v912, 0.0
      %v949 = vmax.f32 %v913, 0.0
      %v950 = vmax.f32 %v914, 0.0
      %v951 = vmax.f32 %v915, 0.0
      %v952 = vmax.f32 %v916, 0.0
      %v953 = vmax.f32 %v917, 0.0
      %v954 = vmax.f32 %v918, 0.0
      %v955 = vmax.f32 %v919, 0.0
      %v956 = vmax.f32 %v920, 0.0
      %v957 = vmax.f32 %v921, 0.0
      %v958 = vmax.f32 %v922, 0.0
      %v959 = vmax.f32 %v923, 0.0
      %v960 = vmax.f32 %v924, 0.0
      %v961 = vmax.f32 %v925, 0.0
      %v962 = vmax.f32 %v926, 0.0
      %v963 = vmax.f32 %v927, 0.0
      %v964 = vmax.f32 %v928, 0.0
      %v965 = vmax.f32 %v929, 0.0
      %v966 = vmax.f32 %v930, 0.0
      %v967 = vmax.f32 %v931, 0.0
      %v968 = vmax.f32 %v932, 0.0
      %v969 = vmax.f32 %v933, 0.0
      %v970 = vmax.f32 %v934, 0.0
      %v971 = vmax.f32 %v935, 0.0
      %v972 = vmax.f32 %v936, 0.0
      %v973 = vmax.f32 %v937, 0.0
      %v974 = vmax.f32 %v938, 0.0
      %v975 = vmax.f32 %v939, 0.0
      %v976 = vmax.f32 %v940, 0.0
      %v977 = vmax.f32 %v941, 0.0
      %v978 = vmax.f32 %v942, 0.0
      %979 = vst [vmem:[%s298] sm:$0xff] %v943
      %980 = vst [vmem:[%s298 + $0x8] sm:$0xff] %v944
      %981 = vst [vmem:[%s298 + $0x10] sm:$0xff] %v945
      %982 = vst [vmem:[%s298 + $0x18] sm:$0xff] %v946
      %983 = vst [vmem:[%s298 + $0x20] sm:$0xff] %v947
      %984 = vst [vmem:[%s298 + $0x28] sm:$0xff] %v948
      %985 = vst [vmem:[%s298 + $0x30] sm:$0xff] %v949
      %986 = vst [vmem:[%s298 + $0x38] sm:$0xff] %v950
      %987 = vst [vmem:[%s298 + $0x40] sm:$0xff] %v951
      %988 = vst [vmem:[%s298 + $0x48] sm:$0xff] %v952
      %989 = vst [vmem:[%s298 + $0x50] sm:$0xff] %v953
      %990 = vst [vmem:[%s298 + $0x58] sm:$0xff] %v954
      %991 = vst [vmem:[%s298 + $0x60] sm:$0xff] %v955
      %992 = vst [vmem:[%s298 + $0x68] sm:$0xff] %v956
      %993 = vst [vmem:[%s298 + $0x70] sm:$0xff] %v957
      %994 = vst [vmem:[%s298 + $0x78] sm:$0xff] %v958
      %995 = vst [vmem:[%s298 + $0x80] sm:$0xff] %v959
      %996 = vst [vmem:[%s298 + $0x88] sm:$0xff] %v960
      %997 = vst [vmem:[%s298 + $0x90] sm:$0xff] %v961
      %998 = vst [vmem:[%s298 + $0x98] sm:$0xff] %v962
      %999 = vst [vmem:[%s298 + $0xa0] sm:$0xff] %v963
      %1000 = vst [vmem:[%s298 + $0xa8] sm:$0xff] %v964
      %1001 = vst [vmem:[%s298 + $0xb0] sm:$0xff] %v965
      %1002 = vst [vmem:[%s298 + $0xb8] sm:$0xff] %v966
      %1003 = vst [vmem:[%s298 + $0xc0] sm:$0xff] %v967
      %1004 = vst [vmem:[%s298 + $0xc8] sm:$0xff] %v968
      %1005 = vst [vmem:[%s298 + $0xd0] sm:$0xff] %v969
      %1006 = vst [vmem:[%s298 + $0xd8] sm:$0xff] %v970
      %1007 = vst [vmem:[%s298 + $0xe0] sm:$0xff] %v971
      %1008 = vst [vmem:[%s298 + $0xe8] sm:$0xff] %v972
      %1009 = vst [vmem:[%s298 + $0xf0] sm:$0xff] %v973
      %1010 = vst [vmem:[%s298 + $0xf8] sm:$0xff] %v974
      %1011 = vst [vmem:[%s298 + $0x100] sm:$0xff] %v975
      %1012 = vst [vmem:[%s298 + $0x108] sm:$0xff] %v976
      %1013 = vst [vmem:[%s298 + $0x110] sm:$0xff] %v977
      %1014 = vst [vmem:[%s298 + $0x118] sm:$0xff] %v978
      %p1015 = scmp.lt.s32.totalorder %s18, 1
      %s1016 = scalar_select %p1015, %s18, 1
      %s1017 = smul.addr %s1016, 36
      %s1018 = smul.addr %s1017, 8
      %s1019 = scalar_lea.vmem %s7, %s1018
      // Predicated region
      $region49: #{basic_block_forward.5} parent=47 // pred_check
        %p1020 = pneg %p193
      $region50: #{basic_block_forward.5} parent=47 // pred_check_branch
        %1022 = sbr.rel (%p1020) target = $region52
      $region51: #{basic_block_forward.5} parent=47 // pred_region
        _
      $region52: #{basic_block_forward.5} parent=47 // pred_fallthru
        _
    $region48: #{basic_block_forward.5} parent=5 // pred_fallthru
      _
    %p1023 = scmp.le.s32.totalorder 2, %s13
    // Predicated region
    $region53: #{basic_block_forward.5} parent=5 // pred_check
      %p1024 = pneg %p1023
    $region54: #{basic_block_forward.5} parent=5 // pred_check_branch
      %1026 = sbr.rel (%p1024) target = $region56
    $region55: #{basic_block_forward.5} parent=5 // pred_region
      %s1027 = ssub.s32 %s13, 2
      // Predicated region
      $region57: #{basic_block_forward.5} parent=55 // pred_check
        %p1028 = pneg %p199
      $region58: #{basic_block_forward.5} parent=55 // pred_check_branch
        %1030 = sbr.rel (%p1028) target = $region60
      $region59: #{basic_block_forward.5} parent=55 // pred_region
        %p1031 = scmp.lt.s32.totalorder %s19, 1
        %s1032 = scalar_select %p1031, %s19, 1
        %s1033 = smul.addr %s1032, 36
        %s1034 = smul.addr %s1033, 8
        %s1035 = scalar_lea.vmem %s7, %s1034
      $region60: #{basic_block_forward.5} parent=55 // pred_fallthru
        _
    $region56: #{basic_block_forward.5} parent=5 // pred_fallthru
      _
  $region6: #{basic_block_forward.5} parent=0 // loop_footer
    %s17 = sadd.s32 1, %s13
  $region7: #{basic_block_forward.5} parent=0 // loop_footer_branch
    %12 = sbr.rel target = $region3
  $region8: #{basic_block_forward.5} parent=0 // loop_exit
    _

// kernel: basic_block_forward.3
$region0: #{basic_block_forward.3}
  #allocation0 [shape = 'u32[]', space=smem, size = 0x4, offset = 0x4, fixed_abs, tag = 'smem constant byte address 0x4 - core index']
  #allocation1 [shape = 'u32[144,128]{1,0:T(1,128)}', space=vmem, size = 0x12000, scoped, tag = 'internal scratch']
  %s0 = inlined_call_operand.vmem [shape: bf16[2,342,4], index: 0, kind: input, shape index: {}]
  %s1 = inlined_call_operand.vmem [shape: bf16[9,4,128], index: 1, kind: input, shape index: {}]
  %s2 = inlined_call_operand.vmem [shape: f32[288,1], index: 2, kind: input, shape index: {}]
  %s3 = inlined_call_operand.vmem [shape: bf16[2,288,128], index: 3, kind: output, shape index: {0}]
  %s4 = inlined_call_operand.vmem [shape: f32[2,2,128], index: 4, kind: output, shape index: {1}]
  %5 = xla_tuple %s3, %s4
  %s6 = sld [smem:[#allocation0]]
  $region53: #{basic_block_forward.3} parent=0
    _
  %s8 = ssub.s32 1, %s6
  %s9 = scalar_select 0, %s8, %s6
  loop: start=0, step=1, limit=4
  $region2: #{basic_block_forward.3} parent=0 // loop_pre_header
    _
  $region3: #{basic_block_forward.3} parent=0 // loop_header
    %s11 = sphi 0, %s15
    %p12 = scmp.ge.s32.totalorder %s11, 4
    %s21 = sphi 0, %s23
    %s24 = sphi 0, %s21
    %s25 = sphi 0, %s24
    %s41 = sphi 0, %s25
    %s45 = sphi 0, %s45
    %s47 = sphi 0, %s45
    %s48 = sphi 0, %s47
    %s62 = sphi 0, %s48
    %s66 = sphi 0, %s66
    %s68 = sphi 0, %s66
    %s69 = sphi 0, %s68
    %s83 = sphi 0, %s69
    %s89 = sphi 0, %s91
    %s92 = sphi 0, %s89
    %s93 = sphi 0, %s92
    %s109 = sphi 0, %s93
    %s115 = sphi 0, %s117
    %s118 = sphi 0, %s115
    %s119 = sphi 0, %s118
    %s135 = sphi 0, %s119
  $region4: #{basic_block_forward.3} parent=0 // loop_header_branch
    %14 = sbr.rel (%p12) target = $region8
  $region5: #{basic_block_forward.3} parent=0 // loop_body
    %s16 = ssub.s32 %s11, 1
    %s17 = ssub.s32 %s11, 2
    %s18 = sadd.s32 %s11, 1
    %s19 = ssub.s32 %s11, %s18
    %p20 = scmp.eq.s32.totalorder %s19, 0
    %s22 = sadd.s32 %s21, 1
    %s23 = scalar_select %p20, %s21, %s22
    %p26 = pneg %p20
    %p27 = scmp.eq.s32.totalorder %s11, 1
    %p28 = por %p26, %p27
    %p29 = scmp.ne.s32.totalorder %s21, %s24
    %p30 = scmp.eq.s32.totalorder %s11, 0
    %p31 = por %p29, %p30
    %p32 = scmp.ne.s32.totalorder %s21, %s24
    %p33 = scmp.eq.s32.totalorder %s16, 1
    %p34 = por %p32, %p33
    %p35 = scmp.ne.s32.totalorder %s24, %s25
    %p36 = scmp.eq.s32.totalorder %s16, 0
    %p37 = por %p35, %p36
    %p38 = scmp.ne.s32.totalorder %s24, %s25
    %p39 = scmp.eq.s32.totalorder %s17, 1
    %p40 = por %p38, %p39
    %p42 = scmp.ne.s32.totalorder %s25, %s41
    %p43 = scmp.eq.s32.totalorder %s17, 0
    %p44 = por %p42, %p43
    %s46 = sadd.s32 %s45, 1
    %p49 = scmp.eq.s32.totalorder %s11, 1
    %p50 = scmp.ne.s32.totalorder %s45, %s47
    %p51 = scmp.eq.s32.totalorder %s11, 0
    %p52 = por %p50, %p51
    %p53 = scmp.ne.s32.totalorder %s45, %s47
    %p54 = scmp.eq.s32.totalorder %s16, 1
    %p55 = por %p53, %p54
    %p56 = scmp.ne.s32.totalorder %s47, %s48
    %p57 = scmp.eq.s32.totalorder %s16, 0
    %p58 = por %p56, %p57
    %p59 = scmp.ne.s32.totalorder %s47, %s48
    %p60 = scmp.eq.s32.totalorder %s17, 1
    %p61 = por %p59, %p60
    %p63 = scmp.ne.s32.totalorder %s48, %s62
    %p64 = scmp.eq.s32.totalorder %s17, 0
    %p65 = por %p63, %p64
    %s67 = sadd.s32 %s66, 1
    %p70 = scmp.eq.s32.totalorder %s11, 1
    %p71 = scmp.ne.s32.totalorder %s66, %s68
    %p72 = scmp.eq.s32.totalorder %s11, 0
    %p73 = por %p71, %p72
    %p74 = scmp.ne.s32.totalorder %s66, %s68
    %p75 = scmp.eq.s32.totalorder %s16, 1
    %p76 = por %p74, %p75
    %p77 = scmp.ne.s32.totalorder %s68, %s69
    %p78 = scmp.eq.s32.totalorder %s16, 0
    %p79 = por %p77, %p78
    %p80 = scmp.ne.s32.totalorder %s68, %s69
    %p81 = scmp.eq.s32.totalorder %s17, 1
    %p82 = por %p80, %p81
    %p84 = scmp.ne.s32.totalorder %s69, %s83
    %p85 = scmp.eq.s32.totalorder %s17, 0
    %p86 = por %p84, %p85
    %s87 = ssub.s32 %s11, %s18
    %p88 = scmp.eq.s32.totalorder %s87, 0
    %s90 = sadd.s32 %s89, 1
    %s91 = scalar_select %p88, %s89, %s90
    %p94 = pneg %p88
    %p95 = scmp.eq.s32.totalorder %s11, 1
    %p96 = por %p94, %p95
    %p97 = scmp.ne.s32.totalorder %s89, %s92
    %p98 = scmp.eq.s32.totalorder %s11, 0
    %p99 = por %p97, %p98
    %p100 = scmp.ne.s32.totalorder %s89, %s92
    %p101 = scmp.eq.s32.totalorder %s16, 1
    %p102 = por %p100, %p101
    %p103 = scmp.ne.s32.totalorder %s92, %s93
    %p104 = scmp.eq.s32.totalorder %s16, 0
    %p105 = por %p103, %p104
    %p106 = scmp.ne.s32.totalorder %s92, %s93
    %p107 = scmp.eq.s32.totalorder %s17, 1
    %p108 = por %p106, %p107
    %p110 = scmp.ne.s32.totalorder %s93, %s109
    %p111 = scmp.eq.s32.totalorder %s17, 0
    %p112 = por %p110, %p111
    %s113 = ssub.s32 %s11, %s18
    %p114 = scmp.eq.s32.totalorder %s113, 0
    %s116 = sadd.s32 %s115, 1
    %s117 = scalar_select %p114, %s115, %s116
    %p120 = pneg %p114
    %p121 = scmp.eq.s32.totalorder %s11, 1
    %p122 = por %p120, %p121
    %p123 = scmp.ne.s32.totalorder %s115, %s118
    %p124 = scmp.eq.s32.totalorder %s11, 0
    %p125 = por %p123, %p124
    %p126 = scmp.ne.s32.totalorder %s115, %s118
    %p127 = scmp.eq.s32.totalorder %s16, 1
    %p128 = por %p126, %p127
    %p129 = scmp.ne.s32.totalorder %s118, %s119
    %p130 = scmp.eq.s32.totalorder %s16, 0
    %p131 = por %p129, %p130
    %p132 = scmp.ne.s32.totalorder %s118, %s119
    %p133 = scmp.eq.s32.totalorder %s17, 1
    %p134 = por %p132, %p133
    %p136 = scmp.ne.s32.totalorder %s119, %s135
    %p137 = scmp.eq.s32.totalorder %s17, 0
    %p138 = por %p136, %p137
    %p139 = scmp.le.s32.totalorder 1, %s11
    %p140 = scmp.lt.s32.totalorder %s11, 3
    %p141 = pnand %p139, %p140
    %p142 = pneg %p141
    // Predicated region
    $region9: #{basic_block_forward.3} parent=5 // pred_check
      _
    $region10: #{basic_block_forward.3} parent=5 // pred_check_branch
      %144 = sbr.rel (%p141) target = $region12
    $region11: #{basic_block_forward.3} parent=5 // pred_region
      %s145 = ssub.s32 %s11, 1
      // Predicated region
      $region13: #{basic_block_forward.3} parent=11 // pred_check
        %p146 = pneg %p58
      $region14: #{basic_block_forward.3} parent=11 // pred_check_branch
        %148 = sbr.rel (%p146) target = $region16
      $region15: #{basic_block_forward.3} parent=11 // pred_region
        _
      $region16: #{basic_block_forward.3} parent=11 // pred_fallthru
        _
      // Predicated region
      $region17: #{basic_block_forward.3} parent=11 // pred_check
        %p149 = pneg %p79
      $region18: #{basic_block_forward.3} parent=11 // pred_check_branch
        %151 = sbr.rel (%p149) target = $region20
      $region19: #{basic_block_forward.3} parent=11 // pred_region
        _
      $region20: #{basic_block_forward.3} parent=11 // pred_fallthru
        _
    $region12: #{basic_block_forward.3} parent=5 // pred_fallthru
      _
    %p152 = scmp.lt.s32.totalorder %s11, 2
    // Predicated region
    $region21: #{basic_block_forward.3} parent=5 // pred_check
      %p153 = pneg %p152
    $region22: #{basic_block_forward.3} parent=5 // pred_check_branch
      %155 = sbr.rel (%p153) target = $region24
    $region23: #{basic_block_forward.3} parent=5 // pred_region
      // Predicated region
      $region25: #{basic_block_forward.3} parent=23 // pred_check
        %p156 = pneg %p31
      $region26: #{basic_block_forward.3} parent=23 // pred_check_branch
        %158 = sbr.rel (%p156) target = $region28
      $region27: #{basic_block_forward.3} parent=23 // pred_region
        %p159 = scmp.lt.s32.totalorder %s11, 1
        %s160 = scalar_select %p159, %s11, 1
        %s161 = smul.addr %s160, 43
        %s162 = smul.addr %s161, 4
        %s163 = scalar_lea.vmem %s0, %s162
      $region28: #{basic_block_forward.3} parent=23 // pred_fallthru
        _
    $region24: #{basic_block_forward.3} parent=5 // pred_fallthru
      _
    %p164 = scmp.le.s32.totalorder 1, %s11
    %p165 = scmp.lt.s32.totalorder %s11, 3
    %p166 = pnand %p164, %p165
    %p167 = pneg %p166
    // Predicated region
    $region29: #{basic_block_forward.3} parent=5 // pred_check
      _
    $region30: #{basic_block_forward.3} parent=5 // pred_check_branch
      %169 = sbr.rel (%p166) target = $region32
    $region31: #{basic_block_forward.3} parent=5 // pred_region
      %s170 = ssub.s32 %s11, 1
      %p171 = scmp.lt.s32.totalorder %s16, 1
      %s172 = scalar_select %p171, %s16, 1
      %s173 = smul.addr %s172, 43
      %s174 = smul.addr %s173, 4
      %s175 = scalar_lea.vmem %s0, %s174
      %p176 = pneg %p37
      %p177 = pneg %p34
      %p178 = pneg %p58
      %p179 = pneg %p55
      %p180 = pneg %p79
      %p181 = pneg %p76
      %p182 = pneg %p105
      %p183 = pneg %p102
      %p184 = scmp.lt.s32.totalorder %s16, 1
      %s185 = scalar_select %p184, %s16, 1
      %s186 = smul.addr %s185, 36
      %s187 = smul.addr %s186, 4
      %s188 = scalar_lea.vmem %s3, %s187
      %p189 = pneg %p131
      %p190 = pneg %p128
      %p191 = scmp.lt.s32.totalorder %s16, 1
      %s192 = scalar_select %p191, %s16, 1
      %s193 = smul.addr %s192, 2
      %s194 = scalar_lea.vmem %s4, %s193
      %p195 = scmp.lt.s32.totalorder %s16, 1
      %s196 = scalar_select %p195, %s16, 1
      %s197 = smul.addr %s196, 43
      %s198 = smul.addr %s197, 4
      %s199 = scalar_lea.vmem %s0, %s198
      %p200 = scmp.lt.s32.totalorder %s16, 1
      %s201 = scalar_select %p200, %s16, 1
      %s202 = smul.addr %s201, 36
      %s203 = smul.addr %s202, 4
      %s204 = scalar_lea.vmem %s3, %s203
      %p205 = scmp.lt.s32.totalorder %s16, 1
      %s206 = scalar_select %p205, %s16, 1
      %s207 = smul.addr %s206, 2
      %s208 = scalar_lea.vmem %s4, %s207
      %v210 = vld [vmem:[%s199] sm:$0xf]
      %v211 = vld [vmem:[%s199 + $0x4] sm:$0xf]
      %v212 = vld [vmem:[%s199 + $0x8] sm:$0xf]
      %v213 = vld [vmem:[%s199 + $0xc] sm:$0xf]
      %v214 = vld [vmem:[%s199 + $0x10] sm:$0xf]
      %v215 = vld [vmem:[%s199 + $0x14] sm:$0xf]
      %v216 = vld [vmem:[%s199 + $0x18] sm:$0xf]
      %v217 = vld [vmem:[%s199 + $0x1c] sm:$0xf]
      %v218 = vld [vmem:[%s199 + $0x20] sm:$0xf]
      %v219 = vld [vmem:[%s199 + $0x24] sm:$0xf]
      %v220 = vld [vmem:[%s199 + $0x28] sm:$0xf]
      %v221 = vld [vmem:[%s199 + $0x2c] sm:$0xf]
      %v222 = vld [vmem:[%s199 + $0x30] sm:$0xf]
      %v223 = vld [vmem:[%s199 + $0x34] sm:$0xf]
      %v224 = vld [vmem:[%s199 + $0x38] sm:$0xf]
      %v225 = vld [vmem:[%s199 + $0x3c] sm:$0xf]
      %v226 = vld [vmem:[%s199 + $0x40] sm:$0xf]
      %v227 = vld [vmem:[%s199 + $0x44] sm:$0xf]
      %v228 = vld [vmem:[%s199 + $0x48] sm:$0xf]
      %v229 = vld [vmem:[%s199 + $0x4c] sm:$0xf]
      %v230 = vld [vmem:[%s199 + $0x50] sm:$0xf]
      %v231 = vld [vmem:[%s199 + $0x54] sm:$0xf]
      %v232 = vld [vmem:[%s199 + $0x58] sm:$0xf]
      %v233 = vld [vmem:[%s199 + $0x5c] sm:$0xf]
      %v234 = vld [vmem:[%s199 + $0x60] sm:$0xf]
      %v235 = vld [vmem:[%s199 + $0x64] sm:$0xf]
      %v236 = vld [vmem:[%s199 + $0x68] sm:$0xf]
      %v237 = vld [vmem:[%s199 + $0x6c] sm:$0xf]
      %v238 = vld [vmem:[%s199 + $0x70] sm:$0xf]
      %v239 = vld [vmem:[%s199 + $0x74] sm:$0xf]
      %v240 = vld [vmem:[%s199 + $0x78] sm:$0xf]
      %v241 = vld [vmem:[%s199 + $0x7c] sm:$0xf]
      %v242 = vld [vmem:[%s199 + $0x80] sm:$0xf]
      %v243 = vld [vmem:[%s199 + $0x84] sm:$0xf]
      %v244 = vld [vmem:[%s199 + $0x88] sm:$0xf]
      %v245 = vld [vmem:[%s199 + $0x8c] sm:$0xf]
      %v246 = vld [vmem:[%s1] sm:$0x3]
      %v247 = vld [vmem:[%s199 + $0x90] sm:$0x1]
      %s248 = scalar_lea.vmem %s1, 2
      %v249 = vld [vmem:[%s248] sm:$0x3]
      %v287 = vunpack.c.l.b16 %v210
      %v288 = vunpack.c.l.b16 %v211
      %v289 = vunpack.c.l.b16 %v212
      %v290 = vunpack.c.l.b16 %v213
      %v291 = vunpack.c.l.b16 %v214
      %v292 = vunpack.c.l.b16 %v215
      %v293 = vunpack.c.l.b16 %v216
      %v294 = vunpack.c.l.b16 %v217
      %v295 = vunpack.c.l.b16 %v218
      %v296 = vunpack.c.l.b16 %v219
      %v297 = vunpack.c.l.b16 %v220
      %v298 = vunpack.c.l.b16 %v221
      %v299 = vunpack.c.l.b16 %v222
      %v300 = vunpack.c.l.b16 %v223
      %v301 = vunpack.c.l.b16 %v224
      %v302 = vunpack.c.l.b16 %v225
      %v303 = vunpack.c.l.b16 %v226
      %v304 = vunpack.c.l.b16 %v227
      %v305 = vunpack.c.l.b16 %v228
      %v306 = vunpack.c.l.b16 %v229
      %v307 = vunpack.c.l.b16 %v230
      %v308 = vunpack.c.l.b16 %v231
      %v309 = vunpack.c.l.b16 %v232
      %v310 = vunpack.c.l.b16 %v233
      %v311 = vunpack.c.l.b16 %v234
      %v312 = vunpack.c.l.b16 %v235
      %v313 = vunpack.c.l.b16 %v236
      %v314 = vunpack.c.l.b16 %v237
      %v315 = vunpack.c.l.b16 %v238
      %v316 = vunpack.c.l.b16 %v239
      %v317 = vunpack.c.l.b16 %v240
      %v318 = vunpack.c.l.b16 %v241
      %v319 = vunpack.c.l.b16 %v242
      %v320 = vunpack.c.l.b16 %v243
      %v321 = vunpack.c.l.b16 %v244
      %v322 = vunpack.c.l.b16 %v245
      %v323 = vunpack.c.l.b16 %v247
      %v324 = vpack.c.b16 %v288, %v287
      %v325 = vpack.c.b16 %v290, %v289
      %v326 = vpack.c.b16 %v292, %v291
      %v327 = vpack.c.b16 %v294, %v293
      %v328 = vpack.c.b16 %v296, %v295
      %v329 = vpack.c.b16 %v298, %v297
      %v330 = vpack.c.b16 %v300, %v299
      %v331 = vpack.c.b16 %v302, %v301
      %v332 = vpack.c.b16 %v304, %v303
      %v333 = vpack.c.b16 %v306, %v305
      %v334 = vpack.c.b16 %v308, %v307
      %v335 = vpack.c.b16 %v310, %v309
      %v336 = vpack.c.b16 %v312, %v311
      %v337 = vpack.c.b16 %v314, %v313
      %v338 = vpack.c.b16 %v316, %v315
      %v339 = vpack.c.b16 %v318, %v317
      %v340 = vpack.c.b16 %v320, %v319
      %v341 = vpack.c.b16 %v322, %v321
      %v342 = vpack.c.b16 %v323, %v323
      %vm343 = vsmask.f32 7424
      %v345 = vshrl.u32 %v324, 16
      %v347 = vshll.u32 %v324, 16
      %v349 = vrot.slane %v347, 1
      %v350 = vor.u32 %v345, %v349
      %v352 = vshll.u32 %v325, 16
      %v354 = vrot.slane %v352, 1
      %v355 = vsel %vm343, %v350, %v354
      %v356 = vshrl.u32 %v325, 16
      %v358 = vor.u32 %v356, %v354
      %v360 = vshll.u32 %v326, 16
      %v362 = vrot.slane %v360, 1
      %v363 = vsel %vm343, %v358, %v362
      %v364 = vshrl.u32 %v326, 16
      %v366 = vor.u32 %v364, %v362
      %v368 = vshll.u32 %v327, 16
      %v370 = vrot.slane %v368, 1
      %v371 = vsel %vm343, %v366, %v370
      %v372 = vshrl.u32 %v327, 16
      %v374 = vor.u32 %v372, %v370
      %v376 = vshll.u32 %v328, 16
      %v378 = vrot.slane %v376, 1
      %v379 = vsel %vm343, %v374, %v378
      %v380 = vshrl.u32 %v328, 16
      %v382 = vor.u32 %v380, %v378
      %v384 = vshll.u32 %v329, 16
      %v386 = vrot.slane %v384, 1
      %v387 = vsel %vm343, %v382, %v386
      %v388 = vshrl.u32 %v329, 16
      %v390 = vor.u32 %v388, %v386
      %v392 = vshll.u32 %v330, 16
      %v394 = vrot.slane %v392, 1
      %v395 = vsel %vm343, %v390, %v394
      %v396 = vshrl.u32 %v330, 16
      %v398 = vor.u32 %v396, %v394
      %v400 = vshll.u32 %v331, 16
      %v402 = vrot.slane %v400, 1
      %v403 = vsel %vm343, %v398, %v402
      %v404 = vshrl.u32 %v331, 16
      %v406 = vor.u32 %v404, %v402
      %v408 = vshll.u32 %v332, 16
      %v410 = vrot.slane %v408, 1
      %v411 = vsel %vm343, %v406, %v410
      %v412 = vshrl.u32 %v332, 16
      %v414 = vor.u32 %v412, %v410
      %v416 = vshll.u32 %v333, 16
      %v418 = vrot.slane %v416, 1
      %v419 = vsel %vm343, %v414, %v418
      %v420 = vshrl.u32 %v333, 16
      %v422 = vor.u32 %v420, %v418
      %v424 = vshll.u32 %v334, 16
      %v426 = vrot.slane %v424, 1
      %v427 = vsel %vm343, %v422, %v426
      %v428 = vshrl.u32 %v334, 16
      %v430 = vor.u32 %v428, %v426
      %v432 = vshll.u32 %v335, 16
      %v434 = vrot.slane %v432, 1
      %v435 = vsel %vm343, %v430, %v434
      %v436 = vshrl.u32 %v335, 16
      %v438 = vor.u32 %v436, %v434
      %v440 = vshll.u32 %v336, 16
      %v442 = vrot.slane %v440, 1
      %v443 = vsel %vm343, %v438, %v442
      %v444 = vshrl.u32 %v336, 16
      %v446 = vor.u32 %v444, %v442
      %v448 = vshll.u32 %v337, 16
      %v450 = vrot.slane %v448, 1
      %v451 = vsel %vm343, %v446, %v450
      %v452 = vshrl.u32 %v337, 16
      %v454 = vor.u32 %v452, %v450
      %v456 = vshll.u32 %v338, 16
      %v458 = vrot.slane %v456, 1
      %v459 = vsel %vm343, %v454, %v458
      %v460 = vshrl.u32 %v338, 16
      %v462 = vor.u32 %v460, %v458
      %v464 = vshll.u32 %v339, 16
      %v466 = vrot.slane %v464, 1
      %v467 = vsel %vm343, %v462, %v466
      %v468 = vshrl.u32 %v339, 16
      %v470 = vor.u32 %v468, %v466
      %v472 = vshll.u32 %v340, 16
      %v474 = vrot.slane %v472, 1
      %v475 = vsel %vm343, %v470, %v474
      %v476 = vshrl.u32 %v340, 16
      %v478 = vor.u32 %v476, %v474
      %v480 = vshll.u32 %v341, 16
      %v482 = vrot.slane %v480, 1
      %v483 = vsel %vm343, %v478, %v482
      %v484 = vshrl.u32 %v341, 16
      %v486 = vor.u32 %v484, %v482
      %v488 = vshll.u32 %v342, 16
      %v490 = vrot.slane %v488, 1
      %v491 = vsel %vm343, %v486, %v490
      %vm492 = vcmask 31744
      %v494 = vsel %vm492, %v355, 0
      %v497 = vsel %vm492, %v363, 0
      %v500 = vsel %vm492, %v371, 0
      %v503 = vsel %vm492, %v379, 0
      %v506 = vsel %vm492, %v387, 0
      %v509 = vsel %vm492, %v395, 0
      %v512 = vsel %vm492, %v403, 0
      %v515 = vsel %vm492, %v411, 0
      %v518 = vsel %vm492, %v419, 0
      %v521 = vsel %vm492, %v427, 0
      %v524 = vsel %vm492, %v435, 0
      %v527 = vsel %vm492, %v443, 0
      %v530 = vsel %vm492, %v451, 0
      %v533 = vsel %vm492, %v459, 0
      %v536 = vsel %vm492, %v467, 0
      %v539 = vsel %vm492, %v475, 0
      %v542 = vsel %vm492, %v483, 0
      %v545 = vsel %vm492, %v491, 0
      %vm547 = vcmask 1041408
      %v549 = vsel %vm547, %v249, 0
      %551 = vmatprep.subr.bf16.mxu0 0
      %552 = vmatpush1.bf16.msra.mxu0 %v549
      %553 = vmatprep.subr.bf16.mxu0 0
      %554 = vmatpush1.bf16.msra.mxu0 0
      %555 = vmatprep.subr.bf16.mxu0 0
      %556 = vmatpush1.bf16.msra.mxu0 0
      %557 = vmatprep.subr.bf16.mxu0 0
      %558 = vmatpush1.bf16.msra.mxu0 0
      %559 = vmatprep.subr.bf16.mxu0 0
      %560 = vmatpush1.bf16.msra.mxu0 0
      %561 = vmatprep.subr.bf16.mxu0 0
      %562 = vmatpush1.bf16.msra.mxu0 0
      %563 = vmatprep.subr.bf16.mxu0 0
      %564 = vmatpush1.bf16.msra.mxu0 0
      %565 = vmatprep.subr.bf16.mxu0 0
      %566 = vmatpush1.bf16.msra.mxu0 0
      %567 = vmatprep.subr.bf16.mxu0 0
      %568 = vmatpush1.bf16.msra.mxu0 0
      %569 = vmatprep.subr.bf16.mxu0 0
      %570 = vmatpush1.bf16.msra.mxu0 0
      %571 = vmatprep.subr.bf16.mxu0 0
      %572 = vmatpush1.bf16.msra.mxu0 0
      %573 = vmatprep.subr.bf16.mxu0 0
      %574 = vmatpush1.bf16.msra.mxu0 0
      %575 = vmatprep.subr.bf16.mxu0 0
      %576 = vmatpush1.bf16.msra.mxu0 0
      %577 = vmatprep.subr.bf16.mxu0 0
      %578 = vmatpush1.bf16.msra.mxu0 0
      %579 = vmatprep.subr.bf16.mxu0 0
      %580 = vmatpush1.bf16.msra.mxu0 0
      %581 = vmatprep.subr.bf16.mxu0 0
      %582 = vmatpush1.bf16.msra.mxu0 0
      %583 = vmatprep.mubr.bf16.mxu0 0
      %584 = vmatmul.mubr.bf16.gmra.mrb[0].mxu0 %v494
      %v585 = vpop.f32.mrb[0].mxu0
      %v586 = vadd.f32 0.0, %v585
      %v587 = vpop.f32.mrb[0].mxu0
      %v588 = vpop.f32.mrb[0].mxu0
      %v589 = vadd.f32 0.0, %v588
      %v590 = vpop.f32.mrb[0].mxu0
      %591 = vmatprep.mubr.bf16.mxu0 0
      %592 = vmatmul.mubr.bf16.gmra.mrb[0].mxu0 %v497
      %v593 = vpop.f32.mrb[0].mxu0
      %v594 = vadd.f32 0.0, %v593
      %v595 = vpop.f32.mrb[0].mxu0
      %v596 = vpop.f32.mrb[0].mxu0
      %v597 = vadd.f32 0.0, %v596
      %v598 = vpop.f32.mrb[0].mxu0
      %599 = vmatprep.mubr.bf16.mxu0 0
      %600 = vmatmul.mubr.bf16.gmra.mrb[0].mxu0 %v500
      %v601 = vpop.f32.mrb[0].mxu0
      %v602 = vadd.f32 0.0, %v601
      %v603 = vpop.f32.mrb[0].mxu0
      %v604 = vpop.f32.mrb[0].mxu0
      %v605 = vadd.f32 0.0, %v604
      %v606 = vpop.f32.mrb[0].mxu0
      %607 = vmatprep.mubr.bf16.mxu0 0
      %608 = vmatmul.mubr.bf16.gmra.mrb[0].mxu0 %v503
      %v609 = vpop.f32.mrb[0].mxu0
      %v610 = vadd.f32 0.0, %v609
      %v611 = vpop.f32.mrb[0].mxu0
      %v612 = vpop.f32.mrb[0].mxu0
      %v613 = vadd.f32 0.0, %v612
      %v614 = vpop.f32.mrb[0].mxu0
      %615 = vmatprep.mubr.bf16.mxu0 0
      %616 = vmatmul.mubr.bf16.gmra.mrb[0].mxu0 %v506
      %v617 = vpop.f32.mrb[0].mxu0
      %v618 = vadd.f32 0.0, %v617
      %v619 = vpop.f32.mrb[0].mxu0
      %v620 = vpop.f32.mrb[0].mxu0
      %v621 = vadd.f32 0.0, %v620
      %v622 = vpop.f32.mrb[0].mxu0
      %623 = vmatprep.mubr.bf16.mxu0 0
      %624 = vmatmul.mubr.bf16.gmra.mrb[0].mxu0 %v509
      %v625 = vpop.f32.mrb[0].mxu0
      %v626 = vadd.f32 0.0, %v625
      %v627 = vpop.f32.mrb[0].mxu0
      %v628 = vpop.f32.mrb[0].mxu0
      %v629 = vadd.f32 0.0, %v628
      %v630 = vpop.f32.mrb[0].mxu0
      %631 = vmatprep.mubr.bf16.mxu0 0
      %632 = vmatmul.mubr.bf16.gmra.mrb[0].mxu0 %v512
      %v633 = vpop.f32.mrb[0].mxu0
      %v634 = vadd.f32 0.0, %v633
      %v635 = vpop.f32.mrb[0].mxu0
      %v636 = vpop.f32.mrb[0].mxu0
      %v637 = vadd.f32 0.0, %v636
      %v638 = vpop.f32.mrb[0].mxu0
      %639 = vmatprep.mubr.bf16.mxu0 0
      %640 = vmatmul.mubr.bf16.gmra.mrb[0].mxu0 %v515
      %v641 = vpop.f32.mrb[0].mxu0
      %v642 = vadd.f32 0.0, %v641
      %v643 = vpop.f32.mrb[0].mxu0
      %v644 = vpop.f32.mrb[0].mxu0
      %v645 = vadd.f32 0.0, %v644
      %v646 = vpop.f32.mrb[0].mxu0
      %647 = vmatprep.mubr.bf16.mxu0 0
      %648 = vmatmul.mubr.bf16.gmra.mrb[0].mxu0 %v518
      %v649 = vpop.f32.mrb[0].mxu0
      %v650 = vadd.f32 0.0, %v649
      %v651 = vpop.f32.mrb[0].mxu0
      %v652 = vpop.f32.mrb[0].mxu0
      %v653 = vadd.f32 0.0, %v652
      %v654 = vpop.f32.mrb[0].mxu0
      %655 = vmatprep.mubr.bf16.mxu0 0
      %656 = vmatmul.mubr.bf16.gmra.mrb[0].mxu0 %v521
      %v657 = vpop.f32.mrb[0].mxu0
      %v658 = vadd.f32 0.0, %v657
      %v659 = vpop.f32.mrb[0].mxu0
      %v660 = vpop.f32.mrb[0].mxu0
      %v661 = vadd.f32 0.0, %v660
      %v662 = vpop.f32.mrb[0].mxu0
      %663 = vmatprep.mubr.bf16.mxu0 0
      %664 = vmatmul.mubr.bf16.gmra.mrb[0].mxu0 %v524
      %v665 = vpop.f32.mrb[0].mxu0
      %v666 = vadd.f32 0.0, %v665
      %v667 = vpop.f32.mrb[0].mxu0
      %v668 = vpop.f32.mrb[0].mxu0
      %v669 = vadd.f32 0.0, %v668
      %v670 = vpop.f32.mrb[0].mxu0
      %671 = vmatprep.mubr.bf16.mxu0 0
      %672 = vmatmul.mubr.bf16.gmra.mrb[0].mxu0 %v527
      %v673 = vpop.f32.mrb[0].mxu0
      %v674 = vadd.f32 0.0, %v673
      %v675 = vpop.f32.mrb[0].mxu0
      %v676 = vpop.f32.mrb[0].mxu0
      %v677 = vadd.f32 0.0, %v676
      %v678 = vpop.f32.mrb[0].mxu0
      %679 = vmatprep.mubr.bf16.mxu0 0
      %680 = vmatmul.mubr.bf16.gmra.mrb[0].mxu0 %v530
      %v681 = vpop.f32.mrb[0].mxu0
      %v682 = vadd.f32 0.0, %v681
      %v683 = vpop.f32.mrb[0].mxu0
      %v684 = vpop.f32.mrb[0].mxu0
      %v685 = vadd.f32 0.0, %v684
      %v686 = vpop.f32.mrb[0].mxu0
      %687 = vmatprep.mubr.bf16.mxu0 0
      %688 = vmatmul.mubr.bf16.gmra.mrb[0].mxu0 %v533
      %v689 = vpop.f32.mrb[0].mxu0
      %v690 = vadd.f32 0.0, %v689
      %v691 = vpop.f32.mrb[0].mxu0
      %v692 = vpop.f32.mrb[0].mxu0
      %v693 = vadd.f32 0.0, %v692
      %v694 = vpop.f32.mrb[0].mxu0
      %695 = vmatprep.mubr.bf16.mxu0 0
      %696 = vmatmul.mubr.bf16.gmra.mrb[0].mxu0 %v536
      %v697 = vpop.f32.mrb[0].mxu0
      %v698 = vadd.f32 0.0, %v697
      %v699 = vpop.f32.mrb[0].mxu0
      %v700 = vpop.f32.mrb[0].mxu0
      %v701 = vadd.f32 0.0, %v700
      %v702 = vpop.f32.mrb[0].mxu0
      %703 = vmatprep.mubr.bf16.mxu0 0
      %704 = vmatmul.mubr.bf16.gmra.mrb[0].mxu0 %v539
      %v705 = vpop.f32.mrb[0].mxu0
      %v706 = vadd.f32 0.0, %v705
      %v707 = vpop.f32.mrb[0].mxu0
      %v708 = vpop.f32.mrb[0].mxu0
      %v709 = vadd.f32 0.0, %v708
      %v710 = vpop.f32.mrb[0].mxu0
      %711 = vmatprep.mubr.bf16.mxu0 0
      %712 = vmatmul.mubr.bf16.gmra.mrb[0].mxu0 %v542
      %v713 = vpop.f32.mrb[0].mxu0
      %v714 = vadd.f32 0.0, %v713
      %v715 = vpop.f32.mrb[0].mxu0
      %v716 = vpop.f32.mrb[0].mxu0
      %v717 = vadd.f32 0.0, %v716
      %v718 = vpop.f32.mrb[0].mxu0
      %719 = vmatprep.mubr.bf16.mxu0 0
      %720 = vmatmul.mubr.bf16.gmra.mrb[0].mxu0 %v545
      %v721 = vpop.f32.mrb[0].mxu0
      %v722 = vadd.f32 0.0, %v721
      %v723 = vpop.f32.mrb[0].mxu0
      %v724 = vpop.f32.mrb[0].mxu0
      %v725 = vadd.f32 0.0, %v724
      %v726 = vpop.f32.mrb[0].mxu0
      %727 = vdwg.mxu0
      %v728 = vsel %vm492, %v324, 0
      %v730 = vsel %vm492, %v325, 0
      %v732 = vsel %vm492, %v326, 0
      %v734 = vsel %vm492, %v327, 0
      %v736 = vsel %vm492, %v328, 0
      %v738 = vsel %vm492, %v329, 0
      %v740 = vsel %vm492, %v330, 0
      %v742 = vsel %vm492, %v331, 0
      %v744 = vsel %vm492, %v332, 0
      %v746 = vsel %vm492, %v333, 0
      %v748 = vsel %vm492, %v334, 0
      %v750 = vsel %vm492, %v335, 0
      %v752 = vsel %vm492, %v336, 0
      %v754 = vsel %vm492, %v337, 0
      %v756 = vsel %vm492, %v338, 0
      %v758 = vsel %vm492, %v339, 0
      %v760 = vsel %vm492, %v340, 0
      %v762 = vsel %vm492, %v341, 0
      %v765 = vsel %vm547, %v246, 0
      %767 = vmatprep.subr.bf16.mxu0 0
      %768 = vmatpush1.bf16.msra.mxu0 %v765
      %769 = vmatprep.subr.bf16.mxu0 0
      %770 = vmatpush1.bf16.msra.mxu0 0
      %771 = vmatprep.subr.bf16.mxu0 0
      %772 = vmatpush1.bf16.msra.mxu0 0
      %773 = vmatprep.subr.bf16.mxu0 0
      %774 = vmatpush1.bf16.msra.mxu0 0
      %775 = vmatprep.subr.bf16.mxu0 0
      %776 = vmatpush1.bf16.msra.mxu0 0
      %777 = vmatprep.subr.bf16.mxu0 0
      %778 = vmatpush1.bf16.msra.mxu0 0
      %779 = vmatprep.subr.bf16.mxu0 0
      %780 = vmatpush1.bf16.msra.mxu0 0
      %781 = vmatprep.subr.bf16.mxu0 0
      %782 = vmatpush1.bf16.msra.mxu0 0
      %783 = vmatprep.subr.bf16.mxu0 0
      %784 = vmatpush1.bf16.msra.mxu0 0
      %785 = vmatprep.subr.bf16.mxu0 0
      %786 = vmatpush1.bf16.msra.mxu0 0
      %787 = vmatprep.subr.bf16.mxu0 0
      %788 = vmatpush1.bf16.msra.mxu0 0
      %789 = vmatprep.subr.bf16.mxu0 0
      %790 = vmatpush1.bf16.msra.mxu0 0
      %791 = vmatprep.subr.bf16.mxu0 0
      %792 = vmatpush1.bf16.msra.mxu0 0
      %793 = vmatprep.subr.bf16.mxu0 0
      %794 = vmatpush1.bf16.msra.mxu0 0
      %795 = vmatprep.subr.bf16.mxu0 0
      %796 = vmatpush1.bf16.msra.mxu0 0
      %797 = vmatprep.subr.bf16.mxu0 0
      %798 = vmatpush1.bf16.msra.mxu0 0
      %799 = vmatprep.mubr.bf16.mxu0 0
      %800 = vmatmul.mubr.bf16.gmra.mrb[0].mxu0 %v728
      %v801 = vpop.f32.mrb[0].mxu0
      %v802 = vadd.f32 %v586, %v801
      %v803 = vpop.f32.mrb[0].mxu0
      %v804 = vpop.f32.mrb[0].mxu0
      %v805 = vadd.f32 %v589, %v804
      %v806 = vpop.f32.mrb[0].mxu0
      %807 = vmatprep.mubr.bf16.mxu0 0
      %808 = vmatmul.mubr.bf16.gmra.mrb[0].mxu0 %v730
      %v809 = vpop.f32.mrb[0].mxu0
      %v810 = vadd.f32 %v594, %v809
      %v811 = vpop.f32.mrb[0].mxu0
      %v812 = vpop.f32.mrb[0].mxu0
      %v813 = vadd.f32 %v597, %v812
      %v814 = vpop.f32.mrb[0].mxu0
      %815 = vmatprep.mubr.bf16.mxu0 0
      %816 = vmatmul.mubr.bf16.gmra.mrb[0].mxu0 %v732
      %v817 = vpop.f32.mrb[0].mxu0
      %v818 = vadd.f32 %v602, %v817
      %v819 = vpop.f32.mrb[0].mxu0
      %v820 = vpop.f32.mrb[0].mxu0
      %v821 = vadd.f32 %v605, %v820
      %v822 = vpop.f32.mrb[0].mxu0
      %823 = vmatprep.mubr.bf16.mxu0 0
      %824 = vmatmul.mubr.bf16.gmra.mrb[0].mxu0 %v734
      %v825 = vpop.f32.mrb[0].mxu0
      %v826 = vadd.f32 %v610, %v825
      %v827 = vpop.f32.mrb[0].mxu0
      %v828 = vpop.f32.mrb[0].mxu0
      %v829 = vadd.f32 %v613, %v828
      %v830 = vpop.f32.mrb[0].mxu0
      %831 = vmatprep.mubr.bf16.mxu0 0
      %832 = vmatmul.mubr.bf16.gmra.mrb[0].mxu0 %v736
      %v833 = vpop.f32.mrb[0].mxu0
      %v834 = vadd.f32 %v618, %v833
      %v835 = vpop.f32.mrb[0].mxu0
      %v836 = vpop.f32.mrb[0].mxu0
      %v837 = vadd.f32 %v621, %v836
      %v838 = vpop.f32.mrb[0].mxu0
      %839 = vmatprep.mubr.bf16.mxu0 0
      %840 = vmatmul.mubr.bf16.gmra.mrb[0].mxu0 %v738
      %v841 = vpop.f32.mrb[0].mxu0
      %v842 = vadd.f32 %v626, %v841
      %v843 = vpop.f32.mrb[0].mxu0
      %v844 = vpop.f32.mrb[0].mxu0
      %v845 = vadd.f32 %v629, %v844
      %v846 = vpop.f32.mrb[0].mxu0
      %847 = vmatprep.mubr.bf16.mxu0 0
      %848 = vmatmul.mubr.bf16.gmra.mrb[0].mxu0 %v740
      %v849 = vpop.f32.mrb[0].mxu0
      %v850 = vadd.f32 %v634, %v849
      %v851 = vpop.f32.mrb[0].mxu0
      %v852 = vpop.f32.mrb[0].mxu0
      %v853 = vadd.f32 %v637, %v852
      %v854 = vpop.f32.mrb[0].mxu0
      %855 = vmatprep.mubr.bf16.mxu0 0
      %856 = vmatmul.mubr.bf16.gmra.mrb[0].mxu0 %v742
      %v857 = vpop.f32.mrb[0].mxu0
      %v858 = vadd.f32 %v642, %v857
      %v859 = vpop.f32.mrb[0].mxu0
      %v860 = vpop.f32.mrb[0].mxu0
      %v861 = vadd.f32 %v645, %v860
      %v862 = vpop.f32.mrb[0].mxu0
      %863 = vmatprep.mubr.bf16.mxu0 0
      %864 = vmatmul.mubr.bf16.gmra.mrb[0].mxu0 %v744
      %v865 = vpop.f32.mrb[0].mxu0
      %v866 = vadd.f32 %v650, %v865
      %v867 = vpop.f32.mrb[0].mxu0
      %v868 = vpop.f32.mrb[0].mxu0
      %v869 = vadd.f32 %v653, %v868
      %v870 = vpop.f32.mrb[0].mxu0
      %871 = vmatprep.mubr.bf16.mxu0 0
      %872 = vmatmul.mubr.bf16.gmra.mrb[0].mxu0 %v746
      %v873 = vpop.f32.mrb[0].mxu0
      %v874 = vadd.f32 %v658, %v873
      %v875 = vpop.f32.mrb[0].mxu0
      %v876 = vpop.f32.mrb[0].mxu0
      %v877 = vadd.f32 %v661, %v876
      %v878 = vpop.f32.mrb[0].mxu0
      %879 = vmatprep.mubr.bf16.mxu0 0
      %880 = vmatmul.mubr.bf16.gmra.mrb[0].mxu0 %v748
      %v881 = vpop.f32.mrb[0].mxu0
      %v882 = vadd.f32 %v666, %v881
      %v883 = vpop.f32.mrb[0].mxu0
      %v884 = vpop.f32.mrb[0].mxu0
      %v885 = vadd.f32 %v669, %v884
      %v886 = vpop.f32.mrb[0].mxu0
      %887 = vmatprep.mubr.bf16.mxu0 0
      %888 = vmatmul.mubr.bf16.gmra.mrb[0].mxu0 %v750
      %v889 = vpop.f32.mrb[0].mxu0
      %v890 = vadd.f32 %v674, %v889
      %v891 = vpop.f32.mrb[0].mxu0
      %v892 = vpop.f32.mrb[0].mxu0
      %v893 = vadd.f32 %v677, %v892
      %v894 = vpop.f32.mrb[0].mxu0
      %895 = vmatprep.mubr.bf16.mxu0 0
      %896 = vmatmul.mubr.bf16.gmra.mrb[0].mxu0 %v752
      %v897 = vpop.f32.mrb[0].mxu0
      %v898 = vadd.f32 %v682, %v897
      %v899 = vpop.f32.mrb[0].mxu0
      %v900 = vpop.f32.mrb[0].mxu0
      %v901 = vadd.f32 %v685, %v900
      %v902 = vpop.f32.mrb[0].mxu0
      %903 = vmatprep.mubr.bf16.mxu0 0
      %904 = vmatmul.mubr.bf16.gmra.mrb[0].mxu0 %v754
      %v905 = vpop.f32.mrb[0].mxu0
      %v906 = vadd.f32 %v690, %v905
      %v907 = vpop.f32.mrb[0].mxu0
      %v908 = vpop.f32.mrb[0].mxu0
      %v909 = vadd.f32 %v693, %v908
      %v910 = vpop.f32.mrb[0].mxu0
      %911 = vmatprep.mubr.bf16.mxu0 0
      %912 = vmatmul.mubr.bf16.gmra.mrb[0].mxu0 %v756
      %v913 = vpop.f32.mrb[0].mxu0
      %v914 = vadd.f32 %v698, %v913
      %v915 = vpop.f32.mrb[0].mxu0
      %v916 = vpop.f32.mrb[0].mxu0
      %v917 = vadd.f32 %v701, %v916
      %v918 = vpop.f32.mrb[0].mxu0
      %919 = vmatprep.mubr.bf16.mxu0 0
      %920 = vmatmul.mubr.bf16.gmra.mrb[0].mxu0 %v758
      %v921 = vpop.f32.mrb[0].mxu0
      %v922 = vadd.f32 %v706, %v921
      %v923 = vpop.f32.mrb[0].mxu0
      %v924 = vpop.f32.mrb[0].mxu0
      %v925 = vadd.f32 %v709, %v924
      %v926 = vpop.f32.mrb[0].mxu0
      %927 = vmatprep.mubr.bf16.mxu0 0
      %928 = vmatmul.mubr.bf16.gmra.mrb[0].mxu0 %v760
      %v929 = vpop.f32.mrb[0].mxu0
      %v930 = vadd.f32 %v714, %v929
      %v931 = vpop.f32.mrb[0].mxu0
      %v932 = vpop.f32.mrb[0].mxu0
      %v933 = vadd.f32 %v717, %v932
      %v934 = vpop.f32.mrb[0].mxu0
      %935 = vmatprep.mubr.bf16.mxu0 0
      %936 = vmatmul.mubr.bf16.gmra.mrb[0].mxu0 %v762
      %v937 = vpop.f32.mrb[0].mxu0
      %v938 = vadd.f32 %v722, %v937
      %v939 = vpop.f32.mrb[0].mxu0
      %v940 = vpop.f32.mrb[0].mxu0
      %v941 = vadd.f32 %v725, %v940
      %v942 = vpop.f32.mrb[0].mxu0
      %943 = vdwg.mxu0
      %v944 = vld [vmem:[%s199] sm:$0xe]
      %s945 = scalar_lea.vmem %s1, 4
      %v946 = vld [vmem:[%s945] sm:$0x3]
      %v948 = vunpack.c.l.b16 %v944
      %v949 = vpack.c.b16 %v288, %v948
      %vm950 = vcmask 1046528
      %v951 = vrot.slane %v949, 1
      %v952 = vrot.slane %v325, 1
      %v953 = vsel %vm950, %v951, %v952
      %v954 = vrot.slane %v326, 1
      %v955 = vsel %vm950, %v952, %v954
      %v956 = vrot.slane %v327, 1
      %v957 = vsel %vm950, %v954, %v956
      %v958 = vrot.slane %v328, 1
      %v959 = vsel %vm950, %v956, %v958
      %v960 = vrot.slane %v329, 1
      %v961 = vsel %vm950, %v958, %v960
      %v962 = vrot.slane %v330, 1
      %v963 = vsel %vm950, %v960, %v962
      %v964 = vrot.slane %v331, 1
      %v965 = vsel %vm950, %v962, %v964
      %v966 = vrot.slane %v332, 1
      %v967 = vsel %vm950, %v964, %v966
      %v968 = vrot.slane %v333, 1
      %v969 = vsel %vm950, %v966, %v968
      %v970 = vrot.slane %v334, 1
      %v971 = vsel %vm950, %v968, %v970
      %v972 = vrot.slane %v335, 1
      %v973 = vsel %vm950, %v970, %v972
      %v974 = vrot.slane %v336, 1
      %v975 = vsel %vm950, %v972, %v974
      %v976 = vrot.slane %v337, 1
      %v977 = vsel %vm950, %v974, %v976
      %v978 = vrot.slane %v338, 1
      %v979 = vsel %vm950, %v976, %v978
      %v980 = vrot.slane %v339, 1
      %v981 = vsel %vm950, %v978, %v980
      %v982 = vrot.slane %v340, 1
      %v983 = vsel %vm950, %v980, %v982
      %v984 = vrot.slane %v341, 1
      %v985 = vsel %vm950, %v982, %v984
      %v986 = vrot.slane %v342, 1
      %v987 = vsel %vm950, %v984, %v986
      %v989 = vsel %vm492, %v953, 0
      %v992 = vsel %vm492, %v955, 0
      %v995 = vsel %vm492, %v957, 0
      %v998 = vsel %vm492, %v959, 0
      %v1001 = vsel %vm492, %v961, 0
      %v1004 = vsel %vm492, %v963, 0
      %v1007 = vsel %vm492, %v965, 0
      %v1010 = vsel %vm492, %v967, 0
      %v1013 = vsel %vm492, %v969, 0
      %v1016 = vsel %vm492, %v971, 0
      %v1019 = vsel %vm492, %v973, 0
      %v1022 = vsel %vm492, %v975, 0
      %v1025 = vsel %vm492, %v977, 0
      %v1028 = vsel %vm492, %v979, 0
      %v1031 = vsel %vm492, %v981, 0
      %v1034 = vsel %vm492, %v983, 0
      %v1037 = vsel %vm492, %v985, 0
      %v1040 = vsel %vm492, %v987, 0
      %v1043 = vsel %vm547, %v946, 0
      %1045 = vmatprep.subr.bf16.mxu0 0
      %1046 = vmatpush1.bf16.msra.mxu0 %v1043
      %1047 = vmatprep.subr.bf16.mxu0 0
      %1048 = vmatpush1.bf16.msra.mxu0 0
      %1049 = vmatprep.subr.bf16.mxu0 0
      %1050 = vmatpush1.bf16.msra.mxu0 0
      %1051 = vmatprep.subr.bf16.mxu0 0
      %1052 = vmatpush1.bf16.msra.mxu0 0
      %1053 = vmatprep.subr.bf16.mxu0 0
      %1054 = vmatpush1.bf16.msra.mxu0 0
      %1055 = vmatprep.subr.bf16.mxu0 0
      %1056 = vmatpush1.bf16.msra.mxu0 0
      %1057 = vmatprep.subr.bf16.mxu0 0
      %1058 = vmatpush1.bf16.msra.mxu0 0
      %1059 = vmatprep.subr.bf16.mxu0 0
      %1060 = vmatpush1.bf16.msra.mxu0 0
      %1061 = vmatprep.subr.bf16.mxu0 0
      %1062 = vmatpush1.bf16.msra.mxu0 0
      %1063 = vmatprep.subr.bf16.mxu0 0
      %1064 = vmatpush1.bf16.msra.mxu0 0
      %1065 = vmatprep.subr.bf16.mxu0 0
      %1066 = vmatpush1.bf16.msra.mxu0 0
      %1067 = vmatprep.subr.bf16.mxu0 0
      %1068 = vmatpush1.bf16.msra.mxu0 0
      %1069 = vmatprep.subr.bf16.mxu0 0
      %1070 = vmatpush1.bf16.msra.mxu0 0
      %1071 = vmatprep.subr.bf16.mxu0 0
      %1072 = vmatpush1.bf16.msra.mxu0 0
      %1073 = vmatprep.subr.bf16.mxu0 0
      %1074 = vmatpush1.bf16.msra.mxu0 0
      %1075 = vmatprep.subr.bf16.mxu0 0
      %1076 = vmatpush1.bf16.msra.mxu0 0
      %1077 = vmatprep.mubr.bf16.mxu0 0
      %1078 = vmatmul.mubr.bf16.gmra.mrb[0].mxu0 %v989
      %v1079 = vpop.f32.mrb[0].mxu0
      %v1080 = vadd.f32 0.0, %v1079
      %v1081 = vpop.f32.mrb[0].mxu0
      %v1082 = vpop.f32.mrb[0].mxu0
      %v1083 = vadd.f32 0.0, %v1082
      %v1084 = vpop.f32.mrb[0].mxu0
      %1085 = vmatprep.mubr.bf16.mxu0 0
      %1086 = vmatmul.mubr.bf16.gmra.mrb[0].mxu0 %v992
      %v1087 = vpop.f32.mrb[0].mxu0
      %v1088 = vadd.f32 0.0, %v1087
      %v1089 = vpop.f32.mrb[0].mxu0
      %v1090 = vpop.f32.mrb[0].mxu0
      %v1091 = vadd.f32 0.0, %v1090
      %v1092 = vpop.f32.mrb[0].mxu0
      %1093 = vmatprep.mubr.bf16.mxu0 0
      %1094 = vmatmul.mubr.bf16.gmra.mrb[0].mxu0 %v995
      %v1095 = vpop.f32.mrb[0].mxu0
      %v1096 = vadd.f32 0.0, %v1095
      %v1097 = vpop.f32.mrb[0].mxu0
      %v1098 = vpop.f32.mrb[0].mxu0
      %v1099 = vadd.f32 0.0, %v1098
      %v1100 = vpop.f32.mrb[0].mxu0
      %1101 = vmatprep.mubr.bf16.mxu0 0
      %1102 = vmatmul.mubr.bf16.gmra.mrb[0].mxu0 %v998
      %v1103 = vpop.f32.mrb[0].mxu0
      %v1104 = vadd.f32 0.0, %v1103
      %v1105 = vpop.f32.mrb[0].mxu0
      %v1106 = vpop.f32.mrb[0].mxu0
      %v1107 = vadd.f32 0.0, %v1106
      %v1108 = vpop.f32.mrb[0].mxu0
      %1109 = vmatprep.mubr.bf16.mxu0 0
      %1110 = vmatmul.mubr.bf16.gmra.mrb[0].mxu0 %v1001
      %v1111 = vpop.f32.mrb[0].mxu0
      %v1112 = vadd.f32 0.0, %v1111
      %v1113 = vpop.f32.mrb[0].mxu0
      %v1114 = vpop.f32.mrb[0].mxu0
      %v1115 = vadd.f32 0.0, %v1114
      %v1116 = vpop.f32.mrb[0].mxu0
      %1117 = vmatprep.mubr.bf16.mxu0 0
      %1118 = vmatmul.mubr.bf16.gmra.mrb[0].mxu0 %v1004
      %v1119 = vpop.f32.mrb[0].mxu0
      %v1120 = vadd.f32 0.0, %v1119
      %v1121 = vpop.f32.mrb[0].mxu0
      %v1122 = vpop.f32.mrb[0].mxu0
      %v1123 = vadd.f32 0.0, %v1122
      %v1124 = vpop.f32.mrb[0].mxu0
      %1125 = vmatprep.mubr.bf16.mxu0 0
      %1126 = vmatmul.mubr.bf16.gmra.mrb[0].mxu0 %v1007
      %v1127 = vpop.f32.mrb[0].mxu0
      %v1128 = vadd.f32 0.0, %v1127
      %v1129 = vpop.f32.mrb[0].mxu0
      %v1130 = vpop.f32.mrb[0].mxu0
      %v1131 = vadd.f32 0.0, %v1130
      %v1132 = vpop.f32.mrb[0].mxu0
      %1133 = vmatprep.mubr.bf16.mxu0 0
      %1134 = vmatmul.mubr.bf16.gmra.mrb[0].mxu0 %v1010
      %v1135 = vpop.f32.mrb[0].mxu0
      %v1136 = vadd.f32 0.0, %v1135
      %v1137 = vpop.f32.mrb[0].mxu0
      %v1138 = vpop.f32.mrb[0].mxu0
      %v1139 = vadd.f32 0.0, %v1138
      %v1140 = vpop.f32.mrb[0].mxu0
      %1141 = vmatprep.mubr.bf16.mxu0 0
      %1142 = vmatmul.mubr.bf16.gmra.mrb[0].mxu0 %v1013
      %v1143 = vpop.f32.mrb[0].mxu0
      %v1144 = vadd.f32 0.0, %v1143
      %v1145 = vpop.f32.mrb[0].mxu0
      %v1146 = vpop.f32.mrb[0].mxu0
      %v1147 = vadd.f32 0.0, %v1146
      %v1148 = vpop.f32.mrb[0].mxu0
      %1149 = vmatprep.mubr.bf16.mxu0 0
      %1150 = vmatmul.mubr.bf16.gmra.mrb[0].mxu0 %v1016
      %v1151 = vpop.f32.mrb[0].mxu0
      %v1152 = vadd.f32 0.0, %v1151
      %v1153 = vpop.f32.mrb[0].mxu0
      %v1154 = vpop.f32.mrb[0].mxu0
      %v1155 = vadd.f32 0.0, %v1154
      %v1156 = vpop.f32.mrb[0].mxu0
      %1157 = vmatprep.mubr.bf16.mxu0 0
      %1158 = vmatmul.mubr.bf16.gmra.mrb[0].mxu0 %v1019
      %v1159 = vpop.f32.mrb[0].mxu0
      %v1160 = vadd.f32 0.0, %v1159
      %v1161 = vpop.f32.mrb[0].mxu0
      %v1162 = vpop.f32.mrb[0].mxu0
      %v1163 = vadd.f32 0.0, %v1162
      %v1164 = vpop.f32.mrb[0].mxu0
      %1165 = vmatprep.mubr.bf16.mxu0 0
      %1166 = vmatmul.mubr.bf16.gmra.mrb[0].mxu0 %v1022
      %v1167 = vpop.f32.mrb[0].mxu0
      %v1168 = vadd.f32 0.0, %v1167
      %v1169 = vpop.f32.mrb[0].mxu0
      %v1170 = vpop.f32.mrb[0].mxu0
      %v1171 = vadd.f32 0.0, %v1170
      %v1172 = vpop.f32.mrb[0].mxu0
      %1173 = vmatprep.mubr.bf16.mxu0 0
      %1174 = vmatmul.mubr.bf16.gmra.mrb[0].mxu0 %v1025
      %v1175 = vpop.f32.mrb[0].mxu0
      %v1176 = vadd.f32 0.0, %v1175
      %v1177 = vpop.f32.mrb[0].mxu0
      %v1178 = vpop.f32.mrb[0].mxu0
      %v1179 = vadd.f32 0.0, %v1178
      %v1180 = vpop.f32.mrb[0].mxu0
      %1181 = vmatprep.mubr.bf16.mxu0 0
      %1182 = vmatmul.mubr.bf16.gmra.mrb[0].mxu0 %v1028
      %v1183 = vpop.f32.mrb[0].mxu0
      %v1184 = vadd.f32 0.0, %v1183
      %v1185 = vpop.f32.mrb[0].mxu0
      %v1186 = vpop.f32.mrb[0].mxu0
      %v1187 = vadd.f32 0.0, %v1186
      %v1188 = vpop.f32.mrb[0].mxu0
      %1189 = vmatprep.mubr.bf16.mxu0 0
      %1190 = vmatmul.mubr.bf16.gmra.mrb[0].mxu0 %v1031
      %v1191 = vpop.f32.mrb[0].mxu0
      %v1192 = vadd.f32 0.0, %v1191
      %v1193 = vpop.f32.mrb[0].mxu0
      %v1194 = vpop.f32.mrb[0].mxu0
      %v1195 = vadd.f32 0.0, %v1194
      %v1196 = vpop.f32.mrb[0].mxu0
      %1197 = vmatprep.mubr.bf16.mxu0 0
      %1198 = vmatmul.mubr.bf16.gmra.mrb[0].mxu0 %v1034
      %v1199 = vpop.f32.mrb[0].mxu0
      %v1200 = vadd.f32 0.0, %v1199
      %v1201 = vpop.f32.mrb[0].mxu0
      %v1202 = vpop.f32.mrb[0].mxu0
      %v1203 = vadd.f32 0.0, %v1202
      %v1204 = vpop.f32.mrb[0].mxu0
      %1205 = vmatprep.mubr.bf16.mxu0 0
      %1206 = vmatmul.mubr.bf16.gmra.mrb[0].mxu0 %v1037
      %v1207 = vpop.f32.mrb[0].mxu0
      %v1208 = vadd.f32 0.0, %v1207
      %v1209 = vpop.f32.mrb[0].mxu0
      %v1210 = vpop.f32.mrb[0].mxu0
      %v1211 = vadd.f32 0.0, %v1210
      %v1212 = vpop.f32.mrb[0].mxu0
      %1213 = vmatprep.mubr.bf16.mxu0 0
      %1214 = vmatmul.mubr.bf16.gmra.mrb[0].mxu0 %v1040
      %v1215 = vpop.f32.mrb[0].mxu0
      %v1216 = vadd.f32 0.0, %v1215
      %v1217 = vpop.f32.mrb[0].mxu0
      %v1218 = vpop.f32.mrb[0].mxu0
      %v1219 = vadd.f32 0.0, %v1218
      %v1220 = vpop.f32.mrb[0].mxu0
      %1221 = vdwg.mxu0
      %v1222 = vadd.f32 %v802, %v1080
      %v1223 = vadd.f32 %v805, %v1083
      %v1224 = vadd.f32 %v810, %v1088
      %v1225 = vadd.f32 %v813, %v1091
      %v1226 = vadd.f32 %v818, %v1096
      %v1227 = vadd.f32 %v821, %v1099
      %v1228 = vadd.f32 %v826, %v1104
      %v1229 = vadd.f32 %v829, %v1107
      %v1230 = vadd.f32 %v834, %v1112
      %v1231 = vadd.f32 %v837, %v1115
      %v1232 = vadd.f32 %v842, %v1120
      %v1233 = vadd.f32 %v845, %v1123
      %v1234 = vadd.f32 %v850, %v1128
      %v1235 = vadd.f32 %v853, %v1131
      %v1236 = vadd.f32 %v858, %v1136
      %v1237 = vadd.f32 %v861, %v1139
      %v1238 = vadd.f32 %v866, %v1144
      %v1239 = vadd.f32 %v869, %v1147
      %v1240 = vadd.f32 %v874, %v1152
      %v1241 = vadd.f32 %v877, %v1155
      %v1242 = vadd.f32 %v882, %v1160
      %v1243 = vadd.f32 %v885, %v1163
      %v1244 = vadd.f32 %v890, %v1168
      %v1245 = vadd.f32 %v893, %v1171
      %v1246 = vadd.f32 %v898, %v1176
      %v1247 = vadd.f32 %v901, %v1179
      %v1248 = vadd.f32 %v906, %v1184
      %v1249 = vadd.f32 %v909, %v1187
      %v1250 = vadd.f32 %v914, %v1192
      %v1251 = vadd.f32 %v917, %v1195
      %v1252 = vadd.f32 %v922, %v1200
      %v1253 = vadd.f32 %v925, %v1203
      %v1254 = vadd.f32 %v930, %v1208
      %v1255 = vadd.f32 %v933, %v1211
      %v1256 = vadd.f32 %v938, %v1216
      %v1257 = vadd.f32 %v941, %v1219
      %v1258 = vld [vmem:[%s199 + $0x8] sm:$0xe]
      %v1259 = vld [vmem:[%s199 + $0xc] sm:$0xf]
      %v1260 = vld [vmem:[%s199 + $0x10] sm:$0xf]
      %v1261 = vld [vmem:[%s199 + $0x14] sm:$0xf]
      %v1262 = vld [vmem:[%s199 + $0x18] sm:$0xf]
      %v1263 = vld [vmem:[%s199 + $0x1c] sm:$0xf]
      %v1264 = vld [vmem:[%s199 + $0x20] sm:$0xf]
      %v1265 = vld [vmem:[%s199 + $0x24] sm:$0xf]
      %v1266 = vld [vmem:[%s199 + $0x28] sm:$0xf]
      %v1267 = vld [vmem:[%s199 + $0x2c] sm:$0xf]
      %v1268 = vld [vmem:[%s199 + $0x30] sm:$0xf]
      %v1269 = vld [vmem:[%s199 + $0x34] sm:$0xf]
      %v1270 = vld [vmem:[%s199 + $0x38] sm:$0xf]
      %v1271 = vld [vmem:[%s199 + $0x3c] sm:$0xf]
      %v1272 = vld [vmem:[%s199 + $0x40] sm:$0xf]
      %v1273 = vld [vmem:[%s199 + $0x44] sm:$0xf]
      %v1274 = vld [vmem:[%s199 + $0x48] sm:$0xf]
      %v1275 = vld [vmem:[%s199 + $0x4c] sm:$0xf]
      %v1276 = vld [vmem:[%s199 + $0x50] sm:$0xf]
      %v1277 = vld [vmem:[%s199 + $0x54] sm:$0xf]
      %v1278 = vld [vmem:[%s199 + $0x58] sm:$0xf]
      %v1279 = vld [vmem:[%s199 + $0x5c] sm:$0xf]
      %v1280 = vld [vmem:[%s199 + $0x60] sm:$0xf]
      %v1281 = vld [vmem:[%s199 + $0x64] sm:$0xf]
      %v1282 = vld [vmem:[%s199 + $0x68] sm:$0xf]
      %v1283 = vld [vmem:[%s199 + $0x6c] sm:$0xf]
      %v1284 = vld [vmem:[%s199 + $0x70] sm:$0xf]
      %v1285 = vld [vmem:[%s199 + $0x74] sm:$0xf]
      %v1286 = vld [vmem:[%s199 + $0x78] sm:$0xf]
      %v1287 = vld [vmem:[%s199 + $0x7c] sm:$0xf]
      %v1288 = vld [vmem:[%s199 + $0x80] sm:$0xf]
      %v1289 = vld [vmem:[%s199 + $0x84] sm:$0xf]
      %v1290 = vld [vmem:[%s199 + $0x88] sm:$0xf]
      %v1291 = vld [vmem:[%s199 + $0x8c] sm:$0xf]
      %v1292 = vld [vmem:[%s199 + $0x90] sm:$0xf]
      %v1293 = vld [vmem:[%s199 + $0x94] sm:$0xf]
      %v1294 = vld [vmem:[%s199 + $0x98] sm:$0x1]
      %s1295 = scalar_lea.vmem %s1, 6
      %v1296 = vld [vmem:[%s1295] sm:$0x3]
      %v1334 = vunpack.c.l.b16 %v1258
      %v1335 = vunpack.c.l.b16 %v1259
      %v1336 = vunpack.c.l.b16 %v1260
      %v1337 = vunpack.c.l.b16 %v1261
      %v1338 = vunpack.c.l.b16 %v1262
      %v1339 = vunpack.c.l.b16 %v1263
      %v1340 = vunpack.c.l.b16 %v1264
      %v1341 = vunpack.c.l.b16 %v1265
      %v1342 = vunpack.c.l.b16 %v1266
      %v1343 = vunpack.c.l.b16 %v1267
      %v1344 = vunpack.c.l.b16 %v1268
      %v1345 = vunpack.c.l.b16 %v1269
      %v1346 = vunpack.c.l.b16 %v1270
      %v1347 = vunpack.c.l.b16 %v1271
      %v1348 = vunpack.c.l.b16 %v1272
      %v1349 = vunpack.c.l.b16 %v1273
      %v1350 = vunpack.c.l.b16 %v1274
      %v1351 = vunpack.c.l.b16 %v1275
      %v1352 = vunpack.c.l.b16 %v1276
      %v1353 = vunpack.c.l.b16 %v1277
      %v1354 = vunpack.c.l.b16 %v1278
      %v1355 = vunpack.c.l.b16 %v1279
      %v1356 = vunpack.c.l.b16 %v1280
      %v1357 = vunpack.c.l.b16 %v1281
      %v1358 = vunpack.c.l.b16 %v1282
      %v1359 = vunpack.c.l.b16 %v1283
      %v1360 = vunpack.c.l.b16 %v1284
      %v1361 = vunpack.c.l.b16 %v1285
      %v1362 = vunpack.c.l.b16 %v1286
      %v1363 = vunpack.c.l.b16 %v1287
      %v1364 = vunpack.c.l.b16 %v1288
      %v1365 = vunpack.c.l.b16 %v1289
      %v1366 = vunpack.c.l.b16 %v1290
      %v1367 = vunpack.c.l.b16 %v1291
      %v1368 = vunpack.c.l.b16 %v1292
      %v1369 = vunpack.c.l.b16 %v1293
      %v1370 = vunpack.c.l.b16 %v1294
      %v1371 = vpack.c.b16 %v1335, %v1334
      %v1372 = vpack.c.b16 %v1337, %v1336
      %v1373 = vpack.c.b16 %v1339, %v1338
      %v1374 = vpack.c.b16 %v1341, %v1340
      %v1375 = vpack.c.b16 %v1343, %v1342
      %v1376 = vpack.c.b16 %v1345, %v1344
      %v1377 = vpack.c.b16 %v1347, %v1346
      %v1378 = vpack.c.b16 %v1349, %v1348
      %v1379 = vpack.c.b16 %v1351, %v1350
      %v1380 = vpack.c.b16 %v1353, %v1352
      %v1381 = vpack.c.b16 %v1355, %v1354
      %v1382 = vpack.c.b16 %v1357, %v1356
      %v1383 = vpack.c.b16 %v1359, %v1358
      %v1384 = vpack.c.b16 %v1361, %v1360
      %v1385 = vpack.c.b16 %v1363, %v1362
      %v1386 = vpack.c.b16 %v1365, %v1364
      %v1387 = vpack.c.b16 %v1367, %v1366
      %v1388 = vpack.c.b16 %v1369, %v1368
      %v1389 = vpack.c.b16 %v1370, %v1370
      %v1390 = vrot.slane %v1371, 1
      %v1391 = vrot.slane %v1372, 1
      %v1392 = vsel %vm950, %v1390, %v1391
      %v1393 = vrot.slane %v1373, 1
      %v1394 = vsel %vm950, %v1391, %v1393
      %v1395 = vrot.slane %v1374, 1
      %v1396 = vsel %vm950, %v1393, %v1395
      %v1397 = vrot.slane %v1375, 1
      %v1398 = vsel %vm950, %v1395, %v1397
      %v1399 = vrot.slane %v1376, 1
      %v1400 = vsel %vm950, %v1397, %v1399
      %v1401 = vrot.slane %v1377, 1
      %v1402 = vsel %vm950, %v1399, %v1401
      %v1403 = vrot.slane %v1378, 1
      %v1404 = vsel %vm950, %v1401, %v1403
      %v1405 = vrot.slane %v1379, 1
      %v1406 = vsel %vm950, %v1403, %v1405
      %v1407 = vrot.slane %v1380, 1
      %v1408 = vsel %vm950, %v1405, %v1407
      %v1409 = vrot.slane %v1381, 1
      %v1410 = vsel %vm950, %v1407, %v1409
      %v1411 = vrot.slane %v1382, 1
      %v1412 = vsel %vm950, %v1409, %v1411
      %v1413 = vrot.slane %v1383, 1
      %v1414 = vsel %vm950, %v1411, %v1413
      %v1415 = vrot.slane %v1384, 1
      %v1416 = vsel %vm950, %v1413, %v1415
      %v1417 = vrot.slane %v1385, 1
      %v1418 = vsel %vm950, %v1415, %v1417
      %v1419 = vrot.slane %v1386, 1
      %v1420 = vsel %vm950, %v1417, %v1419
      %v1421 = vrot.slane %v1387, 1
      %v1422 = vsel %vm950, %v1419, %v1421
      %v1423 = vrot.slane %v1388, 1
      %v1424 = vsel %vm950, %v1421, %v1423
      %v1425 = vrot.slane %v1389, 1
      %v1426 = vsel %vm950, %v1423, %v1425
      %v1428 = vsel %vm492, %v1392, 0
      %v1431 = vsel %vm492, %v1394, 0
      %v1434 = vsel %vm492, %v1396, 0
      %v1437 = vsel %vm492, %v1398, 0
      %v1440 = vsel %vm492, %v1400, 0
      %v1443 = vsel %vm492, %v1402, 0
      %v1446 = vsel %vm492, %v1404, 0
      %v1449 = vsel %vm492, %v1406, 0
      %v1452 = vsel %vm492, %v1408, 0
      %v1455 = vsel %vm492, %v1410, 0
      %v1458 = vsel %vm492, %v1412, 0
      %v1461 = vsel %vm492, %v1414, 0
      %v1464 = vsel %vm492, %v1416, 0
      %v1467 = vsel %vm492, %v1418, 0
      %v1470 = vsel %vm492, %v1420, 0
      %v1473 = vsel %vm492, %v1422, 0
      %v1476 = vsel %vm492, %v1424, 0
      %v1479 = vsel %vm492, %v1426, 0
      %v1482 = vsel %vm547, %v1296, 0
      %1484 = vmatprep.subr.bf16.mxu0 0
      %1485 = vmatpush1.bf16.msra.mxu0 %v1482
      %1486 = vmatprep.subr.bf16.mxu0 0
      %1487 = vmatpush1.bf16.msra.mxu0 0
      %1488 = vmatprep.subr.bf16.mxu0 0
      %1489 = vmatpush1.bf16.msra.mxu0 0
      %1490 = vmatprep.subr.bf16.mxu0 0
      %1491 = vmatpush1.bf16.msra.mxu0 0
      %1492 = vmatprep.subr.bf16.mxu0 0
      %1493 = vmatpush1.bf16.msra.mxu0 0
      %1494 = vmatprep.subr.bf16.mxu0 0
      %1495 = vmatpush1.bf16.msra.mxu0 0
      %1496 = vmatprep.subr.bf16.mxu0 0
      %1497 = vmatpush1.bf16.msra.mxu0 0
      %1498 = vmatprep.subr.bf16.mxu0 0
      %1499 = vmatpush1.bf16.msra.mxu0 0
      %1500 = vmatprep.subr.bf16.mxu0 0
      %1501 = vmatpush1.bf16.msra.mxu0 0
      %1502 = vmatprep.subr.bf16.mxu0 0
      %1503 = vmatpush1.bf16.msra.mxu0 0
      %1504 = vmatprep.subr.bf16.mxu0 0
      %1505 = vmatpush1.bf16.msra.mxu0 0
      %1506 = vmatprep.subr.bf16.mxu0 0
      %1507 = vmatpush1.bf16.msra.mxu0 0
      %1508 = vmatprep.subr.bf16.mxu0 0
      %1509 = vmatpush1.bf16.msra.mxu0 0
      %1510 = vmatprep.subr.bf16.mxu0 0
      %1511 = vmatpush1.bf16.msra.mxu0 0
      %1512 = vmatprep.subr.bf16.mxu0 0
      %1513 = vmatpush1.bf16.msra.mxu0 0
      %1514 = vmatprep.subr.bf16.mxu0 0
      %1515 = vmatpush1.bf16.msra.mxu0 0
      %1516 = vmatprep.mubr.bf16.mxu0 0
      %1517 = vmatmul.mubr.bf16.gmra.mrb[0].mxu0 %v1428
      %v1518 = vpop.f32.mrb[0].mxu0
      %v1519 = vadd.f32 0.0, %v1518
      %v1520 = vpop.f32.mrb[0].mxu0
      %v1521 = vpop.f32.mrb[0].mxu0
      %v1522 = vadd.f32 0.0, %v1521
      %v1523 = vpop.f32.mrb[0].mxu0
      %1524 = vmatprep.mubr.bf16.mxu0 0
      %1525 = vmatmul.mubr.bf16.gmra.mrb[0].mxu0 %v1431
      %v1526 = vpop.f32.mrb[0].mxu0
      %v1527 = vadd.f32 0.0, %v1526
      %v1528 = vpop.f32.mrb[0].mxu0
      %v1529 = vpop.f32.mrb[0].mxu0
      %v1530 = vadd.f32 0.0, %v1529
      %v1531 = vpop.f32.mrb[0].mxu0
      %1532 = vmatprep.mubr.bf16.mxu0 0
      %1533 = vmatmul.mubr.bf16.gmra.mrb[0].mxu0 %v1434
      %v1534 = vpop.f32.mrb[0].mxu0
      %v1535 = vadd.f32 0.0, %v1534
      %v1536 = vpop.f32.mrb[0].mxu0
      %v1537 = vpop.f32.mrb[0].mxu0
      %v1538 = vadd.f32 0.0, %v1537
      %v1539 = vpop.f32.mrb[0].mxu0
      %1540 = vmatprep.mubr.bf16.mxu0 0
      %1541 = vmatmul.mubr.bf16.gmra.mrb[0].mxu0 %v1437
      %v1542 = vpop.f32.mrb[0].mxu0
      %v1543 = vadd.f32 0.0, %v1542
      %v1544 = vpop.f32.mrb[0].mxu0
      %v1545 = vpop.f32.mrb[0].mxu0
      %v1546 = vadd.f32 0.0, %v1545
      %v1547 = vpop.f32.mrb[0].mxu0
      %1548 = vmatprep.mubr.bf16.mxu0 0
      %1549 = vmatmul.mubr.bf16.gmra.mrb[0].mxu0 %v1440
      %v1550 = vpop.f32.mrb[0].mxu0
      %v1551 = vadd.f32 0.0, %v1550
      %v1552 = vpop.f32.mrb[0].mxu0
      %v1553 = vpop.f32.mrb[0].mxu0
      %v1554 = vadd.f32 0.0, %v1553
      %v1555 = vpop.f32.mrb[0].mxu0
      %1556 = vmatprep.mubr.bf16.mxu0 0
      %1557 = vmatmul.mubr.bf16.gmra.mrb[0].mxu0 %v1443
      %v1558 = vpop.f32.mrb[0].mxu0
      %v1559 = vadd.f32 0.0, %v1558
      %v1560 = vpop.f32.mrb[0].mxu0
      %v1561 = vpop.f32.mrb[0].mxu0
      %v1562 = vadd.f32 0.0, %v1561
      %v1563 = vpop.f32.mrb[0].mxu0
      %1564 = vmatprep.mubr.bf16.mxu0 0
      %1565 = vmatmul.mubr.bf16.gmra.mrb[0].mxu0 %v1446
      %v1566 = vpop.f32.mrb[0].mxu0
      %v1567 = vadd.f32 0.0, %v1566
      %v1568 = vpop.f32.mrb[0].mxu0
      %v1569 = vpop.f32.mrb[0].mxu0
      %v1570 = vadd.f32 0.0, %v1569
      %v1571 = vpop.f32.mrb[0].mxu0
      %1572 = vmatprep.mubr.bf16.mxu0 0
      %1573 = vmatmul.mubr.bf16.gmra.mrb[0].mxu0 %v1449
      %v1574 = vpop.f32.mrb[0].mxu0
      %v1575 = vadd.f32 0.0, %v1574
      %v1576 = vpop.f32.mrb[0].mxu0
      %v1577 = vpop.f32.mrb[0].mxu0
      %v1578 = vadd.f32 0.0, %v1577
      %v1579 = vpop.f32.mrb[0].mxu0
      %1580 = vmatprep.mubr.bf16.mxu0 0
      %1581 = vmatmul.mubr.bf16.gmra.mrb[0].mxu0 %v1452
      %v1582 = vpop.f32.mrb[0].mxu0
      %v1583 = vadd.f32 0.0, %v1582
      %v1584 = vpop.f32.mrb[0].mxu0
      %v1585 = vpop.f32.mrb[0].mxu0
      %v1586 = vadd.f32 0.0, %v1585
      %v1587 = vpop.f32.mrb[0].mxu0
      %1588 = vmatprep.mubr.bf16.mxu0 0
      %1589 = vmatmul.mubr.bf16.gmra.mrb[0].mxu0 %v1455
      %v1590 = vpop.f32.mrb[0].mxu0
      %v1591 = vadd.f32 0.0, %v1590
      %v1592 = vpop.f32.mrb[0].mxu0
      %v1593 = vpop.f32.mrb[0].mxu0
      %v1594 = vadd.f32 0.0, %v1593
      %v1595 = vpop.f32.mrb[0].mxu0
      %1596 = vmatprep.mubr.bf16.mxu0 0
      %1597 = vmatmul.mubr.bf16.gmra.mrb[0].mxu0 %v1458
      %v1598 = vpop.f32.mrb[0].mxu0
      %v1599 = vadd.f32 0.0, %v1598
      %v1600 = vpop.f32.mrb[0].mxu0
      %v1601 = vpop.f32.mrb[0].mxu0
      %v1602 = vadd.f32 0.0, %v1601
      %v1603 = vpop.f32.mrb[0].mxu0
      %1604 = vmatprep.mubr.bf16.mxu0 0
      %1605 = vmatmul.mubr.bf16.gmra.mrb[0].mxu0 %v1461
      %v1606 = vpop.f32.mrb[0].mxu0
      %v1607 = vadd.f32 0.0, %v1606
      %v1608 = vpop.f32.mrb[0].mxu0
      %v1609 = vpop.f32.mrb[0].mxu0
      %v1610 = vadd.f32 0.0, %v1609
      %v1611 = vpop.f32.mrb[0].mxu0
      %1612 = vmatprep.mubr.bf16.mxu0 0
      %1613 = vmatmul.mubr.bf16.gmra.mrb[0].mxu0 %v1464
      %v1614 = vpop.f32.mrb[0].mxu0
      %v1615 = vadd.f32 0.0, %v1614
      %v1616 = vpop.f32.mrb[0].mxu0
      %v1617 = vpop.f32.mrb[0].mxu0
      %v1618 = vadd.f32 0.0, %v1617
      %v1619 = vpop.f32.mrb[0].mxu0
      %1620 = vmatprep.mubr.bf16.mxu0 0
      %1621 = vmatmul.mubr.bf16.gmra.mrb[0].mxu0 %v1467
      %v1622 = vpop.f32.mrb[0].mxu0
      %v1623 = vadd.f32 0.0, %v1622
      %v1624 = vpop.f32.mrb[0].mxu0
      %v1625 = vpop.f32.mrb[0].mxu0
      %v1626 = vadd.f32 0.0, %v1625
      %v1627 = vpop.f32.mrb[0].mxu0
      %1628 = vmatprep.mubr.bf16.mxu0 0
      %1629 = vmatmul.mubr.bf16.gmra.mrb[0].mxu0 %v1470
      %v1630 = vpop.f32.mrb[0].mxu0
      %v1631 = vadd.f32 0.0, %v1630
      %v1632 = vpop.f32.mrb[0].mxu0
      %v1633 = vpop.f32.mrb[0].mxu0
      %v1634 = vadd.f32 0.0, %v1633
      %v1635 = vpop.f32.mrb[0].mxu0
      %1636 = vmatprep.mubr.bf16.mxu0 0
      %1637 = vmatmul.mubr.bf16.gmra.mrb[0].mxu0 %v1473
      %v1638 = vpop.f32.mrb[0].mxu0
      %v1639 = vadd.f32 0.0, %v1638
      %v1640 = vpop.f32.mrb[0].mxu0
      %v1641 = vpop.f32.mrb[0].mxu0
      %v1642 = vadd.f32 0.0, %v1641
      %v1643 = vpop.f32.mrb[0].mxu0
      %1644 = vmatprep.mubr.bf16.mxu0 0
      %1645 = vmatmul.mubr.bf16.gmra.mrb[0].mxu0 %v1476
      %v1646 = vpop.f32.mrb[0].mxu0
      %v1647 = vadd.f32 0.0, %v1646
      %v1648 = vpop.f32.mrb[0].mxu0
      %v1649 = vpop.f32.mrb[0].mxu0
      %v1650 = vadd.f32 0.0, %v1649
      %v1651 = vpop.f32.mrb[0].mxu0
      %1652 = vmatprep.mubr.bf16.mxu0 0
      %1653 = vmatmul.mubr.bf16.gmra.mrb[0].mxu0 %v1479
      %v1654 = vpop.f32.mrb[0].mxu0
      %v1655 = vadd.f32 0.0, %v1654
      %v1656 = vpop.f32.mrb[0].mxu0
      %v1657 = vpop.f32.mrb[0].mxu0
      %v1658 = vadd.f32 0.0, %v1657
      %v1659 = vpop.f32.mrb[0].mxu0
      %1660 = vdwg.mxu0
      %v1661 = vadd.f32 %v1222, %v1519
      %v1662 = vadd.f32 %v1223, %v1522
      %v1663 = vadd.f32 %v1224, %v1527
      %v1664 = vadd.f32 %v1225, %v1530
      %v1665 = vadd.f32 %v1226, %v1535
      %v1666 = vadd.f32 %v1227, %v1538
      %v1667 = vadd.f32 %v1228, %v1543
      %v1668 = vadd.f32 %v1229, %v1546
      %v1669 = vadd.f32 %v1230, %v1551
      %v1670 = vadd.f32 %v1231, %v1554
      %v1671 = vadd.f32 %v1232, %v1559
      %v1672 = vadd.f32 %v1233, %v1562
      %v1673 = vadd.f32 %v1234, %v1567
      %v1674 = vadd.f32 %v1235, %v1570
      %v1675 = vadd.f32 %v1236, %v1575
      %v1676 = vadd.f32 %v1237, %v1578
      %v1677 = vadd.f32 %v1238, %v1583
      %v1678 = vadd.f32 %v1239, %v1586
      %v1679 = vadd.f32 %v1240, %v1591
      %v1680 = vadd.f32 %v1241, %v1594
      %v1681 = vadd.f32 %v1242, %v1599
      %v1682 = vadd.f32 %v1243, %v1602
      %v1683 = vadd.f32 %v1244, %v1607
      %v1684 = vadd.f32 %v1245, %v1610
      %v1685 = vadd.f32 %v1246, %v1615
      %v1686 = vadd.f32 %v1247, %v1618
      %v1687 = vadd.f32 %v1248, %v1623
      %v1688 = vadd.f32 %v1249, %v1626
      %v1689 = vadd.f32 %v1250, %v1631
      %v1690 = vadd.f32 %v1251, %v1634
      %v1691 = vadd.f32 %v1252, %v1639
      %v1692 = vadd.f32 %v1253, %v1642
      %v1693 = vadd.f32 %v1254, %v1647
      %v1694 = vadd.f32 %v1255, %v1650
      %v1695 = vadd.f32 %v1256, %v1655
      %v1696 = vadd.f32 %v1257, %v1658
      %v1697 = vld [vmem:[%s199 + $0x98] sm:$0x3]
      %s1698 = scalar_lea.vmem %s1, 8
      %v1699 = vld [vmem:[%s1698] sm:$0x3]
      %v1701 = vunpack.c.l.b16 %v1697
      %v1702 = vpack.c.b16 %v1701, %v1701
      %vm1703 = vsmask.f32 6400
      %v1705 = vshrl.u32 %v1371, 16
      %v1707 = vrot.slane %v1705, 1
      %v1708 = vshll.u32 %v1371, 16
      %v1710 = vrot.slane %v1708, 2
      %v1711 = vor.u32 %v1707, %v1710
      %v1713 = vshrl.u32 %v1372, 16
      %v1715 = vrot.slane %v1713, 1
      %v1716 = vshll.u32 %v1372, 16
      %v1718 = vrot.slane %v1716, 2
      %v1719 = vor.u32 %v1715, %v1718
      %v1720 = vsel %vm1703, %v1711, %v1719
      %v1722 = vshrl.u32 %v1373, 16
      %v1724 = vrot.slane %v1722, 1
      %v1725 = vshll.u32 %v1373, 16
      %v1727 = vrot.slane %v1725, 2
      %v1728 = vor.u32 %v1724, %v1727
      %v1729 = vsel %vm1703, %v1719, %v1728
      %v1731 = vshrl.u32 %v1374, 16
      %v1733 = vrot.slane %v1731, 1
      %v1734 = vshll.u32 %v1374, 16
      %v1736 = vrot.slane %v1734, 2
      %v1737 = vor.u32 %v1733, %v1736
      %v1738 = vsel %vm1703, %v1728, %v1737
      %v1740 = vshrl.u32 %v1375, 16
      %v1742 = vrot.slane %v1740, 1
      %v1743 = vshll.u32 %v1375, 16
      %v1745 = vrot.slane %v1743, 2
      %v1746 = vor.u32 %v1742, %v1745
      %v1747 = vsel %vm1703, %v1737, %v1746
      %v1749 = vshrl.u32 %v1376, 16
      %v1751 = vrot.slane %v1749, 1
      %v1752 = vshll.u32 %v1376, 16
      %v1754 = vrot.slane %v1752, 2
      %v1755 = vor.u32 %v1751, %v1754
      %v1756 = vsel %vm1703, %v1746, %v1755
      %v1758 = vshrl.u32 %v1377, 16
      %v1760 = vrot.slane %v1758, 1
      %v1761 = vshll.u32 %v1377, 16
      %v1763 = vrot.slane %v1761, 2
      %v1764 = vor.u32 %v1760, %v1763
      %v1765 = vsel %vm1703, %v1755, %v1764
      %v1767 = vshrl.u32 %v1378, 16
      %v1769 = vrot.slane %v1767, 1
      %v1770 = vshll.u32 %v1378, 16
      %v1772 = vrot.slane %v1770, 2
      %v1773 = vor.u32 %v1769, %v1772
      %v1774 = vsel %vm1703, %v1764, %v1773
      %v1776 = vshrl.u32 %v1379, 16
      %v1778 = vrot.slane %v1776, 1
      %v1779 = vshll.u32 %v1379, 16
      %v1781 = vrot.slane %v1779, 2
      %v1782 = vor.u32 %v1778, %v1781
      %v1783 = vsel %vm1703, %v1773, %v1782
      %v1785 = vshrl.u32 %v1380, 16
      %v1787 = vrot.slane %v1785, 1
      %v1788 = vshll.u32 %v1380, 16
      %v1790 = vrot.slane %v1788, 2
      %v1791 = vor.u32 %v1787, %v1790
      %v1792 = vsel %vm1703, %v1782, %v1791
      %v1794 = vshrl.u32 %v1381, 16
      %v1796 = vrot.slane %v1794, 1
      %v1797 = vshll.u32 %v1381, 16
      %v1799 = vrot.slane %v1797, 2
      %v1800 = vor.u32 %v1796, %v1799
      %v1801 = vsel %vm1703, %v1791, %v1800
      %v1803 = vshrl.u32 %v1382, 16
      %v1805 = vrot.slane %v1803, 1
      %v1806 = vshll.u32 %v1382, 16
      %v1808 = vrot.slane %v1806, 2
      %v1809 = vor.u32 %v1805, %v1808
      %v1810 = vsel %vm1703, %v1800, %v1809
      %v1812 = vshrl.u32 %v1383, 16
      %v1814 = vrot.slane %v1812, 1
      %v1815 = vshll.u32 %v1383, 16
      %v1817 = vrot.slane %v1815, 2
      %v1818 = vor.u32 %v1814, %v1817
      %v1819 = vsel %vm1703, %v1809, %v1818
      %v1821 = vshrl.u32 %v1384, 16
      %v1823 = vrot.slane %v1821, 1
      %v1824 = vshll.u32 %v1384, 16
      %v1826 = vrot.slane %v1824, 2
      %v1827 = vor.u32 %v1823, %v1826
      %v1828 = vsel %vm1703, %v1818, %v1827
      %v1830 = vshrl.u32 %v1385, 16
      %v1832 = vrot.slane %v1830, 1
      %v1833 = vshll.u32 %v1385, 16
      %v1835 = vrot.slane %v1833, 2
      %v1836 = vor.u32 %v1832, %v1835
      %v1837 = vsel %vm1703, %v1827, %v1836
      %v1839 = vshrl.u32 %v1386, 16
      %v1841 = vrot.slane %v1839, 1
      %v1842 = vshll.u32 %v1386, 16
      %v1844 = vrot.slane %v1842, 2
      %v1845 = vor.u32 %v1841, %v1844
      %v1846 = vsel %vm1703, %v1836, %v1845
      %v1848 = vshrl.u32 %v1387, 16
      %v1850 = vrot.slane %v1848, 1
      %v1851 = vshll.u32 %v1387, 16
      %v1853 = vrot.slane %v1851, 2
      %v1854 = vor.u32 %v1850, %v1853
      %v1855 = vsel %vm1703, %v1845, %v1854
      %v1857 = vshrl.u32 %v1388, 16
      %v1859 = vrot.slane %v1857, 1
      %v1860 = vshll.u32 %v1388, 16
      %v1862 = vrot.slane %v1860, 2
      %v1863 = vor.u32 %v1859, %v1862
      %v1864 = vsel %vm1703, %v1854, %v1863
      %v1866 = vshrl.u32 %v1702, 16
      %v1868 = vrot.slane %v1866, 1
      %v1869 = vshll.u32 %v1702, 16
      %v1871 = vrot.slane %v1869, 2
      %v1872 = vor.u32 %v1868, %v1871
      %v1873 = vsel %vm1703, %v1863, %v1872
      %v1875 = vsel %vm492, %v1720, 0
      %v1878 = vsel %vm492, %v1729, 0
      %v1881 = vsel %vm492, %v1738, 0
      %v1884 = vsel %vm492, %v1747, 0
      %v1887 = vsel %vm492, %v1756, 0
      %v1890 = vsel %vm492, %v1765, 0
      %v1893 = vsel %vm492, %v1774, 0
      %v1896 = vsel %vm492, %v1783, 0
      %v1899 = vsel %vm492, %v1792, 0
      %v1902 = vsel %vm492, %v1801, 0
      %v1905 = vsel %vm492, %v1810, 0
      %v1908 = vsel %vm492, %v1819, 0
      %v1911 = vsel %vm492, %v1828, 0
      %v1914 = vsel %vm492, %v1837, 0
      %v1917 = vsel %vm492, %v1846, 0
      %v1920 = vsel %vm492, %v1855, 0
      %v1923 = vsel %vm492, %v1864, 0
      %v1926 = vsel %vm492, %v1873, 0
      %v1929 = vsel %vm547, %v1699, 0
      %1931 = vmatprep.subr.bf16.mxu0 0
      %1932 = vmatpush1.bf16.msra.mxu0 %v1929
      %1933 = vmatprep.subr.bf16.mxu0 0
      %1934 = vmatpush1.bf16.msra.mxu0 0
      %1935 = vmatprep.subr.bf16.mxu0 0
      %1936 = vmatpush1.bf16.msra.mxu0 0
      %1937 = vmatprep.subr.bf16.mxu0 0
      %1938 = vmatpush1.bf16.msra.mxu0 0
      %1939 = vmatprep.subr.bf16.mxu0 0
      %1940 = vmatpush1.bf16.msra.mxu0 0
      %1941 = vmatprep.subr.bf16.mxu0 0
      %1942 = vmatpush1.bf16.msra.mxu0 0
      %1943 = vmatprep.subr.bf16.mxu0 0
      %1944 = vmatpush1.bf16.msra.mxu0 0
      %1945 = vmatprep.subr.bf16.mxu0 0
      %1946 = vmatpush1.bf16.msra.mxu0 0
      %1947 = vmatprep.subr.bf16.mxu0 0
      %1948 = vmatpush1.bf16.msra.mxu0 0
      %1949 = vmatprep.subr.bf16.mxu0 0
      %1950 = vmatpush1.bf16.msra.mxu0 0
      %1951 = vmatprep.subr.bf16.mxu0 0
      %1952 = vmatpush1.bf16.msra.mxu0 0
      %1953 = vmatprep.subr.bf16.mxu0 0
      %1954 = vmatpush1.bf16.msra.mxu0 0
      %1955 = vmatprep.subr.bf16.mxu0 0
      %1956 = vmatpush1.bf16.msra.mxu0 0
      %1957 = vmatprep.subr.bf16.mxu0 0
      %1958 = vmatpush1.bf16.msra.mxu0 0
      %1959 = vmatprep.subr.bf16.mxu0 0
      %1960 = vmatpush1.bf16.msra.mxu0 0
      %1961 = vmatprep.subr.bf16.mxu0 0
      %1962 = vmatpush1.bf16.msra.mxu0 0
      %1963 = vmatprep.mubr.bf16.mxu0 0
      %1964 = vmatmul.mubr.bf16.gmra.mrb[0].mxu0 %v1875
      %v1965 = vpop.f32.mrb[0].mxu0
      %v1966 = vadd.f32 0.0, %v1965
      %v1967 = vpop.f32.mrb[0].mxu0
      %v1968 = vpop.f32.mrb[0].mxu0
      %v1969 = vadd.f32 0.0, %v1968
      %v1970 = vpop.f32.mrb[0].mxu0
      %1971 = vmatprep.mubr.bf16.mxu0 0
      %1972 = vmatmul.mubr.bf16.gmra.mrb[0].mxu0 %v1878
      %v1973 = vpop.f32.mrb[0].mxu0
      %v1974 = vadd.f32 0.0, %v1973
      %v1975 = vpop.f32.mrb[0].mxu0
      %v1976 = vpop.f32.mrb[0].mxu0
      %v1977 = vadd.f32 0.0, %v1976
      %v1978 = vpop.f32.mrb[0].mxu0
      %1979 = vmatprep.mubr.bf16.mxu0 0
      %1980 = vmatmul.mubr.bf16.gmra.mrb[0].mxu0 %v1881
      %v1981 = vpop.f32.mrb[0].mxu0
      %v1982 = vadd.f32 0.0, %v1981
      %v1983 = vpop.f32.mrb[0].mxu0
      %v1984 = vpop.f32.mrb[0].mxu0
      %v1985 = vadd.f32 0.0, %v1984
      %v1986 = vpop.f32.mrb[0].mxu0
      %1987 = vmatprep.mubr.bf16.mxu0 0
      %1988 = vmatmul.mubr.bf16.gmra.mrb[0].mxu0 %v1884
      %v1989 = vpop.f32.mrb[0].mxu0
      %v1990 = vadd.f32 0.0, %v1989
      %v1991 = vpop.f32.mrb[0].mxu0
      %v1992 = vpop.f32.mrb[0].mxu0
      %v1993 = vadd.f32 0.0, %v1992
      %v1994 = vpop.f32.mrb[0].mxu0
      %1995 = vmatprep.mubr.bf16.mxu0 0
      %1996 = vmatmul.mubr.bf16.gmra.mrb[0].mxu0 %v1887
      %v1997 = vpop.f32.mrb[0].mxu0
      %v1998 = vadd.f32 0.0, %v1997
      %v1999 = vpop.f32.mrb[0].mxu0
      %v2000 = vpop.f32.mrb[0].mxu0
      %v2001 = vadd.f32 0.0, %v2000
      %v2002 = vpop.f32.mrb[0].mxu0
      %2003 = vmatprep.mubr.bf16.mxu0 0
      %2004 = vmatmul.mubr.bf16.gmra.mrb[0].mxu0 %v1890
      %v2005 = vpop.f32.mrb[0].mxu0
      %v2006 = vadd.f32 0.0, %v2005
      %v2007 = vpop.f32.mrb[0].mxu0
      %v2008 = vpop.f32.mrb[0].mxu0
      %v2009 = vadd.f32 0.0, %v2008
      %v2010 = vpop.f32.mrb[0].mxu0
      %2011 = vmatprep.mubr.bf16.mxu0 0
      %2012 = vmatmul.mubr.bf16.gmra.mrb[0].mxu0 %v1893
      %v2013 = vpop.f32.mrb[0].mxu0
      %v2014 = vadd.f32 0.0, %v2013
      %v2015 = vpop.f32.mrb[0].mxu0
      %v2016 = vpop.f32.mrb[0].mxu0
      %v2017 = vadd.f32 0.0, %v2016
      %v2018 = vpop.f32.mrb[0].mxu0
      %2019 = vmatprep.mubr.bf16.mxu0 0
      %2020 = vmatmul.mubr.bf16.gmra.mrb[0].mxu0 %v1896
      %v2021 = vpop.f32.mrb[0].mxu0
      %v2022 = vadd.f32 0.0, %v2021
      %v2023 = vpop.f32.mrb[0].mxu0
      %v2024 = vpop.f32.mrb[0].mxu0
      %v2025 = vadd.f32 0.0, %v2024
      %v2026 = vpop.f32.mrb[0].mxu0
      %2027 = vmatprep.mubr.bf16.mxu0 0
      %2028 = vmatmul.mubr.bf16.gmra.mrb[0].mxu0 %v1899
      %v2029 = vpop.f32.mrb[0].mxu0
      %v2030 = vadd.f32 0.0, %v2029
      %v2031 = vpop.f32.mrb[0].mxu0
      %v2032 = vpop.f32.mrb[0].mxu0
      %v2033 = vadd.f32 0.0, %v2032
      %v2034 = vpop.f32.mrb[0].mxu0
      %2035 = vmatprep.mubr.bf16.mxu0 0
      %2036 = vmatmul.mubr.bf16.gmra.mrb[0].mxu0 %v1902
      %v2037 = vpop.f32.mrb[0].mxu0
      %v2038 = vadd.f32 0.0, %v2037
      %v2039 = vpop.f32.mrb[0].mxu0
      %v2040 = vpop.f32.mrb[0].mxu0
      %v2041 = vadd.f32 0.0, %v2040
      %v2042 = vpop.f32.mrb[0].mxu0
      %2043 = vmatprep.mubr.bf16.mxu0 0
      %2044 = vmatmul.mubr.bf16.gmra.mrb[0].mxu0 %v1905
      %v2045 = vpop.f32.mrb[0].mxu0
      %v2046 = vadd.f32 0.0, %v2045
      %v2047 = vpop.f32.mrb[0].mxu0
      %v2048 = vpop.f32.mrb[0].mxu0
      %v2049 = vadd.f32 0.0, %v2048
      %v2050 = vpop.f32.mrb[0].mxu0
      %2051 = vmatprep.mubr.bf16.mxu0 0
      %2052 = vmatmul.mubr.bf16.gmra.mrb[0].mxu0 %v1908
      %v2053 = vpop.f32.mrb[0].mxu0
      %v2054 = vadd.f32 0.0, %v2053
      %v2055 = vpop.f32.mrb[0].mxu0
      %v2056 = vpop.f32.mrb[0].mxu0
      %v2057 = vadd.f32 0.0, %v2056
      %v2058 = vpop.f32.mrb[0].mxu0
      %2059 = vmatprep.mubr.bf16.mxu0 0
      %2060 = vmatmul.mubr.bf16.gmra.mrb[0].mxu0 %v1911
      %v2061 = vpop.f32.mrb[0].mxu0
      %v2062 = vadd.f32 0.0, %v2061
      %v2063 = vpop.f32.mrb[0].mxu0
      %v2064 = vpop.f32.mrb[0].mxu0
      %v2065 = vadd.f32 0.0, %v2064
      %v2066 = vpop.f32.mrb[0].mxu0
      %2067 = vmatprep.mubr.bf16.mxu0 0
      %2068 = vmatmul.mubr.bf16.gmra.mrb[0].mxu0 %v1914
      %v2069 = vpop.f32.mrb[0].mxu0
      %v2070 = vadd.f32 0.0, %v2069
      %v2071 = vpop.f32.mrb[0].mxu0
      %v2072 = vpop.f32.mrb[0].mxu0
      %v2073 = vadd.f32 0.0, %v2072
      %v2074 = vpop.f32.mrb[0].mxu0
      %2075 = vmatprep.mubr.bf16.mxu0 0
      %2076 = vmatmul.mubr.bf16.gmra.mrb[0].mxu0 %v1917
      %v2077 = vpop.f32.mrb[0].mxu0
      %v2078 = vadd.f32 0.0, %v2077
      %v2079 = vpop.f32.mrb[0].mxu0
      %v2080 = vpop.f32.mrb[0].mxu0
      %v2081 = vadd.f32 0.0, %v2080
      %v2082 = vpop.f32.mrb[0].mxu0
      %2083 = vmatprep.mubr.bf16.mxu0 0
      %2084 = vmatmul.mubr.bf16.gmra.mrb[0].mxu0 %v1920
      %v2085 = vpop.f32.mrb[0].mxu0
      %v2086 = vadd.f32 0.0, %v2085
      %v2087 = vpop.f32.mrb[0].mxu0
      %v2088 = vpop.f32.mrb[0].mxu0
      %v2089 = vadd.f32 0.0, %v2088
      %v2090 = vpop.f32.mrb[0].mxu0
      %2091 = vmatprep.mubr.bf16.mxu0 0
      %2092 = vmatmul.mubr.bf16.gmra.mrb[0].mxu0 %v1923
      %v2093 = vpop.f32.mrb[0].mxu0
      %v2094 = vadd.f32 0.0, %v2093
      %v2095 = vpop.f32.mrb[0].mxu0
      %v2096 = vpop.f32.mrb[0].mxu0
      %v2097 = vadd.f32 0.0, %v2096
      %v2098 = vpop.f32.mrb[0].mxu0
      %2099 = vmatprep.mubr.bf16.mxu0 0
      %2100 = vmatmul.mubr.bf16.gmra.mrb[0].mxu0 %v1926
      %v2101 = vpop.f32.mrb[0].mxu0
      %v2102 = vadd.f32 0.0, %v2101
      %v2103 = vpop.f32.mrb[0].mxu0
      %v2104 = vpop.f32.mrb[0].mxu0
      %v2105 = vadd.f32 0.0, %v2104
      %v2106 = vpop.f32.mrb[0].mxu0
      %2107 = vdwg.mxu0
      %v2108 = vadd.f32 %v1661, %v1966
      %v2109 = vadd.f32 %v1662, %v1969
      %v2110 = vadd.f32 %v1663, %v1974
      %v2111 = vadd.f32 %v1664, %v1977
      %v2112 = vadd.f32 %v1665, %v1982
      %v2113 = vadd.f32 %v1666, %v1985
      %v2114 = vadd.f32 %v1667, %v1990
      %v2115 = vadd.f32 %v1668, %v1993
      %v2116 = vadd.f32 %v1669, %v1998
      %v2117 = vadd.f32 %v1670, %v2001
      %v2118 = vadd.f32 %v1671, %v2006
      %v2119 = vadd.f32 %v1672, %v2009
      %v2120 = vadd.f32 %v1673, %v2014
      %v2121 = vadd.f32 %v1674, %v2017
      %v2122 = vadd.f32 %v1675, %v2022
      %v2123 = vadd.f32 %v1676, %v2025
      %v2124 = vadd.f32 %v1677, %v2030
      %v2125 = vadd.f32 %v1678, %v2033
      %v2126 = vadd.f32 %v1679, %v2038
      %v2127 = vadd.f32 %v1680, %v2041
      %v2128 = vadd.f32 %v1681, %v2046
      %v2129 = vadd.f32 %v1682, %v2049
      %v2130 = vadd.f32 %v1683, %v2054
      %v2131 = vadd.f32 %v1684, %v2057
      %v2132 = vadd.f32 %v1685, %v2062
      %v2133 = vadd.f32 %v1686, %v2065
      %v2134 = vadd.f32 %v1687, %v2070
      %v2135 = vadd.f32 %v1688, %v2073
      %v2136 = vadd.f32 %v1689, %v2078
      %v2137 = vadd.f32 %v1690, %v2081
      %v2138 = vadd.f32 %v1691, %v2086
      %v2139 = vadd.f32 %v1692, %v2089
      %v2140 = vadd.f32 %v1693, %v2094
      %v2141 = vadd.f32 %v1694, %v2097
      %v2142 = vadd.f32 %v1695, %v2102
      %v2143 = vadd.f32 %v1696, %v2105
      %v2144 = vld [vmem:[%s199 + $0x8] sm:$0xc]
      %s2145 = scalar_lea.vmem %s1, 10
      %v2146 = vld [vmem:[%s2145] sm:$0x3]
      %v2148 = vunpack.c.l.b16 %v2144
      %v2149 = vpack.c.b16 %v1335, %v2148
      %vm2150 = vcmask 1045504
      %v2151 = vrot.slane %v2149, 2
      %v2152 = vrot.slane %v1372, 2
      %v2153 = vsel %vm2150, %v2151, %v2152
      %v2154 = vrot.slane %v1373, 2
      %v2155 = vsel %vm2150, %v2152, %v2154
      %v2156 = vrot.slane %v1374, 2
      %v2157 = vsel %vm2150, %v2154, %v2156
      %v2158 = vrot.slane %v1375, 2
      %v2159 = vsel %vm2150, %v2156, %v2158
      %v2160 = vrot.slane %v1376, 2
      %v2161 = vsel %vm2150, %v2158, %v2160
      %v2162 = vrot.slane %v1377, 2
      %v2163 = vsel %vm2150, %v2160, %v2162
      %v2164 = vrot.slane %v1378, 2
      %v2165 = vsel %vm2150, %v2162, %v2164
      %v2166 = vrot.slane %v1379, 2
      %v2167 = vsel %vm2150, %v2164, %v2166
      %v2168 = vrot.slane %v1380, 2
      %v2169 = vsel %vm2150, %v2166, %v2168
      %v2170 = vrot.slane %v1381, 2
      %v2171 = vsel %vm2150, %v2168, %v2170
      %v2172 = vrot.slane %v1382, 2
      %v2173 = vsel %vm2150, %v2170, %v2172
      %v2174 = vrot.slane %v1383, 2
      %v2175 = vsel %vm2150, %v2172, %v2174
      %v2176 = vrot.slane %v1384, 2
      %v2177 = vsel %vm2150, %v2174, %v2176
      %v2178 = vrot.slane %v1385, 2
      %v2179 = vsel %vm2150, %v2176, %v2178
      %v2180 = vrot.slane %v1386, 2
      %v2181 = vsel %vm2150, %v2178, %v2180
      %v2182 = vrot.slane %v1387, 2
      %v2183 = vsel %vm2150, %v2180, %v2182
      %v2184 = vrot.slane %v1388, 2
      %v2185 = vsel %vm2150, %v2182, %v2184
      %v2186 = vrot.slane %v1702, 2
      %v2187 = vsel %vm2150, %v2184, %v2186
      %v2189 = vsel %vm492, %v2153, 0
      %v2192 = vsel %vm492, %v2155, 0
      %v2195 = vsel %vm492, %v2157, 0
      %v2198 = vsel %vm492, %v2159, 0
      %v2201 = vsel %vm492, %v2161, 0
      %v2204 = vsel %vm492, %v2163, 0
      %v2207 = vsel %vm492, %v2165, 0
      %v2210 = vsel %vm492, %v2167, 0
      %v2213 = vsel %vm492, %v2169, 0
      %v2216 = vsel %vm492, %v2171, 0
      %v2219 = vsel %vm492, %v2173, 0
      %v2222 = vsel %vm492, %v2175, 0
      %v2225 = vsel %vm492, %v2177, 0
      %v2228 = vsel %vm492, %v2179, 0
      %v2231 = vsel %vm492, %v2181, 0
      %v2234 = vsel %vm492, %v2183, 0
      %v2237 = vsel %vm492, %v2185, 0
      %v2240 = vsel %vm492, %v2187, 0
      %v2243 = vsel %vm547, %v2146, 0
      %2245 = vmatprep.subr.bf16.mxu0 0
      %2246 = vmatpush1.bf16.msra.mxu0 %v2243
      %2247 = vmatprep.subr.bf16.mxu0 0
      %2248 = vmatpush1.bf16.msra.mxu0 0
      %2249 = vmatprep.subr.bf16.mxu0 0
      %2250 = vmatpush1.bf16.msra.mxu0 0
      %2251 = vmatprep.subr.bf16.mxu0 0
      %2252 = vmatpush1.bf16.msra.mxu0 0
      %2253 = vmatprep.subr.bf16.mxu0 0
      %2254 = vmatpush1.bf16.msra.mxu0 0
      %2255 = vmatprep.subr.bf16.mxu0 0
      %2256 = vmatpush1.bf16.msra.mxu0 0
      %2257 = vmatprep.subr.bf16.mxu0 0
      %2258 = vmatpush1.bf16.msra.mxu0 0
      %2259 = vmatprep.subr.bf16.mxu0 0
      %2260 = vmatpush1.bf16.msra.mxu0 0
      %2261 = vmatprep.subr.bf16.mxu0 0
      %2262 = vmatpush1.bf16.msra.mxu0 0
      %2263 = vmatprep.subr.bf16.mxu0 0
      %2264 = vmatpush1.bf16.msra.mxu0 0
      %2265 = vmatprep.subr.bf16.mxu0 0
      %2266 = vmatpush1.bf16.msra.mxu0 0
      %2267 = vmatprep.subr.bf16.mxu0 0
      %2268 = vmatpush1.bf16.msra.mxu0 0
      %2269 = vmatprep.subr.bf16.mxu0 0
      %2270 = vmatpush1.bf16.msra.mxu0 0
      %2271 = vmatprep.subr.bf16.mxu0 0
      %2272 = vmatpush1.bf16.msra.mxu0 0
      %2273 = vmatprep.subr.bf16.mxu0 0
      %2274 = vmatpush1.bf16.msra.mxu0 0
      %2275 = vmatprep.subr.bf16.mxu0 0
      %2276 = vmatpush1.bf16.msra.mxu0 0
      %2277 = vmatprep.mubr.bf16.mxu0 0
      %2278 = vmatmul.mubr.bf16.gmra.mrb[0].mxu0 %v2189
      %v2279 = vpop.f32.mrb[0].mxu0
      %v2280 = vadd.f32 0.0, %v2279
      %v2281 = vpop.f32.mrb[0].mxu0
      %v2282 = vpop.f32.mrb[0].mxu0
      %v2283 = vadd.f32 0.0, %v2282
      %v2284 = vpop.f32.mrb[0].mxu0
      %2285 = vmatprep.mubr.bf16.mxu0 0
      %2286 = vmatmul.mubr.bf16.gmra.mrb[0].mxu0 %v2192
      %v2287 = vpop.f32.mrb[0].mxu0
      %v2288 = vadd.f32 0.0, %v2287
      %v2289 = vpop.f32.mrb[0].mxu0
      %v2290 = vpop.f32.mrb[0].mxu0
      %v2291 = vadd.f32 0.0, %v2290
      %v2292 = vpop.f32.mrb[0].mxu0
      %2293 = vmatprep.mubr.bf16.mxu0 0
      %2294 = vmatmul.mubr.bf16.gmra.mrb[0].mxu0 %v2195
      %v2295 = vpop.f32.mrb[0].mxu0
      %v2296 = vadd.f32 0.0, %v2295
      %v2297 = vpop.f32.mrb[0].mxu0
      %v2298 = vpop.f32.mrb[0].mxu0
      %v2299 = vadd.f32 0.0, %v2298
      %v2300 = vpop.f32.mrb[0].mxu0
      %2301 = vmatprep.mubr.bf16.mxu0 0
      %2302 = vmatmul.mubr.bf16.gmra.mrb[0].mxu0 %v2198
      %v2303 = vpop.f32.mrb[0].mxu0
      %v2304 = vadd.f32 0.0, %v2303
      %v2305 = vpop.f32.mrb[0].mxu0
      %v2306 = vpop.f32.mrb[0].mxu0
      %v2307 = vadd.f32 0.0, %v2306
      %v2308 = vpop.f32.mrb[0].mxu0
      %2309 = vmatprep.mubr.bf16.mxu0 0
      %2310 = vmatmul.mubr.bf16.gmra.mrb[0].mxu0 %v2201
      %v2311 = vpop.f32.mrb[0].mxu0
      %v2312 = vadd.f32 0.0, %v2311
      %v2313 = vpop.f32.mrb[0].mxu0
      %v2314 = vpop.f32.mrb[0].mxu0
      %v2315 = vadd.f32 0.0, %v2314
      %v2316 = vpop.f32.mrb[0].mxu0
      %2317 = vmatprep.mubr.bf16.mxu0 0
      %2318 = vmatmul.mubr.bf16.gmra.mrb[0].mxu0 %v2204
      %v2319 = vpop.f32.mrb[0].mxu0
      %v2320 = vadd.f32 0.0, %v2319
      %v2321 = vpop.f32.mrb[0].mxu0
      %v2322 = vpop.f32.mrb[0].mxu0
      %v2323 = vadd.f32 0.0, %v2322
      %v2324 = vpop.f32.mrb[0].mxu0
      %2325 = vmatprep.mubr.bf16.mxu0 0
      %2326 = vmatmul.mubr.bf16.gmra.mrb[0].mxu0 %v2207
      %v2327 = vpop.f32.mrb[0].mxu0
      %v2328 = vadd.f32 0.0, %v2327
      %v2329 = vpop.f32.mrb[0].mxu0
      %v2330 = vpop.f32.mrb[0].mxu0
      %v2331 = vadd.f32 0.0, %v2330
      %v2332 = vpop.f32.mrb[0].mxu0
      %2333 = vmatprep.mubr.bf16.mxu0 0
      %2334 = vmatmul.mubr.bf16.gmra.mrb[0].mxu0 %v2210
      %v2335 = vpop.f32.mrb[0].mxu0
      %v2336 = vadd.f32 0.0, %v2335
      %v2337 = vpop.f32.mrb[0].mxu0
      %v2338 = vpop.f32.mrb[0].mxu0
      %v2339 = vadd.f32 0.0, %v2338
      %v2340 = vpop.f32.mrb[0].mxu0
      %2341 = vmatprep.mubr.bf16.mxu0 0
      %2342 = vmatmul.mubr.bf16.gmra.mrb[0].mxu0 %v2213
      %v2343 = vpop.f32.mrb[0].mxu0
      %v2344 = vadd.f32 0.0, %v2343
      %v2345 = vpop.f32.mrb[0].mxu0
      %v2346 = vpop.f32.mrb[0].mxu0
      %v2347 = vadd.f32 0.0, %v2346
      %v2348 = vpop.f32.mrb[0].mxu0
      %2349 = vmatprep.mubr.bf16.mxu0 0
      %2350 = vmatmul.mubr.bf16.gmra.mrb[0].mxu0 %v2216
      %v2351 = vpop.f32.mrb[0].mxu0
      %v2352 = vadd.f32 0.0, %v2351
      %v2353 = vpop.f32.mrb[0].mxu0
      %v2354 = vpop.f32.mrb[0].mxu0
      %v2355 = vadd.f32 0.0, %v2354
      %v2356 = vpop.f32.mrb[0].mxu0
      %2357 = vmatprep.mubr.bf16.mxu0 0
      %2358 = vmatmul.mubr.bf16.gmra.mrb[0].mxu0 %v2219
      %v2359 = vpop.f32.mrb[0].mxu0
      %v2360 = vadd.f32 0.0, %v2359
      %v2361 = vpop.f32.mrb[0].mxu0
      %v2362 = vpop.f32.mrb[0].mxu0
      %v2363 = vadd.f32 0.0, %v2362
      %v2364 = vpop.f32.mrb[0].mxu0
      %2365 = vmatprep.mubr.bf16.mxu0 0
      %2366 = vmatmul.mubr.bf16.gmra.mrb[0].mxu0 %v2222
      %v2367 = vpop.f32.mrb[0].mxu0
      %v2368 = vadd.f32 0.0, %v2367
      %v2369 = vpop.f32.mrb[0].mxu0
      %v2370 = vpop.f32.mrb[0].mxu0
      %v2371 = vadd.f32 0.0, %v2370
      %v2372 = vpop.f32.mrb[0].mxu0
      %2373 = vmatprep.mubr.bf16.mxu0 0
      %2374 = vmatmul.mubr.bf16.gmra.mrb[0].mxu0 %v2225
      %v2375 = vpop.f32.mrb[0].mxu0
      %v2376 = vadd.f32 0.0, %v2375
      %v2377 = vpop.f32.mrb[0].mxu0
      %v2378 = vpop.f32.mrb[0].mxu0
      %v2379 = vadd.f32 0.0, %v2378
      %v2380 = vpop.f32.mrb[0].mxu0
      %2381 = vmatprep.mubr.bf16.mxu0 0
      %2382 = vmatmul.mubr.bf16.gmra.mrb[0].mxu0 %v2228
      %v2383 = vpop.f32.mrb[0].mxu0
      %v2384 = vadd.f32 0.0, %v2383
      %v2385 = vpop.f32.mrb[0].mxu0
      %v2386 = vpop.f32.mrb[0].mxu0
      %v2387 = vadd.f32 0.0, %v2386
      %v2388 = vpop.f32.mrb[0].mxu0
      %2389 = vmatprep.mubr.bf16.mxu0 0
      %2390 = vmatmul.mubr.bf16.gmra.mrb[0].mxu0 %v2231
      %v2391 = vpop.f32.mrb[0].mxu0
      %v2392 = vadd.f32 0.0, %v2391
      %v2393 = vpop.f32.mrb[0].mxu0
      %v2394 = vpop.f32.mrb[0].mxu0
      %v2395 = vadd.f32 0.0, %v2394
      %v2396 = vpop.f32.mrb[0].mxu0
      %2397 = vmatprep.mubr.bf16.mxu0 0
      %2398 = vmatmul.mubr.bf16.gmra.mrb[0].mxu0 %v2234
      %v2399 = vpop.f32.mrb[0].mxu0
      %v2400 = vadd.f32 0.0, %v2399
      %v2401 = vpop.f32.mrb[0].mxu0
      %v2402 = vpop.f32.mrb[0].mxu0
      %v2403 = vadd.f32 0.0, %v2402
      %v2404 = vpop.f32.mrb[0].mxu0
      %2405 = vmatprep.mubr.bf16.mxu0 0
      %2406 = vmatmul.mubr.bf16.gmra.mrb[0].mxu0 %v2237
      %v2407 = vpop.f32.mrb[0].mxu0
      %v2408 = vadd.f32 0.0, %v2407
      %v2409 = vpop.f32.mrb[0].mxu0
      %v2410 = vpop.f32.mrb[0].mxu0
      %v2411 = vadd.f32 0.0, %v2410
      %v2412 = vpop.f32.mrb[0].mxu0
      %2413 = vmatprep.mubr.bf16.mxu0 0
      %2414 = vmatmul.mubr.bf16.gmra.mrb[0].mxu0 %v2240
      %v2415 = vpop.f32.mrb[0].mxu0
      %v2416 = vadd.f32 0.0, %v2415
      %v2417 = vpop.f32.mrb[0].mxu0
      %v2418 = vpop.f32.mrb[0].mxu0
      %v2419 = vadd.f32 0.0, %v2418
      %v2420 = vpop.f32.mrb[0].mxu0
      %2421 = vdwg.mxu0
      %v2422 = vadd.f32 %v2108, %v2280
      %v2423 = vadd.f32 %v2109, %v2283
      %v2424 = vadd.f32 %v2110, %v2288
      %v2425 = vadd.f32 %v2111, %v2291
      %v2426 = vadd.f32 %v2112, %v2296
      %v2427 = vadd.f32 %v2113, %v2299
      %v2428 = vadd.f32 %v2114, %v2304
      %v2429 = vadd.f32 %v2115, %v2307
      %v2430 = vadd.f32 %v2116, %v2312
      %v2431 = vadd.f32 %v2117, %v2315
      %v2432 = vadd.f32 %v2118, %v2320
      %v2433 = vadd.f32 %v2119, %v2323
      %v2434 = vadd.f32 %v2120, %v2328
      %v2435 = vadd.f32 %v2121, %v2331
      %v2436 = vadd.f32 %v2122, %v2336
      %v2437 = vadd.f32 %v2123, %v2339
      %v2438 = vadd.f32 %v2124, %v2344
      %v2439 = vadd.f32 %v2125, %v2347
      %v2440 = vadd.f32 %v2126, %v2352
      %v2441 = vadd.f32 %v2127, %v2355
      %v2442 = vadd.f32 %v2128, %v2360
      %v2443 = vadd.f32 %v2129, %v2363
      %v2444 = vadd.f32 %v2130, %v2368
      %v2445 = vadd.f32 %v2131, %v2371
      %v2446 = vadd.f32 %v2132, %v2376
      %v2447 = vadd.f32 %v2133, %v2379
      %v2448 = vadd.f32 %v2134, %v2384
      %v2449 = vadd.f32 %v2135, %v2387
      %v2450 = vadd.f32 %v2136, %v2392
      %v2451 = vadd.f32 %v2137, %v2395
      %v2452 = vadd.f32 %v2138, %v2400
      %v2453 = vadd.f32 %v2139, %v2403
      %v2454 = vadd.f32 %v2140, %v2408
      %v2455 = vadd.f32 %v2141, %v2411
      %v2456 = vadd.f32 %v2142, %v2416
      %v2457 = vadd.f32 %v2143, %v2419
      %v2458 = vld [vmem:[%s199 + $0x10] sm:$0xc]
      %v2459 = vld [vmem:[%s199 + $0x14] sm:$0xf]
      %v2460 = vld [vmem:[%s199 + $0x18] sm:$0xf]
      %v2461 = vld [vmem:[%s199 + $0x1c] sm:$0xf]
      %v2462 = vld [vmem:[%s199 + $0x20] sm:$0xf]
      %v2463 = vld [vmem:[%s199 + $0x24] sm:$0xf]
      %v2464 = vld [vmem:[%s199 + $0x28] sm:$0xf]
      %v2465 = vld [vmem:[%s199 + $0x2c] sm:$0xf]
      %v2466 = vld [vmem:[%s199 + $0x30] sm:$0xf]
      %v2467 = vld [vmem:[%s199 + $0x34] sm:$0xf]
      %v2468 = vld [vmem:[%s199 + $0x38] sm:$0xf]
      %v2469 = vld [vmem:[%s199 + $0x3c] sm:$0xf]
      %v2470 = vld [vmem:[%s199 + $0x40] sm:$0xf]
      %v2471 = vld [vmem:[%s199 + $0x44] sm:$0xf]
      %v2472 = vld [vmem:[%s199 + $0x48] sm:$0xf]
      %v2473 = vld [vmem:[%s199 + $0x4c] sm:$0xf]
      %v2474 = vld [vmem:[%s199 + $0x50] sm:$0xf]
      %v2475 = vld [vmem:[%s199 + $0x54] sm:$0xf]
      %v2476 = vld [vmem:[%s199 + $0x58] sm:$0xf]
      %v2477 = vld [vmem:[%s199 + $0x5c] sm:$0xf]
      %v2478 = vld [vmem:[%s199 + $0x60] sm:$0xf]
      %v2479 = vld [vmem:[%s199 + $0x64] sm:$0xf]
      %v2480 = vld [vmem:[%s199 + $0x68] sm:$0xf]
      %v2481 = vld [vmem:[%s199 + $0x6c] sm:$0xf]
      %v2482 = vld [vmem:[%s199 + $0x70] sm:$0xf]
      %v2483 = vld [vmem:[%s199 + $0x74] sm:$0xf]
      %v2484 = vld [vmem:[%s199 + $0x78] sm:$0xf]
      %v2485 = vld [vmem:[%s199 + $0x7c] sm:$0xf]
      %v2486 = vld [vmem:[%s199 + $0x80] sm:$0xf]
      %v2487 = vld [vmem:[%s199 + $0x84] sm:$0xf]
      %v2488 = vld [vmem:[%s199 + $0x88] sm:$0xf]
      %v2489 = vld [vmem:[%s199 + $0x8c] sm:$0xf]
      %v2490 = vld [vmem:[%s199 + $0x90] sm:$0xf]
      %v2491 = vld [vmem:[%s199 + $0x94] sm:$0xf]
      %v2492 = vld [vmem:[%s199 + $0x98] sm:$0xf]
      %v2493 = vld [vmem:[%s199 + $0x9c] sm:$0xf]
      %v2494 = vld [vmem:[%s199 + $0xa0] sm:$0x3]
      %s2495 = scalar_lea.vmem %s1, 12
      %v2496 = vld [vmem:[%s2495] sm:$0x3]
      %v2534 = vunpack.c.l.b16 %v2458
      %v2535 = vunpack.c.l.b16 %v2459
      %v2536 = vunpack.c.l.b16 %v2460
      %v2537 = vunpack.c.l.b16 %v2461
      %v2538 = vunpack.c.l.b16 %v2462
      %v2539 = vunpack.c.l.b16 %v2463
      %v2540 = vunpack.c.l.b16 %v2464
      %v2541 = vunpack.c.l.b16 %v2465
      %v2542 = vunpack.c.l.b16 %v2466
      %v2543 = vunpack.c.l.b16 %v2467
      %v2544 = vunpack.c.l.b16 %v2468
      %v2545 = vunpack.c.l.b16 %v2469
      %v2546 = vunpack.c.l.b16 %v2470
      %v2547 = vunpack.c.l.b16 %v2471
      %v2548 = vunpack.c.l.b16 %v2472
      %v2549 = vunpack.c.l.b16 %v2473
      %v2550 = vunpack.c.l.b16 %v2474
      %v2551 = vunpack.c.l.b16 %v2475
      %v2552 = vunpack.c.l.b16 %v2476
      %v2553 = vunpack.c.l.b16 %v2477
      %v2554 = vunpack.c.l.b16 %v2478
      %v2555 = vunpack.c.l.b16 %v2479
      %v2556 = vunpack.c.l.b16 %v2480
      %v2557 = vunpack.c.l.b16 %v2481
      %v2558 = vunpack.c.l.b16 %v2482
      %v2559 = vunpack.c.l.b16 %v2483
      %v2560 = vunpack.c.l.b16 %v2484
      %v2561 = vunpack.c.l.b16 %v2485
      %v2562 = vunpack.c.l.b16 %v2486
      %v2563 = vunpack.c.l.b16 %v2487
      %v2564 = vunpack.c.l.b16 %v2488
      %v2565 = vunpack.c.l.b16 %v2489
      %v2566 = vunpack.c.l.b16 %v2490
      %v2567 = vunpack.c.l.b16 %v2491
      %v2568 = vunpack.c.l.b16 %v2492
      %v2569 = vunpack.c.l.b16 %v2493
      %v2570 = vunpack.c.l.b16 %v2494
      %v2571 = vpack.c.b16 %v2535, %v2534
      %v2572 = vpack.c.b16 %v2537, %v2536
      %v2573 = vpack.c.b16 %v2539, %v2538
      %v2574 = vpack.c.b16 %v2541, %v2540
      %v2575 = vpack.c.b16 %v2543, %v2542
      %v2576 = vpack.c.b16 %v2545, %v2544
      %v2577 = vpack.c.b16 %v2547, %v2546
      %v2578 = vpack.c.b16 %v2549, %v2548
      %v2579 = vpack.c.b16 %v2551, %v2550
      %v2580 = vpack.c.b16 %v2553, %v2552
      %v2581 = vpack.c.b16 %v2555, %v2554
      %v2582 = vpack.c.b16 %v2557, %v2556
      %v2583 = vpack.c.b16 %v2559, %v2558
      %v2584 = vpack.c.b16 %v2561, %v2560
      %v2585 = vpack.c.b16 %v2563, %v2562
      %v2586 = vpack.c.b16 %v2565, %v2564
      %v2587 = vpack.c.b16 %v2567, %v2566
      %v2588 = vpack.c.b16 %v2569, %v2568
      %v2589 = vpack.c.b16 %v2570, %v2570
      %v2590 = vrot.slane %v2571, 2
      %v2591 = vrot.slane %v2572, 2
      %v2592 = vsel %vm2150, %v2590, %v2591
      %v2593 = vrot.slane %v2573, 2
      %v2594 = vsel %vm2150, %v2591, %v2593
      %v2595 = vrot.slane %v2574, 2
      %v2596 = vsel %vm2150, %v2593, %v2595
      %v2597 = vrot.slane %v2575, 2
      %v2598 = vsel %vm2150, %v2595, %v2597
      %v2599 = vrot.slane %v2576, 2
      %v2600 = vsel %vm2150, %v2597, %v2599
      %v2601 = vrot.slane %v2577, 2
      %v2602 = vsel %vm2150, %v2599, %v2601
      %v2603 = vrot.slane %v2578, 2
      %v2604 = vsel %vm2150, %v2601, %v2603
      %v2605 = vrot.slane %v2579, 2
      %v2606 = vsel %vm2150, %v2603, %v2605
      %v2607 = vrot.slane %v2580, 2
      %v2608 = vsel %vm2150, %v2605, %v2607
      %v2609 = vrot.slane %v2581, 2
      %v2610 = vsel %vm2150, %v2607, %v2609
      %v2611 = vrot.slane %v2582, 2
      %v2612 = vsel %vm2150, %v2609, %v2611
      %v2613 = vrot.slane %v2583, 2
      %v2614 = vsel %vm2150, %v2611, %v2613
      %v2615 = vrot.slane %v2584, 2
      %v2616 = vsel %vm2150, %v2613, %v2615
      %v2617 = vrot.slane %v2585, 2
      %v2618 = vsel %vm2150, %v2615, %v2617
      %v2619 = vrot.slane %v2586, 2
      %v2620 = vsel %vm2150, %v2617, %v2619
      %v2621 = vrot.slane %v2587, 2
      %v2622 = vsel %vm2150, %v2619, %v2621
      %v2623 = vrot.slane %v2588, 2
      %v2624 = vsel %vm2150, %v2621, %v2623
      %v2625 = vrot.slane %v2589, 2
      %v2626 = vsel %vm2150, %v2623, %v2625
      %v2628 = vsel %vm492, %v2592, 0
      %v2631 = vsel %vm492, %v2594, 0
      %v2634 = vsel %vm492, %v2596, 0
      %v2637 = vsel %vm492, %v2598, 0
      %v2640 = vsel %vm492, %v2600, 0
      %v2643 = vsel %vm492, %v2602, 0
      %v2646 = vsel %vm492, %v2604, 0
      %v2649 = vsel %vm492, %v2606, 0
      %v2652 = vsel %vm492, %v2608, 0
      %v2655 = vsel %vm492, %v2610, 0
      %v2658 = vsel %vm492, %v2612, 0
      %v2661 = vsel %vm492, %v2614, 0
      %v2664 = vsel %vm492, %v2616, 0
      %v2667 = vsel %vm492, %v2618, 0
      %v2670 = vsel %vm492, %v2620, 0
      %v2673 = vsel %vm492, %v2622, 0
      %v2676 = vsel %vm492, %v2624, 0
      %v2679 = vsel %vm492, %v2626, 0
      %v2682 = vsel %vm547, %v2496, 0
      %2684 = vmatprep.subr.bf16.mxu0 0
      %2685 = vmatpush1.bf16.msra.mxu0 %v2682
      %2686 = vmatprep.subr.bf16.mxu0 0
      %2687 = vmatpush1.bf16.msra.mxu0 0
      %2688 = vmatprep.subr.bf16.mxu0 0
      %2689 = vmatpush1.bf16.msra.mxu0 0
      %2690 = vmatprep.subr.bf16.mxu0 0
      %2691 = vmatpush1.bf16.msra.mxu0 0
      %2692 = vmatprep.subr.bf16.mxu0 0
      %2693 = vmatpush1.bf16.msra.mxu0 0
      %2694 = vmatprep.subr.bf16.mxu0 0
      %2695 = vmatpush1.bf16.msra.mxu0 0
      %2696 = vmatprep.subr.bf16.mxu0 0
      %2697 = vmatpush1.bf16.msra.mxu0 0
      %2698 = vmatprep.subr.bf16.mxu0 0
      %2699 = vmatpush1.bf16.msra.mxu0 0
      %2700 = vmatprep.subr.bf16.mxu0 0
      %2701 = vmatpush1.bf16.msra.mxu0 0
      %2702 = vmatprep.subr.bf16.mxu0 0
      %2703 = vmatpush1.bf16.msra.mxu0 0
      %2704 = vmatprep.subr.bf16.mxu0 0
      %2705 = vmatpush1.bf16.msra.mxu0 0
      %2706 = vmatprep.subr.bf16.mxu0 0
      %2707 = vmatpush1.bf16.msra.mxu0 0
      %2708 = vmatprep.subr.bf16.mxu0 0
      %2709 = vmatpush1.bf16.msra.mxu0 0
      %2710 = vmatprep.subr.bf16.mxu0 0
      %2711 = vmatpush1.bf16.msra.mxu0 0
      %2712 = vmatprep.subr.bf16.mxu0 0
      %2713 = vmatpush1.bf16.msra.mxu0 0
      %2714 = vmatprep.subr.bf16.mxu0 0
      %2715 = vmatpush1.bf16.msra.mxu0 0
      %2716 = vmatprep.mubr.bf16.mxu0 0
      %2717 = vmatmul.mubr.bf16.gmra.mrb[0].mxu0 %v2628
      %v2718 = vpop.f32.mrb[0].mxu0
      %v2719 = vadd.f32 0.0, %v2718
      %v2720 = vpop.f32.mrb[0].mxu0
      %v2721 = vpop.f32.mrb[0].mxu0
      %v2722 = vadd.f32 0.0, %v2721
      %v2723 = vpop.f32.mrb[0].mxu0
      %2724 = vmatprep.mubr.bf16.mxu0 0
      %2725 = vmatmul.mubr.bf16.gmra.mrb[0].mxu0 %v2631
      %v2726 = vpop.f32.mrb[0].mxu0
      %v2727 = vadd.f32 0.0, %v2726
      %v2728 = vpop.f32.mrb[0].mxu0
      %v2729 = vpop.f32.mrb[0].mxu0
      %v2730 = vadd.f32 0.0, %v2729
      %v2731 = vpop.f32.mrb[0].mxu0
      %2732 = vmatprep.mubr.bf16.mxu0 0
      %2733 = vmatmul.mubr.bf16.gmra.mrb[0].mxu0 %v2634
      %v2734 = vpop.f32.mrb[0].mxu0
      %v2735 = vadd.f32 0.0, %v2734
      %v2736 = vpop.f32.mrb[0].mxu0
      %v2737 = vpop.f32.mrb[0].mxu0
      %v2738 = vadd.f32 0.0, %v2737
      %v2739 = vpop.f32.mrb[0].mxu0
      %2740 = vmatprep.mubr.bf16.mxu0 0
      %2741 = vmatmul.mubr.bf16.gmra.mrb[0].mxu0 %v2637
      %v2742 = vpop.f32.mrb[0].mxu0
      %v2743 = vadd.f32 0.0, %v2742
      %v2744 = vpop.f32.mrb[0].mxu0
      %v2745 = vpop.f32.mrb[0].mxu0
      %v2746 = vadd.f32 0.0, %v2745
      %v2747 = vpop.f32.mrb[0].mxu0
      %2748 = vmatprep.mubr.bf16.mxu0 0
      %2749 = vmatmul.mubr.bf16.gmra.mrb[0].mxu0 %v2640
      %v2750 = vpop.f32.mrb[0].mxu0
      %v2751 = vadd.f32 0.0, %v2750
      %v2752 = vpop.f32.mrb[0].mxu0
      %v2753 = vpop.f32.mrb[0].mxu0
      %v2754 = vadd.f32 0.0, %v2753
      %v2755 = vpop.f32.mrb[0].mxu0
      %2756 = vmatprep.mubr.bf16.mxu0 0
      %2757 = vmatmul.mubr.bf16.gmra.mrb[0].mxu0 %v2643
      %v2758 = vpop.f32.mrb[0].mxu0
      %v2759 = vadd.f32 0.0, %v2758
      %v2760 = vpop.f32.mrb[0].mxu0
      %v2761 = vpop.f32.mrb[0].mxu0
      %v2762 = vadd.f32 0.0, %v2761
      %v2763 = vpop.f32.mrb[0].mxu0
      %2764 = vmatprep.mubr.bf16.mxu0 0
      %2765 = vmatmul.mubr.bf16.gmra.mrb[0].mxu0 %v2646
      %v2766 = vpop.f32.mrb[0].mxu0
      %v2767 = vadd.f32 0.0, %v2766
      %v2768 = vpop.f32.mrb[0].mxu0
      %v2769 = vpop.f32.mrb[0].mxu0
      %v2770 = vadd.f32 0.0, %v2769
      %v2771 = vpop.f32.mrb[0].mxu0
      %2772 = vmatprep.mubr.bf16.mxu0 0
      %2773 = vmatmul.mubr.bf16.gmra.mrb[0].mxu0 %v2649
      %v2774 = vpop.f32.mrb[0].mxu0
      %v2775 = vadd.f32 0.0, %v2774
      %v2776 = vpop.f32.mrb[0].mxu0
      %v2777 = vpop.f32.mrb[0].mxu0
      %v2778 = vadd.f32 0.0, %v2777
      %v2779 = vpop.f32.mrb[0].mxu0
      %2780 = vmatprep.mubr.bf16.mxu0 0
      %2781 = vmatmul.mubr.bf16.gmra.mrb[0].mxu0 %v2652
      %v2782 = vpop.f32.mrb[0].mxu0
      %v2783 = vadd.f32 0.0, %v2782
      %v2784 = vpop.f32.mrb[0].mxu0
      %v2785 = vpop.f32.mrb[0].mxu0
      %v2786 = vadd.f32 0.0, %v2785
      %v2787 = vpop.f32.mrb[0].mxu0
      %2788 = vmatprep.mubr.bf16.mxu0 0
      %2789 = vmatmul.mubr.bf16.gmra.mrb[0].mxu0 %v2655
      %v2790 = vpop.f32.mrb[0].mxu0
      %v2791 = vadd.f32 0.0, %v2790
      %v2792 = vpop.f32.mrb[0].mxu0
      %v2793 = vpop.f32.mrb[0].mxu0
      %v2794 = vadd.f32 0.0, %v2793
      %v2795 = vpop.f32.mrb[0].mxu0
      %2796 = vmatprep.mubr.bf16.mxu0 0
      %2797 = vmatmul.mubr.bf16.gmra.mrb[0].mxu0 %v2658
      %v2798 = vpop.f32.mrb[0].mxu0
      %v2799 = vadd.f32 0.0, %v2798
      %v2800 = vpop.f32.mrb[0].mxu0
      %v2801 = vpop.f32.mrb[0].mxu0
      %v2802 = vadd.f32 0.0, %v2801
      %v2803 = vpop.f32.mrb[0].mxu0
      %2804 = vmatprep.mubr.bf16.mxu0 0
      %2805 = vmatmul.mubr.bf16.gmra.mrb[0].mxu0 %v2661
      %v2806 = vpop.f32.mrb[0].mxu0
      %v2807 = vadd.f32 0.0, %v2806
      %v2808 = vpop.f32.mrb[0].mxu0
      %v2809 = vpop.f32.mrb[0].mxu0
      %v2810 = vadd.f32 0.0, %v2809
      %v2811 = vpop.f32.mrb[0].mxu0
      %2812 = vmatprep.mubr.bf16.mxu0 0
      %2813 = vmatmul.mubr.bf16.gmra.mrb[0].mxu0 %v2664
      %v2814 = vpop.f32.mrb[0].mxu0
      %v2815 = vadd.f32 0.0, %v2814
      %v2816 = vpop.f32.mrb[0].mxu0
      %v2817 = vpop.f32.mrb[0].mxu0
      %v2818 = vadd.f32 0.0, %v2817
      %v2819 = vpop.f32.mrb[0].mxu0
      %2820 = vmatprep.mubr.bf16.mxu0 0
      %2821 = vmatmul.mubr.bf16.gmra.mrb[0].mxu0 %v2667
      %v2822 = vpop.f32.mrb[0].mxu0
      %v2823 = vadd.f32 0.0, %v2822
      %v2824 = vpop.f32.mrb[0].mxu0
      %v2825 = vpop.f32.mrb[0].mxu0
      %v2826 = vadd.f32 0.0, %v2825
      %v2827 = vpop.f32.mrb[0].mxu0
      %2828 = vmatprep.mubr.bf16.mxu0 0
      %2829 = vmatmul.mubr.bf16.gmra.mrb[0].mxu0 %v2670
      %v2830 = vpop.f32.mrb[0].mxu0
      %v2831 = vadd.f32 0.0, %v2830
      %v2832 = vpop.f32.mrb[0].mxu0
      %v2833 = vpop.f32.mrb[0].mxu0
      %v2834 = vadd.f32 0.0, %v2833
      %v2835 = vpop.f32.mrb[0].mxu0
      %2836 = vmatprep.mubr.bf16.mxu0 0
      %2837 = vmatmul.mubr.bf16.gmra.mrb[0].mxu0 %v2673
      %v2838 = vpop.f32.mrb[0].mxu0
      %v2839 = vadd.f32 0.0, %v2838
      %v2840 = vpop.f32.mrb[0].mxu0
      %v2841 = vpop.f32.mrb[0].mxu0
      %v2842 = vadd.f32 0.0, %v2841
      %v2843 = vpop.f32.mrb[0].mxu0
      %2844 = vmatprep.mubr.bf16.mxu0 0
      %2845 = vmatmul.mubr.bf16.gmra.mrb[0].mxu0 %v2676
      %v2846 = vpop.f32.mrb[0].mxu0
      %v2847 = vadd.f32 0.0, %v2846
      %v2848 = vpop.f32.mrb[0].mxu0
      %v2849 = vpop.f32.mrb[0].mxu0
      %v2850 = vadd.f32 0.0, %v2849
      %v2851 = vpop.f32.mrb[0].mxu0
      %2852 = vmatprep.mubr.bf16.mxu0 0
      %2853 = vmatmul.mubr.bf16.gmra.mrb[0].mxu0 %v2679
      %v2854 = vpop.f32.mrb[0].mxu0
      %v2855 = vadd.f32 0.0, %v2854
      %v2856 = vpop.f32.mrb[0].mxu0
      %v2857 = vpop.f32.mrb[0].mxu0
      %v2858 = vadd.f32 0.0, %v2857
      %v2859 = vpop.f32.mrb[0].mxu0
      %2860 = vdwg.mxu0
      %v2861 = vadd.f32 %v2422, %v2719
      %v2862 = vadd.f32 %v2423, %v2722
      %v2863 = vadd.f32 %v2424, %v2727
      %v2864 = vadd.f32 %v2425, %v2730
      %v2865 = vadd.f32 %v2426, %v2735
      %v2866 = vadd.f32 %v2427, %v2738
      %v2867 = vadd.f32 %v2428, %v2743
      %v2868 = vadd.f32 %v2429, %v2746
      %v2869 = vadd.f32 %v2430, %v2751
      %v2870 = vadd.f32 %v2431, %v2754
      %v2871 = vadd.f32 %v2432, %v2759
      %v2872 = vadd.f32 %v2433, %v2762
      %v2873 = vadd.f32 %v2434, %v2767
      %v2874 = vadd.f32 %v2435, %v2770
      %v2875 = vadd.f32 %v2436, %v2775
      %v2876 = vadd.f32 %v2437, %v2778
      %v2877 = vadd.f32 %v2438, %v2783
      %v2878 = vadd.f32 %v2439, %v2786
      %v2879 = vadd.f32 %v2440, %v2791
      %v2880 = vadd.f32 %v2441, %v2794
      %v2881 = vadd.f32 %v2442, %v2799
      %v2882 = vadd.f32 %v2443, %v2802
      %v2883 = vadd.f32 %v2444, %v2807
      %v2884 = vadd.f32 %v2445, %v2810
      %v2885 = vadd.f32 %v2446, %v2815
      %v2886 = vadd.f32 %v2447, %v2818
      %v2887 = vadd.f32 %v2448, %v2823
      %v2888 = vadd.f32 %v2449, %v2826
      %v2889 = vadd.f32 %v2450, %v2831
      %v2890 = vadd.f32 %v2451, %v2834
      %v2891 = vadd.f32 %v2452, %v2839
      %v2892 = vadd.f32 %v2453, %v2842
      %v2893 = vadd.f32 %v2454, %v2847
      %v2894 = vadd.f32 %v2455, %v2850
      %v2895 = vadd.f32 %v2456, %v2855
      %v2896 = vadd.f32 %v2457, %v2858
      %v2897 = vld [vmem:[%s199 + $0xa0] sm:$0x7]
      %s2898 = scalar_lea.vmem %s1, 14
      %v2899 = vld [vmem:[%s2898] sm:$0x3]
      %v2901 = vunpack.c.l.b16 %v2897
      %v2902 = vpack.c.b16 %v2901, %v2901
      %vm2903 = vsmask.f32 5376
      %v2905 = vshrl.u32 %v2571, 16
      %v2907 = vrot.slane %v2905, 2
      %v2908 = vshll.u32 %v2571, 16
      %v2910 = vrot.slane %v2908, 3
      %v2911 = vor.u32 %v2907, %v2910
      %v2913 = vshrl.u32 %v2572, 16
      %v2915 = vrot.slane %v2913, 2
      %v2916 = vshll.u32 %v2572, 16
      %v2918 = vrot.slane %v2916, 3
      %v2919 = vor.u32 %v2915, %v2918
      %v2920 = vsel %vm2903, %v2911, %v2919
      %v2922 = vshrl.u32 %v2573, 16
      %v2924 = vrot.slane %v2922, 2
      %v2925 = vshll.u32 %v2573, 16
      %v2927 = vrot.slane %v2925, 3
      %v2928 = vor.u32 %v2924, %v2927
      %v2929 = vsel %vm2903, %v2919, %v2928
      %v2931 = vshrl.u32 %v2574, 16
      %v2933 = vrot.slane %v2931, 2
      %v2934 = vshll.u32 %v2574, 16
      %v2936 = vrot.slane %v2934, 3
      %v2937 = vor.u32 %v2933, %v2936
      %v2938 = vsel %vm2903, %v2928, %v2937
      %v2940 = vshrl.u32 %v2575, 16
      %v2942 = vrot.slane %v2940, 2
      %v2943 = vshll.u32 %v2575, 16
      %v2945 = vrot.slane %v2943, 3
      %v2946 = vor.u32 %v2942, %v2945
      %v2947 = vsel %vm2903, %v2937, %v2946
      %v2949 = vshrl.u32 %v2576, 16
      %v2951 = vrot.slane %v2949, 2
      %v2952 = vshll.u32 %v2576, 16
      %v2954 = vrot.slane %v2952, 3
      %v2955 = vor.u32 %v2951, %v2954
      %v2956 = vsel %vm2903, %v2946, %v2955
      %v2958 = vshrl.u32 %v2577, 16
      %v2960 = vrot.slane %v2958, 2
      %v2961 = vshll.u32 %v2577, 16
      %v2963 = vrot.slane %v2961, 3
      %v2964 = vor.u32 %v2960, %v2963
      %v2965 = vsel %vm2903, %v2955, %v2964
      %v2967 = vshrl.u32 %v2578, 16
      %v2969 = vrot.slane %v2967, 2
      %v2970 = vshll.u32 %v2578, 16
      %v2972 = vrot.slane %v2970, 3
      %v2973 = vor.u32 %v2969, %v2972
      %v2974 = vsel %vm2903, %v2964, %v2973
      %v2976 = vshrl.u32 %v2579, 16
      %v2978 = vrot.slane %v2976, 2
      %v2979 = vshll.u32 %v2579, 16
      %v2981 = vrot.slane %v2979, 3
      %v2982 = vor.u32 %v2978, %v2981
      %v2983 = vsel %vm2903, %v2973, %v2982
      %v2985 = vshrl.u32 %v2580, 16
      %v2987 = vrot.slane %v2985, 2
      %v2988 = vshll.u32 %v2580, 16
      %v2990 = vrot.slane %v2988, 3
      %v2991 = vor.u32 %v2987, %v2990
      %v2992 = vsel %vm2903, %v2982, %v2991
      %v2994 = vshrl.u32 %v2581, 16
      %v2996 = vrot.slane %v2994, 2
      %v2997 = vshll.u32 %v2581, 16
      %v2999 = vrot.slane %v2997, 3
      %v3000 = vor.u32 %v2996, %v2999
      %v3001 = vsel %vm2903, %v2991, %v3000
      %v3003 = vshrl.u32 %v2582, 16
      %v3005 = vrot.slane %v3003, 2
      %v3006 = vshll.u32 %v2582, 16
      %v3008 = vrot.slane %v3006, 3
      %v3009 = vor.u32 %v3005, %v3008
      %v3010 = vsel %vm2903, %v3000, %v3009
      %v3012 = vshrl.u32 %v2583, 16
      %v3014 = vrot.slane %v3012, 2
      %v3015 = vshll.u32 %v2583, 16
      %v3017 = vrot.slane %v3015, 3
      %v3018 = vor.u32 %v3014, %v3017
      %v3019 = vsel %vm2903, %v3009, %v3018
      %v3021 = vshrl.u32 %v2584, 16
      %v3023 = vrot.slane %v3021, 2
      %v3024 = vshll.u32 %v2584, 16
      %v3026 = vrot.slane %v3024, 3
      %v3027 = vor.u32 %v3023, %v3026
      %v3028 = vsel %vm2903, %v3018, %v3027
      %v3030 = vshrl.u32 %v2585, 16
      %v3032 = vrot.slane %v3030, 2
      %v3033 = vshll.u32 %v2585, 16
      %v3035 = vrot.slane %v3033, 3
      %v3036 = vor.u32 %v3032, %v3035
      %v3037 = vsel %vm2903, %v3027, %v3036
      %v3039 = vshrl.u32 %v2586, 16
      %v3041 = vrot.slane %v3039, 2
      %v3042 = vshll.u32 %v2586, 16
      %v3044 = vrot.slane %v3042, 3
      %v3045 = vor.u32 %v3041, %v3044
      %v3046 = vsel %vm2903, %v3036, %v3045
      %v3048 = vshrl.u32 %v2587, 16
      %v3050 = vrot.slane %v3048, 2
      %v3051 = vshll.u32 %v2587, 16
      %v3053 = vrot.slane %v3051, 3
      %v3054 = vor.u32 %v3050, %v3053
      %v3055 = vsel %vm2903, %v3045, %v3054
      %v3057 = vshrl.u32 %v2588, 16
      %v3059 = vrot.slane %v3057, 2
      %v3060 = vshll.u32 %v2588, 16
      %v3062 = vrot.slane %v3060, 3
      %v3063 = vor.u32 %v3059, %v3062
      %v3064 = vsel %vm2903, %v3054, %v3063
      %v3066 = vshrl.u32 %v2902, 16
      %v3068 = vrot.slane %v3066, 2
      %v3069 = vshll.u32 %v2902, 16
      %v3071 = vrot.slane %v3069, 3
      %v3072 = vor.u32 %v3068, %v3071
      %v3073 = vsel %vm2903, %v3063, %v3072
      %v3075 = vsel %vm492, %v2920, 0
      %v3078 = vsel %vm492, %v2929, 0
      %v3081 = vsel %vm492, %v2938, 0
      %v3084 = vsel %vm492, %v2947, 0
      %v3087 = vsel %vm492, %v2956, 0
      %v3090 = vsel %vm492, %v2965, 0
      %v3093 = vsel %vm492, %v2974, 0
      %v3096 = vsel %vm492, %v2983, 0
      %v3099 = vsel %vm492, %v2992, 0
      %v3102 = vsel %vm492, %v3001, 0
      %v3105 = vsel %vm492, %v3010, 0
      %v3108 = vsel %vm492, %v3019, 0
      %v3111 = vsel %vm492, %v3028, 0
      %v3114 = vsel %vm492, %v3037, 0
      %v3117 = vsel %vm492, %v3046, 0
      %v3120 = vsel %vm492, %v3055, 0
      %v3123 = vsel %vm492, %v3064, 0
      %v3126 = vsel %vm492, %v3073, 0
      %v3129 = vsel %vm547, %v2899, 0
      %3131 = vmatprep.subr.bf16.mxu0 0
      %3132 = vmatpush1.bf16.msra.mxu0 %v3129
      %3133 = vmatprep.subr.bf16.mxu0 0
      %3134 = vmatpush1.bf16.msra.mxu0 0
      %3135 = vmatprep.subr.bf16.mxu0 0
      %3136 = vmatpush1.bf16.msra.mxu0 0
      %3137 = vmatprep.subr.bf16.mxu0 0
      %3138 = vmatpush1.bf16.msra.mxu0 0
      %3139 = vmatprep.subr.bf16.mxu0 0
      %3140 = vmatpush1.bf16.msra.mxu0 0
      %3141 = vmatprep.subr.bf16.mxu0 0
      %3142 = vmatpush1.bf16.msra.mxu0 0
      %3143 = vmatprep.subr.bf16.mxu0 0
      %3144 = vmatpush1.bf16.msra.mxu0 0
      %3145 = vmatprep.subr.bf16.mxu0 0
      %3146 = vmatpush1.bf16.msra.mxu0 0
      %3147 = vmatprep.subr.bf16.mxu0 0
      %3148 = vmatpush1.bf16.msra.mxu0 0
      %3149 = vmatprep.subr.bf16.mxu0 0
      %3150 = vmatpush1.bf16.msra.mxu0 0
      %3151 = vmatprep.subr.bf16.mxu0 0
      %3152 = vmatpush1.bf16.msra.mxu0 0
      %3153 = vmatprep.subr.bf16.mxu0 0
      %3154 = vmatpush1.bf16.msra.mxu0 0
      %3155 = vmatprep.subr.bf16.mxu0 0
      %3156 = vmatpush1.bf16.msra.mxu0 0
      %3157 = vmatprep.subr.bf16.mxu0 0
      %3158 = vmatpush1.bf16.msra.mxu0 0
      %3159 = vmatprep.subr.bf16.mxu0 0
      %3160 = vmatpush1.bf16.msra.mxu0 0
      %3161 = vmatprep.subr.bf16.mxu0 0
      %3162 = vmatpush1.bf16.msra.mxu0 0
      %3163 = vmatprep.mubr.bf16.mxu0 0
      %3164 = vmatmul.mubr.bf16.gmra.mrb[0].mxu0 %v3075
      %v3165 = vpop.f32.mrb[0].mxu0
      %v3166 = vadd.f32 0.0, %v3165
      %v3167 = vpop.f32.mrb[0].mxu0
      %v3168 = vpop.f32.mrb[0].mxu0
      %v3169 = vadd.f32 0.0, %v3168
      %v3170 = vpop.f32.mrb[0].mxu0
      %3171 = vmatprep.mubr.bf16.mxu0 0
      %3172 = vmatmul.mubr.bf16.gmra.mrb[0].mxu0 %v3078
      %v3173 = vpop.f32.mrb[0].mxu0
      %v3174 = vadd.f32 0.0, %v3173
      %v3175 = vpop.f32.mrb[0].mxu0
      %v3176 = vpop.f32.mrb[0].mxu0
      %v3177 = vadd.f32 0.0, %v3176
      %v3178 = vpop.f32.mrb[0].mxu0
      %3179 = vmatprep.mubr.bf16.mxu0 0
      %3180 = vmatmul.mubr.bf16.gmra.mrb[0].mxu0 %v3081
      %v3181 = vpop.f32.mrb[0].mxu0
      %v3182 = vadd.f32 0.0, %v3181
      %v3183 = vpop.f32.mrb[0].mxu0
      %v3184 = vpop.f32.mrb[0].mxu0
      %v3185 = vadd.f32 0.0, %v3184
      %v3186 = vpop.f32.mrb[0].mxu0
      %3187 = vmatprep.mubr.bf16.mxu0 0
      %3188 = vmatmul.mubr.bf16.gmra.mrb[0].mxu0 %v3084
      %v3189 = vpop.f32.mrb[0].mxu0
      %v3190 = vadd.f32 0.0, %v3189
      %v3191 = vpop.f32.mrb[0].mxu0
      %v3192 = vpop.f32.mrb[0].mxu0
      %v3193 = vadd.f32 0.0, %v3192
      %v3194 = vpop.f32.mrb[0].mxu0
      %3195 = vmatprep.mubr.bf16.mxu0 0
      %3196 = vmatmul.mubr.bf16.gmra.mrb[0].mxu0 %v3087
      %v3197 = vpop.f32.mrb[0].mxu0
      %v3198 = vadd.f32 0.0, %v3197
      %v3199 = vpop.f32.mrb[0].mxu0
      %v3200 = vpop.f32.mrb[0].mxu0
      %v3201 = vadd.f32 0.0, %v3200
      %v3202 = vpop.f32.mrb[0].mxu0
      %3203 = vmatprep.mubr.bf16.mxu0 0
      %3204 = vmatmul.mubr.bf16.gmra.mrb[0].mxu0 %v3090
      %v3205 = vpop.f32.mrb[0].mxu0
      %v3206 = vadd.f32 0.0, %v3205
      %v3207 = vpop.f32.mrb[0].mxu0
      %v3208 = vpop.f32.mrb[0].mxu0
      %v3209 = vadd.f32 0.0, %v3208
      %v3210 = vpop.f32.mrb[0].mxu0
      %3211 = vmatprep.mubr.bf16.mxu0 0
      %3212 = vmatmul.mubr.bf16.gmra.mrb[0].mxu0 %v3093
      %v3213 = vpop.f32.mrb[0].mxu0
      %v3214 = vadd.f32 0.0, %v3213
      %v3215 = vpop.f32.mrb[0].mxu0
      %v3216 = vpop.f32.mrb[0].mxu0
      %v3217 = vadd.f32 0.0, %v3216
      %v3218 = vpop.f32.mrb[0].mxu0
      %3219 = vmatprep.mubr.bf16.mxu0 0
      %3220 = vmatmul.mubr.bf16.gmra.mrb[0].mxu0 %v3096
      %v3221 = vpop.f32.mrb[0].mxu0
      %v3222 = vadd.f32 0.0, %v3221
      %v3223 = vpop.f32.mrb[0].mxu0
      %v3224 = vpop.f32.mrb[0].mxu0
      %v3225 = vadd.f32 0.0, %v3224
      %v3226 = vpop.f32.mrb[0].mxu0
      %3227 = vmatprep.mubr.bf16.mxu0 0
      %3228 = vmatmul.mubr.bf16.gmra.mrb[0].mxu0 %v3099
      %v3229 = vpop.f32.mrb[0].mxu0
      %v3230 = vadd.f32 0.0, %v3229
      %v3231 = vpop.f32.mrb[0].mxu0
      %v3232 = vpop.f32.mrb[0].mxu0
      %v3233 = vadd.f32 0.0, %v3232
      %v3234 = vpop.f32.mrb[0].mxu0
      %3235 = vmatprep.mubr.bf16.mxu0 0
      %3236 = vmatmul.mubr.bf16.gmra.mrb[0].mxu0 %v3102
      %v3237 = vpop.f32.mrb[0].mxu0
      %v3238 = vadd.f32 0.0, %v3237
      %v3239 = vpop.f32.mrb[0].mxu0
      %v3240 = vpop.f32.mrb[0].mxu0
      %v3241 = vadd.f32 0.0, %v3240
      %v3242 = vpop.f32.mrb[0].mxu0
      %3243 = vmatprep.mubr.bf16.mxu0 0
      %3244 = vmatmul.mubr.bf16.gmra.mrb[0].mxu0 %v3105
      %v3245 = vpop.f32.mrb[0].mxu0
      %v3246 = vadd.f32 0.0, %v3245
      %v3247 = vpop.f32.mrb[0].mxu0
      %v3248 = vpop.f32.mrb[0].mxu0
      %v3249 = vadd.f32 0.0, %v3248
      %v3250 = vpop.f32.mrb[0].mxu0
      %3251 = vmatprep.mubr.bf16.mxu0 0
      %3252 = vmatmul.mubr.bf16.gmra.mrb[0].mxu0 %v3108
      %v3253 = vpop.f32.mrb[0].mxu0
      %v3254 = vadd.f32 0.0, %v3253
      %v3255 = vpop.f32.mrb[0].mxu0
      %v3256 = vpop.f32.mrb[0].mxu0
      %v3257 = vadd.f32 0.0, %v3256
      %v3258 = vpop.f32.mrb[0].mxu0
      %3259 = vmatprep.mubr.bf16.mxu0 0
      %3260 = vmatmul.mubr.bf16.gmra.mrb[0].mxu0 %v3111
      %v3261 = vpop.f32.mrb[0].mxu0
      %v3262 = vadd.f32 0.0, %v3261
      %v3263 = vpop.f32.mrb[0].mxu0
      %v3264 = vpop.f32.mrb[0].mxu0
      %v3265 = vadd.f32 0.0, %v3264
      %v3266 = vpop.f32.mrb[0].mxu0
      %3267 = vmatprep.mubr.bf16.mxu0 0
      %3268 = vmatmul.mubr.bf16.gmra.mrb[0].mxu0 %v3114
      %v3269 = vpop.f32.mrb[0].mxu0
      %v3270 = vadd.f32 0.0, %v3269
      %v3271 = vpop.f32.mrb[0].mxu0
      %v3272 = vpop.f32.mrb[0].mxu0
      %v3273 = vadd.f32 0.0, %v3272
      %v3274 = vpop.f32.mrb[0].mxu0
      %3275 = vmatprep.mubr.bf16.mxu0 0
      %3276 = vmatmul.mubr.bf16.gmra.mrb[0].mxu0 %v3117
      %v3277 = vpop.f32.mrb[0].mxu0
      %v3278 = vadd.f32 0.0, %v3277
      %v3279 = vpop.f32.mrb[0].mxu0
      %v3280 = vpop.f32.mrb[0].mxu0
      %v3281 = vadd.f32 0.0, %v3280
      %v3282 = vpop.f32.mrb[0].mxu0
      %3283 = vmatprep.mubr.bf16.mxu0 0
      %3284 = vmatmul.mubr.bf16.gmra.mrb[0].mxu0 %v3120
      %v3285 = vpop.f32.mrb[0].mxu0
      %v3286 = vadd.f32 0.0, %v3285
      %v3287 = vpop.f32.mrb[0].mxu0
      %v3288 = vpop.f32.mrb[0].mxu0
      %v3289 = vadd.f32 0.0, %v3288
      %v3290 = vpop.f32.mrb[0].mxu0
      %3291 = vmatprep.mubr.bf16.mxu0 0
      %3292 = vmatmul.mubr.bf16.gmra.mrb[0].mxu0 %v3123
      %v3293 = vpop.f32.mrb[0].mxu0
      %v3294 = vadd.f32 0.0, %v3293
      %v3295 = vpop.f32.mrb[0].mxu0
      %v3296 = vpop.f32.mrb[0].mxu0
      %v3297 = vadd.f32 0.0, %v3296
      %v3298 = vpop.f32.mrb[0].mxu0
      %3299 = vmatprep.mubr.bf16.mxu0 0
      %3300 = vmatmul.mubr.bf16.gmra.mrb[0].mxu0 %v3126
      %v3301 = vpop.f32.mrb[0].mxu0
      %v3302 = vadd.f32 0.0, %v3301
      %v3303 = vpop.f32.mrb[0].mxu0
      %v3304 = vpop.f32.mrb[0].mxu0
      %v3305 = vadd.f32 0.0, %v3304
      %v3306 = vpop.f32.mrb[0].mxu0
      %3307 = vdwg.mxu0
      %v3308 = vadd.f32 %v2861, %v3166
      %v3309 = vadd.f32 %v2862, %v3169
      %v3310 = vadd.f32 %v2863, %v3174
      %v3311 = vadd.f32 %v2864, %v3177
      %v3312 = vadd.f32 %v2865, %v3182
      %v3313 = vadd.f32 %v2866, %v3185
      %v3314 = vadd.f32 %v2867, %v3190
      %v3315 = vadd.f32 %v2868, %v3193
      %v3316 = vadd.f32 %v2869, %v3198
      %v3317 = vadd.f32 %v2870, %v3201
      %v3318 = vadd.f32 %v2871, %v3206
      %v3319 = vadd.f32 %v2872, %v3209
      %v3320 = vadd.f32 %v2873, %v3214
      %v3321 = vadd.f32 %v2874, %v3217
      %v3322 = vadd.f32 %v2875, %v3222
      %v3323 = vadd.f32 %v2876, %v3225
      %v3324 = vadd.f32 %v2877, %v3230
      %v3325 = vadd.f32 %v2878, %v3233
      %v3326 = vadd.f32 %v2879, %v3238
      %v3327 = vadd.f32 %v2880, %v3241
      %v3328 = vadd.f32 %v2881, %v3246
      %v3329 = vadd.f32 %v2882, %v3249
      %v3330 = vadd.f32 %v2883, %v3254
      %v3331 = vadd.f32 %v2884, %v3257
      %v3332 = vadd.f32 %v2885, %v3262
      %v3333 = vadd.f32 %v2886, %v3265
      %v3334 = vadd.f32 %v2887, %v3270
      %v3335 = vadd.f32 %v2888, %v3273
      %v3336 = vadd.f32 %v2889, %v3278
      %v3337 = vadd.f32 %v2890, %v3281
      %v3338 = vadd.f32 %v2891, %v3286
      %v3339 = vadd.f32 %v2892, %v3289
      %v3340 = vadd.f32 %v2893, %v3294
      %v3341 = vadd.f32 %v2894, %v3297
      %v3342 = vadd.f32 %v2895, %v3302
      %v3343 = vadd.f32 %v2896, %v3305
      %v3344 = vld [vmem:[%s199 + $0x10] sm:$0x8]
      %s3345 = scalar_lea.vmem %s1, 16
      %v3346 = vld [vmem:[%s3345] sm:$0x3]
      %v3348 = vunpack.c.l.b16 %v3344
      %v3349 = vpack.c.b16 %v2535, %v3348
      %vm3350 = vcmask 1044480
      %v3351 = vrot.slane %v3349, 3
      %v3352 = vrot.slane %v2572, 3
      %v3353 = vsel %vm3350, %v3351, %v3352
      %v3354 = vrot.slane %v2573, 3
      %v3355 = vsel %vm3350, %v3352, %v3354
      %v3356 = vrot.slane %v2574, 3
      %v3357 = vsel %vm3350, %v3354, %v3356
      %v3358 = vrot.slane %v2575, 3
      %v3359 = vsel %vm3350, %v3356, %v3358
      %v3360 = vrot.slane %v2576, 3
      %v3361 = vsel %vm3350, %v3358, %v3360
      %v3362 = vrot.slane %v2577, 3
      %v3363 = vsel %vm3350, %v3360, %v3362
      %v3364 = vrot.slane %v2578, 3
      %v3365 = vsel %vm3350, %v3362, %v3364
      %v3366 = vrot.slane %v2579, 3
      %v3367 = vsel %vm3350, %v3364, %v3366
      %v3368 = vrot.slane %v2580, 3
      %v3369 = vsel %vm3350, %v3366, %v3368
      %v3370 = vrot.slane %v2581, 3
      %v3371 = vsel %vm3350, %v3368, %v3370
      %v3372 = vrot.slane %v2582, 3
      %v3373 = vsel %vm3350, %v3370, %v3372
      %v3374 = vrot.slane %v2583, 3
      %v3375 = vsel %vm3350, %v3372, %v3374
      %v3376 = vrot.slane %v2584, 3
      %v3377 = vsel %vm3350, %v3374, %v3376
      %v3378 = vrot.slane %v2585, 3
      %v3379 = vsel %vm3350, %v3376, %v3378
      %v3380 = vrot.slane %v2586, 3
      %v3381 = vsel %vm3350, %v3378, %v3380
      %v3382 = vrot.slane %v2587, 3
      %v3383 = vsel %vm3350, %v3380, %v3382
      %v3384 = vrot.slane %v2588, 3
      %v3385 = vsel %vm3350, %v3382, %v3384
      %v3386 = vrot.slane %v2902, 3
      %v3387 = vsel %vm3350, %v3384, %v3386
      %v3389 = vsel %vm492, %v3353, 0
      %v3392 = vsel %vm492, %v3355, 0
      %v3395 = vsel %vm492, %v3357, 0
      %v3398 = vsel %vm492, %v3359, 0
      %v3401 = vsel %vm492, %v3361, 0
      %v3404 = vsel %vm492, %v3363, 0
      %v3407 = vsel %vm492, %v3365, 0
      %v3410 = vsel %vm492, %v3367, 0
      %v3413 = vsel %vm492, %v3369, 0
      %v3416 = vsel %vm492, %v3371, 0
      %v3419 = vsel %vm492, %v3373, 0
      %v3422 = vsel %vm492, %v3375, 0
      %v3425 = vsel %vm492, %v3377, 0
      %v3428 = vsel %vm492, %v3379, 0
      %v3431 = vsel %vm492, %v3381, 0
      %v3434 = vsel %vm492, %v3383, 0
      %v3437 = vsel %vm492, %v3385, 0
      %v3440 = vsel %vm492, %v3387, 0
      %v3443 = vsel %vm547, %v3346, 0
      %3445 = vmatprep.subr.bf16.mxu0 0
      %3446 = vmatpush1.bf16.msra.mxu0 %v3443
      %3447 = vmatprep.subr.bf16.mxu0 0
      %3448 = vmatpush1.bf16.msra.mxu0 0
      %3449 = vmatprep.subr.bf16.mxu0 0
      %3450 = vmatpush1.bf16.msra.mxu0 0
      %3451 = vmatprep.subr.bf16.mxu0 0
      %3452 = vmatpush1.bf16.msra.mxu0 0
      %3453 = vmatprep.subr.bf16.mxu0 0
      %3454 = vmatpush1.bf16.msra.mxu0 0
      %3455 = vmatprep.subr.bf16.mxu0 0
      %3456 = vmatpush1.bf16.msra.mxu0 0
      %3457 = vmatprep.subr.bf16.mxu0 0
      %3458 = vmatpush1.bf16.msra.mxu0 0
      %3459 = vmatprep.subr.bf16.mxu0 0
      %3460 = vmatpush1.bf16.msra.mxu0 0
      %3461 = vmatprep.subr.bf16.mxu0 0
      %3462 = vmatpush1.bf16.msra.mxu0 0
      %3463 = vmatprep.subr.bf16.mxu0 0
      %3464 = vmatpush1.bf16.msra.mxu0 0
      %3465 = vmatprep.subr.bf16.mxu0 0
      %3466 = vmatpush1.bf16.msra.mxu0 0
      %3467 = vmatprep.subr.bf16.mxu0 0
      %3468 = vmatpush1.bf16.msra.mxu0 0
      %3469 = vmatprep.subr.bf16.mxu0 0
      %3470 = vmatpush1.bf16.msra.mxu0 0
      %3471 = vmatprep.subr.bf16.mxu0 0
      %3472 = vmatpush1.bf16.msra.mxu0 0
      %3473 = vmatprep.subr.bf16.mxu0 0
      %3474 = vmatpush1.bf16.msra.mxu0 0
      %3475 = vmatprep.subr.bf16.mxu0 0
      %3476 = vmatpush1.bf16.msra.mxu0 0
      %3477 = vmatprep.mubr.bf16.mxu0 0
      %3478 = vmatmul.mubr.bf16.gmra.mrb[0].mxu0 %v3389
      %v3479 = vpop.f32.mrb[0].mxu0
      %v3480 = vadd.f32 0.0, %v3479
      %v3481 = vpop.f32.mrb[0].mxu0
      %v3482 = vpop.f32.mrb[0].mxu0
      %v3483 = vadd.f32 0.0, %v3482
      %v3484 = vpop.f32.mrb[0].mxu0
      %3485 = vmatprep.mubr.bf16.mxu0 0
      %3486 = vmatmul.mubr.bf16.gmra.mrb[0].mxu0 %v3392
      %v3487 = vpop.f32.mrb[0].mxu0
      %v3488 = vadd.f32 0.0, %v3487
      %v3489 = vpop.f32.mrb[0].mxu0
      %v3490 = vpop.f32.mrb[0].mxu0
      %v3491 = vadd.f32 0.0, %v3490
      %v3492 = vpop.f32.mrb[0].mxu0
      %3493 = vmatprep.mubr.bf16.mxu0 0
      %3494 = vmatmul.mubr.bf16.gmra.mrb[0].mxu0 %v3395
      %v3495 = vpop.f32.mrb[0].mxu0
      %v3496 = vadd.f32 0.0, %v3495
      %v3497 = vpop.f32.mrb[0].mxu0
      %v3498 = vpop.f32.mrb[0].mxu0
      %v3499 = vadd.f32 0.0, %v3498
      %v3500 = vpop.f32.mrb[0].mxu0
      %3501 = vmatprep.mubr.bf16.mxu0 0
      %3502 = vmatmul.mubr.bf16.gmra.mrb[0].mxu0 %v3398
      %v3503 = vpop.f32.mrb[0].mxu0
      %v3504 = vadd.f32 0.0, %v3503
      %v3505 = vpop.f32.mrb[0].mxu0
      %v3506 = vpop.f32.mrb[0].mxu0
      %v3507 = vadd.f32 0.0, %v3506
      %v3508 = vpop.f32.mrb[0].mxu0
      %3509 = vmatprep.mubr.bf16.mxu0 0
      %3510 = vmatmul.mubr.bf16.gmra.mrb[0].mxu0 %v3401
      %v3511 = vpop.f32.mrb[0].mxu0
      %v3512 = vadd.f32 0.0, %v3511
      %v3513 = vpop.f32.mrb[0].mxu0
      %v3514 = vpop.f32.mrb[0].mxu0
      %v3515 = vadd.f32 0.0, %v3514
      %v3516 = vpop.f32.mrb[0].mxu0
      %3517 = vmatprep.mubr.bf16.mxu0 0
      %3518 = vmatmul.mubr.bf16.gmra.mrb[0].mxu0 %v3404
      %v3519 = vpop.f32.mrb[0].mxu0
      %v3520 = vadd.f32 0.0, %v3519
      %v3521 = vpop.f32.mrb[0].mxu0
      %v3522 = vpop.f32.mrb[0].mxu0
      %v3523 = vadd.f32 0.0, %v3522
      %v3524 = vpop.f32.mrb[0].mxu0
      %3525 = vmatprep.mubr.bf16.mxu0 0
      %3526 = vmatmul.mubr.bf16.gmra.mrb[0].mxu0 %v3407
      %v3527 = vpop.f32.mrb[0].mxu0
      %v3528 = vadd.f32 0.0, %v3527
      %v3529 = vpop.f32.mrb[0].mxu0
      %v3530 = vpop.f32.mrb[0].mxu0
      %v3531 = vadd.f32 0.0, %v3530
      %v3532 = vpop.f32.mrb[0].mxu0
      %3533 = vmatprep.mubr.bf16.mxu0 0
      %3534 = vmatmul.mubr.bf16.gmra.mrb[0].mxu0 %v3410
      %v3535 = vpop.f32.mrb[0].mxu0
      %v3536 = vadd.f32 0.0, %v3535
      %v3537 = vpop.f32.mrb[0].mxu0
      %v3538 = vpop.f32.mrb[0].mxu0
      %v3539 = vadd.f32 0.0, %v3538
      %v3540 = vpop.f32.mrb[0].mxu0
      %3541 = vmatprep.mubr.bf16.mxu0 0
      %3542 = vmatmul.mubr.bf16.gmra.mrb[0].mxu0 %v3413
      %v3543 = vpop.f32.mrb[0].mxu0
      %v3544 = vadd.f32 0.0, %v3543
      %v3545 = vpop.f32.mrb[0].mxu0
      %v3546 = vpop.f32.mrb[0].mxu0
      %v3547 = vadd.f32 0.0, %v3546
      %v3548 = vpop.f32.mrb[0].mxu0
      %3549 = vmatprep.mubr.bf16.mxu0 0
      %3550 = vmatmul.mubr.bf16.gmra.mrb[0].mxu0 %v3416
      %v3551 = vpop.f32.mrb[0].mxu0
      %v3552 = vadd.f32 0.0, %v3551
      %v3553 = vpop.f32.mrb[0].mxu0
      %v3554 = vpop.f32.mrb[0].mxu0
      %v3555 = vadd.f32 0.0, %v3554
      %v3556 = vpop.f32.mrb[0].mxu0
      %3557 = vmatprep.mubr.bf16.mxu0 0
      %3558 = vmatmul.mubr.bf16.gmra.mrb[0].mxu0 %v3419
      %v3559 = vpop.f32.mrb[0].mxu0
      %v3560 = vadd.f32 0.0, %v3559
      %v3561 = vpop.f32.mrb[0].mxu0
      %v3562 = vpop.f32.mrb[0].mxu0
      %v3563 = vadd.f32 0.0, %v3562
      %v3564 = vpop.f32.mrb[0].mxu0
      %3565 = vmatprep.mubr.bf16.mxu0 0
      %3566 = vmatmul.mubr.bf16.gmra.mrb[0].mxu0 %v3422
      %v3567 = vpop.f32.mrb[0].mxu0
      %v3568 = vadd.f32 0.0, %v3567
      %v3569 = vpop.f32.mrb[0].mxu0
      %v3570 = vpop.f32.mrb[0].mxu0
      %v3571 = vadd.f32 0.0, %v3570
      %v3572 = vpop.f32.mrb[0].mxu0
      %3573 = vmatprep.mubr.bf16.mxu0 0
      %3574 = vmatmul.mubr.bf16.gmra.mrb[0].mxu0 %v3425
      %v3575 = vpop.f32.mrb[0].mxu0
      %v3576 = vadd.f32 0.0, %v3575
      %v3577 = vpop.f32.mrb[0].mxu0
      %v3578 = vpop.f32.mrb[0].mxu0
      %v3579 = vadd.f32 0.0, %v3578
      %v3580 = vpop.f32.mrb[0].mxu0
      %3581 = vmatprep.mubr.bf16.mxu0 0
      %3582 = vmatmul.mubr.bf16.gmra.mrb[0].mxu0 %v3428
      %v3583 = vpop.f32.mrb[0].mxu0
      %v3584 = vadd.f32 0.0, %v3583
      %v3585 = vpop.f32.mrb[0].mxu0
      %v3586 = vpop.f32.mrb[0].mxu0
      %v3587 = vadd.f32 0.0, %v3586
      %v3588 = vpop.f32.mrb[0].mxu0
      %3589 = vmatprep.mubr.bf16.mxu0 0
      %3590 = vmatmul.mubr.bf16.gmra.mrb[0].mxu0 %v3431
      %v3591 = vpop.f32.mrb[0].mxu0
      %v3592 = vadd.f32 0.0, %v3591
      %v3593 = vpop.f32.mrb[0].mxu0
      %v3594 = vpop.f32.mrb[0].mxu0
      %v3595 = vadd.f32 0.0, %v3594
      %v3596 = vpop.f32.mrb[0].mxu0
      %3597 = vmatprep.mubr.bf16.mxu0 0
      %3598 = vmatmul.mubr.bf16.gmra.mrb[0].mxu0 %v3434
      %v3599 = vpop.f32.mrb[0].mxu0
      %v3600 = vadd.f32 0.0, %v3599
      %v3601 = vpop.f32.mrb[0].mxu0
      %v3602 = vpop.f32.mrb[0].mxu0
      %v3603 = vadd.f32 0.0, %v3602
      %v3604 = vpop.f32.mrb[0].mxu0
      %3605 = vmatprep.mubr.bf16.mxu0 0
      %3606 = vmatmul.mubr.bf16.gmra.mrb[0].mxu0 %v3437
      %v3607 = vpop.f32.mrb[0].mxu0
      %v3608 = vadd.f32 0.0, %v3607
      %v3609 = vpop.f32.mrb[0].mxu0
      %v3610 = vpop.f32.mrb[0].mxu0
      %v3611 = vadd.f32 0.0, %v3610
      %v3612 = vpop.f32.mrb[0].mxu0
      %3613 = vmatprep.mubr.bf16.mxu0 0
      %3614 = vmatmul.mubr.bf16.gmra.mrb[0].mxu0 %v3440
      %v3615 = vpop.f32.mrb[0].mxu0
      %v3616 = vadd.f32 0.0, %v3615
      %v3617 = vpop.f32.mrb[0].mxu0
      %v3618 = vpop.f32.mrb[0].mxu0
      %v3619 = vadd.f32 0.0, %v3618
      %v3620 = vpop.f32.mrb[0].mxu0
      %3621 = vdwg.mxu0
      %v3622 = vadd.f32 %v3308, %v3480
      %v3623 = vadd.f32 %v3309, %v3483
      %v3624 = vadd.f32 %v3310, %v3488
      %v3625 = vadd.f32 %v3311, %v3491
      %v3626 = vadd.f32 %v3312, %v3496
      %v3627 = vadd.f32 %v3313, %v3499
      %v3628 = vadd.f32 %v3314, %v3504
      %v3629 = vadd.f32 %v3315, %v3507
      %v3630 = vadd.f32 %v3316, %v3512
      %v3631 = vadd.f32 %v3317, %v3515
      %v3632 = vadd.f32 %v3318, %v3520
      %v3633 = vadd.f32 %v3319, %v3523
      %v3634 = vadd.f32 %v3320, %v3528
      %v3635 = vadd.f32 %v3321, %v3531
      %v3636 = vadd.f32 %v3322, %v3536
      %v3637 = vadd.f32 %v3323, %v3539
      %v3638 = vadd.f32 %v3324, %v3544
      %v3639 = vadd.f32 %v3325, %v3547
      %v3640 = vadd.f32 %v3326, %v3552
      %v3641 = vadd.f32 %v3327, %v3555
      %v3642 = vadd.f32 %v3328, %v3560
      %v3643 = vadd.f32 %v3329, %v3563
      %v3644 = vadd.f32 %v3330, %v3568
      %v3645 = vadd.f32 %v3331, %v3571
      %v3646 = vadd.f32 %v3332, %v3576
      %v3647 = vadd.f32 %v3333, %v3579
      %v3648 = vadd.f32 %v3334, %v3584
      %v3649 = vadd.f32 %v3335, %v3587
      %v3650 = vadd.f32 %v3336, %v3592
      %v3651 = vadd.f32 %v3337, %v3595
      %v3652 = vadd.f32 %v3338, %v3600
      %v3653 = vadd.f32 %v3339, %v3603
      %v3654 = vadd.f32 %v3340, %v3608
      %v3655 = vadd.f32 %v3341, %v3611
      %v3656 = vadd.f32 %v3342, %v3616
      %v3657 = vadd.f32 %v3343, %v3619
      %v3658 = vpack.c.bf16 %v3623, %v3622
      %v3659 = vpack.c.bf16 %v3625, %v3624
      %v3660 = vpack.c.bf16 %v3627, %v3626
      %v3661 = vpack.c.bf16 %v3629, %v3628
      %v3662 = vpack.c.bf16 %v3631, %v3630
      %v3663 = vpack.c.bf16 %v3633, %v3632
      %v3664 = vpack.c.bf16 %v3635, %v3634
      %v3665 = vpack.c.bf16 %v3637, %v3636
      %v3666 = vpack.c.bf16 %v3639, %v3638
      %v3667 = vpack.c.bf16 %v3641, %v3640
      %v3668 = vpack.c.bf16 %v3643, %v3642
      %v3669 = vpack.c.bf16 %v3645, %v3644
      %v3670 = vpack.c.bf16 %v3647, %v3646
      %v3671 = vpack.c.bf16 %v3649, %v3648
      %v3672 = vpack.c.bf16 %v3651, %v3650
      %v3673 = vpack.c.bf16 %v3653, %v3652
      %v3674 = vpack.c.bf16 %v3655, %v3654
      %v3675 = vpack.c.bf16 %v3657, %v3656
      %v3694 = vunpack.c.l.b16 %v3658
      %v3695 = vunpack.c.h.b16 %v3658
      %v3696 = vunpack.c.l.b16 %v3659
      %v3697 = vunpack.c.h.b16 %v3659
      %v3698 = vunpack.c.l.b16 %v3660
      %v3699 = vunpack.c.h.b16 %v3660
      %v3700 = vunpack.c.l.b16 %v3661
      %v3701 = vunpack.c.h.b16 %v3661
      %v3702 = vunpack.c.l.b16 %v3662
      %v3703 = vunpack.c.h.b16 %v3662
      %v3704 = vunpack.c.l.b16 %v3663
      %v3705 = vunpack.c.h.b16 %v3663
      %v3706 = vunpack.c.l.b16 %v3664
      %v3707 = vunpack.c.h.b16 %v3664
      %v3708 = vunpack.c.l.b16 %v3665
      %v3709 = vunpack.c.h.b16 %v3665
      %v3710 = vunpack.c.l.b16 %v3666
      %v3711 = vunpack.c.h.b16 %v3666
      %v3712 = vunpack.c.l.b16 %v3667
      %v3713 = vunpack.c.h.b16 %v3667
      %v3714 = vunpack.c.l.b16 %v3668
      %v3715 = vunpack.c.h.b16 %v3668
      %v3716 = vunpack.c.l.b16 %v3669
      %v3717 = vunpack.c.h.b16 %v3669
      %v3718 = vunpack.c.l.b16 %v3670
      %v3719 = vunpack.c.h.b16 %v3670
      %v3720 = vunpack.c.l.b16 %v3671
      %v3721 = vunpack.c.h.b16 %v3671
      %v3722 = vunpack.c.l.b16 %v3672
      %v3723 = vunpack.c.h.b16 %v3672
      %v3724 = vunpack.c.l.b16 %v3673
      %v3725 = vunpack.c.h.b16 %v3673
      %v3726 = vunpack.c.l.b16 %v3674
      %v3727 = vunpack.c.h.b16 %v3674
      %v3728 = vunpack.c.l.b16 %v3675
      %v3729 = vunpack.c.h.b16 %v3675
      %v3730 = vpack.c.b16 %v3694, %v3694
      %v3731 = vpack.c.b16 %v3695, %v3695
      %v3732 = vpack.c.b16 %v3696, %v3696
      %v3733 = vpack.c.b16 %v3697, %v3697
      %v3734 = vpack.c.b16 %v3698, %v3698
      %v3735 = vpack.c.b16 %v3699, %v3699
      %v3736 = vpack.c.b16 %v3700, %v3700
      %v3737 = vpack.c.b16 %v3701, %v3701
      %v3738 = vpack.c.b16 %v3702, %v3702
      %v3739 = vpack.c.b16 %v3703, %v3703
      %v3740 = vpack.c.b16 %v3704, %v3704
      %v3741 = vpack.c.b16 %v3705, %v3705
      %v3742 = vpack.c.b16 %v3706, %v3706
      %v3743 = vpack.c.b16 %v3707, %v3707
      %v3744 = vpack.c.b16 %v3708, %v3708
      %v3745 = vpack.c.b16 %v3709, %v3709
      %v3746 = vpack.c.b16 %v3710, %v3710
      %v3747 = vpack.c.b16 %v3711, %v3711
      %v3748 = vpack.c.b16 %v3712, %v3712
      %v3749 = vpack.c.b16 %v3713, %v3713
      %v3750 = vpack.c.b16 %v3714, %v3714
      %v3751 = vpack.c.b16 %v3715, %v3715
      %v3752 = vpack.c.b16 %v3716, %v3716
      %v3753 = vpack.c.b16 %v3717, %v3717
      %v3754 = vpack.c.b16 %v3718, %v3718
      %v3755 = vpack.c.b16 %v3719, %v3719
      %v3756 = vpack.c.b16 %v3720, %v3720
      %v3757 = vpack.c.b16 %v3721, %v3721
      %v3758 = vpack.c.b16 %v3722, %v3722
      %v3759 = vpack.c.b16 %v3723, %v3723
      %v3760 = vpack.c.b16 %v3724, %v3724
      %v3761 = vpack.c.b16 %v3725, %v3725
      %v3762 = vpack.c.b16 %v3726, %v3726
      %v3763 = vpack.c.b16 %v3727, %v3727
      %v3764 = vpack.c.b16 %v3728, %v3728
      %v3765 = vpack.c.b16 %v3729, %v3729
      %3802 = vst [vmem:[%s204] sm:$0xf] %v3730
      %3803 = vst [vmem:[%s204 + $0x4] sm:$0xf] %v3731
      %3804 = vst [vmem:[%s204 + $0x8] sm:$0xf] %v3732
      %3805 = vst [vmem:[%s204 + $0xc] sm:$0xf] %v3733
      %3806 = vst [vmem:[%s204 + $0x10] sm:$0xf] %v3734
      %3807 = vst [vmem:[%s204 + $0x14] sm:$0xf] %v3735
      %3808 = vst [vmem:[%s204 + $0x18] sm:$0xf] %v3736
      %3809 = vst [vmem:[%s204 + $0x1c] sm:$0xf] %v3737
      %3810 = vst [vmem:[%s204 + $0x20] sm:$0xf] %v3738
      %3811 = vst [vmem:[%s204 + $0x24] sm:$0xf] %v3739
      %3812 = vst [vmem:[%s204 + $0x28] sm:$0xf] %v3740
      %3813 = vst [vmem:[%s204 + $0x2c] sm:$0xf] %v3741
      %3814 = vst [vmem:[%s204 + $0x30] sm:$0xf] %v3742
      %3815 = vst [vmem:[%s204 + $0x34] sm:$0xf] %v3743
      %3816 = vst [vmem:[%s204 + $0x38] sm:$0xf] %v3744
      %3817 = vst [vmem:[%s204 + $0x3c] sm:$0xf] %v3745
      %3818 = vst [vmem:[%s204 + $0x40] sm:$0xf] %v3746
      %3819 = vst [vmem:[%s204 + $0x44] sm:$0xf] %v3747
      %3820 = vst [vmem:[%s204 + $0x48] sm:$0xf] %v3748
      %3821 = vst [vmem:[%s204 + $0x4c] sm:$0xf] %v3749
      %3822 = vst [vmem:[%s204 + $0x50] sm:$0xf] %v3750
      %3823 = vst [vmem:[%s204 + $0x54] sm:$0xf] %v3751
      %3824 = vst [vmem:[%s204 + $0x58] sm:$0xf] %v3752
      %3825 = vst [vmem:[%s204 + $0x5c] sm:$0xf] %v3753
      %3826 = vst [vmem:[%s204 + $0x60] sm:$0xf] %v3754
      %3827 = vst [vmem:[%s204 + $0x64] sm:$0xf] %v3755
      %3828 = vst [vmem:[%s204 + $0x68] sm:$0xf] %v3756
      %3829 = vst [vmem:[%s204 + $0x6c] sm:$0xf] %v3757
      %3830 = vst [vmem:[%s204 + $0x70] sm:$0xf] %v3758
      %3831 = vst [vmem:[%s204 + $0x74] sm:$0xf] %v3759
      %3832 = vst [vmem:[%s204 + $0x78] sm:$0xf] %v3760
      %3833 = vst [vmem:[%s204 + $0x7c] sm:$0xf] %v3761
      %3834 = vst [vmem:[%s204 + $0x80] sm:$0xf] %v3762
      %3835 = vst [vmem:[%s204 + $0x84] sm:$0xf] %v3763
      %3836 = vst [vmem:[%s204 + $0x88] sm:$0xf] %v3764
      %3837 = vst [vmem:[%s204 + $0x8c] sm:$0xf] %v3765
      %v3838 = vld [vmem:[%s2] sm:$0xff]
      %v3839 = vld [vmem:[%s2 + $0x8] sm:$0xff]
      %v3840 = vld [vmem:[%s2 + $0x10] sm:$0xff]
      %v3841 = vld [vmem:[%s2 + $0x18] sm:$0xff]
      %v3842 = vld [vmem:[%s2 + $0x20] sm:$0xff]
      %v3843 = vld [vmem:[%s2 + $0x28] sm:$0xff]
      %v3844 = vld [vmem:[%s2 + $0x30] sm:$0xff]
      %v3845 = vld [vmem:[%s2 + $0x38] sm:$0xff]
      %v3846 = vld [vmem:[%s2 + $0x40] sm:$0xff]
      %v3847 = vld [vmem:[%s2 + $0x48] sm:$0xff]
      %v3848 = vld [vmem:[%s2 + $0x50] sm:$0xff]
      %v3849 = vld [vmem:[%s2 + $0x58] sm:$0xff]
      %v3850 = vld [vmem:[%s2 + $0x60] sm:$0xff]
      %v3851 = vld [vmem:[%s2 + $0x68] sm:$0xff]
      %v3852 = vld [vmem:[%s2 + $0x70] sm:$0xff]
      %v3853 = vld [vmem:[%s2 + $0x78] sm:$0xff]
      %v3854 = vld [vmem:[%s2 + $0x80] sm:$0xff]
      %v3855 = vld [vmem:[%s2 + $0x88] sm:$0xff]
      %v3856 = vld [vmem:[%s2 + $0x90] sm:$0xff]
      %v3857 = vld [vmem:[%s2 + $0x98] sm:$0xff]
      %v3858 = vld [vmem:[%s2 + $0xa0] sm:$0xff]
      %v3859 = vld [vmem:[%s2 + $0xa8] sm:$0xff]
      %v3860 = vld [vmem:[%s2 + $0xb0] sm:$0xff]
      %v3861 = vld [vmem:[%s2 + $0xb8] sm:$0xff]
      %v3862 = vld [vmem:[%s2 + $0xc0] sm:$0xff]
      %v3863 = vld [vmem:[%s2 + $0xc8] sm:$0xff]
      %v3864 = vld [vmem:[%s2 + $0xd0] sm:$0xff]
      %v3865 = vld [vmem:[%s2 + $0xd8] sm:$0xff]
      %v3866 = vld [vmem:[%s2 + $0xe0] sm:$0xff]
      %v3867 = vld [vmem:[%s2 + $0xe8] sm:$0xff]
      %v3868 = vld [vmem:[%s2 + $0xf0] sm:$0xff]
      %v3869 = vld [vmem:[%s2 + $0xf8] sm:$0xff]
      %v3870 = vld [vmem:[%s2 + $0x100] sm:$0xff]
      %v3871 = vld [vmem:[%s2 + $0x108] sm:$0xff]
      %v3872 = vld [vmem:[%s2 + $0x110] sm:$0xff]
      %v3873 = vld [vmem:[%s2 + $0x118] sm:$0xff]
      %3875 = vset.pattern.permute.xlu0 0
      %3876 = vperm.xlu0 %3875, %v3838
      %v3877 = vpop.permute.xlu0 %3876
      %3880 = vset.pattern.permute.xlu0 0
      %3881 = vperm.xlu0 %3880, %v3839
      %v3882 = vpop.permute.xlu0 %3881
      %3885 = vset.pattern.permute.xlu0 0
      %3886 = vperm.xlu0 %3885, %v3840
      %v3887 = vpop.permute.xlu0 %3886
      %3890 = vset.pattern.permute.xlu0 0
      %3891 = vperm.xlu0 %3890, %v3841
      %v3892 = vpop.permute.xlu0 %3891
      %3895 = vset.pattern.permute.xlu0 0
      %3896 = vperm.xlu0 %3895, %v3842
      %v3897 = vpop.permute.xlu0 %3896
      %3900 = vset.pattern.permute.xlu0 0
      %3901 = vperm.xlu0 %3900, %v3843
      %v3902 = vpop.permute.xlu0 %3901
      %3905 = vset.pattern.permute.xlu0 0
      %3906 = vperm.xlu0 %3905, %v3844
      %v3907 = vpop.permute.xlu0 %3906
      %3910 = vset.pattern.permute.xlu0 0
      %3911 = vperm.xlu0 %3910, %v3845
      %v3912 = vpop.permute.xlu0 %3911
      %3915 = vset.pattern.permute.xlu0 0
      %3916 = vperm.xlu0 %3915, %v3846
      %v3917 = vpop.permute.xlu0 %3916
      %3920 = vset.pattern.permute.xlu0 0
      %3921 = vperm.xlu0 %3920, %v3847
      %v3922 = vpop.permute.xlu0 %3921
      %3925 = vset.pattern.permute.xlu0 0
      %3926 = vperm.xlu0 %3925, %v3848
      %v3927 = vpop.permute.xlu0 %3926
      %3930 = vset.pattern.permute.xlu0 0
      %3931 = vperm.xlu0 %3930, %v3849
      %v3932 = vpop.permute.xlu0 %3931
      %3935 = vset.pattern.permute.xlu0 0
      %3936 = vperm.xlu0 %3935, %v3850
      %v3937 = vpop.permute.xlu0 %3936
      %3940 = vset.pattern.permute.xlu0 0
      %3941 = vperm.xlu0 %3940, %v3851
      %v3942 = vpop.permute.xlu0 %3941
      %3945 = vset.pattern.permute.xlu0 0
      %3946 = vperm.xlu0 %3945, %v3852
      %v3947 = vpop.permute.xlu0 %3946
      %3950 = vset.pattern.permute.xlu0 0
      %3951 = vperm.xlu0 %3950, %v3853
      %v3952 = vpop.permute.xlu0 %3951
      %3955 = vset.pattern.permute.xlu0 0
      %3956 = vperm.xlu0 %3955, %v3854
      %v3957 = vpop.permute.xlu0 %3956
      %3960 = vset.pattern.permute.xlu0 0
      %3961 = vperm.xlu0 %3960, %v3855
      %v3962 = vpop.permute.xlu0 %3961
      %3965 = vset.pattern.permute.xlu0 0
      %3966 = vperm.xlu0 %3965, %v3856
      %v3967 = vpop.permute.xlu0 %3966
      %3970 = vset.pattern.permute.xlu0 0
      %3971 = vperm.xlu0 %3970, %v3857
      %v3972 = vpop.permute.xlu0 %3971
      %3975 = vset.pattern.permute.xlu0 0
      %3976 = vperm.xlu0 %3975, %v3858
      %v3977 = vpop.permute.xlu0 %3976
      %3980 = vset.pattern.permute.xlu0 0
      %3981 = vperm.xlu0 %3980, %v3859
      %v3982 = vpop.permute.xlu0 %3981
      %3985 = vset.pattern.permute.xlu0 0
      %3986 = vperm.xlu0 %3985, %v3860
      %v3987 = vpop.permute.xlu0 %3986
      %3990 = vset.pattern.permute.xlu0 0
      %3991 = vperm.xlu0 %3990, %v3861
      %v3992 = vpop.permute.xlu0 %3991
      %3995 = vset.pattern.permute.xlu0 0
      %3996 = vperm.xlu0 %3995, %v3862
      %v3997 = vpop.permute.xlu0 %3996
      %4000 = vset.pattern.permute.xlu0 0
      %4001 = vperm.xlu0 %4000, %v3863
      %v4002 = vpop.permute.xlu0 %4001
      %4005 = vset.pattern.permute.xlu0 0
      %4006 = vperm.xlu0 %4005, %v3864
      %v4007 = vpop.permute.xlu0 %4006
      %4010 = vset.pattern.permute.xlu0 0
      %4011 = vperm.xlu0 %4010, %v3865
      %v4012 = vpop.permute.xlu0 %4011
      %4015 = vset.pattern.permute.xlu0 0
      %4016 = vperm.xlu0 %4015, %v3866
      %v4017 = vpop.permute.xlu0 %4016
      %4020 = vset.pattern.permute.xlu0 0
      %4021 = vperm.xlu0 %4020, %v3867
      %v4022 = vpop.permute.xlu0 %4021
      %4025 = vset.pattern.permute.xlu0 0
      %4026 = vperm.xlu0 %4025, %v3868
      %v4027 = vpop.permute.xlu0 %4026
      %4030 = vset.pattern.permute.xlu0 0
      %4031 = vperm.xlu0 %4030, %v3869
      %v4032 = vpop.permute.xlu0 %4031
      %4035 = vset.pattern.permute.xlu0 0
      %4036 = vperm.xlu0 %4035, %v3870
      %v4037 = vpop.permute.xlu0 %4036
      %4040 = vset.pattern.permute.xlu0 0
      %4041 = vperm.xlu0 %4040, %v3871
      %v4042 = vpop.permute.xlu0 %4041
      %4045 = vset.pattern.permute.xlu0 0
      %4046 = vperm.xlu0 %4045, %v3872
      %v4047 = vpop.permute.xlu0 %4046
      %4050 = vset.pattern.permute.xlu0 0
      %4051 = vperm.xlu0 %4050, %v3873
      %v4052 = vpop.permute.xlu0 %4051
      %v4054 = vmul.f32 %v3622, %v3877
      %v4055 = vmul.f32 %v3623, %v3882
      %v4056 = vmul.f32 %v3624, %v3887
      %v4057 = vmul.f32 %v3625, %v3892
      %v4058 = vmul.f32 %v3626, %v3897
      %v4059 = vmul.f32 %v3627, %v3902
      %v4060 = vmul.f32 %v3628, %v3907
      %v4061 = vmul.f32 %v3629, %v3912
      %v4062 = vmul.f32 %v3630, %v3917
      %v4063 = vmul.f32 %v3631, %v3922
      %v4064 = vmul.f32 %v3632, %v3927
      %v4065 = vmul.f32 %v3633, %v3932
      %v4066 = vmul.f32 %v3634, %v3937
      %v4067 = vmul.f32 %v3635, %v3942
      %v4068 = vmul.f32 %v3636, %v3947
      %v4069 = vmul.f32 %v3637, %v3952
      %v4070 = vmul.f32 %v3638, %v3957
      %v4071 = vmul.f32 %v3639, %v3962
      %v4072 = vmul.f32 %v3640, %v3967
      %v4073 = vmul.f32 %v3641, %v3972
      %v4074 = vmul.f32 %v3642, %v3977
      %v4075 = vmul.f32 %v3643, %v3982
      %v4076 = vmul.f32 %v3644, %v3987
      %v4077 = vmul.f32 %v3645, %v3992
      %v4078 = vmul.f32 %v3646, %v3997
      %v4079 = vmul.f32 %v3647, %v4002
      %v4080 = vmul.f32 %v3648, %v4007
      %v4081 = vmul.f32 %v3649, %v4012
      %v4082 = vmul.f32 %v3650, %v4017
      %v4083 = vmul.f32 %v3651, %v4022
      %v4084 = vmul.f32 %v3652, %v4027
      %v4085 = vmul.f32 %v3653, %v4032
      %v4086 = vmul.f32 %v3654, %v4037
      %v4087 = vmul.f32 %v3655, %v4042
      %v4088 = vmul.f32 %v3656, %v4047
      %v4089 = vmul.f32 %v3657, %v4052
      %v4090 = vadd.f32 %v4054, %v4055
      %v4091 = vadd.f32 %v4090, %v4056
      %v4092 = vadd.f32 %v4091, %v4057
      %v4093 = vadd.f32 %v4092, %v4058
      %v4094 = vadd.f32 %v4093, %v4059
      %v4095 = vadd.f32 %v4094, %v4060
      %v4096 = vadd.f32 %v4095, %v4061
      %v4097 = vadd.f32 %v4096, %v4062
      %v4098 = vadd.f32 %v4097, %v4063
      %v4099 = vadd.f32 %v4098, %v4064
      %v4100 = vadd.f32 %v4099, %v4065
      %v4101 = vadd.f32 %v4100, %v4066
      %v4102 = vadd.f32 %v4101, %v4067
      %v4103 = vadd.f32 %v4102, %v4068
      %v4104 = vadd.f32 %v4103, %v4069
      %v4105 = vadd.f32 %v4104, %v4070
      %v4106 = vadd.f32 %v4105, %v4071
      %v4107 = vadd.f32 %v4106, %v4072
      %v4108 = vadd.f32 %v4107, %v4073
      %v4109 = vadd.f32 %v4108, %v4074
      %v4110 = vadd.f32 %v4109, %v4075
      %v4111 = vadd.f32 %v4110, %v4076
      %v4112 = vadd.f32 %v4111, %v4077
      %v4113 = vadd.f32 %v4112, %v4078
      %v4114 = vadd.f32 %v4113, %v4079
      %v4115 = vadd.f32 %v4114, %v4080
      %v4116 = vadd.f32 %v4115, %v4081
      %v4117 = vadd.f32 %v4116, %v4082
      %v4118 = vadd.f32 %v4117, %v4083
      %v4119 = vadd.f32 %v4118, %v4084
      %v4120 = vadd.f32 %v4119, %v4085
      %v4121 = vadd.f32 %v4120, %v4086
      %v4122 = vadd.f32 %v4121, %v4087
      %v4123 = vadd.f32 %v4122, %v4088
      %v4124 = vadd.f32 %v4123, %v4089
      %v4125 = vrot.slane %v4124, 4
      %v4126 = vadd.f32 %v4124, %v4125
      %v4127 = vrot.slane %v4126, 2
      %v4128 = vadd.f32 %v4126, %v4127
      %v4129 = vrot.slane %v4128, 1
      %v4130 = vadd.f32 %v4128, %v4129
      %v4131 = vmul.f32 %v4054, %v3622
      %v4132 = vmul.f32 %v4055, %v3623
      %v4133 = vmul.f32 %v4056, %v3624
      %v4134 = vmul.f32 %v4057, %v3625
      %v4135 = vmul.f32 %v4058, %v3626
      %v4136 = vmul.f32 %v4059, %v3627
      %v4137 = vmul.f32 %v4060, %v3628
      %v4138 = vmul.f32 %v4061, %v3629
      %v4139 = vmul.f32 %v4062, %v3630
      %v4140 = vmul.f32 %v4063, %v3631
      %v4141 = vmul.f32 %v4064, %v3632
      %v4142 = vmul.f32 %v4065, %v3633
      %v4143 = vmul.f32 %v4066, %v3634
      %v4144 = vmul.f32 %v4067, %v3635
      %v4145 = vmul.f32 %v4068, %v3636
      %v4146 = vmul.f32 %v4069, %v3637
      %v4147 = vmul.f32 %v4070, %v3638
      %v4148 = vmul.f32 %v4071, %v3639
      %v4149 = vmul.f32 %v4072, %v3640
      %v4150 = vmul.f32 %v4073, %v3641
      %v4151 = vmul.f32 %v4074, %v3642
      %v4152 = vmul.f32 %v4075, %v3643
      %v4153 = vmul.f32 %v4076, %v3644
      %v4154 = vmul.f32 %v4077, %v3645
      %v4155 = vmul.f32 %v4078, %v3646
      %v4156 = vmul.f32 %v4079, %v3647
      %v4157 = vmul.f32 %v4080, %v3648
      %v4158 = vmul.f32 %v4081, %v3649
      %v4159 = vmul.f32 %v4082, %v3650
      %v4160 = vmul.f32 %v4083, %v3651
      %v4161 = vmul.f32 %v4084, %v3652
      %v4162 = vmul.f32 %v4085, %v3653
      %v4163 = vmul.f32 %v4086, %v3654
      %v4164 = vmul.f32 %v4087, %v3655
      %v4165 = vmul.f32 %v4088, %v3656
      %v4166 = vmul.f32 %v4089, %v3657
      %v4167 = vadd.f32 %v4131, %v4132
      %v4168 = vadd.f32 %v4167, %v4133
      %v4169 = vadd.f32 %v4168, %v4134
      %v4170 = vadd.f32 %v4169, %v4135
      %v4171 = vadd.f32 %v4170, %v4136
      %v4172 = vadd.f32 %v4171, %v4137
      %v4173 = vadd.f32 %v4172, %v4138
      %v4174 = vadd.f32 %v4173, %v4139
      %v4175 = vadd.f32 %v4174, %v4140
      %v4176 = vadd.f32 %v4175, %v4141
      %v4177 = vadd.f32 %v4176, %v4142
      %v4178 = vadd.f32 %v4177, %v4143
      %v4179 = vadd.f32 %v4178, %v4144
      %v4180 = vadd.f32 %v4179, %v4145
      %v4181 = vadd.f32 %v4180, %v4146
      %v4182 = vadd.f32 %v4181, %v4147
      %v4183 = vadd.f32 %v4182, %v4148
      %v4184 = vadd.f32 %v4183, %v4149
      %v4185 = vadd.f32 %v4184, %v4150
      %v4186 = vadd.f32 %v4185, %v4151
      %v4187 = vadd.f32 %v4186, %v4152
      %v4188 = vadd.f32 %v4187, %v4153
      %v4189 = vadd.f32 %v4188, %v4154
      %v4190 = vadd.f32 %v4189, %v4155
      %v4191 = vadd.f32 %v4190, %v4156
      %v4192 = vadd.f32 %v4191, %v4157
      %v4193 = vadd.f32 %v4192, %v4158
      %v4194 = vadd.f32 %v4193, %v4159
      %v4195 = vadd.f32 %v4194, %v4160
      %v4196 = vadd.f32 %v4195, %v4161
      %v4197 = vadd.f32 %v4196, %v4162
      %v4198 = vadd.f32 %v4197, %v4163
      %v4199 = vadd.f32 %v4198, %v4164
      %v4200 = vadd.f32 %v4199, %v4165
      %v4201 = vadd.f32 %v4200, %v4166
      %v4202 = vrot.slane %v4201, 4
      %v4203 = vadd.f32 %v4201, %v4202
      %v4204 = vrot.slane %v4203, 2
      %v4205 = vadd.f32 %v4203, %v4204
      %v4206 = vrot.slane %v4205, 1
      %v4207 = vadd.f32 %v4205, %v4206
      %vm4208 = vcmask 1040384
      %v4209 = vsel %vm4208, %v4130, %v4207
      %4210 = vst [vmem:[%s208] sm:$0x3] %v4209
      %p4211 = scmp.lt.s32.totalorder %s16, 1
      %s4212 = scalar_select %p4211, %s16, 1
      %s4213 = smul.addr %s4212, 36
      %s4214 = smul.addr %s4213, 4
      %s4215 = scalar_lea.vmem %s3, %s4214
      %p4216 = scmp.lt.s32.totalorder %s16, 1
      %s4217 = scalar_select %p4216, %s16, 1
      %s4218 = smul.addr %s4217, 2
      %s4219 = scalar_lea.vmem %s4, %s4218
      // Predicated region
      $region33: #{basic_block_forward.3} parent=31 // pred_check
        %p4220 = pneg %p102
      $region34: #{basic_block_forward.3} parent=31 // pred_check_branch
        %4222 = sbr.rel (%p4220) target = $region36
      $region35: #{basic_block_forward.3} parent=31 // pred_region
        _
      $region36: #{basic_block_forward.3} parent=31 // pred_fallthru
        _
      // Predicated region
      $region37: #{basic_block_forward.3} parent=31 // pred_check
        %p4223 = pneg %p128
      $region38: #{basic_block_forward.3} parent=31 // pred_check_branch
        %4225 = sbr.rel (%p4223) target = $region40
      $region39: #{basic_block_forward.3} parent=31 // pred_region
        _
      $region40: #{basic_block_forward.3} parent=31 // pred_fallthru
        _
    $region32: #{basic_block_forward.3} parent=5 // pred_fallthru
      _
    %p4226 = scmp.le.s32.totalorder 2, %s11
    // Predicated region
    $region41: #{basic_block_forward.3} parent=5 // pred_check
      %p4227 = pneg %p4226
    $region42: #{basic_block_forward.3} parent=5 // pred_check_branch
      %4229 = sbr.rel (%p4227) target = $region44
    $region43: #{basic_block_forward.3} parent=5 // pred_region
      %s4230 = ssub.s32 %s11, 2
      // Predicated region
      $region45: #{basic_block_forward.3} parent=43 // pred_check
        %p4231 = pneg %p108
      $region46: #{basic_block_forward.3} parent=43 // pred_check_branch
        %4233 = sbr.rel (%p4231) target = $region48
      $region47: #{basic_block_forward.3} parent=43 // pred_region
        %p4234 = scmp.lt.s32.totalorder %s17, 1
        %s4235 = scalar_select %p4234, %s17, 1
        %s4236 = smul.addr %s4235, 36
        %s4237 = smul.addr %s4236, 4
        %s4238 = scalar_lea.vmem %s3, %s4237
      $region48: #{basic_block_forward.3} parent=43 // pred_fallthru
        _
      // Predicated region
      $region49: #{basic_block_forward.3} parent=43 // pred_check
        %p4239 = pneg %p134
      $region50: #{basic_block_forward.3} parent=43 // pred_check_branch
        %4241 = sbr.rel (%p4239) target = $region52
      $region51: #{basic_block_forward.3} parent=43 // pred_region
        %p4242 = scmp.lt.s32.totalorder %s17, 1
        %s4243 = scalar_select %p4242, %s17, 1
        %s4244 = smul.addr %s4243, 2
        %s4245 = scalar_lea.vmem %s4, %s4244
      $region52: #{basic_block_forward.3} parent=43 // pred_fallthru
        _
    $region44: #{basic_block_forward.3} parent=5 // pred_fallthru
      _
  $region6: #{basic_block_forward.3} parent=0 // loop_footer
    %s15 = sadd.s32 1, %s11
  $region7: #{basic_block_forward.3} parent=0 // loop_footer_branch
    %10 = sbr.rel target = $region3
  $region8: #{basic_block_forward.3} parent=0 // loop_exit
    _

// kernel: basic_block_forward.4
$region0: #{basic_block_forward.4}
  #allocation0 [shape = 'u32[]', space=smem, size = 0x4, offset = 0x4, fixed_abs, tag = 'smem constant byte address 0x4 - core index']
  #allocation1 [shape = 'u32[144,128]{1,0:T(1,128)}', space=vmem, size = 0x12000, scoped, tag = 'internal scratch']
  %s0 = inlined_call_operand.vmem [shape: bf16[2,342,8], index: 0, kind: input, shape index: {}]
  %s1 = inlined_call_operand.vmem [shape: bf16[9,8,128], index: 1, kind: input, shape index: {}]
  %s2 = inlined_call_operand.vmem [shape: bf16[2,288,4], index: 2, kind: input, shape index: {}]
  %s3 = inlined_call_operand.vmem [shape: bf16[4,128], index: 3, kind: input, shape index: {}]
  %s4 = inlined_call_operand.vmem [shape: f32[288,1], index: 4, kind: input, shape index: {}]
  %s5 = inlined_call_operand.vmem [shape: bf16[2,288,128], index: 5, kind: output, shape index: {0}]
  %s6 = inlined_call_operand.vmem [shape: f32[2,2,128], index: 6, kind: output, shape index: {1}]
  %s7 = inlined_call_operand.vmem [shape: f32[2,2,128], index: 7, kind: output, shape index: {2}]
  %8 = xla_tuple %s5, %s6, %s7
  %s9 = sld [smem:[#allocation0]]
  $region69: #{basic_block_forward.4} parent=0
    _
  %s11 = ssub.s32 1, %s9
  %s12 = scalar_select 0, %s11, %s9
  loop: start=0, step=1, limit=4
  $region2: #{basic_block_forward.4} parent=0 // loop_pre_header
    _
  $region3: #{basic_block_forward.4} parent=0 // loop_header
    %s14 = sphi 0, %s18
    %p15 = scmp.ge.s32.totalorder %s14, 4
    %s24 = sphi 0, %s26
    %s27 = sphi 0, %s24
    %s28 = sphi 0, %s27
    %s44 = sphi 0, %s28
    %s48 = sphi 0, %s48
    %s50 = sphi 0, %s48
    %s51 = sphi 0, %s50
    %s65 = sphi 0, %s51
    %s71 = sphi 0, %s73
    %s74 = sphi 0, %s71
    %s75 = sphi 0, %s74
    %s91 = sphi 0, %s75
    %s95 = sphi 0, %s95
    %s97 = sphi 0, %s95
    %s98 = sphi 0, %s97
    %s112 = sphi 0, %s98
    %s116 = sphi 0, %s116
    %s118 = sphi 0, %s116
    %s119 = sphi 0, %s118
    %s133 = sphi 0, %s119
    %s139 = sphi 0, %s141
    %s142 = sphi 0, %s139
    %s143 = sphi 0, %s142
    %s159 = sphi 0, %s143
    %s165 = sphi 0, %s167
    %s168 = sphi 0, %s165
    %s169 = sphi 0, %s168
    %s185 = sphi 0, %s169
    %s191 = sphi 0, %s193
    %s194 = sphi 0, %s191
    %s195 = sphi 0, %s194
    %s211 = sphi 0, %s195
  $region4: #{basic_block_forward.4} parent=0 // loop_header_branch
    %17 = sbr.rel (%p15) target = $region8
  $region5: #{basic_block_forward.4} parent=0 // loop_body
    %s19 = ssub.s32 %s14, 1
    %s20 = ssub.s32 %s14, 2
    %s21 = sadd.s32 %s14, 1
    %s22 = ssub.s32 %s14, %s21
    %p23 = scmp.eq.s32.totalorder %s22, 0
    %s25 = sadd.s32 %s24, 1
    %s26 = scalar_select %p23, %s24, %s25
    %p29 = pneg %p23
    %p30 = scmp.eq.s32.totalorder %s14, 1
    %p31 = por %p29, %p30
    %p32 = scmp.ne.s32.totalorder %s24, %s27
    %p33 = scmp.eq.s32.totalorder %s14, 0
    %p34 = por %p32, %p33
    %p35 = scmp.ne.s32.totalorder %s24, %s27
    %p36 = scmp.eq.s32.totalorder %s19, 1
    %p37 = por %p35, %p36
    %p38 = scmp.ne.s32.totalorder %s27, %s28
    %p39 = scmp.eq.s32.totalorder %s19, 0
    %p40 = por %p38, %p39
    %p41 = scmp.ne.s32.totalorder %s27, %s28
    %p42 = scmp.eq.s32.totalorder %s20, 1
    %p43 = por %p41, %p42
    %p45 = scmp.ne.s32.totalorder %s28, %s44
    %p46 = scmp.eq.s32.totalorder %s20, 0
    %p47 = por %p45, %p46
    %s49 = sadd.s32 %s48, 1
    %p52 = scmp.eq.s32.totalorder %s14, 1
    %p53 = scmp.ne.s32.totalorder %s48, %s50
    %p54 = scmp.eq.s32.totalorder %s14, 0
    %p55 = por %p53, %p54
    %p56 = scmp.ne.s32.totalorder %s48, %s50
    %p57 = scmp.eq.s32.totalorder %s19, 1
    %p58 = por %p56, %p57
    %p59 = scmp.ne.s32.totalorder %s50, %s51
    %p60 = scmp.eq.s32.totalorder %s19, 0
    %p61 = por %p59, %p60
    %p62 = scmp.ne.s32.totalorder %s50, %s51
    %p63 = scmp.eq.s32.totalorder %s20, 1
    %p64 = por %p62, %p63
    %p66 = scmp.ne.s32.totalorder %s51, %s65
    %p67 = scmp.eq.s32.totalorder %s20, 0
    %p68 = por %p66, %p67
    %s69 = ssub.s32 %s14, %s21
    %p70 = scmp.eq.s32.totalorder %s69, 0
    %s72 = sadd.s32 %s71, 1
    %s73 = scalar_select %p70, %s71, %s72
    %p76 = pneg %p70
    %p77 = scmp.eq.s32.totalorder %s14, 1
    %p78 = por %p76, %p77
    %p79 = scmp.ne.s32.totalorder %s71, %s74
    %p80 = scmp.eq.s32.totalorder %s14, 0
    %p81 = por %p79, %p80
    %p82 = scmp.ne.s32.totalorder %s71, %s74
    %p83 = scmp.eq.s32.totalorder %s19, 1
    %p84 = por %p82, %p83
    %p85 = scmp.ne.s32.totalorder %s74, %s75
    %p86 = scmp.eq.s32.totalorder %s19, 0
    %p87 = por %p85, %p86
    %p88 = scmp.ne.s32.totalorder %s74, %s75
    %p89 = scmp.eq.s32.totalorder %s20, 1
    %p90 = por %p88, %p89
    %p92 = scmp.ne.s32.totalorder %s75, %s91
    %p93 = scmp.eq.s32.totalorder %s20, 0
    %p94 = por %p92, %p93
    %s96 = sadd.s32 %s95, 1
    %p99 = scmp.eq.s32.totalorder %s14, 1
    %p100 = scmp.ne.s32.totalorder %s95, %s97
    %p101 = scmp.eq.s32.totalorder %s14, 0
    %p102 = por %p100, %p101
    %p103 = scmp.ne.s32.totalorder %s95, %s97
    %p104 = scmp.eq.s32.totalorder %s19, 1
    %p105 = por %p103, %p104
    %p106 = scmp.ne.s32.totalorder %s97, %s98
    %p107 = scmp.eq.s32.totalorder %s19, 0
    %p108 = por %p106, %p107
    %p109 = scmp.ne.s32.totalorder %s97, %s98
    %p110 = scmp.eq.s32.totalorder %s20, 1
    %p111 = por %p109, %p110
    %p113 = scmp.ne.s32.totalorder %s98, %s112
    %p114 = scmp.eq.s32.totalorder %s20, 0
    %p115 = por %p113, %p114
    %s117 = sadd.s32 %s116, 1
    %p120 = scmp.eq.s32.totalorder %s14, 1
    %p121 = scmp.ne.s32.totalorder %s116, %s118
    %p122 = scmp.eq.s32.totalorder %s14, 0
    %p123 = por %p121, %p122
    %p124 = scmp.ne.s32.totalorder %s116, %s118
    %p125 = scmp.eq.s32.totalorder %s19, 1
    %p126 = por %p124, %p125
    %p127 = scmp.ne.s32.totalorder %s118, %s119
    %p128 = scmp.eq.s32.totalorder %s19, 0
    %p129 = por %p127, %p128
    %p130 = scmp.ne.s32.totalorder %s118, %s119
    %p131 = scmp.eq.s32.totalorder %s20, 1
    %p132 = por %p130, %p131
    %p134 = scmp.ne.s32.totalorder %s119, %s133
    %p135 = scmp.eq.s32.totalorder %s20, 0
    %p136 = por %p134, %p135
    %s137 = ssub.s32 %s14, %s21
    %p138 = scmp.eq.s32.totalorder %s137, 0
    %s140 = sadd.s32 %s139, 1
    %s141 = scalar_select %p138, %s139, %s140
    %p144 = pneg %p138
    %p145 = scmp.eq.s32.totalorder %s14, 1
    %p146 = por %p144, %p145
    %p147 = scmp.ne.s32.totalorder %s139, %s142
    %p148 = scmp.eq.s32.totalorder %s14, 0
    %p149 = por %p147, %p148
    %p150 = scmp.ne.s32.totalorder %s139, %s142
    %p151 = scmp.eq.s32.totalorder %s19, 1
    %p152 = por %p150, %p151
    %p153 = scmp.ne.s32.totalorder %s142, %s143
    %p154 = scmp.eq.s32.totalorder %s19, 0
    %p155 = por %p153, %p154
    %p156 = scmp.ne.s32.totalorder %s142, %s143
    %p157 = scmp.eq.s32.totalorder %s20, 1
    %p158 = por %p156, %p157
    %p160 = scmp.ne.s32.totalorder %s143, %s159
    %p161 = scmp.eq.s32.totalorder %s20, 0
    %p162 = por %p160, %p161
    %s163 = ssub.s32 %s14, %s21
    %p164 = scmp.eq.s32.totalorder %s163, 0
    %s166 = sadd.s32 %s165, 1
    %s167 = scalar_select %p164, %s165, %s166
    %p170 = pneg %p164
    %p171 = scmp.eq.s32.totalorder %s14, 1
    %p172 = por %p170, %p171
    %p173 = scmp.ne.s32.totalorder %s165, %s168
    %p174 = scmp.eq.s32.totalorder %s14, 0
    %p175 = por %p173, %p174
    %p176 = scmp.ne.s32.totalorder %s165, %s168
    %p177 = scmp.eq.s32.totalorder %s19, 1
    %p178 = por %p176, %p177
    %p179 = scmp.ne.s32.totalorder %s168, %s169
    %p180 = scmp.eq.s32.totalorder %s19, 0
    %p181 = por %p179, %p180
    %p182 = scmp.ne.s32.totalorder %s168, %s169
    %p183 = scmp.eq.s32.totalorder %s20, 1
    %p184 = por %p182, %p183
    %p186 = scmp.ne.s32.totalorder %s169, %s185
    %p187 = scmp.eq.s32.totalorder %s20, 0
    %p188 = por %p186, %p187
    %s189 = ssub.s32 %s14, %s21
    %p190 = scmp.eq.s32.totalorder %s189, 0
    %s192 = sadd.s32 %s191, 1
    %s193 = scalar_select %p190, %s191, %s192
    %p196 = pneg %p190
    %p197 = scmp.eq.s32.totalorder %s14, 1
    %p198 = por %p196, %p197
    %p199 = scmp.ne.s32.totalorder %s191, %s194
    %p200 = scmp.eq.s32.totalorder %s14, 0
    %p201 = por %p199, %p200
    %p202 = scmp.ne.s32.totalorder %s191, %s194
    %p203 = scmp.eq.s32.totalorder %s19, 1
    %p204 = por %p202, %p203
    %p205 = scmp.ne.s32.totalorder %s194, %s195
    %p206 = scmp.eq.s32.totalorder %s19, 0
    %p207 = por %p205, %p206
    %p208 = scmp.ne.s32.totalorder %s194, %s195
    %p209 = scmp.eq.s32.totalorder %s20, 1
    %p210 = por %p208, %p209
    %p212 = scmp.ne.s32.totalorder %s195, %s211
    %p213 = scmp.eq.s32.totalorder %s20, 0
    %p214 = por %p212, %p213
    %p215 = scmp.le.s32.totalorder 1, %s14
    %p216 = scmp.lt.s32.totalorder %s14, 3
    %p217 = pnand %p215, %p216
    %p218 = pneg %p217
    // Predicated region
    $region9: #{basic_block_forward.4} parent=5 // pred_check
      _
    $region10: #{basic_block_forward.4} parent=5 // pred_check_branch
      %220 = sbr.rel (%p217) target = $region12
    $region11: #{basic_block_forward.4} parent=5 // pred_region
      %s221 = ssub.s32 %s14, 1
      // Predicated region
      $region13: #{basic_block_forward.4} parent=11 // pred_check
        %p222 = pneg %p61
      $region14: #{basic_block_forward.4} parent=11 // pred_check_branch
        %224 = sbr.rel (%p222) target = $region16
      $region15: #{basic_block_forward.4} parent=11 // pred_region
        _
      $region16: #{basic_block_forward.4} parent=11 // pred_fallthru
        _
      // Predicated region
      $region17: #{basic_block_forward.4} parent=11 // pred_check
        %p225 = pneg %p108
      $region18: #{basic_block_forward.4} parent=11 // pred_check_branch
        %227 = sbr.rel (%p225) target = $region20
      $region19: #{basic_block_forward.4} parent=11 // pred_region
        _
      $region20: #{basic_block_forward.4} parent=11 // pred_fallthru
        _
      // Predicated region
      $region21: #{basic_block_forward.4} parent=11 // pred_check
        %p228 = pneg %p129
      $region22: #{basic_block_forward.4} parent=11 // pred_check_branch
        %230 = sbr.rel (%p228) target = $region24
      $region23: #{basic_block_forward.4} parent=11 // pred_region
        _
      $region24: #{basic_block_forward.4} parent=11 // pred_fallthru
        _
    $region12: #{basic_block_forward.4} parent=5 // pred_fallthru
      _
    %p231 = scmp.lt.s32.totalorder %s14, 2
    // Predicated region
    $region25: #{basic_block_forward.4} parent=5 // pred_check
      %p232 = pneg %p231
    $region26: #{basic_block_forward.4} parent=5 // pred_check_branch
      %234 = sbr.rel (%p232) target = $region28
    $region27: #{basic_block_forward.4} parent=5 // pred_region
      // Predicated region
      $region29: #{basic_block_forward.4} parent=27 // pred_check
        %p235 = pneg %p34
      $region30: #{basic_block_forward.4} parent=27 // pred_check_branch
        %237 = sbr.rel (%p235) target = $region32
      $region31: #{basic_block_forward.4} parent=27 // pred_region
        %p238 = scmp.lt.s32.totalorder %s14, 1
        %s239 = scalar_select %p238, %s14, 1
        %s240 = smul.addr %s239, 43
        %s241 = smul.addr %s240, 4
        %s242 = scalar_lea.vmem %s0, %s241
      $region32: #{basic_block_forward.4} parent=27 // pred_fallthru
        _
      // Predicated region
      $region33: #{basic_block_forward.4} parent=27 // pred_check
        %p243 = pneg %p81
      $region34: #{basic_block_forward.4} parent=27 // pred_check_branch
        %245 = sbr.rel (%p243) target = $region36
      $region35: #{basic_block_forward.4} parent=27 // pred_region
        %p246 = scmp.lt.s32.totalorder %s14, 1
        %s247 = scalar_select %p246, %s14, 1
        %s248 = smul.addr %s247, 36
        %s249 = smul.addr %s248, 4
        %s250 = scalar_lea.vmem %s2, %s249
      $region36: #{basic_block_forward.4} parent=27 // pred_fallthru
        _
    $region28: #{basic_block_forward.4} parent=5 // pred_fallthru
      _
    %p251 = scmp.le.s32.totalorder 1, %s14
    %p252 = scmp.lt.s32.totalorder %s14, 3
    %p253 = pnand %p251, %p252
    %p254 = pneg %p253
    // Predicated region
    $region37: #{basic_block_forward.4} parent=5 // pred_check
      _
    $region38: #{basic_block_forward.4} parent=5 // pred_check_branch
      %256 = sbr.rel (%p253) target = $region40
    $region39: #{basic_block_forward.4} parent=5 // pred_region
      %s257 = ssub.s32 %s14, 1
      %p258 = scmp.lt.s32.totalorder %s19, 1
      %s259 = scalar_select %p258, %s19, 1
      %s260 = smul.addr %s259, 43
      %s261 = smul.addr %s260, 4
      %s262 = scalar_lea.vmem %s0, %s261
      %p263 = pneg %p40
      %p264 = pneg %p37
      %p265 = pneg %p61
      %p266 = pneg %p58
      %p267 = scmp.lt.s32.totalorder %s19, 1
      %s268 = scalar_select %p267, %s19, 1
      %s269 = smul.addr %s268, 36
      %s270 = smul.addr %s269, 4
      %s271 = scalar_lea.vmem %s2, %s270
      %p272 = pneg %p87
      %p273 = pneg %p84
      %p274 = pneg %p108
      %p275 = pneg %p105
      %p276 = pneg %p129
      %p277 = pneg %p126
      %p278 = pneg %p155
      %p279 = pneg %p152
      %p280 = scmp.lt.s32.totalorder %s19, 1
      %s281 = scalar_select %p280, %s19, 1
      %s282 = smul.addr %s281, 36
      %s283 = smul.addr %s282, 4
      %s284 = scalar_lea.vmem %s5, %s283
      %p285 = pneg %p181
      %p286 = pneg %p178
      %p287 = scmp.lt.s32.totalorder %s19, 1
      %s288 = scalar_select %p287, %s19, 1
      %s289 = smul.addr %s288, 2
      %s290 = scalar_lea.vmem %s6, %s289
      %p291 = pneg %p207
      %p292 = pneg %p204
      %p293 = scmp.lt.s32.totalorder %s19, 1
      %s294 = scalar_select %p293, %s19, 1
      %s295 = smul.addr %s294, 2
      %s296 = scalar_lea.vmem %s7, %s295
      %p297 = scmp.lt.s32.totalorder %s19, 1
      %s298 = scalar_select %p297, %s19, 1
      %s299 = smul.addr %s298, 43
      %s300 = smul.addr %s299, 4
      %s301 = scalar_lea.vmem %s0, %s300
      %p302 = scmp.lt.s32.totalorder %s19, 1
      %s303 = scalar_select %p302, %s19, 1
      %s304 = smul.addr %s303, 36
      %s305 = smul.addr %s304, 4
      %s306 = scalar_lea.vmem %s2, %s305
      %p307 = scmp.lt.s32.totalorder %s19, 1
      %s308 = scalar_select %p307, %s19, 1
      %s309 = smul.addr %s308, 36
      %s310 = smul.addr %s309, 4
      %s311 = scalar_lea.vmem %s5, %s310
      %p312 = scmp.lt.s32.totalorder %s19, 1
      %s313 = scalar_select %p312, %s19, 1
      %s314 = smul.addr %s313, 2
      %s315 = scalar_lea.vmem %s6, %s314
      %p316 = scmp.lt.s32.totalorder %s19, 1
      %s317 = scalar_select %p316, %s19, 1
      %s318 = smul.addr %s317, 2
      %s319 = scalar_lea.vmem %s7, %s318
      %v321 = vld [vmem:[%s301] sm:$0xf]
      %v322 = vld [vmem:[%s301 + $0x4] sm:$0xf]
      %v323 = vld [vmem:[%s301 + $0x8] sm:$0xf]
      %v324 = vld [vmem:[%s301 + $0xc] sm:$0xf]
      %v325 = vld [vmem:[%s301 + $0x10] sm:$0xf]
      %v326 = vld [vmem:[%s301 + $0x14] sm:$0xf]
      %v327 = vld [vmem:[%s301 + $0x18] sm:$0xf]
      %v328 = vld [vmem:[%s301 + $0x1c] sm:$0xf]
      %v329 = vld [vmem:[%s301 + $0x20] sm:$0xf]
      %v330 = vld [vmem:[%s301 + $0x24] sm:$0xf]
      %v331 = vld [vmem:[%s301 + $0x28] sm:$0xf]
      %v332 = vld [vmem:[%s301 + $0x2c] sm:$0xf]
      %v333 = vld [vmem:[%s301 + $0x30] sm:$0xf]
      %v334 = vld [vmem:[%s301 + $0x34] sm:$0xf]
      %v335 = vld [vmem:[%s301 + $0x38] sm:$0xf]
      %v336 = vld [vmem:[%s301 + $0x3c] sm:$0xf]
      %v337 = vld [vmem:[%s301 + $0x40] sm:$0xf]
      %v338 = vld [vmem:[%s301 + $0x44] sm:$0xf]
      %v339 = vld [vmem:[%s301 + $0x48] sm:$0xf]
      %v340 = vld [vmem:[%s301 + $0x4c] sm:$0xf]
      %v341 = vld [vmem:[%s301 + $0x50] sm:$0xf]
      %v342 = vld [vmem:[%s301 + $0x54] sm:$0xf]
      %v343 = vld [vmem:[%s301 + $0x58] sm:$0xf]
      %v344 = vld [vmem:[%s301 + $0x5c] sm:$0xf]
      %v345 = vld [vmem:[%s301 + $0x60] sm:$0xf]
      %v346 = vld [vmem:[%s301 + $0x64] sm:$0xf]
      %v347 = vld [vmem:[%s301 + $0x68] sm:$0xf]
      %v348 = vld [vmem:[%s301 + $0x6c] sm:$0xf]
      %v349 = vld [vmem:[%s301 + $0x70] sm:$0xf]
      %v350 = vld [vmem:[%s301 + $0x74] sm:$0xf]
      %v351 = vld [vmem:[%s301 + $0x78] sm:$0xf]
      %v352 = vld [vmem:[%s301 + $0x7c] sm:$0xf]
      %v353 = vld [vmem:[%s301 + $0x80] sm:$0xf]
      %v354 = vld [vmem:[%s301 + $0x84] sm:$0xf]
      %v355 = vld [vmem:[%s301 + $0x88] sm:$0xf]
      %v356 = vld [vmem:[%s301 + $0x8c] sm:$0xf]
      %v357 = vld [vmem:[%s1] sm:$0xf]
      %v358 = vld [vmem:[%s301 + $0x90] sm:$0x1]
      %s359 = scalar_lea.vmem %s1, 4
      %v360 = vld [vmem:[%s359] sm:$0xf]
      %v398 = vunpack.c.l.b16 %v321
      %v399 = vunpack.c.l.b16 %v322
      %v400 = vunpack.c.l.b16 %v323
      %v401 = vunpack.c.l.b16 %v324
      %v402 = vunpack.c.l.b16 %v325
      %v403 = vunpack.c.l.b16 %v326
      %v404 = vunpack.c.l.b16 %v327
      %v405 = vunpack.c.l.b16 %v328
      %v406 = vunpack.c.l.b16 %v329
      %v407 = vunpack.c.l.b16 %v330
      %v408 = vunpack.c.l.b16 %v331
      %v409 = vunpack.c.l.b16 %v332
      %v410 = vunpack.c.l.b16 %v333
      %v411 = vunpack.c.l.b16 %v334
      %v412 = vunpack.c.l.b16 %v335
      %v413 = vunpack.c.l.b16 %v336
      %v414 = vunpack.c.l.b16 %v337
      %v415 = vunpack.c.l.b16 %v338
      %v416 = vunpack.c.l.b16 %v339
      %v417 = vunpack.c.l.b16 %v340
      %v418 = vunpack.c.l.b16 %v341
      %v419 = vunpack.c.l.b16 %v342
      %v420 = vunpack.c.l.b16 %v343
      %v421 = vunpack.c.l.b16 %v344
      %v422 = vunpack.c.l.b16 %v345
      %v423 = vunpack.c.l.b16 %v346
      %v424 = vunpack.c.l.b16 %v347
      %v425 = vunpack.c.l.b16 %v348
      %v426 = vunpack.c.l.b16 %v349
      %v427 = vunpack.c.l.b16 %v350
      %v428 = vunpack.c.l.b16 %v351
      %v429 = vunpack.c.l.b16 %v352
      %v430 = vunpack.c.l.b16 %v353
      %v431 = vunpack.c.l.b16 %v354
      %v432 = vunpack.c.l.b16 %v355
      %v433 = vunpack.c.l.b16 %v356
      %v434 = vunpack.c.l.b16 %v358
      %v435 = vpack.c.b16 %v399, %v398
      %v436 = vpack.c.b16 %v401, %v400
      %v437 = vpack.c.b16 %v403, %v402
      %v438 = vpack.c.b16 %v405, %v404
      %v439 = vpack.c.b16 %v407, %v406
      %v440 = vpack.c.b16 %v409, %v408
      %v441 = vpack.c.b16 %v411, %v410
      %v442 = vpack.c.b16 %v413, %v412
      %v443 = vpack.c.b16 %v415, %v414
      %v444 = vpack.c.b16 %v417, %v416
      %v445 = vpack.c.b16 %v419, %v418
      %v446 = vpack.c.b16 %v421, %v420
      %v447 = vpack.c.b16 %v423, %v422
      %v448 = vpack.c.b16 %v425, %v424
      %v449 = vpack.c.b16 %v427, %v426
      %v450 = vpack.c.b16 %v429, %v428
      %v451 = vpack.c.b16 %v431, %v430
      %v452 = vpack.c.b16 %v433, %v432
      %v453 = vpack.c.b16 %v434, %v434
      %vm454 = vsmask.f32 7424
      %v456 = vshrl.u32 %v435, 16
      %v458 = vshll.u32 %v435, 16
      %v460 = vrot.slane %v458, 1
      %v461 = vor.u32 %v456, %v460
      %v463 = vshll.u32 %v436, 16
      %v465 = vrot.slane %v463, 1
      %v466 = vsel %vm454, %v461, %v465
      %v467 = vshrl.u32 %v436, 16
      %v469 = vor.u32 %v467, %v465
      %v471 = vshll.u32 %v437, 16
      %v473 = vrot.slane %v471, 1
      %v474 = vsel %vm454, %v469, %v473
      %v475 = vshrl.u32 %v437, 16
      %v477 = vor.u32 %v475, %v473
      %v479 = vshll.u32 %v438, 16
      %v481 = vrot.slane %v479, 1
      %v482 = vsel %vm454, %v477, %v481
      %v483 = vshrl.u32 %v438, 16
      %v485 = vor.u32 %v483, %v481
      %v487 = vshll.u32 %v439, 16
      %v489 = vrot.slane %v487, 1
      %v490 = vsel %vm454, %v485, %v489
      %v491 = vshrl.u32 %v439, 16
      %v493 = vor.u32 %v491, %v489
      %v495 = vshll.u32 %v440, 16
      %v497 = vrot.slane %v495, 1
      %v498 = vsel %vm454, %v493, %v497
      %v499 = vshrl.u32 %v440, 16
      %v501 = vor.u32 %v499, %v497
      %v503 = vshll.u32 %v441, 16
      %v505 = vrot.slane %v503, 1
      %v506 = vsel %vm454, %v501, %v505
      %v507 = vshrl.u32 %v441, 16
      %v509 = vor.u32 %v507, %v505
      %v511 = vshll.u32 %v442, 16
      %v513 = vrot.slane %v511, 1
      %v514 = vsel %vm454, %v509, %v513
      %v515 = vshrl.u32 %v442, 16
      %v517 = vor.u32 %v515, %v513
      %v519 = vshll.u32 %v443, 16
      %v521 = vrot.slane %v519, 1
      %v522 = vsel %vm454, %v517, %v521
      %v523 = vshrl.u32 %v443, 16
      %v525 = vor.u32 %v523, %v521
      %v527 = vshll.u32 %v444, 16
      %v529 = vrot.slane %v527, 1
      %v530 = vsel %vm454, %v525, %v529
      %v531 = vshrl.u32 %v444, 16
      %v533 = vor.u32 %v531, %v529
      %v535 = vshll.u32 %v445, 16
      %v537 = vrot.slane %v535, 1
      %v538 = vsel %vm454, %v533, %v537
      %v539 = vshrl.u32 %v445, 16
      %v541 = vor.u32 %v539, %v537
      %v543 = vshll.u32 %v446, 16
      %v545 = vrot.slane %v543, 1
      %v546 = vsel %vm454, %v541, %v545
      %v547 = vshrl.u32 %v446, 16
      %v549 = vor.u32 %v547, %v545
      %v551 = vshll.u32 %v447, 16
      %v553 = vrot.slane %v551, 1
      %v554 = vsel %vm454, %v549, %v553
      %v555 = vshrl.u32 %v447, 16
      %v557 = vor.u32 %v555, %v553
      %v559 = vshll.u32 %v448, 16
      %v561 = vrot.slane %v559, 1
      %v562 = vsel %vm454, %v557, %v561
      %v563 = vshrl.u32 %v448, 16
      %v565 = vor.u32 %v563, %v561
      %v567 = vshll.u32 %v449, 16
      %v569 = vrot.slane %v567, 1
      %v570 = vsel %vm454, %v565, %v569
      %v571 = vshrl.u32 %v449, 16
      %v573 = vor.u32 %v571, %v569
      %v575 = vshll.u32 %v450, 16
      %v577 = vrot.slane %v575, 1
      %v578 = vsel %vm454, %v573, %v577
      %v579 = vshrl.u32 %v450, 16
      %v581 = vor.u32 %v579, %v577
      %v583 = vshll.u32 %v451, 16
      %v585 = vrot.slane %v583, 1
      %v586 = vsel %vm454, %v581, %v585
      %v587 = vshrl.u32 %v451, 16
      %v589 = vor.u32 %v587, %v585
      %v591 = vshll.u32 %v452, 16
      %v593 = vrot.slane %v591, 1
      %v594 = vsel %vm454, %v589, %v593
      %v595 = vshrl.u32 %v452, 16
      %v597 = vor.u32 %v595, %v593
      %v599 = vshll.u32 %v453, 16
      %v601 = vrot.slane %v599, 1
      %v602 = vsel %vm454, %v597, %v601
      %vm603 = vcmask 64512
      %v605 = vsel %vm603, %v466, 0
      %v608 = vsel %vm603, %v474, 0
      %v611 = vsel %vm603, %v482, 0
      %v614 = vsel %vm603, %v490, 0
      %v617 = vsel %vm603, %v498, 0
      %v620 = vsel %vm603, %v506, 0
      %v623 = vsel %vm603, %v514, 0
      %v626 = vsel %vm603, %v522, 0
      %v629 = vsel %vm603, %v530, 0
      %v632 = vsel %vm603, %v538, 0
      %v635 = vsel %vm603, %v546, 0
      %v638 = vsel %vm603, %v554, 0
      %v641 = vsel %vm603, %v562, 0
      %v644 = vsel %vm603, %v570, 0
      %v647 = vsel %vm603, %v578, 0
      %v650 = vsel %vm603, %v586, 0
      %v653 = vsel %vm603, %v594, 0
      %v656 = vsel %vm603, %v602, 0
      %vm658 = vcmask 1043456
      %v660 = vsel %vm658, %v360, 0
      %662 = vmatprep.subr.bf16.mxu0 0
      %663 = vmatpush1.bf16.msra.mxu0 %v660
      %664 = vmatprep.subr.bf16.mxu0 0
      %665 = vmatpush1.bf16.msra.mxu0 0
      %666 = vmatprep.subr.bf16.mxu0 0
      %667 = vmatpush1.bf16.msra.mxu0 0
      %668 = vmatprep.subr.bf16.mxu0 0
      %669 = vmatpush1.bf16.msra.mxu0 0
      %670 = vmatprep.subr.bf16.mxu0 0
      %671 = vmatpush1.bf16.msra.mxu0 0
      %672 = vmatprep.subr.bf16.mxu0 0
      %673 = vmatpush1.bf16.msra.mxu0 0
      %674 = vmatprep.subr.bf16.mxu0 0
      %675 = vmatpush1.bf16.msra.mxu0 0
      %676 = vmatprep.subr.bf16.mxu0 0
      %677 = vmatpush1.bf16.msra.mxu0 0
      %678 = vmatprep.subr.bf16.mxu0 0
      %679 = vmatpush1.bf16.msra.mxu0 0
      %680 = vmatprep.subr.bf16.mxu0 0
      %681 = vmatpush1.bf16.msra.mxu0 0
      %682 = vmatprep.subr.bf16.mxu0 0
      %683 = vmatpush1.bf16.msra.mxu0 0
      %684 = vmatprep.subr.bf16.mxu0 0
      %685 = vmatpush1.bf16.msra.mxu0 0
      %686 = vmatprep.subr.bf16.mxu0 0
      %687 = vmatpush1.bf16.msra.mxu0 0
      %688 = vmatprep.subr.bf16.mxu0 0
      %689 = vmatpush1.bf16.msra.mxu0 0
      %690 = vmatprep.subr.bf16.mxu0 0
      %691 = vmatpush1.bf16.msra.mxu0 0
      %692 = vmatprep.subr.bf16.mxu0 0
      %693 = vmatpush1.bf16.msra.mxu0 0
      %694 = vmatprep.mubr.bf16.mxu0 0
      %695 = vmatmul.mubr.bf16.gmra.mrb[0].mxu0 %v605
      %v696 = vpop.f32.mrb[0].mxu0
      %v697 = vadd.f32 0.0, %v696
      %v698 = vpop.f32.mrb[0].mxu0
      %v699 = vpop.f32.mrb[0].mxu0
      %v700 = vadd.f32 0.0, %v699
      %v701 = vpop.f32.mrb[0].mxu0
      %702 = vmatprep.mubr.bf16.mxu0 0
      %703 = vmatmul.mubr.bf16.gmra.mrb[0].mxu0 %v608
      %v704 = vpop.f32.mrb[0].mxu0
      %v705 = vadd.f32 0.0, %v704
      %v706 = vpop.f32.mrb[0].mxu0
      %v707 = vpop.f32.mrb[0].mxu0
      %v708 = vadd.f32 0.0, %v707
      %v709 = vpop.f32.mrb[0].mxu0
      %710 = vmatprep.mubr.bf16.mxu0 0
      %711 = vmatmul.mubr.bf16.gmra.mrb[0].mxu0 %v611
      %v712 = vpop.f32.mrb[0].mxu0
      %v713 = vadd.f32 0.0, %v712
      %v714 = vpop.f32.mrb[0].mxu0
      %v715 = vpop.f32.mrb[0].mxu0
      %v716 = vadd.f32 0.0, %v715
      %v717 = vpop.f32.mrb[0].mxu0
      %718 = vmatprep.mubr.bf16.mxu0 0
      %719 = vmatmul.mubr.bf16.gmra.mrb[0].mxu0 %v614
      %v720 = vpop.f32.mrb[0].mxu0
      %v721 = vadd.f32 0.0, %v720
      %v722 = vpop.f32.mrb[0].mxu0
      %v723 = vpop.f32.mrb[0].mxu0
      %v724 = vadd.f32 0.0, %v723
      %v725 = vpop.f32.mrb[0].mxu0
      %726 = vmatprep.mubr.bf16.mxu0 0
      %727 = vmatmul.mubr.bf16.gmra.mrb[0].mxu0 %v617
      %v728 = vpop.f32.mrb[0].mxu0
      %v729 = vadd.f32 0.0, %v728
      %v730 = vpop.f32.mrb[0].mxu0
      %v731 = vpop.f32.mrb[0].mxu0
      %v732 = vadd.f32 0.0, %v731
      %v733 = vpop.f32.mrb[0].mxu0
      %734 = vmatprep.mubr.bf16.mxu0 0
      %735 = vmatmul.mubr.bf16.gmra.mrb[0].mxu0 %v620
      %v736 = vpop.f32.mrb[0].mxu0
      %v737 = vadd.f32 0.0, %v736
      %v738 = vpop.f32.mrb[0].mxu0
      %v739 = vpop.f32.mrb[0].mxu0
      %v740 = vadd.f32 0.0, %v739
      %v741 = vpop.f32.mrb[0].mxu0
      %742 = vmatprep.mubr.bf16.mxu0 0
      %743 = vmatmul.mubr.bf16.gmra.mrb[0].mxu0 %v623
      %v744 = vpop.f32.mrb[0].mxu0
      %v745 = vadd.f32 0.0, %v744
      %v746 = vpop.f32.mrb[0].mxu0
      %v747 = vpop.f32.mrb[0].mxu0
      %v748 = vadd.f32 0.0, %v747
      %v749 = vpop.f32.mrb[0].mxu0
      %750 = vmatprep.mubr.bf16.mxu0 0
      %751 = vmatmul.mubr.bf16.gmra.mrb[0].mxu0 %v626
      %v752 = vpop.f32.mrb[0].mxu0
      %v753 = vadd.f32 0.0, %v752
      %v754 = vpop.f32.mrb[0].mxu0
      %v755 = vpop.f32.mrb[0].mxu0
      %v756 = vadd.f32 0.0, %v755
      %v757 = vpop.f32.mrb[0].mxu0
      %758 = vmatprep.mubr.bf16.mxu0 0
      %759 = vmatmul.mubr.bf16.gmra.mrb[0].mxu0 %v629
      %v760 = vpop.f32.mrb[0].mxu0
      %v761 = vadd.f32 0.0, %v760
      %v762 = vpop.f32.mrb[0].mxu0
      %v763 = vpop.f32.mrb[0].mxu0
      %v764 = vadd.f32 0.0, %v763
      %v765 = vpop.f32.mrb[0].mxu0
      %766 = vmatprep.mubr.bf16.mxu0 0
      %767 = vmatmul.mubr.bf16.gmra.mrb[0].mxu0 %v632
      %v768 = vpop.f32.mrb[0].mxu0
      %v769 = vadd.f32 0.0, %v768
      %v770 = vpop.f32.mrb[0].mxu0
      %v771 = vpop.f32.mrb[0].mxu0
      %v772 = vadd.f32 0.0, %v771
      %v773 = vpop.f32.mrb[0].mxu0
      %774 = vmatprep.mubr.bf16.mxu0 0
      %775 = vmatmul.mubr.bf16.gmra.mrb[0].mxu0 %v635
      %v776 = vpop.f32.mrb[0].mxu0
      %v777 = vadd.f32 0.0, %v776
      %v778 = vpop.f32.mrb[0].mxu0
      %v779 = vpop.f32.mrb[0].mxu0
      %v780 = vadd.f32 0.0, %v779
      %v781 = vpop.f32.mrb[0].mxu0
      %782 = vmatprep.mubr.bf16.mxu0 0
      %783 = vmatmul.mubr.bf16.gmra.mrb[0].mxu0 %v638
      %v784 = vpop.f32.mrb[0].mxu0
      %v785 = vadd.f32 0.0, %v784
      %v786 = vpop.f32.mrb[0].mxu0
      %v787 = vpop.f32.mrb[0].mxu0
      %v788 = vadd.f32 0.0, %v787
      %v789 = vpop.f32.mrb[0].mxu0
      %790 = vmatprep.mubr.bf16.mxu0 0
      %791 = vmatmul.mubr.bf16.gmra.mrb[0].mxu0 %v641
      %v792 = vpop.f32.mrb[0].mxu0
      %v793 = vadd.f32 0.0, %v792
      %v794 = vpop.f32.mrb[0].mxu0
      %v795 = vpop.f32.mrb[0].mxu0
      %v796 = vadd.f32 0.0, %v795
      %v797 = vpop.f32.mrb[0].mxu0
      %798 = vmatprep.mubr.bf16.mxu0 0
      %799 = vmatmul.mubr.bf16.gmra.mrb[0].mxu0 %v644
      %v800 = vpop.f32.mrb[0].mxu0
      %v801 = vadd.f32 0.0, %v800
      %v802 = vpop.f32.mrb[0].mxu0
      %v803 = vpop.f32.mrb[0].mxu0
      %v804 = vadd.f32 0.0, %v803
      %v805 = vpop.f32.mrb[0].mxu0
      %806 = vmatprep.mubr.bf16.mxu0 0
      %807 = vmatmul.mubr.bf16.gmra.mrb[0].mxu0 %v647
      %v808 = vpop.f32.mrb[0].mxu0
      %v809 = vadd.f32 0.0, %v808
      %v810 = vpop.f32.mrb[0].mxu0
      %v811 = vpop.f32.mrb[0].mxu0
      %v812 = vadd.f32 0.0, %v811
      %v813 = vpop.f32.mrb[0].mxu0
      %814 = vmatprep.mubr.bf16.mxu0 0
      %815 = vmatmul.mubr.bf16.gmra.mrb[0].mxu0 %v650
      %v816 = vpop.f32.mrb[0].mxu0
      %v817 = vadd.f32 0.0, %v816
      %v818 = vpop.f32.mrb[0].mxu0
      %v819 = vpop.f32.mrb[0].mxu0
      %v820 = vadd.f32 0.0, %v819
      %v821 = vpop.f32.mrb[0].mxu0
      %822 = vmatprep.mubr.bf16.mxu0 0
      %823 = vmatmul.mubr.bf16.gmra.mrb[0].mxu0 %v653
      %v824 = vpop.f32.mrb[0].mxu0
      %v825 = vadd.f32 0.0, %v824
      %v826 = vpop.f32.mrb[0].mxu0
      %v827 = vpop.f32.mrb[0].mxu0
      %v828 = vadd.f32 0.0, %v827
      %v829 = vpop.f32.mrb[0].mxu0
      %830 = vmatprep.mubr.bf16.mxu0 0
      %831 = vmatmul.mubr.bf16.gmra.mrb[0].mxu0 %v656
      %v832 = vpop.f32.mrb[0].mxu0
      %v833 = vadd.f32 0.0, %v832
      %v834 = vpop.f32.mrb[0].mxu0
      %v835 = vpop.f32.mrb[0].mxu0
      %v836 = vadd.f32 0.0, %v835
      %v837 = vpop.f32.mrb[0].mxu0
      %838 = vdwg.mxu0
      %v839 = vsel %vm603, %v435, 0
      %v841 = vsel %vm603, %v436, 0
      %v843 = vsel %vm603, %v437, 0
      %v845 = vsel %vm603, %v438, 0
      %v847 = vsel %vm603, %v439, 0
      %v849 = vsel %vm603, %v440, 0
      %v851 = vsel %vm603, %v441, 0
      %v853 = vsel %vm603, %v442, 0
      %v855 = vsel %vm603, %v443, 0
      %v857 = vsel %vm603, %v444, 0
      %v859 = vsel %vm603, %v445, 0
      %v861 = vsel %vm603, %v446, 0
      %v863 = vsel %vm603, %v447, 0
      %v865 = vsel %vm603, %v448, 0
      %v867 = vsel %vm603, %v449, 0
      %v869 = vsel %vm603, %v450, 0
      %v871 = vsel %vm603, %v451, 0
      %v873 = vsel %vm603, %v452, 0
      %v876 = vsel %vm658, %v357, 0
      %878 = vmatprep.subr.bf16.mxu0 0
      %879 = vmatpush1.bf16.msra.mxu0 %v876
      %880 = vmatprep.subr.bf16.mxu0 0
      %881 = vmatpush1.bf16.msra.mxu0 0
      %882 = vmatprep.subr.bf16.mxu0 0
      %883 = vmatpush1.bf16.msra.mxu0 0
      %884 = vmatprep.subr.bf16.mxu0 0
      %885 = vmatpush1.bf16.msra.mxu0 0
      %886 = vmatprep.subr.bf16.mxu0 0
      %887 = vmatpush1.bf16.msra.mxu0 0
      %888 = vmatprep.subr.bf16.mxu0 0
      %889 = vmatpush1.bf16.msra.mxu0 0
      %890 = vmatprep.subr.bf16.mxu0 0
      %891 = vmatpush1.bf16.msra.mxu0 0
      %892 = vmatprep.subr.bf16.mxu0 0
      %893 = vmatpush1.bf16.msra.mxu0 0
      %894 = vmatprep.subr.bf16.mxu0 0
      %895 = vmatpush1.bf16.msra.mxu0 0
      %896 = vmatprep.subr.bf16.mxu0 0
      %897 = vmatpush1.bf16.msra.mxu0 0
      %898 = vmatprep.subr.bf16.mxu0 0
      %899 = vmatpush1.bf16.msra.mxu0 0
      %900 = vmatprep.subr.bf16.mxu0 0
      %901 = vmatpush1.bf16.msra.mxu0 0
      %902 = vmatprep.subr.bf16.mxu0 0
      %903 = vmatpush1.bf16.msra.mxu0 0
      %904 = vmatprep.subr.bf16.mxu0 0
      %905 = vmatpush1.bf16.msra.mxu0 0
      %906 = vmatprep.subr.bf16.mxu0 0
      %907 = vmatpush1.bf16.msra.mxu0 0
      %908 = vmatprep.subr.bf16.mxu0 0
      %909 = vmatpush1.bf16.msra.mxu0 0
      %910 = vmatprep.mubr.bf16.mxu0 0
      %911 = vmatmul.mubr.bf16.gmra.mrb[0].mxu0 %v839
      %v912 = vpop.f32.mrb[0].mxu0
      %v913 = vadd.f32 %v697, %v912
      %v914 = vpop.f32.mrb[0].mxu0
      %v915 = vpop.f32.mrb[0].mxu0
      %v916 = vadd.f32 %v700, %v915
      %v917 = vpop.f32.mrb[0].mxu0
      %918 = vmatprep.mubr.bf16.mxu0 0
      %919 = vmatmul.mubr.bf16.gmra.mrb[0].mxu0 %v841
      %v920 = vpop.f32.mrb[0].mxu0
      %v921 = vadd.f32 %v705, %v920
      %v922 = vpop.f32.mrb[0].mxu0
      %v923 = vpop.f32.mrb[0].mxu0
      %v924 = vadd.f32 %v708, %v923
      %v925 = vpop.f32.mrb[0].mxu0
      %926 = vmatprep.mubr.bf16.mxu0 0
      %927 = vmatmul.mubr.bf16.gmra.mrb[0].mxu0 %v843
      %v928 = vpop.f32.mrb[0].mxu0
      %v929 = vadd.f32 %v713, %v928
      %v930 = vpop.f32.mrb[0].mxu0
      %v931 = vpop.f32.mrb[0].mxu0
      %v932 = vadd.f32 %v716, %v931
      %v933 = vpop.f32.mrb[0].mxu0
      %934 = vmatprep.mubr.bf16.mxu0 0
      %935 = vmatmul.mubr.bf16.gmra.mrb[0].mxu0 %v845
      %v936 = vpop.f32.mrb[0].mxu0
      %v937 = vadd.f32 %v721, %v936
      %v938 = vpop.f32.mrb[0].mxu0
      %v939 = vpop.f32.mrb[0].mxu0
      %v940 = vadd.f32 %v724, %v939
      %v941 = vpop.f32.mrb[0].mxu0
      %942 = vmatprep.mubr.bf16.mxu0 0
      %943 = vmatmul.mubr.bf16.gmra.mrb[0].mxu0 %v847
      %v944 = vpop.f32.mrb[0].mxu0
      %v945 = vadd.f32 %v729, %v944
      %v946 = vpop.f32.mrb[0].mxu0
      %v947 = vpop.f32.mrb[0].mxu0
      %v948 = vadd.f32 %v732, %v947
      %v949 = vpop.f32.mrb[0].mxu0
      %950 = vmatprep.mubr.bf16.mxu0 0
      %951 = vmatmul.mubr.bf16.gmra.mrb[0].mxu0 %v849
      %v952 = vpop.f32.mrb[0].mxu0
      %v953 = vadd.f32 %v737, %v952
      %v954 = vpop.f32.mrb[0].mxu0
      %v955 = vpop.f32.mrb[0].mxu0
      %v956 = vadd.f32 %v740, %v955
      %v957 = vpop.f32.mrb[0].mxu0
      %958 = vmatprep.mubr.bf16.mxu0 0
      %959 = vmatmul.mubr.bf16.gmra.mrb[0].mxu0 %v851
      %v960 = vpop.f32.mrb[0].mxu0
      %v961 = vadd.f32 %v745, %v960
      %v962 = vpop.f32.mrb[0].mxu0
      %v963 = vpop.f32.mrb[0].mxu0
      %v964 = vadd.f32 %v748, %v963
      %v965 = vpop.f32.mrb[0].mxu0
      %966 = vmatprep.mubr.bf16.mxu0 0
      %967 = vmatmul.mubr.bf16.gmra.mrb[0].mxu0 %v853
      %v968 = vpop.f32.mrb[0].mxu0
      %v969 = vadd.f32 %v753, %v968
      %v970 = vpop.f32.mrb[0].mxu0
      %v971 = vpop.f32.mrb[0].mxu0
      %v972 = vadd.f32 %v756, %v971
      %v973 = vpop.f32.mrb[0].mxu0
      %974 = vmatprep.mubr.bf16.mxu0 0
      %975 = vmatmul.mubr.bf16.gmra.mrb[0].mxu0 %v855
      %v976 = vpop.f32.mrb[0].mxu0
      %v977 = vadd.f32 %v761, %v976
      %v978 = vpop.f32.mrb[0].mxu0
      %v979 = vpop.f32.mrb[0].mxu0
      %v980 = vadd.f32 %v764, %v979
      %v981 = vpop.f32.mrb[0].mxu0
      %982 = vmatprep.mubr.bf16.mxu0 0
      %983 = vmatmul.mubr.bf16.gmra.mrb[0].mxu0 %v857
      %v984 = vpop.f32.mrb[0].mxu0
      %v985 = vadd.f32 %v769, %v984
      %v986 = vpop.f32.mrb[0].mxu0
      %v987 = vpop.f32.mrb[0].mxu0
      %v988 = vadd.f32 %v772, %v987
      %v989 = vpop.f32.mrb[0].mxu0
      %990 = vmatprep.mubr.bf16.mxu0 0
      %991 = vmatmul.mubr.bf16.gmra.mrb[0].mxu0 %v859
      %v992 = vpop.f32.mrb[0].mxu0
      %v993 = vadd.f32 %v777, %v992
      %v994 = vpop.f32.mrb[0].mxu0
      %v995 = vpop.f32.mrb[0].mxu0
      %v996 = vadd.f32 %v780, %v995
      %v997 = vpop.f32.mrb[0].mxu0
      %998 = vmatprep.mubr.bf16.mxu0 0
      %999 = vmatmul.mubr.bf16.gmra.mrb[0].mxu0 %v861
      %v1000 = vpop.f32.mrb[0].mxu0
      %v1001 = vadd.f32 %v785, %v1000
      %v1002 = vpop.f32.mrb[0].mxu0
      %v1003 = vpop.f32.mrb[0].mxu0
      %v1004 = vadd.f32 %v788, %v1003
      %v1005 = vpop.f32.mrb[0].mxu0
      %1006 = vmatprep.mubr.bf16.mxu0 0
      %1007 = vmatmul.mubr.bf16.gmra.mrb[0].mxu0 %v863
      %v1008 = vpop.f32.mrb[0].mxu0
      %v1009 = vadd.f32 %v793, %v1008
      %v1010 = vpop.f32.mrb[0].mxu0
      %v1011 = vpop.f32.mrb[0].mxu0
      %v1012 = vadd.f32 %v796, %v1011
      %v1013 = vpop.f32.mrb[0].mxu0
      %1014 = vmatprep.mubr.bf16.mxu0 0
      %1015 = vmatmul.mubr.bf16.gmra.mrb[0].mxu0 %v865
      %v1016 = vpop.f32.mrb[0].mxu0
      %v1017 = vadd.f32 %v801, %v1016
      %v1018 = vpop.f32.mrb[0].mxu0
      %v1019 = vpop.f32.mrb[0].mxu0
      %v1020 = vadd.f32 %v804, %v1019
      %v1021 = vpop.f32.mrb[0].mxu0
      %1022 = vmatprep.mubr.bf16.mxu0 0
      %1023 = vmatmul.mubr.bf16.gmra.mrb[0].mxu0 %v867
      %v1024 = vpop.f32.mrb[0].mxu0
      %v1025 = vadd.f32 %v809, %v1024
      %v1026 = vpop.f32.mrb[0].mxu0
      %v1027 = vpop.f32.mrb[0].mxu0
      %v1028 = vadd.f32 %v812, %v1027
      %v1029 = vpop.f32.mrb[0].mxu0
      %1030 = vmatprep.mubr.bf16.mxu0 0
      %1031 = vmatmul.mubr.bf16.gmra.mrb[0].mxu0 %v869
      %v1032 = vpop.f32.mrb[0].mxu0
      %v1033 = vadd.f32 %v817, %v1032
      %v1034 = vpop.f32.mrb[0].mxu0
      %v1035 = vpop.f32.mrb[0].mxu0
      %v1036 = vadd.f32 %v820, %v1035
      %v1037 = vpop.f32.mrb[0].mxu0
      %1038 = vmatprep.mubr.bf16.mxu0 0
      %1039 = vmatmul.mubr.bf16.gmra.mrb[0].mxu0 %v871
      %v1040 = vpop.f32.mrb[0].mxu0
      %v1041 = vadd.f32 %v825, %v1040
      %v1042 = vpop.f32.mrb[0].mxu0
      %v1043 = vpop.f32.mrb[0].mxu0
      %v1044 = vadd.f32 %v828, %v1043
      %v1045 = vpop.f32.mrb[0].mxu0
      %1046 = vmatprep.mubr.bf16.mxu0 0
      %1047 = vmatmul.mubr.bf16.gmra.mrb[0].mxu0 %v873
      %v1048 = vpop.f32.mrb[0].mxu0
      %v1049 = vadd.f32 %v833, %v1048
      %v1050 = vpop.f32.mrb[0].mxu0
      %v1051 = vpop.f32.mrb[0].mxu0
      %v1052 = vadd.f32 %v836, %v1051
      %v1053 = vpop.f32.mrb[0].mxu0
      %1054 = vdwg.mxu0
      %v1055 = vld [vmem:[%s301] sm:$0xe]
      %s1056 = scalar_lea.vmem %s1, 8
      %v1057 = vld [vmem:[%s1056] sm:$0xf]
      %v1059 = vunpack.c.l.b16 %v1055
      %v1060 = vpack.c.b16 %v399, %v1059
      %vm1061 = vcmask 1046528
      %v1062 = vrot.slane %v1060, 1
      %v1063 = vrot.slane %v436, 1
      %v1064 = vsel %vm1061, %v1062, %v1063
      %v1065 = vrot.slane %v437, 1
      %v1066 = vsel %vm1061, %v1063, %v1065
      %v1067 = vrot.slane %v438, 1
      %v1068 = vsel %vm1061, %v1065, %v1067
      %v1069 = vrot.slane %v439, 1
      %v1070 = vsel %vm1061, %v1067, %v1069
      %v1071 = vrot.slane %v440, 1
      %v1072 = vsel %vm1061, %v1069, %v1071
      %v1073 = vrot.slane %v441, 1
      %v1074 = vsel %vm1061, %v1071, %v1073
      %v1075 = vrot.slane %v442, 1
      %v1076 = vsel %vm1061, %v1073, %v1075
      %v1077 = vrot.slane %v443, 1
      %v1078 = vsel %vm1061, %v1075, %v1077
      %v1079 = vrot.slane %v444, 1
      %v1080 = vsel %vm1061, %v1077, %v1079
      %v1081 = vrot.slane %v445, 1
      %v1082 = vsel %vm1061, %v1079, %v1081
      %v1083 = vrot.slane %v446, 1
      %v1084 = vsel %vm1061, %v1081, %v1083
      %v1085 = vrot.slane %v447, 1
      %v1086 = vsel %vm1061, %v1083, %v1085
      %v1087 = vrot.slane %v448, 1
      %v1088 = vsel %vm1061, %v1085, %v1087
      %v1089 = vrot.slane %v449, 1
      %v1090 = vsel %vm1061, %v1087, %v1089
      %v1091 = vrot.slane %v450, 1
      %v1092 = vsel %vm1061, %v1089, %v1091
      %v1093 = vrot.slane %v451, 1
      %v1094 = vsel %vm1061, %v1091, %v1093
      %v1095 = vrot.slane %v452, 1
      %v1096 = vsel %vm1061, %v1093, %v1095
      %v1097 = vrot.slane %v453, 1
      %v1098 = vsel %vm1061, %v1095, %v1097
      %v1100 = vsel %vm603, %v1064, 0
      %v1103 = vsel %vm603, %v1066, 0
      %v1106 = vsel %vm603, %v1068, 0
      %v1109 = vsel %vm603, %v1070, 0
      %v1112 = vsel %vm603, %v1072, 0
      %v1115 = vsel %vm603, %v1074, 0
      %v1118 = vsel %vm603, %v1076, 0
      %v1121 = vsel %vm603, %v1078, 0
      %v1124 = vsel %vm603, %v1080, 0
      %v1127 = vsel %vm603, %v1082, 0
      %v1130 = vsel %vm603, %v1084, 0
      %v1133 = vsel %vm603, %v1086, 0
      %v1136 = vsel %vm603, %v1088, 0
      %v1139 = vsel %vm603, %v1090, 0
      %v1142 = vsel %vm603, %v1092, 0
      %v1145 = vsel %vm603, %v1094, 0
      %v1148 = vsel %vm603, %v1096, 0
      %v1151 = vsel %vm603, %v1098, 0
      %v1154 = vsel %vm658, %v1057, 0
      %1156 = vmatprep.subr.bf16.mxu0 0
      %1157 = vmatpush1.bf16.msra.mxu0 %v1154
      %1158 = vmatprep.subr.bf16.mxu0 0
      %1159 = vmatpush1.bf16.msra.mxu0 0
      %1160 = vmatprep.subr.bf16.mxu0 0
      %1161 = vmatpush1.bf16.msra.mxu0 0
      %1162 = vmatprep.subr.bf16.mxu0 0
      %1163 = vmatpush1.bf16.msra.mxu0 0
      %1164 = vmatprep.subr.bf16.mxu0 0
      %1165 = vmatpush1.bf16.msra.mxu0 0
      %1166 = vmatprep.subr.bf16.mxu0 0
      %1167 = vmatpush1.bf16.msra.mxu0 0
      %1168 = vmatprep.subr.bf16.mxu0 0
      %1169 = vmatpush1.bf16.msra.mxu0 0
      %1170 = vmatprep.subr.bf16.mxu0 0
      %1171 = vmatpush1.bf16.msra.mxu0 0
      %1172 = vmatprep.subr.bf16.mxu0 0
      %1173 = vmatpush1.bf16.msra.mxu0 0
      %1174 = vmatprep.subr.bf16.mxu0 0
      %1175 = vmatpush1.bf16.msra.mxu0 0
      %1176 = vmatprep.subr.bf16.mxu0 0
      %1177 = vmatpush1.bf16.msra.mxu0 0
      %1178 = vmatprep.subr.bf16.mxu0 0
      %1179 = vmatpush1.bf16.msra.mxu0 0
      %1180 = vmatprep.subr.bf16.mxu0 0
      %1181 = vmatpush1.bf16.msra.mxu0 0
      %1182 = vmatprep.subr.bf16.mxu0 0
      %1183 = vmatpush1.bf16.msra.mxu0 0
      %1184 = vmatprep.subr.bf16.mxu0 0
      %1185 = vmatpush1.bf16.msra.mxu0 0
      %1186 = vmatprep.subr.bf16.mxu0 0
      %1187 = vmatpush1.bf16.msra.mxu0 0
      %1188 = vmatprep.mubr.bf16.mxu0 0
      %1189 = vmatmul.mubr.bf16.gmra.mrb[0].mxu0 %v1100
      %v1190 = vpop.f32.mrb[0].mxu0
      %v1191 = vadd.f32 0.0, %v1190
      %v1192 = vpop.f32.mrb[0].mxu0
      %v1193 = vpop.f32.mrb[0].mxu0
      %v1194 = vadd.f32 0.0, %v1193
      %v1195 = vpop.f32.mrb[0].mxu0
      %1196 = vmatprep.mubr.bf16.mxu0 0
      %1197 = vmatmul.mubr.bf16.gmra.mrb[0].mxu0 %v1103
      %v1198 = vpop.f32.mrb[0].mxu0
      %v1199 = vadd.f32 0.0, %v1198
      %v1200 = vpop.f32.mrb[0].mxu0
      %v1201 = vpop.f32.mrb[0].mxu0
      %v1202 = vadd.f32 0.0, %v1201
      %v1203 = vpop.f32.mrb[0].mxu0
      %1204 = vmatprep.mubr.bf16.mxu0 0
      %1205 = vmatmul.mubr.bf16.gmra.mrb[0].mxu0 %v1106
      %v1206 = vpop.f32.mrb[0].mxu0
      %v1207 = vadd.f32 0.0, %v1206
      %v1208 = vpop.f32.mrb[0].mxu0
      %v1209 = vpop.f32.mrb[0].mxu0
      %v1210 = vadd.f32 0.0, %v1209
      %v1211 = vpop.f32.mrb[0].mxu0
      %1212 = vmatprep.mubr.bf16.mxu0 0
      %1213 = vmatmul.mubr.bf16.gmra.mrb[0].mxu0 %v1109
      %v1214 = vpop.f32.mrb[0].mxu0
      %v1215 = vadd.f32 0.0, %v1214
      %v1216 = vpop.f32.mrb[0].mxu0
      %v1217 = vpop.f32.mrb[0].mxu0
      %v1218 = vadd.f32 0.0, %v1217
      %v1219 = vpop.f32.mrb[0].mxu0
      %1220 = vmatprep.mubr.bf16.mxu0 0
      %1221 = vmatmul.mubr.bf16.gmra.mrb[0].mxu0 %v1112
      %v1222 = vpop.f32.mrb[0].mxu0
      %v1223 = vadd.f32 0.0, %v1222
      %v1224 = vpop.f32.mrb[0].mxu0
      %v1225 = vpop.f32.mrb[0].mxu0
      %v1226 = vadd.f32 0.0, %v1225
      %v1227 = vpop.f32.mrb[0].mxu0
      %1228 = vmatprep.mubr.bf16.mxu0 0
      %1229 = vmatmul.mubr.bf16.gmra.mrb[0].mxu0 %v1115
      %v1230 = vpop.f32.mrb[0].mxu0
      %v1231 = vadd.f32 0.0, %v1230
      %v1232 = vpop.f32.mrb[0].mxu0
      %v1233 = vpop.f32.mrb[0].mxu0
      %v1234 = vadd.f32 0.0, %v1233
      %v1235 = vpop.f32.mrb[0].mxu0
      %1236 = vmatprep.mubr.bf16.mxu0 0
      %1237 = vmatmul.mubr.bf16.gmra.mrb[0].mxu0 %v1118
      %v1238 = vpop.f32.mrb[0].mxu0
      %v1239 = vadd.f32 0.0, %v1238
      %v1240 = vpop.f32.mrb[0].mxu0
      %v1241 = vpop.f32.mrb[0].mxu0
      %v1242 = vadd.f32 0.0, %v1241
      %v1243 = vpop.f32.mrb[0].mxu0
      %1244 = vmatprep.mubr.bf16.mxu0 0
      %1245 = vmatmul.mubr.bf16.gmra.mrb[0].mxu0 %v1121
      %v1246 = vpop.f32.mrb[0].mxu0
      %v1247 = vadd.f32 0.0, %v1246
      %v1248 = vpop.f32.mrb[0].mxu0
      %v1249 = vpop.f32.mrb[0].mxu0
      %v1250 = vadd.f32 0.0, %v1249
      %v1251 = vpop.f32.mrb[0].mxu0
      %1252 = vmatprep.mubr.bf16.mxu0 0
      %1253 = vmatmul.mubr.bf16.gmra.mrb[0].mxu0 %v1124
      %v1254 = vpop.f32.mrb[0].mxu0
      %v1255 = vadd.f32 0.0, %v1254
      %v1256 = vpop.f32.mrb[0].mxu0
      %v1257 = vpop.f32.mrb[0].mxu0
      %v1258 = vadd.f32 0.0, %v1257
      %v1259 = vpop.f32.mrb[0].mxu0
      %1260 = vmatprep.mubr.bf16.mxu0 0
      %1261 = vmatmul.mubr.bf16.gmra.mrb[0].mxu0 %v1127
      %v1262 = vpop.f32.mrb[0].mxu0
      %v1263 = vadd.f32 0.0, %v1262
      %v1264 = vpop.f32.mrb[0].mxu0
      %v1265 = vpop.f32.mrb[0].mxu0
      %v1266 = vadd.f32 0.0, %v1265
      %v1267 = vpop.f32.mrb[0].mxu0
      %1268 = vmatprep.mubr.bf16.mxu0 0
      %1269 = vmatmul.mubr.bf16.gmra.mrb[0].mxu0 %v1130
      %v1270 = vpop.f32.mrb[0].mxu0
      %v1271 = vadd.f32 0.0, %v1270
      %v1272 = vpop.f32.mrb[0].mxu0
      %v1273 = vpop.f32.mrb[0].mxu0
      %v1274 = vadd.f32 0.0, %v1273
      %v1275 = vpop.f32.mrb[0].mxu0
      %1276 = vmatprep.mubr.bf16.mxu0 0
      %1277 = vmatmul.mubr.bf16.gmra.mrb[0].mxu0 %v1133
      %v1278 = vpop.f32.mrb[0].mxu0
      %v1279 = vadd.f32 0.0, %v1278
      %v1280 = vpop.f32.mrb[0].mxu0
      %v1281 = vpop.f32.mrb[0].mxu0
      %v1282 = vadd.f32 0.0, %v1281
      %v1283 = vpop.f32.mrb[0].mxu0
      %1284 = vmatprep.mubr.bf16.mxu0 0
      %1285 = vmatmul.mubr.bf16.gmra.mrb[0].mxu0 %v1136
      %v1286 = vpop.f32.mrb[0].mxu0
      %v1287 = vadd.f32 0.0, %v1286
      %v1288 = vpop.f32.mrb[0].mxu0
      %v1289 = vpop.f32.mrb[0].mxu0
      %v1290 = vadd.f32 0.0, %v1289
      %v1291 = vpop.f32.mrb[0].mxu0
      %1292 = vmatprep.mubr.bf16.mxu0 0
      %1293 = vmatmul.mubr.bf16.gmra.mrb[0].mxu0 %v1139
      %v1294 = vpop.f32.mrb[0].mxu0
      %v1295 = vadd.f32 0.0, %v1294
      %v1296 = vpop.f32.mrb[0].mxu0
      %v1297 = vpop.f32.mrb[0].mxu0
      %v1298 = vadd.f32 0.0, %v1297
      %v1299 = vpop.f32.mrb[0].mxu0
      %1300 = vmatprep.mubr.bf16.mxu0 0
      %1301 = vmatmul.mubr.bf16.gmra.mrb[0].mxu0 %v1142
      %v1302 = vpop.f32.mrb[0].mxu0
      %v1303 = vadd.f32 0.0, %v1302
      %v1304 = vpop.f32.mrb[0].mxu0
      %v1305 = vpop.f32.mrb[0].mxu0
      %v1306 = vadd.f32 0.0, %v1305
      %v1307 = vpop.f32.mrb[0].mxu0
      %1308 = vmatprep.mubr.bf16.mxu0 0
      %1309 = vmatmul.mubr.bf16.gmra.mrb[0].mxu0 %v1145
      %v1310 = vpop.f32.mrb[0].mxu0
      %v1311 = vadd.f32 0.0, %v1310
      %v1312 = vpop.f32.mrb[0].mxu0
      %v1313 = vpop.f32.mrb[0].mxu0
      %v1314 = vadd.f32 0.0, %v1313
      %v1315 = vpop.f32.mrb[0].mxu0
      %1316 = vmatprep.mubr.bf16.mxu0 0
      %1317 = vmatmul.mubr.bf16.gmra.mrb[0].mxu0 %v1148
      %v1318 = vpop.f32.mrb[0].mxu0
      %v1319 = vadd.f32 0.0, %v1318
      %v1320 = vpop.f32.mrb[0].mxu0
      %v1321 = vpop.f32.mrb[0].mxu0
      %v1322 = vadd.f32 0.0, %v1321
      %v1323 = vpop.f32.mrb[0].mxu0
      %1324 = vmatprep.mubr.bf16.mxu0 0
      %1325 = vmatmul.mubr.bf16.gmra.mrb[0].mxu0 %v1151
      %v1326 = vpop.f32.mrb[0].mxu0
      %v1327 = vadd.f32 0.0, %v1326
      %v1328 = vpop.f32.mrb[0].mxu0
      %v1329 = vpop.f32.mrb[0].mxu0
      %v1330 = vadd.f32 0.0, %v1329
      %v1331 = vpop.f32.mrb[0].mxu0
      %1332 = vdwg.mxu0
      %v1333 = vadd.f32 %v913, %v1191
      %v1334 = vadd.f32 %v916, %v1194
      %v1335 = vadd.f32 %v921, %v1199
      %v1336 = vadd.f32 %v924, %v1202
      %v1337 = vadd.f32 %v929, %v1207
      %v1338 = vadd.f32 %v932, %v1210
      %v1339 = vadd.f32 %v937, %v1215
      %v1340 = vadd.f32 %v940, %v1218
      %v1341 = vadd.f32 %v945, %v1223
      %v1342 = vadd.f32 %v948, %v1226
      %v1343 = vadd.f32 %v953, %v1231
      %v1344 = vadd.f32 %v956, %v1234
      %v1345 = vadd.f32 %v961, %v1239
      %v1346 = vadd.f32 %v964, %v1242
      %v1347 = vadd.f32 %v969, %v1247
      %v1348 = vadd.f32 %v972, %v1250
      %v1349 = vadd.f32 %v977, %v1255
      %v1350 = vadd.f32 %v980, %v1258
      %v1351 = vadd.f32 %v985, %v1263
      %v1352 = vadd.f32 %v988, %v1266
      %v1353 = vadd.f32 %v993, %v1271
      %v1354 = vadd.f32 %v996, %v1274
      %v1355 = vadd.f32 %v1001, %v1279
      %v1356 = vadd.f32 %v1004, %v1282
      %v1357 = vadd.f32 %v1009, %v1287
      %v1358 = vadd.f32 %v1012, %v1290
      %v1359 = vadd.f32 %v1017, %v1295
      %v1360 = vadd.f32 %v1020, %v1298
      %v1361 = vadd.f32 %v1025, %v1303
      %v1362 = vadd.f32 %v1028, %v1306
      %v1363 = vadd.f32 %v1033, %v1311
      %v1364 = vadd.f32 %v1036, %v1314
      %v1365 = vadd.f32 %v1041, %v1319
      %v1366 = vadd.f32 %v1044, %v1322
      %v1367 = vadd.f32 %v1049, %v1327
      %v1368 = vadd.f32 %v1052, %v1330
      %v1369 = vld [vmem:[%s301 + $0x8] sm:$0xe]
      %v1370 = vld [vmem:[%s301 + $0xc] sm:$0xf]
      %v1371 = vld [vmem:[%s301 + $0x10] sm:$0xf]
      %v1372 = vld [vmem:[%s301 + $0x14] sm:$0xf]
      %v1373 = vld [vmem:[%s301 + $0x18] sm:$0xf]
      %v1374 = vld [vmem:[%s301 + $0x1c] sm:$0xf]
      %v1375 = vld [vmem:[%s301 + $0x20] sm:$0xf]
      %v1376 = vld [vmem:[%s301 + $0x24] sm:$0xf]
      %v1377 = vld [vmem:[%s301 + $0x28] sm:$0xf]
      %v1378 = vld [vmem:[%s301 + $0x2c] sm:$0xf]
      %v1379 = vld [vmem:[%s301 + $0x30] sm:$0xf]
      %v1380 = vld [vmem:[%s301 + $0x34] sm:$0xf]
      %v1381 = vld [vmem:[%s301 + $0x38] sm:$0xf]
      %v1382 = vld [vmem:[%s301 + $0x3c] sm:$0xf]
      %v1383 = vld [vmem:[%s301 + $0x40] sm:$0xf]
      %v1384 = vld [vmem:[%s301 + $0x44] sm:$0xf]
      %v1385 = vld [vmem:[%s301 + $0x48] sm:$0xf]
      %v1386 = vld [vmem:[%s301 + $0x4c] sm:$0xf]
      %v1387 = vld [vmem:[%s301 + $0x50] sm:$0xf]
      %v1388 = vld [vmem:[%s301 + $0x54] sm:$0xf]
      %v1389 = vld [vmem:[%s301 + $0x58] sm:$0xf]
      %v1390 = vld [vmem:[%s301 + $0x5c] sm:$0xf]
      %v1391 = vld [vmem:[%s301 + $0x60] sm:$0xf]
      %v1392 = vld [vmem:[%s301 + $0x64] sm:$0xf]
      %v1393 = vld [vmem:[%s301 + $0x68] sm:$0xf]
      %v1394 = vld [vmem:[%s301 + $0x6c] sm:$0xf]
      %v1395 = vld [vmem:[%s301 + $0x70] sm:$0xf]
      %v1396 = vld [vmem:[%s301 + $0x74] sm:$0xf]
      %v1397 = vld [vmem:[%s301 + $0x78] sm:$0xf]
      %v1398 = vld [vmem:[%s301 + $0x7c] sm:$0xf]
      %v1399 = vld [vmem:[%s301 + $0x80] sm:$0xf]
      %v1400 = vld [vmem:[%s301 + $0x84] sm:$0xf]
      %v1401 = vld [vmem:[%s301 + $0x88] sm:$0xf]
      %v1402 = vld [vmem:[%s301 + $0x8c] sm:$0xf]
      %v1403 = vld [vmem:[%s301 + $0x90] sm:$0xf]
      %v1404 = vld [vmem:[%s301 + $0x94] sm:$0xf]
      %v1405 = vld [vmem:[%s301 + $0x98] sm:$0x1]
      %s1406 = scalar_lea.vmem %s1, 12
      %v1407 = vld [vmem:[%s1406] sm:$0xf]
      %v1445 = vunpack.c.l.b16 %v1369
      %v1446 = vunpack.c.l.b16 %v1370
      %v1447 = vunpack.c.l.b16 %v1371
      %v1448 = vunpack.c.l.b16 %v1372
      %v1449 = vunpack.c.l.b16 %v1373
      %v1450 = vunpack.c.l.b16 %v1374
      %v1451 = vunpack.c.l.b16 %v1375
      %v1452 = vunpack.c.l.b16 %v1376
      %v1453 = vunpack.c.l.b16 %v1377
      %v1454 = vunpack.c.l.b16 %v1378
      %v1455 = vunpack.c.l.b16 %v1379
      %v1456 = vunpack.c.l.b16 %v1380
      %v1457 = vunpack.c.l.b16 %v1381
      %v1458 = vunpack.c.l.b16 %v1382
      %v1459 = vunpack.c.l.b16 %v1383
      %v1460 = vunpack.c.l.b16 %v1384
      %v1461 = vunpack.c.l.b16 %v1385
      %v1462 = vunpack.c.l.b16 %v1386
      %v1463 = vunpack.c.l.b16 %v1387
      %v1464 = vunpack.c.l.b16 %v1388
      %v1465 = vunpack.c.l.b16 %v1389
      %v1466 = vunpack.c.l.b16 %v1390
      %v1467 = vunpack.c.l.b16 %v1391
      %v1468 = vunpack.c.l.b16 %v1392
      %v1469 = vunpack.c.l.b16 %v1393
      %v1470 = vunpack.c.l.b16 %v1394
      %v1471 = vunpack.c.l.b16 %v1395
      %v1472 = vunpack.c.l.b16 %v1396
      %v1473 = vunpack.c.l.b16 %v1397
      %v1474 = vunpack.c.l.b16 %v1398
      %v1475 = vunpack.c.l.b16 %v1399
      %v1476 = vunpack.c.l.b16 %v1400
      %v1477 = vunpack.c.l.b16 %v1401
      %v1478 = vunpack.c.l.b16 %v1402
      %v1479 = vunpack.c.l.b16 %v1403
      %v1480 = vunpack.c.l.b16 %v1404
      %v1481 = vunpack.c.l.b16 %v1405
      %v1482 = vpack.c.b16 %v1446, %v1445
      %v1483 = vpack.c.b16 %v1448, %v1447
      %v1484 = vpack.c.b16 %v1450, %v1449
      %v1485 = vpack.c.b16 %v1452, %v1451
      %v1486 = vpack.c.b16 %v1454, %v1453
      %v1487 = vpack.c.b16 %v1456, %v1455
      %v1488 = vpack.c.b16 %v1458, %v1457
      %v1489 = vpack.c.b16 %v1460, %v1459
      %v1490 = vpack.c.b16 %v1462, %v1461
      %v1491 = vpack.c.b16 %v1464, %v1463
      %v1492 = vpack.c.b16 %v1466, %v1465
      %v1493 = vpack.c.b16 %v1468, %v1467
      %v1494 = vpack.c.b16 %v1470, %v1469
      %v1495 = vpack.c.b16 %v1472, %v1471
      %v1496 = vpack.c.b16 %v1474, %v1473
      %v1497 = vpack.c.b16 %v1476, %v1475
      %v1498 = vpack.c.b16 %v1478, %v1477
      %v1499 = vpack.c.b16 %v1480, %v1479
      %v1500 = vpack.c.b16 %v1481, %v1481
      %v1501 = vrot.slane %v1482, 1
      %v1502 = vrot.slane %v1483, 1
      %v1503 = vsel %vm1061, %v1501, %v1502
      %v1504 = vrot.slane %v1484, 1
      %v1505 = vsel %vm1061, %v1502, %v1504
      %v1506 = vrot.slane %v1485, 1
      %v1507 = vsel %vm1061, %v1504, %v1506
      %v1508 = vrot.slane %v1486, 1
      %v1509 = vsel %vm1061, %v1506, %v1508
      %v1510 = vrot.slane %v1487, 1
      %v1511 = vsel %vm1061, %v1508, %v1510
      %v1512 = vrot.slane %v1488, 1
      %v1513 = vsel %vm1061, %v1510, %v1512
      %v1514 = vrot.slane %v1489, 1
      %v1515 = vsel %vm1061, %v1512, %v1514
      %v1516 = vrot.slane %v1490, 1
      %v1517 = vsel %vm1061, %v1514, %v1516
      %v1518 = vrot.slane %v1491, 1
      %v1519 = vsel %vm1061, %v1516, %v1518
      %v1520 = vrot.slane %v1492, 1
      %v1521 = vsel %vm1061, %v1518, %v1520
      %v1522 = vrot.slane %v1493, 1
      %v1523 = vsel %vm1061, %v1520, %v1522
      %v1524 = vrot.slane %v1494, 1
      %v1525 = vsel %vm1061, %v1522, %v1524
      %v1526 = vrot.slane %v1495, 1
      %v1527 = vsel %vm1061, %v1524, %v1526
      %v1528 = vrot.slane %v1496, 1
      %v1529 = vsel %vm1061, %v1526, %v1528
      %v1530 = vrot.slane %v1497, 1
      %v1531 = vsel %vm1061, %v1528, %v1530
      %v1532 = vrot.slane %v1498, 1
      %v1533 = vsel %vm1061, %v1530, %v1532
      %v1534 = vrot.slane %v1499, 1
      %v1535 = vsel %vm1061, %v1532, %v1534
      %v1536 = vrot.slane %v1500, 1
      %v1537 = vsel %vm1061, %v1534, %v1536
      %v1539 = vsel %vm603, %v1503, 0
      %v1542 = vsel %vm603, %v1505, 0
      %v1545 = vsel %vm603, %v1507, 0
      %v1548 = vsel %vm603, %v1509, 0
      %v1551 = vsel %vm603, %v1511, 0
      %v1554 = vsel %vm603, %v1513, 0
      %v1557 = vsel %vm603, %v1515, 0
      %v1560 = vsel %vm603, %v1517, 0
      %v1563 = vsel %vm603, %v1519, 0
      %v1566 = vsel %vm603, %v1521, 0
      %v1569 = vsel %vm603, %v1523, 0
      %v1572 = vsel %vm603, %v1525, 0
      %v1575 = vsel %vm603, %v1527, 0
      %v1578 = vsel %vm603, %v1529, 0
      %v1581 = vsel %vm603, %v1531, 0
      %v1584 = vsel %vm603, %v1533, 0
      %v1587 = vsel %vm603, %v1535, 0
      %v1590 = vsel %vm603, %v1537, 0
      %v1593 = vsel %vm658, %v1407, 0
      %1595 = vmatprep.subr.bf16.mxu0 0
      %1596 = vmatpush1.bf16.msra.mxu0 %v1593
      %1597 = vmatprep.subr.bf16.mxu0 0
      %1598 = vmatpush1.bf16.msra.mxu0 0
      %1599 = vmatprep.subr.bf16.mxu0 0
      %1600 = vmatpush1.bf16.msra.mxu0 0
      %1601 = vmatprep.subr.bf16.mxu0 0
      %1602 = vmatpush1.bf16.msra.mxu0 0
      %1603 = vmatprep.subr.bf16.mxu0 0
      %1604 = vmatpush1.bf16.msra.mxu0 0
      %1605 = vmatprep.subr.bf16.mxu0 0
      %1606 = vmatpush1.bf16.msra.mxu0 0
      %1607 = vmatprep.subr.bf16.mxu0 0
      %1608 = vmatpush1.bf16.msra.mxu0 0
      %1609 = vmatprep.subr.bf16.mxu0 0
      %1610 = vmatpush1.bf16.msra.mxu0 0
      %1611 = vmatprep.subr.bf16.mxu0 0
      %1612 = vmatpush1.bf16.msra.mxu0 0
      %1613 = vmatprep.subr.bf16.mxu0 0
      %1614 = vmatpush1.bf16.msra.mxu0 0
      %1615 = vmatprep.subr.bf16.mxu0 0
      %1616 = vmatpush1.bf16.msra.mxu0 0
      %1617 = vmatprep.subr.bf16.mxu0 0
      %1618 = vmatpush1.bf16.msra.mxu0 0
      %1619 = vmatprep.subr.bf16.mxu0 0
      %1620 = vmatpush1.bf16.msra.mxu0 0
      %1621 = vmatprep.subr.bf16.mxu0 0
      %1622 = vmatpush1.bf16.msra.mxu0 0
      %1623 = vmatprep.subr.bf16.mxu0 0
      %1624 = vmatpush1.bf16.msra.mxu0 0
      %1625 = vmatprep.subr.bf16.mxu0 0
      %1626 = vmatpush1.bf16.msra.mxu0 0
      %1627 = vmatprep.mubr.bf16.mxu0 0
      %1628 = vmatmul.mubr.bf16.gmra.mrb[0].mxu0 %v1539
      %v1629 = vpop.f32.mrb[0].mxu0
      %v1630 = vadd.f32 0.0, %v1629
      %v1631 = vpop.f32.mrb[0].mxu0
      %v1632 = vpop.f32.mrb[0].mxu0
      %v1633 = vadd.f32 0.0, %v1632
      %v1634 = vpop.f32.mrb[0].mxu0
      %1635 = vmatprep.mubr.bf16.mxu0 0
      %1636 = vmatmul.mubr.bf16.gmra.mrb[0].mxu0 %v1542
      %v1637 = vpop.f32.mrb[0].mxu0
      %v1638 = vadd.f32 0.0, %v1637
      %v1639 = vpop.f32.mrb[0].mxu0
      %v1640 = vpop.f32.mrb[0].mxu0
      %v1641 = vadd.f32 0.0, %v1640
      %v1642 = vpop.f32.mrb[0].mxu0
      %1643 = vmatprep.mubr.bf16.mxu0 0
      %1644 = vmatmul.mubr.bf16.gmra.mrb[0].mxu0 %v1545
      %v1645 = vpop.f32.mrb[0].mxu0
      %v1646 = vadd.f32 0.0, %v1645
      %v1647 = vpop.f32.mrb[0].mxu0
      %v1648 = vpop.f32.mrb[0].mxu0
      %v1649 = vadd.f32 0.0, %v1648
      %v1650 = vpop.f32.mrb[0].mxu0
      %1651 = vmatprep.mubr.bf16.mxu0 0
      %1652 = vmatmul.mubr.bf16.gmra.mrb[0].mxu0 %v1548
      %v1653 = vpop.f32.mrb[0].mxu0
      %v1654 = vadd.f32 0.0, %v1653
      %v1655 = vpop.f32.mrb[0].mxu0
      %v1656 = vpop.f32.mrb[0].mxu0
      %v1657 = vadd.f32 0.0, %v1656
      %v1658 = vpop.f32.mrb[0].mxu0
      %1659 = vmatprep.mubr.bf16.mxu0 0
      %1660 = vmatmul.mubr.bf16.gmra.mrb[0].mxu0 %v1551
      %v1661 = vpop.f32.mrb[0].mxu0
      %v1662 = vadd.f32 0.0, %v1661
      %v1663 = vpop.f32.mrb[0].mxu0
      %v1664 = vpop.f32.mrb[0].mxu0
      %v1665 = vadd.f32 0.0, %v1664
      %v1666 = vpop.f32.mrb[0].mxu0
      %1667 = vmatprep.mubr.bf16.mxu0 0
      %1668 = vmatmul.mubr.bf16.gmra.mrb[0].mxu0 %v1554
      %v1669 = vpop.f32.mrb[0].mxu0
      %v1670 = vadd.f32 0.0, %v1669
      %v1671 = vpop.f32.mrb[0].mxu0
      %v1672 = vpop.f32.mrb[0].mxu0
      %v1673 = vadd.f32 0.0, %v1672
      %v1674 = vpop.f32.mrb[0].mxu0
      %1675 = vmatprep.mubr.bf16.mxu0 0
      %1676 = vmatmul.mubr.bf16.gmra.mrb[0].mxu0 %v1557
      %v1677 = vpop.f32.mrb[0].mxu0
      %v1678 = vadd.f32 0.0, %v1677
      %v1679 = vpop.f32.mrb[0].mxu0
      %v1680 = vpop.f32.mrb[0].mxu0
      %v1681 = vadd.f32 0.0, %v1680
      %v1682 = vpop.f32.mrb[0].mxu0
      %1683 = vmatprep.mubr.bf16.mxu0 0
      %1684 = vmatmul.mubr.bf16.gmra.mrb[0].mxu0 %v1560
      %v1685 = vpop.f32.mrb[0].mxu0
      %v1686 = vadd.f32 0.0, %v1685
      %v1687 = vpop.f32.mrb[0].mxu0
      %v1688 = vpop.f32.mrb[0].mxu0
      %v1689 = vadd.f32 0.0, %v1688
      %v1690 = vpop.f32.mrb[0].mxu0
      %1691 = vmatprep.mubr.bf16.mxu0 0
      %1692 = vmatmul.mubr.bf16.gmra.mrb[0].mxu0 %v1563
      %v1693 = vpop.f32.mrb[0].mxu0
      %v1694 = vadd.f32 0.0, %v1693
      %v1695 = vpop.f32.mrb[0].mxu0
      %v1696 = vpop.f32.mrb[0].mxu0
      %v1697 = vadd.f32 0.0, %v1696
      %v1698 = vpop.f32.mrb[0].mxu0
      %1699 = vmatprep.mubr.bf16.mxu0 0
      %1700 = vmatmul.mubr.bf16.gmra.mrb[0].mxu0 %v1566
      %v1701 = vpop.f32.mrb[0].mxu0
      %v1702 = vadd.f32 0.0, %v1701
      %v1703 = vpop.f32.mrb[0].mxu0
      %v1704 = vpop.f32.mrb[0].mxu0
      %v1705 = vadd.f32 0.0, %v1704
      %v1706 = vpop.f32.mrb[0].mxu0
      %1707 = vmatprep.mubr.bf16.mxu0 0
      %1708 = vmatmul.mubr.bf16.gmra.mrb[0].mxu0 %v1569
      %v1709 = vpop.f32.mrb[0].mxu0
      %v1710 = vadd.f32 0.0, %v1709
      %v1711 = vpop.f32.mrb[0].mxu0
      %v1712 = vpop.f32.mrb[0].mxu0
      %v1713 = vadd.f32 0.0, %v1712
      %v1714 = vpop.f32.mrb[0].mxu0
      %1715 = vmatprep.mubr.bf16.mxu0 0
      %1716 = vmatmul.mubr.bf16.gmra.mrb[0].mxu0 %v1572
      %v1717 = vpop.f32.mrb[0].mxu0
      %v1718 = vadd.f32 0.0, %v1717
      %v1719 = vpop.f32.mrb[0].mxu0
      %v1720 = vpop.f32.mrb[0].mxu0
      %v1721 = vadd.f32 0.0, %v1720
      %v1722 = vpop.f32.mrb[0].mxu0
      %1723 = vmatprep.mubr.bf16.mxu0 0
      %1724 = vmatmul.mubr.bf16.gmra.mrb[0].mxu0 %v1575
      %v1725 = vpop.f32.mrb[0].mxu0
      %v1726 = vadd.f32 0.0, %v1725
      %v1727 = vpop.f32.mrb[0].mxu0
      %v1728 = vpop.f32.mrb[0].mxu0
      %v1729 = vadd.f32 0.0, %v1728
      %v1730 = vpop.f32.mrb[0].mxu0
      %1731 = vmatprep.mubr.bf16.mxu0 0
      %1732 = vmatmul.mubr.bf16.gmra.mrb[0].mxu0 %v1578
      %v1733 = vpop.f32.mrb[0].mxu0
      %v1734 = vadd.f32 0.0, %v1733
      %v1735 = vpop.f32.mrb[0].mxu0
      %v1736 = vpop.f32.mrb[0].mxu0
      %v1737 = vadd.f32 0.0, %v1736
      %v1738 = vpop.f32.mrb[0].mxu0
      %1739 = vmatprep.mubr.bf16.mxu0 0
      %1740 = vmatmul.mubr.bf16.gmra.mrb[0].mxu0 %v1581
      %v1741 = vpop.f32.mrb[0].mxu0
      %v1742 = vadd.f32 0.0, %v1741
      %v1743 = vpop.f32.mrb[0].mxu0
      %v1744 = vpop.f32.mrb[0].mxu0
      %v1745 = vadd.f32 0.0, %v1744
      %v1746 = vpop.f32.mrb[0].mxu0
      %1747 = vmatprep.mubr.bf16.mxu0 0
      %1748 = vmatmul.mubr.bf16.gmra.mrb[0].mxu0 %v1584
      %v1749 = vpop.f32.mrb[0].mxu0
      %v1750 = vadd.f32 0.0, %v1749
      %v1751 = vpop.f32.mrb[0].mxu0
      %v1752 = vpop.f32.mrb[0].mxu0
      %v1753 = vadd.f32 0.0, %v1752
      %v1754 = vpop.f32.mrb[0].mxu0
      %1755 = vmatprep.mubr.bf16.mxu0 0
      %1756 = vmatmul.mubr.bf16.gmra.mrb[0].mxu0 %v1587
      %v1757 = vpop.f32.mrb[0].mxu0
      %v1758 = vadd.f32 0.0, %v1757
      %v1759 = vpop.f32.mrb[0].mxu0
      %v1760 = vpop.f32.mrb[0].mxu0
      %v1761 = vadd.f32 0.0, %v1760
      %v1762 = vpop.f32.mrb[0].mxu0
      %1763 = vmatprep.mubr.bf16.mxu0 0
      %1764 = vmatmul.mubr.bf16.gmra.mrb[0].mxu0 %v1590
      %v1765 = vpop.f32.mrb[0].mxu0
      %v1766 = vadd.f32 0.0, %v1765
      %v1767 = vpop.f32.mrb[0].mxu0
      %v1768 = vpop.f32.mrb[0].mxu0
      %v1769 = vadd.f32 0.0, %v1768
      %v1770 = vpop.f32.mrb[0].mxu0
      %1771 = vdwg.mxu0
      %v1772 = vadd.f32 %v1333, %v1630
      %v1773 = vadd.f32 %v1334, %v1633
      %v1774 = vadd.f32 %v1335, %v1638
      %v1775 = vadd.f32 %v1336, %v1641
      %v1776 = vadd.f32 %v1337, %v1646
      %v1777 = vadd.f32 %v1338, %v1649
      %v1778 = vadd.f32 %v1339, %v1654
      %v1779 = vadd.f32 %v1340, %v1657
      %v1780 = vadd.f32 %v1341, %v1662
      %v1781 = vadd.f32 %v1342, %v1665
      %v1782 = vadd.f32 %v1343, %v1670
      %v1783 = vadd.f32 %v1344, %v1673
      %v1784 = vadd.f32 %v1345, %v1678
      %v1785 = vadd.f32 %v1346, %v1681
      %v1786 = vadd.f32 %v1347, %v1686
      %v1787 = vadd.f32 %v1348, %v1689
      %v1788 = vadd.f32 %v1349, %v1694
      %v1789 = vadd.f32 %v1350, %v1697
      %v1790 = vadd.f32 %v1351, %v1702
      %v1791 = vadd.f32 %v1352, %v1705
      %v1792 = vadd.f32 %v1353, %v1710
      %v1793 = vadd.f32 %v1354, %v1713
      %v1794 = vadd.f32 %v1355, %v1718
      %v1795 = vadd.f32 %v1356, %v1721
      %v1796 = vadd.f32 %v1357, %v1726
      %v1797 = vadd.f32 %v1358, %v1729
      %v1798 = vadd.f32 %v1359, %v1734
      %v1799 = vadd.f32 %v1360, %v1737
      %v1800 = vadd.f32 %v1361, %v1742
      %v1801 = vadd.f32 %v1362, %v1745
      %v1802 = vadd.f32 %v1363, %v1750
      %v1803 = vadd.f32 %v1364, %v1753
      %v1804 = vadd.f32 %v1365, %v1758
      %v1805 = vadd.f32 %v1366, %v1761
      %v1806 = vadd.f32 %v1367, %v1766
      %v1807 = vadd.f32 %v1368, %v1769
      %v1808 = vld [vmem:[%s301 + $0x98] sm:$0x3]
      %s1809 = scalar_lea.vmem %s1, 16
      %v1810 = vld [vmem:[%s1809] sm:$0xf]
      %v1812 = vunpack.c.l.b16 %v1808
      %v1813 = vpack.c.b16 %v1812, %v1812
      %vm1814 = vsmask.f32 6400
      %v1816 = vshrl.u32 %v1482, 16
      %v1818 = vrot.slane %v1816, 1
      %v1819 = vshll.u32 %v1482, 16
      %v1821 = vrot.slane %v1819, 2
      %v1822 = vor.u32 %v1818, %v1821
      %v1824 = vshrl.u32 %v1483, 16
      %v1826 = vrot.slane %v1824, 1
      %v1827 = vshll.u32 %v1483, 16
      %v1829 = vrot.slane %v1827, 2
      %v1830 = vor.u32 %v1826, %v1829
      %v1831 = vsel %vm1814, %v1822, %v1830
      %v1833 = vshrl.u32 %v1484, 16
      %v1835 = vrot.slane %v1833, 1
      %v1836 = vshll.u32 %v1484, 16
      %v1838 = vrot.slane %v1836, 2
      %v1839 = vor.u32 %v1835, %v1838
      %v1840 = vsel %vm1814, %v1830, %v1839
      %v1842 = vshrl.u32 %v1485, 16
      %v1844 = vrot.slane %v1842, 1
      %v1845 = vshll.u32 %v1485, 16
      %v1847 = vrot.slane %v1845, 2
      %v1848 = vor.u32 %v1844, %v1847
      %v1849 = vsel %vm1814, %v1839, %v1848
      %v1851 = vshrl.u32 %v1486, 16
      %v1853 = vrot.slane %v1851, 1
      %v1854 = vshll.u32 %v1486, 16
      %v1856 = vrot.slane %v1854, 2
      %v1857 = vor.u32 %v1853, %v1856
      %v1858 = vsel %vm1814, %v1848, %v1857
      %v1860 = vshrl.u32 %v1487, 16
      %v1862 = vrot.slane %v1860, 1
      %v1863 = vshll.u32 %v1487, 16
      %v1865 = vrot.slane %v1863, 2
      %v1866 = vor.u32 %v1862, %v1865
      %v1867 = vsel %vm1814, %v1857, %v1866
      %v1869 = vshrl.u32 %v1488, 16
      %v1871 = vrot.slane %v1869, 1
      %v1872 = vshll.u32 %v1488, 16
      %v1874 = vrot.slane %v1872, 2
      %v1875 = vor.u32 %v1871, %v1874
      %v1876 = vsel %vm1814, %v1866, %v1875
      %v1878 = vshrl.u32 %v1489, 16
      %v1880 = vrot.slane %v1878, 1
      %v1881 = vshll.u32 %v1489, 16
      %v1883 = vrot.slane %v1881, 2
      %v1884 = vor.u32 %v1880, %v1883
      %v1885 = vsel %vm1814, %v1875, %v1884
      %v1887 = vshrl.u32 %v1490, 16
      %v1889 = vrot.slane %v1887, 1
      %v1890 = vshll.u32 %v1490, 16
      %v1892 = vrot.slane %v1890, 2
      %v1893 = vor.u32 %v1889, %v1892
      %v1894 = vsel %vm1814, %v1884, %v1893
      %v1896 = vshrl.u32 %v1491, 16
      %v1898 = vrot.slane %v1896, 1
      %v1899 = vshll.u32 %v1491, 16
      %v1901 = vrot.slane %v1899, 2
      %v1902 = vor.u32 %v1898, %v1901
      %v1903 = vsel %vm1814, %v1893, %v1902
      %v1905 = vshrl.u32 %v1492, 16
      %v1907 = vrot.slane %v1905, 1
      %v1908 = vshll.u32 %v1492, 16
      %v1910 = vrot.slane %v1908, 2
      %v1911 = vor.u32 %v1907, %v1910
      %v1912 = vsel %vm1814, %v1902, %v1911
      %v1914 = vshrl.u32 %v1493, 16
      %v1916 = vrot.slane %v1914, 1
      %v1917 = vshll.u32 %v1493, 16
      %v1919 = vrot.slane %v1917, 2
      %v1920 = vor.u32 %v1916, %v1919
      %v1921 = vsel %vm1814, %v1911, %v1920
      %v1923 = vshrl.u32 %v1494, 16
      %v1925 = vrot.slane %v1923, 1
      %v1926 = vshll.u32 %v1494, 16
      %v1928 = vrot.slane %v1926, 2
      %v1929 = vor.u32 %v1925, %v1928
      %v1930 = vsel %vm1814, %v1920, %v1929
      %v1932 = vshrl.u32 %v1495, 16
      %v1934 = vrot.slane %v1932, 1
      %v1935 = vshll.u32 %v1495, 16
      %v1937 = vrot.slane %v1935, 2
      %v1938 = vor.u32 %v1934, %v1937
      %v1939 = vsel %vm1814, %v1929, %v1938
      %v1941 = vshrl.u32 %v1496, 16
      %v1943 = vrot.slane %v1941, 1
      %v1944 = vshll.u32 %v1496, 16
      %v1946 = vrot.slane %v1944, 2
      %v1947 = vor.u32 %v1943, %v1946
      %v1948 = vsel %vm1814, %v1938, %v1947
      %v1950 = vshrl.u32 %v1497, 16
      %v1952 = vrot.slane %v1950, 1
      %v1953 = vshll.u32 %v1497, 16
      %v1955 = vrot.slane %v1953, 2
      %v1956 = vor.u32 %v1952, %v1955
      %v1957 = vsel %vm1814, %v1947, %v1956
      %v1959 = vshrl.u32 %v1498, 16
      %v1961 = vrot.slane %v1959, 1
      %v1962 = vshll.u32 %v1498, 16
      %v1964 = vrot.slane %v1962, 2
      %v1965 = vor.u32 %v1961, %v1964
      %v1966 = vsel %vm1814, %v1956, %v1965
      %v1968 = vshrl.u32 %v1499, 16
      %v1970 = vrot.slane %v1968, 1
      %v1971 = vshll.u32 %v1499, 16
      %v1973 = vrot.slane %v1971, 2
      %v1974 = vor.u32 %v1970, %v1973
      %v1975 = vsel %vm1814, %v1965, %v1974
      %v1977 = vshrl.u32 %v1813, 16
      %v1979 = vrot.slane %v1977, 1
      %v1980 = vshll.u32 %v1813, 16
      %v1982 = vrot.slane %v1980, 2
      %v1983 = vor.u32 %v1979, %v1982
      %v1984 = vsel %vm1814, %v1974, %v1983
      %v1986 = vsel %vm603, %v1831, 0
      %v1989 = vsel %vm603, %v1840, 0
      %v1992 = vsel %vm603, %v1849, 0
      %v1995 = vsel %vm603, %v1858, 0
      %v1998 = vsel %vm603, %v1867, 0
      %v2001 = vsel %vm603, %v1876, 0
      %v2004 = vsel %vm603, %v1885, 0
      %v2007 = vsel %vm603, %v1894, 0
      %v2010 = vsel %vm603, %v1903, 0
      %v2013 = vsel %vm603, %v1912, 0
      %v2016 = vsel %vm603, %v1921, 0
      %v2019 = vsel %vm603, %v1930, 0
      %v2022 = vsel %vm603, %v1939, 0
      %v2025 = vsel %vm603, %v1948, 0
      %v2028 = vsel %vm603, %v1957, 0
      %v2031 = vsel %vm603, %v1966, 0
      %v2034 = vsel %vm603, %v1975, 0
      %v2037 = vsel %vm603, %v1984, 0
      %v2040 = vsel %vm658, %v1810, 0
      %2042 = vmatprep.subr.bf16.mxu0 0
      %2043 = vmatpush1.bf16.msra.mxu0 %v2040
      %2044 = vmatprep.subr.bf16.mxu0 0
      %2045 = vmatpush1.bf16.msra.mxu0 0
      %2046 = vmatprep.subr.bf16.mxu0 0
      %2047 = vmatpush1.bf16.msra.mxu0 0
      %2048 = vmatprep.subr.bf16.mxu0 0
      %2049 = vmatpush1.bf16.msra.mxu0 0
      %2050 = vmatprep.subr.bf16.mxu0 0
      %2051 = vmatpush1.bf16.msra.mxu0 0
      %2052 = vmatprep.subr.bf16.mxu0 0
      %2053 = vmatpush1.bf16.msra.mxu0 0
      %2054 = vmatprep.subr.bf16.mxu0 0
      %2055 = vmatpush1.bf16.msra.mxu0 0
      %2056 = vmatprep.subr.bf16.mxu0 0
      %2057 = vmatpush1.bf16.msra.mxu0 0
      %2058 = vmatprep.subr.bf16.mxu0 0
      %2059 = vmatpush1.bf16.msra.mxu0 0
      %2060 = vmatprep.subr.bf16.mxu0 0
      %2061 = vmatpush1.bf16.msra.mxu0 0
      %2062 = vmatprep.subr.bf16.mxu0 0
      %2063 = vmatpush1.bf16.msra.mxu0 0
      %2064 = vmatprep.subr.bf16.mxu0 0
      %2065 = vmatpush1.bf16.msra.mxu0 0
      %2066 = vmatprep.subr.bf16.mxu0 0
      %2067 = vmatpush1.bf16.msra.mxu0 0
      %2068 = vmatprep.subr.bf16.mxu0 0
      %2069 = vmatpush1.bf16.msra.mxu0 0
      %2070 = vmatprep.subr.bf16.mxu0 0
      %2071 = vmatpush1.bf16.msra.mxu0 0
      %2072 = vmatprep.subr.bf16.mxu0 0
      %2073 = vmatpush1.bf16.msra.mxu0 0
      %2074 = vmatprep.mubr.bf16.mxu0 0
      %2075 = vmatmul.mubr.bf16.gmra.mrb[0].mxu0 %v1986
      %v2076 = vpop.f32.mrb[0].mxu0
      %v2077 = vadd.f32 0.0, %v2076
      %v2078 = vpop.f32.mrb[0].mxu0
      %v2079 = vpop.f32.mrb[0].mxu0
      %v2080 = vadd.f32 0.0, %v2079
      %v2081 = vpop.f32.mrb[0].mxu0
      %2082 = vmatprep.mubr.bf16.mxu0 0
      %2083 = vmatmul.mubr.bf16.gmra.mrb[0].mxu0 %v1989
      %v2084 = vpop.f32.mrb[0].mxu0
      %v2085 = vadd.f32 0.0, %v2084
      %v2086 = vpop.f32.mrb[0].mxu0
      %v2087 = vpop.f32.mrb[0].mxu0
      %v2088 = vadd.f32 0.0, %v2087
      %v2089 = vpop.f32.mrb[0].mxu0
      %2090 = vmatprep.mubr.bf16.mxu0 0
      %2091 = vmatmul.mubr.bf16.gmra.mrb[0].mxu0 %v1992
      %v2092 = vpop.f32.mrb[0].mxu0
      %v2093 = vadd.f32 0.0, %v2092
      %v2094 = vpop.f32.mrb[0].mxu0
      %v2095 = vpop.f32.mrb[0].mxu0
      %v2096 = vadd.f32 0.0, %v2095
      %v2097 = vpop.f32.mrb[0].mxu0
      %2098 = vmatprep.mubr.bf16.mxu0 0
      %2099 = vmatmul.mubr.bf16.gmra.mrb[0].mxu0 %v1995
      %v2100 = vpop.f32.mrb[0].mxu0
      %v2101 = vadd.f32 0.0, %v2100
      %v2102 = vpop.f32.mrb[0].mxu0
      %v2103 = vpop.f32.mrb[0].mxu0
      %v2104 = vadd.f32 0.0, %v2103
      %v2105 = vpop.f32.mrb[0].mxu0
      %2106 = vmatprep.mubr.bf16.mxu0 0
      %2107 = vmatmul.mubr.bf16.gmra.mrb[0].mxu0 %v1998
      %v2108 = vpop.f32.mrb[0].mxu0
      %v2109 = vadd.f32 0.0, %v2108
      %v2110 = vpop.f32.mrb[0].mxu0
      %v2111 = vpop.f32.mrb[0].mxu0
      %v2112 = vadd.f32 0.0, %v2111
      %v2113 = vpop.f32.mrb[0].mxu0
      %2114 = vmatprep.mubr.bf16.mxu0 0
      %2115 = vmatmul.mubr.bf16.gmra.mrb[0].mxu0 %v2001
      %v2116 = vpop.f32.mrb[0].mxu0
      %v2117 = vadd.f32 0.0, %v2116
      %v2118 = vpop.f32.mrb[0].mxu0
      %v2119 = vpop.f32.mrb[0].mxu0
      %v2120 = vadd.f32 0.0, %v2119
      %v2121 = vpop.f32.mrb[0].mxu0
      %2122 = vmatprep.mubr.bf16.mxu0 0
      %2123 = vmatmul.mubr.bf16.gmra.mrb[0].mxu0 %v2004
      %v2124 = vpop.f32.mrb[0].mxu0
      %v2125 = vadd.f32 0.0, %v2124
      %v2126 = vpop.f32.mrb[0].mxu0
      %v2127 = vpop.f32.mrb[0].mxu0
      %v2128 = vadd.f32 0.0, %v2127
      %v2129 = vpop.f32.mrb[0].mxu0
      %2130 = vmatprep.mubr.bf16.mxu0 0
      %2131 = vmatmul.mubr.bf16.gmra.mrb[0].mxu0 %v2007
      %v2132 = vpop.f32.mrb[0].mxu0
      %v2133 = vadd.f32 0.0, %v2132
      %v2134 = vpop.f32.mrb[0].mxu0
      %v2135 = vpop.f32.mrb[0].mxu0
      %v2136 = vadd.f32 0.0, %v2135
      %v2137 = vpop.f32.mrb[0].mxu0
      %2138 = vmatprep.mubr.bf16.mxu0 0
      %2139 = vmatmul.mubr.bf16.gmra.mrb[0].mxu0 %v2010
      %v2140 = vpop.f32.mrb[0].mxu0
      %v2141 = vadd.f32 0.0, %v2140
      %v2142 = vpop.f32.mrb[0].mxu0
      %v2143 = vpop.f32.mrb[0].mxu0
      %v2144 = vadd.f32 0.0, %v2143
      %v2145 = vpop.f32.mrb[0].mxu0
      %2146 = vmatprep.mubr.bf16.mxu0 0
      %2147 = vmatmul.mubr.bf16.gmra.mrb[0].mxu0 %v2013
      %v2148 = vpop.f32.mrb[0].mxu0
      %v2149 = vadd.f32 0.0, %v2148
      %v2150 = vpop.f32.mrb[0].mxu0
      %v2151 = vpop.f32.mrb[0].mxu0
      %v2152 = vadd.f32 0.0, %v2151
      %v2153 = vpop.f32.mrb[0].mxu0
      %2154 = vmatprep.mubr.bf16.mxu0 0
      %2155 = vmatmul.mubr.bf16.gmra.mrb[0].mxu0 %v2016
      %v2156 = vpop.f32.mrb[0].mxu0
      %v2157 = vadd.f32 0.0, %v2156
      %v2158 = vpop.f32.mrb[0].mxu0
      %v2159 = vpop.f32.mrb[0].mxu0
      %v2160 = vadd.f32 0.0, %v2159
      %v2161 = vpop.f32.mrb[0].mxu0
      %2162 = vmatprep.mubr.bf16.mxu0 0
      %2163 = vmatmul.mubr.bf16.gmra.mrb[0].mxu0 %v2019
      %v2164 = vpop.f32.mrb[0].mxu0
      %v2165 = vadd.f32 0.0, %v2164
      %v2166 = vpop.f32.mrb[0].mxu0
      %v2167 = vpop.f32.mrb[0].mxu0
      %v2168 = vadd.f32 0.0, %v2167
      %v2169 = vpop.f32.mrb[0].mxu0
      %2170 = vmatprep.mubr.bf16.mxu0 0
      %2171 = vmatmul.mubr.bf16.gmra.mrb[0].mxu0 %v2022
      %v2172 = vpop.f32.mrb[0].mxu0
      %v2173 = vadd.f32 0.0, %v2172
      %v2174 = vpop.f32.mrb[0].mxu0
      %v2175 = vpop.f32.mrb[0].mxu0
      %v2176 = vadd.f32 0.0, %v2175
      %v2177 = vpop.f32.mrb[0].mxu0
      %2178 = vmatprep.mubr.bf16.mxu0 0
      %2179 = vmatmul.mubr.bf16.gmra.mrb[0].mxu0 %v2025
      %v2180 = vpop.f32.mrb[0].mxu0
      %v2181 = vadd.f32 0.0, %v2180
      %v2182 = vpop.f32.mrb[0].mxu0
      %v2183 = vpop.f32.mrb[0].mxu0
      %v2184 = vadd.f32 0.0, %v2183
      %v2185 = vpop.f32.mrb[0].mxu0
      %2186 = vmatprep.mubr.bf16.mxu0 0
      %2187 = vmatmul.mubr.bf16.gmra.mrb[0].mxu0 %v2028
      %v2188 = vpop.f32.mrb[0].mxu0
      %v2189 = vadd.f32 0.0, %v2188
      %v2190 = vpop.f32.mrb[0].mxu0
      %v2191 = vpop.f32.mrb[0].mxu0
      %v2192 = vadd.f32 0.0, %v2191
      %v2193 = vpop.f32.mrb[0].mxu0
      %2194 = vmatprep.mubr.bf16.mxu0 0
      %2195 = vmatmul.mubr.bf16.gmra.mrb[0].mxu0 %v2031
      %v2196 = vpop.f32.mrb[0].mxu0
      %v2197 = vadd.f32 0.0, %v2196
      %v2198 = vpop.f32.mrb[0].mxu0
      %v2199 = vpop.f32.mrb[0].mxu0
      %v2200 = vadd.f32 0.0, %v2199
      %v2201 = vpop.f32.mrb[0].mxu0
      %2202 = vmatprep.mubr.bf16.mxu0 0
      %2203 = vmatmul.mubr.bf16.gmra.mrb[0].mxu0 %v2034
      %v2204 = vpop.f32.mrb[0].mxu0
      %v2205 = vadd.f32 0.0, %v2204
      %v2206 = vpop.f32.mrb[0].mxu0
      %v2207 = vpop.f32.mrb[0].mxu0
      %v2208 = vadd.f32 0.0, %v2207
      %v2209 = vpop.f32.mrb[0].mxu0
      %2210 = vmatprep.mubr.bf16.mxu0 0
      %2211 = vmatmul.mubr.bf16.gmra.mrb[0].mxu0 %v2037
      %v2212 = vpop.f32.mrb[0].mxu0
      %v2213 = vadd.f32 0.0, %v2212
      %v2214 = vpop.f32.mrb[0].mxu0
      %v2215 = vpop.f32.mrb[0].mxu0
      %v2216 = vadd.f32 0.0, %v2215
      %v2217 = vpop.f32.mrb[0].mxu0
      %2218 = vdwg.mxu0
      %v2219 = vadd.f32 %v1772, %v2077
      %v2220 = vadd.f32 %v1773, %v2080
      %v2221 = vadd.f32 %v1774, %v2085
      %v2222 = vadd.f32 %v1775, %v2088
      %v2223 = vadd.f32 %v1776, %v2093
      %v2224 = vadd.f32 %v1777, %v2096
      %v2225 = vadd.f32 %v1778, %v2101
      %v2226 = vadd.f32 %v1779, %v2104
      %v2227 = vadd.f32 %v1780, %v2109
      %v2228 = vadd.f32 %v1781, %v2112
      %v2229 = vadd.f32 %v1782, %v2117
      %v2230 = vadd.f32 %v1783, %v2120
      %v2231 = vadd.f32 %v1784, %v2125
      %v2232 = vadd.f32 %v1785, %v2128
      %v2233 = vadd.f32 %v1786, %v2133
      %v2234 = vadd.f32 %v1787, %v2136
      %v2235 = vadd.f32 %v1788, %v2141
      %v2236 = vadd.f32 %v1789, %v2144
      %v2237 = vadd.f32 %v1790, %v2149
      %v2238 = vadd.f32 %v1791, %v2152
      %v2239 = vadd.f32 %v1792, %v2157
      %v2240 = vadd.f32 %v1793, %v2160
      %v2241 = vadd.f32 %v1794, %v2165
      %v2242 = vadd.f32 %v1795, %v2168
      %v2243 = vadd.f32 %v1796, %v2173
      %v2244 = vadd.f32 %v1797, %v2176
      %v2245 = vadd.f32 %v1798, %v2181
      %v2246 = vadd.f32 %v1799, %v2184
      %v2247 = vadd.f32 %v1800, %v2189
      %v2248 = vadd.f32 %v1801, %v2192
      %v2249 = vadd.f32 %v1802, %v2197
      %v2250 = vadd.f32 %v1803, %v2200
      %v2251 = vadd.f32 %v1804, %v2205
      %v2252 = vadd.f32 %v1805, %v2208
      %v2253 = vadd.f32 %v1806, %v2213
      %v2254 = vadd.f32 %v1807, %v2216
      %v2255 = vld [vmem:[%s301 + $0x8] sm:$0xc]
      %s2256 = scalar_lea.vmem %s1, 20
      %v2257 = vld [vmem:[%s2256] sm:$0xf]
      %v2259 = vunpack.c.l.b16 %v2255
      %v2260 = vpack.c.b16 %v1446, %v2259
      %vm2261 = vcmask 1045504
      %v2262 = vrot.slane %v2260, 2
      %v2263 = vrot.slane %v1483, 2
      %v2264 = vsel %vm2261, %v2262, %v2263
      %v2265 = vrot.slane %v1484, 2
      %v2266 = vsel %vm2261, %v2263, %v2265
      %v2267 = vrot.slane %v1485, 2
      %v2268 = vsel %vm2261, %v2265, %v2267
      %v2269 = vrot.slane %v1486, 2
      %v2270 = vsel %vm2261, %v2267, %v2269
      %v2271 = vrot.slane %v1487, 2
      %v2272 = vsel %vm2261, %v2269, %v2271
      %v2273 = vrot.slane %v1488, 2
      %v2274 = vsel %vm2261, %v2271, %v2273
      %v2275 = vrot.slane %v1489, 2
      %v2276 = vsel %vm2261, %v2273, %v2275
      %v2277 = vrot.slane %v1490, 2
      %v2278 = vsel %vm2261, %v2275, %v2277
      %v2279 = vrot.slane %v1491, 2
      %v2280 = vsel %vm2261, %v2277, %v2279
      %v2281 = vrot.slane %v1492, 2
      %v2282 = vsel %vm2261, %v2279, %v2281
      %v2283 = vrot.slane %v1493, 2
      %v2284 = vsel %vm2261, %v2281, %v2283
      %v2285 = vrot.slane %v1494, 2
      %v2286 = vsel %vm2261, %v2283, %v2285
      %v2287 = vrot.slane %v1495, 2
      %v2288 = vsel %vm2261, %v2285, %v2287
      %v2289 = vrot.slane %v1496, 2
      %v2290 = vsel %vm2261, %v2287, %v2289
      %v2291 = vrot.slane %v1497, 2
      %v2292 = vsel %vm2261, %v2289, %v2291
      %v2293 = vrot.slane %v1498, 2
      %v2294 = vsel %vm2261, %v2291, %v2293
      %v2295 = vrot.slane %v1499, 2
      %v2296 = vsel %vm2261, %v2293, %v2295
      %v2297 = vrot.slane %v1813, 2
      %v2298 = vsel %vm2261, %v2295, %v2297
      %v2300 = vsel %vm603, %v2264, 0
      %v2303 = vsel %vm603, %v2266, 0
      %v2306 = vsel %vm603, %v2268, 0
      %v2309 = vsel %vm603, %v2270, 0
      %v2312 = vsel %vm603, %v2272, 0
      %v2315 = vsel %vm603, %v2274, 0
      %v2318 = vsel %vm603, %v2276, 0
      %v2321 = vsel %vm603, %v2278, 0
      %v2324 = vsel %vm603, %v2280, 0
      %v2327 = vsel %vm603, %v2282, 0
      %v2330 = vsel %vm603, %v2284, 0
      %v2333 = vsel %vm603, %v2286, 0
      %v2336 = vsel %vm603, %v2288, 0
      %v2339 = vsel %vm603, %v2290, 0
      %v2342 = vsel %vm603, %v2292, 0
      %v2345 = vsel %vm603, %v2294, 0
      %v2348 = vsel %vm603, %v2296, 0
      %v2351 = vsel %vm603, %v2298, 0
      %v2354 = vsel %vm658, %v2257, 0
      %2356 = vmatprep.subr.bf16.mxu0 0
      %2357 = vmatpush1.bf16.msra.mxu0 %v2354
      %2358 = vmatprep.subr.bf16.mxu0 0
      %2359 = vmatpush1.bf16.msra.mxu0 0
      %2360 = vmatprep.subr.bf16.mxu0 0
      %2361 = vmatpush1.bf16.msra.mxu0 0
      %2362 = vmatprep.subr.bf16.mxu0 0
      %2363 = vmatpush1.bf16.msra.mxu0 0
      %2364 = vmatprep.subr.bf16.mxu0 0
      %2365 = vmatpush1.bf16.msra.mxu0 0
      %2366 = vmatprep.subr.bf16.mxu0 0
      %2367 = vmatpush1.bf16.msra.mxu0 0
      %2368 = vmatprep.subr.bf16.mxu0 0
      %2369 = vmatpush1.bf16.msra.mxu0 0
      %2370 = vmatprep.subr.bf16.mxu0 0
      %2371 = vmatpush1.bf16.msra.mxu0 0
      %2372 = vmatprep.subr.bf16.mxu0 0
      %2373 = vmatpush1.bf16.msra.mxu0 0
      %2374 = vmatprep.subr.bf16.mxu0 0
      %2375 = vmatpush1.bf16.msra.mxu0 0
      %2376 = vmatprep.subr.bf16.mxu0 0
      %2377 = vmatpush1.bf16.msra.mxu0 0
      %2378 = vmatprep.subr.bf16.mxu0 0
      %2379 = vmatpush1.bf16.msra.mxu0 0
      %2380 = vmatprep.subr.bf16.mxu0 0
      %2381 = vmatpush1.bf16.msra.mxu0 0
      %2382 = vmatprep.subr.bf16.mxu0 0
      %2383 = vmatpush1.bf16.msra.mxu0 0
      %2384 = vmatprep.subr.bf16.mxu0 0
      %2385 = vmatpush1.bf16.msra.mxu0 0
      %2386 = vmatprep.subr.bf16.mxu0 0
      %2387 = vmatpush1.bf16.msra.mxu0 0
      %2388 = vmatprep.mubr.bf16.mxu0 0
      %2389 = vmatmul.mubr.bf16.gmra.mrb[0].mxu0 %v2300
      %v2390 = vpop.f32.mrb[0].mxu0
      %v2391 = vadd.f32 0.0, %v2390
      %v2392 = vpop.f32.mrb[0].mxu0
      %v2393 = vpop.f32.mrb[0].mxu0
      %v2394 = vadd.f32 0.0, %v2393
      %v2395 = vpop.f32.mrb[0].mxu0
      %2396 = vmatprep.mubr.bf16.mxu0 0
      %2397 = vmatmul.mubr.bf16.gmra.mrb[0].mxu0 %v2303
      %v2398 = vpop.f32.mrb[0].mxu0
      %v2399 = vadd.f32 0.0, %v2398
      %v2400 = vpop.f32.mrb[0].mxu0
      %v2401 = vpop.f32.mrb[0].mxu0
      %v2402 = vadd.f32 0.0, %v2401
      %v2403 = vpop.f32.mrb[0].mxu0
      %2404 = vmatprep.mubr.bf16.mxu0 0
      %2405 = vmatmul.mubr.bf16.gmra.mrb[0].mxu0 %v2306
      %v2406 = vpop.f32.mrb[0].mxu0
      %v2407 = vadd.f32 0.0, %v2406
      %v2408 = vpop.f32.mrb[0].mxu0
      %v2409 = vpop.f32.mrb[0].mxu0
      %v2410 = vadd.f32 0.0, %v2409
      %v2411 = vpop.f32.mrb[0].mxu0
      %2412 = vmatprep.mubr.bf16.mxu0 0
      %2413 = vmatmul.mubr.bf16.gmra.mrb[0].mxu0 %v2309
      %v2414 = vpop.f32.mrb[0].mxu0
      %v2415 = vadd.f32 0.0, %v2414
      %v2416 = vpop.f32.mrb[0].mxu0
      %v2417 = vpop.f32.mrb[0].mxu0
      %v2418 = vadd.f32 0.0, %v2417
      %v2419 = vpop.f32.mrb[0].mxu0
      %2420 = vmatprep.mubr.bf16.mxu0 0
      %2421 = vmatmul.mubr.bf16.gmra.mrb[0].mxu0 %v2312
      %v2422 = vpop.f32.mrb[0].mxu0
      %v2423 = vadd.f32 0.0, %v2422
      %v2424 = vpop.f32.mrb[0].mxu0
      %v2425 = vpop.f32.mrb[0].mxu0
      %v2426 = vadd.f32 0.0, %v2425
      %v2427 = vpop.f32.mrb[0].mxu0
      %2428 = vmatprep.mubr.bf16.mxu0 0
      %2429 = vmatmul.mubr.bf16.gmra.mrb[0].mxu0 %v2315
      %v2430 = vpop.f32.mrb[0].mxu0
      %v2431 = vadd.f32 0.0, %v2430
      %v2432 = vpop.f32.mrb[0].mxu0
      %v2433 = vpop.f32.mrb[0].mxu0
      %v2434 = vadd.f32 0.0, %v2433
      %v2435 = vpop.f32.mrb[0].mxu0
      %2436 = vmatprep.mubr.bf16.mxu0 0
      %2437 = vmatmul.mubr.bf16.gmra.mrb[0].mxu0 %v2318
      %v2438 = vpop.f32.mrb[0].mxu0
      %v2439 = vadd.f32 0.0, %v2438
      %v2440 = vpop.f32.mrb[0].mxu0
      %v2441 = vpop.f32.mrb[0].mxu0
      %v2442 = vadd.f32 0.0, %v2441
      %v2443 = vpop.f32.mrb[0].mxu0
      %2444 = vmatprep.mubr.bf16.mxu0 0
      %2445 = vmatmul.mubr.bf16.gmra.mrb[0].mxu0 %v2321
      %v2446 = vpop.f32.mrb[0].mxu0
      %v2447 = vadd.f32 0.0, %v2446
      %v2448 = vpop.f32.mrb[0].mxu0
      %v2449 = vpop.f32.mrb[0].mxu0
      %v2450 = vadd.f32 0.0, %v2449
      %v2451 = vpop.f32.mrb[0].mxu0
      %2452 = vmatprep.mubr.bf16.mxu0 0
      %2453 = vmatmul.mubr.bf16.gmra.mrb[0].mxu0 %v2324
      %v2454 = vpop.f32.mrb[0].mxu0
      %v2455 = vadd.f32 0.0, %v2454
      %v2456 = vpop.f32.mrb[0].mxu0
      %v2457 = vpop.f32.mrb[0].mxu0
      %v2458 = vadd.f32 0.0, %v2457
      %v2459 = vpop.f32.mrb[0].mxu0
      %2460 = vmatprep.mubr.bf16.mxu0 0
      %2461 = vmatmul.mubr.bf16.gmra.mrb[0].mxu0 %v2327
      %v2462 = vpop.f32.mrb[0].mxu0
      %v2463 = vadd.f32 0.0, %v2462
      %v2464 = vpop.f32.mrb[0].mxu0
      %v2465 = vpop.f32.mrb[0].mxu0
      %v2466 = vadd.f32 0.0, %v2465
      %v2467 = vpop.f32.mrb[0].mxu0
      %2468 = vmatprep.mubr.bf16.mxu0 0
      %2469 = vmatmul.mubr.bf16.gmra.mrb[0].mxu0 %v2330
      %v2470 = vpop.f32.mrb[0].mxu0
      %v2471 = vadd.f32 0.0, %v2470
      %v2472 = vpop.f32.mrb[0].mxu0
      %v2473 = vpop.f32.mrb[0].mxu0
      %v2474 = vadd.f32 0.0, %v2473
      %v2475 = vpop.f32.mrb[0].mxu0
      %2476 = vmatprep.mubr.bf16.mxu0 0
      %2477 = vmatmul.mubr.bf16.gmra.mrb[0].mxu0 %v2333
      %v2478 = vpop.f32.mrb[0].mxu0
      %v2479 = vadd.f32 0.0, %v2478
      %v2480 = vpop.f32.mrb[0].mxu0
      %v2481 = vpop.f32.mrb[0].mxu0
      %v2482 = vadd.f32 0.0, %v2481
      %v2483 = vpop.f32.mrb[0].mxu0
      %2484 = vmatprep.mubr.bf16.mxu0 0
      %2485 = vmatmul.mubr.bf16.gmra.mrb[0].mxu0 %v2336
      %v2486 = vpop.f32.mrb[0].mxu0
      %v2487 = vadd.f32 0.0, %v2486
      %v2488 = vpop.f32.mrb[0].mxu0
      %v2489 = vpop.f32.mrb[0].mxu0
      %v2490 = vadd.f32 0.0, %v2489
      %v2491 = vpop.f32.mrb[0].mxu0
      %2492 = vmatprep.mubr.bf16.mxu0 0
      %2493 = vmatmul.mubr.bf16.gmra.mrb[0].mxu0 %v2339
      %v2494 = vpop.f32.mrb[0].mxu0
      %v2495 = vadd.f32 0.0, %v2494
      %v2496 = vpop.f32.mrb[0].mxu0
      %v2497 = vpop.f32.mrb[0].mxu0
      %v2498 = vadd.f32 0.0, %v2497
      %v2499 = vpop.f32.mrb[0].mxu0
      %2500 = vmatprep.mubr.bf16.mxu0 0
      %2501 = vmatmul.mubr.bf16.gmra.mrb[0].mxu0 %v2342
      %v2502 = vpop.f32.mrb[0].mxu0
      %v2503 = vadd.f32 0.0, %v2502
      %v2504 = vpop.f32.mrb[0].mxu0
      %v2505 = vpop.f32.mrb[0].mxu0
      %v2506 = vadd.f32 0.0, %v2505
      %v2507 = vpop.f32.mrb[0].mxu0
      %2508 = vmatprep.mubr.bf16.mxu0 0
      %2509 = vmatmul.mubr.bf16.gmra.mrb[0].mxu0 %v2345
      %v2510 = vpop.f32.mrb[0].mxu0
      %v2511 = vadd.f32 0.0, %v2510
      %v2512 = vpop.f32.mrb[0].mxu0
      %v2513 = vpop.f32.mrb[0].mxu0
      %v2514 = vadd.f32 0.0, %v2513
      %v2515 = vpop.f32.mrb[0].mxu0
      %2516 = vmatprep.mubr.bf16.mxu0 0
      %2517 = vmatmul.mubr.bf16.gmra.mrb[0].mxu0 %v2348
      %v2518 = vpop.f32.mrb[0].mxu0
      %v2519 = vadd.f32 0.0, %v2518
      %v2520 = vpop.f32.mrb[0].mxu0
      %v2521 = vpop.f32.mrb[0].mxu0
      %v2522 = vadd.f32 0.0, %v2521
      %v2523 = vpop.f32.mrb[0].mxu0
      %2524 = vmatprep.mubr.bf16.mxu0 0
      %2525 = vmatmul.mubr.bf16.gmra.mrb[0].mxu0 %v2351
      %v2526 = vpop.f32.mrb[0].mxu0
      %v2527 = vadd.f32 0.0, %v2526
      %v2528 = vpop.f32.mrb[0].mxu0
      %v2529 = vpop.f32.mrb[0].mxu0
      %v2530 = vadd.f32 0.0, %v2529
      %v2531 = vpop.f32.mrb[0].mxu0
      %2532 = vdwg.mxu0
      %v2533 = vadd.f32 %v2219, %v2391
      %v2534 = vadd.f32 %v2220, %v2394
      %v2535 = vadd.f32 %v2221, %v2399
      %v2536 = vadd.f32 %v2222, %v2402
      %v2537 = vadd.f32 %v2223, %v2407
      %v2538 = vadd.f32 %v2224, %v2410
      %v2539 = vadd.f32 %v2225, %v2415
      %v2540 = vadd.f32 %v2226, %v2418
      %v2541 = vadd.f32 %v2227, %v2423
      %v2542 = vadd.f32 %v2228, %v2426
      %v2543 = vadd.f32 %v2229, %v2431
      %v2544 = vadd.f32 %v2230, %v2434
      %v2545 = vadd.f32 %v2231, %v2439
      %v2546 = vadd.f32 %v2232, %v2442
      %v2547 = vadd.f32 %v2233, %v2447
      %v2548 = vadd.f32 %v2234, %v2450
      %v2549 = vadd.f32 %v2235, %v2455
      %v2550 = vadd.f32 %v2236, %v2458
      %v2551 = vadd.f32 %v2237, %v2463
      %v2552 = vadd.f32 %v2238, %v2466
      %v2553 = vadd.f32 %v2239, %v2471
      %v2554 = vadd.f32 %v2240, %v2474
      %v2555 = vadd.f32 %v2241, %v2479
      %v2556 = vadd.f32 %v2242, %v2482
      %v2557 = vadd.f32 %v2243, %v2487
      %v2558 = vadd.f32 %v2244, %v2490
      %v2559 = vadd.f32 %v2245, %v2495
      %v2560 = vadd.f32 %v2246, %v2498
      %v2561 = vadd.f32 %v2247, %v2503
      %v2562 = vadd.f32 %v2248, %v2506
      %v2563 = vadd.f32 %v2249, %v2511
      %v2564 = vadd.f32 %v2250, %v2514
      %v2565 = vadd.f32 %v2251, %v2519
      %v2566 = vadd.f32 %v2252, %v2522
      %v2567 = vadd.f32 %v2253, %v2527
      %v2568 = vadd.f32 %v2254, %v2530
      %v2569 = vld [vmem:[%s301 + $0x10] sm:$0xc]
      %v2570 = vld [vmem:[%s301 + $0x14] sm:$0xf]
      %v2571 = vld [vmem:[%s301 + $0x18] sm:$0xf]
      %v2572 = vld [vmem:[%s301 + $0x1c] sm:$0xf]
      %v2573 = vld [vmem:[%s301 + $0x20] sm:$0xf]
      %v2574 = vld [vmem:[%s301 + $0x24] sm:$0xf]
      %v2575 = vld [vmem:[%s301 + $0x28] sm:$0xf]
      %v2576 = vld [vmem:[%s301 + $0x2c] sm:$0xf]
      %v2577 = vld [vmem:[%s301 + $0x30] sm:$0xf]
      %v2578 = vld [vmem:[%s301 + $0x34] sm:$0xf]
      %v2579 = vld [vmem:[%s301 + $0x38] sm:$0xf]
      %v2580 = vld [vmem:[%s301 + $0x3c] sm:$0xf]
      %v2581 = vld [vmem:[%s301 + $0x40] sm:$0xf]
      %v2582 = vld [vmem:[%s301 + $0x44] sm:$0xf]
      %v2583 = vld [vmem:[%s301 + $0x48] sm:$0xf]
      %v2584 = vld [vmem:[%s301 + $0x4c] sm:$0xf]
      %v2585 = vld [vmem:[%s301 + $0x50] sm:$0xf]
      %v2586 = vld [vmem:[%s301 + $0x54] sm:$0xf]
      %v2587 = vld [vmem:[%s301 + $0x58] sm:$0xf]
      %v2588 = vld [vmem:[%s301 + $0x5c] sm:$0xf]
      %v2589 = vld [vmem:[%s301 + $0x60] sm:$0xf]
      %v2590 = vld [vmem:[%s301 + $0x64] sm:$0xf]
      %v2591 = vld [vmem:[%s301 + $0x68] sm:$0xf]
      %v2592 = vld [vmem:[%s301 + $0x6c] sm:$0xf]
      %v2593 = vld [vmem:[%s301 + $0x70] sm:$0xf]
      %v2594 = vld [vmem:[%s301 + $0x74] sm:$0xf]
      %v2595 = vld [vmem:[%s301 + $0x78] sm:$0xf]
      %v2596 = vld [vmem:[%s301 + $0x7c] sm:$0xf]
      %v2597 = vld [vmem:[%s301 + $0x80] sm:$0xf]
      %v2598 = vld [vmem:[%s301 + $0x84] sm:$0xf]
      %v2599 = vld [vmem:[%s301 + $0x88] sm:$0xf]
      %v2600 = vld [vmem:[%s301 + $0x8c] sm:$0xf]
      %v2601 = vld [vmem:[%s301 + $0x90] sm:$0xf]
      %v2602 = vld [vmem:[%s301 + $0x94] sm:$0xf]
      %v2603 = vld [vmem:[%s301 + $0x98] sm:$0xf]
      %v2604 = vld [vmem:[%s301 + $0x9c] sm:$0xf]
      %v2605 = vld [vmem:[%s301 + $0xa0] sm:$0x3]
      %s2606 = scalar_lea.vmem %s1, 24
      %v2607 = vld [vmem:[%s2606] sm:$0xf]
      %v2645 = vunpack.c.l.b16 %v2569
      %v2646 = vunpack.c.l.b16 %v2570
      %v2647 = vunpack.c.l.b16 %v2571
      %v2648 = vunpack.c.l.b16 %v2572
      %v2649 = vunpack.c.l.b16 %v2573
      %v2650 = vunpack.c.l.b16 %v2574
      %v2651 = vunpack.c.l.b16 %v2575
      %v2652 = vunpack.c.l.b16 %v2576
      %v2653 = vunpack.c.l.b16 %v2577
      %v2654 = vunpack.c.l.b16 %v2578
      %v2655 = vunpack.c.l.b16 %v2579
      %v2656 = vunpack.c.l.b16 %v2580
      %v2657 = vunpack.c.l.b16 %v2581
      %v2658 = vunpack.c.l.b16 %v2582
      %v2659 = vunpack.c.l.b16 %v2583
      %v2660 = vunpack.c.l.b16 %v2584
      %v2661 = vunpack.c.l.b16 %v2585
      %v2662 = vunpack.c.l.b16 %v2586
      %v2663 = vunpack.c.l.b16 %v2587
      %v2664 = vunpack.c.l.b16 %v2588
      %v2665 = vunpack.c.l.b16 %v2589
      %v2666 = vunpack.c.l.b16 %v2590
      %v2667 = vunpack.c.l.b16 %v2591
      %v2668 = vunpack.c.l.b16 %v2592
      %v2669 = vunpack.c.l.b16 %v2593
      %v2670 = vunpack.c.l.b16 %v2594
      %v2671 = vunpack.c.l.b16 %v2595
      %v2672 = vunpack.c.l.b16 %v2596
      %v2673 = vunpack.c.l.b16 %v2597
      %v2674 = vunpack.c.l.b16 %v2598
      %v2675 = vunpack.c.l.b16 %v2599
      %v2676 = vunpack.c.l.b16 %v2600
      %v2677 = vunpack.c.l.b16 %v2601
      %v2678 = vunpack.c.l.b16 %v2602
      %v2679 = vunpack.c.l.b16 %v2603
      %v2680 = vunpack.c.l.b16 %v2604
      %v2681 = vunpack.c.l.b16 %v2605
      %v2682 = vpack.c.b16 %v2646, %v2645
      %v2683 = vpack.c.b16 %v2648, %v2647
      %v2684 = vpack.c.b16 %v2650, %v2649
      %v2685 = vpack.c.b16 %v2652, %v2651
      %v2686 = vpack.c.b16 %v2654, %v2653
      %v2687 = vpack.c.b16 %v2656, %v2655
      %v2688 = vpack.c.b16 %v2658, %v2657
      %v2689 = vpack.c.b16 %v2660, %v2659
      %v2690 = vpack.c.b16 %v2662, %v2661
      %v2691 = vpack.c.b16 %v2664, %v2663
      %v2692 = vpack.c.b16 %v2666, %v2665
      %v2693 = vpack.c.b16 %v2668, %v2667
      %v2694 = vpack.c.b16 %v2670, %v2669
      %v2695 = vpack.c.b16 %v2672, %v2671
      %v2696 = vpack.c.b16 %v2674, %v2673
      %v2697 = vpack.c.b16 %v2676, %v2675
      %v2698 = vpack.c.b16 %v2678, %v2677
      %v2699 = vpack.c.b16 %v2680, %v2679
      %v2700 = vpack.c.b16 %v2681, %v2681
      %v2701 = vrot.slane %v2682, 2
      %v2702 = vrot.slane %v2683, 2
      %v2703 = vsel %vm2261, %v2701, %v2702
      %v2704 = vrot.slane %v2684, 2
      %v2705 = vsel %vm2261, %v2702, %v2704
      %v2706 = vrot.slane %v2685, 2
      %v2707 = vsel %vm2261, %v2704, %v2706
      %v2708 = vrot.slane %v2686, 2
      %v2709 = vsel %vm2261, %v2706, %v2708
      %v2710 = vrot.slane %v2687, 2
      %v2711 = vsel %vm2261, %v2708, %v2710
      %v2712 = vrot.slane %v2688, 2
      %v2713 = vsel %vm2261, %v2710, %v2712
      %v2714 = vrot.slane %v2689, 2
      %v2715 = vsel %vm2261, %v2712, %v2714
      %v2716 = vrot.slane %v2690, 2
      %v2717 = vsel %vm2261, %v2714, %v2716
      %v2718 = vrot.slane %v2691, 2
      %v2719 = vsel %vm2261, %v2716, %v2718
      %v2720 = vrot.slane %v2692, 2
      %v2721 = vsel %vm2261, %v2718, %v2720
      %v2722 = vrot.slane %v2693, 2
      %v2723 = vsel %vm2261, %v2720, %v2722
      %v2724 = vrot.slane %v2694, 2
      %v2725 = vsel %vm2261, %v2722, %v2724
      %v2726 = vrot.slane %v2695, 2
      %v2727 = vsel %vm2261, %v2724, %v2726
      %v2728 = vrot.slane %v2696, 2
      %v2729 = vsel %vm2261, %v2726, %v2728
      %v2730 = vrot.slane %v2697, 2
      %v2731 = vsel %vm2261, %v2728, %v2730
      %v2732 = vrot.slane %v2698, 2
      %v2733 = vsel %vm2261, %v2730, %v2732
      %v2734 = vrot.slane %v2699, 2
      %v2735 = vsel %vm2261, %v2732, %v2734
      %v2736 = vrot.slane %v2700, 2
      %v2737 = vsel %vm2261, %v2734, %v2736
      %v2739 = vsel %vm603, %v2703, 0
      %v2742 = vsel %vm603, %v2705, 0
      %v2745 = vsel %vm603, %v2707, 0
      %v2748 = vsel %vm603, %v2709, 0
      %v2751 = vsel %vm603, %v2711, 0
      %v2754 = vsel %vm603, %v2713, 0
      %v2757 = vsel %vm603, %v2715, 0
      %v2760 = vsel %vm603, %v2717, 0
      %v2763 = vsel %vm603, %v2719, 0
      %v2766 = vsel %vm603, %v2721, 0
      %v2769 = vsel %vm603, %v2723, 0
      %v2772 = vsel %vm603, %v2725, 0
      %v2775 = vsel %vm603, %v2727, 0
      %v2778 = vsel %vm603, %v2729, 0
      %v2781 = vsel %vm603, %v2731, 0
      %v2784 = vsel %vm603, %v2733, 0
      %v2787 = vsel %vm603, %v2735, 0
      %v2790 = vsel %vm603, %v2737, 0
      %v2793 = vsel %vm658, %v2607, 0
      %2795 = vmatprep.subr.bf16.mxu0 0
      %2796 = vmatpush1.bf16.msra.mxu0 %v2793
      %2797 = vmatprep.subr.bf16.mxu0 0
      %2798 = vmatpush1.bf16.msra.mxu0 0
      %2799 = vmatprep.subr.bf16.mxu0 0
      %2800 = vmatpush1.bf16.msra.mxu0 0
      %2801 = vmatprep.subr.bf16.mxu0 0
      %2802 = vmatpush1.bf16.msra.mxu0 0
      %2803 = vmatprep.subr.bf16.mxu0 0
      %2804 = vmatpush1.bf16.msra.mxu0 0
      %2805 = vmatprep.subr.bf16.mxu0 0
      %2806 = vmatpush1.bf16.msra.mxu0 0
      %2807 = vmatprep.subr.bf16.mxu0 0
      %2808 = vmatpush1.bf16.msra.mxu0 0
      %2809 = vmatprep.subr.bf16.mxu0 0
      %2810 = vmatpush1.bf16.msra.mxu0 0
      %2811 = vmatprep.subr.bf16.mxu0 0
      %2812 = vmatpush1.bf16.msra.mxu0 0
      %2813 = vmatprep.subr.bf16.mxu0 0
      %2814 = vmatpush1.bf16.msra.mxu0 0
      %2815 = vmatprep.subr.bf16.mxu0 0
      %2816 = vmatpush1.bf16.msra.mxu0 0
      %2817 = vmatprep.subr.bf16.mxu0 0
      %2818 = vmatpush1.bf16.msra.mxu0 0
      %2819 = vmatprep.subr.bf16.mxu0 0
      %2820 = vmatpush1.bf16.msra.mxu0 0
      %2821 = vmatprep.subr.bf16.mxu0 0
      %2822 = vmatpush1.bf16.msra.mxu0 0
      %2823 = vmatprep.subr.bf16.mxu0 0
      %2824 = vmatpush1.bf16.msra.mxu0 0
      %2825 = vmatprep.subr.bf16.mxu0 0
      %2826 = vmatpush1.bf16.msra.mxu0 0
      %2827 = vmatprep.mubr.bf16.mxu0 0
      %2828 = vmatmul.mubr.bf16.gmra.mrb[0].mxu0 %v2739
      %v2829 = vpop.f32.mrb[0].mxu0
      %v2830 = vadd.f32 0.0, %v2829
      %v2831 = vpop.f32.mrb[0].mxu0
      %v2832 = vpop.f32.mrb[0].mxu0
      %v2833 = vadd.f32 0.0, %v2832
      %v2834 = vpop.f32.mrb[0].mxu0
      %2835 = vmatprep.mubr.bf16.mxu0 0
      %2836 = vmatmul.mubr.bf16.gmra.mrb[0].mxu0 %v2742
      %v2837 = vpop.f32.mrb[0].mxu0
      %v2838 = vadd.f32 0.0, %v2837
      %v2839 = vpop.f32.mrb[0].mxu0
      %v2840 = vpop.f32.mrb[0].mxu0
      %v2841 = vadd.f32 0.0, %v2840
      %v2842 = vpop.f32.mrb[0].mxu0
      %2843 = vmatprep.mubr.bf16.mxu0 0
      %2844 = vmatmul.mubr.bf16.gmra.mrb[0].mxu0 %v2745
      %v2845 = vpop.f32.mrb[0].mxu0
      %v2846 = vadd.f32 0.0, %v2845
      %v2847 = vpop.f32.mrb[0].mxu0
      %v2848 = vpop.f32.mrb[0].mxu0
      %v2849 = vadd.f32 0.0, %v2848
      %v2850 = vpop.f32.mrb[0].mxu0
      %2851 = vmatprep.mubr.bf16.mxu0 0
      %2852 = vmatmul.mubr.bf16.gmra.mrb[0].mxu0 %v2748
      %v2853 = vpop.f32.mrb[0].mxu0
      %v2854 = vadd.f32 0.0, %v2853
      %v2855 = vpop.f32.mrb[0].mxu0
      %v2856 = vpop.f32.mrb[0].mxu0
      %v2857 = vadd.f32 0.0, %v2856
      %v2858 = vpop.f32.mrb[0].mxu0
      %2859 = vmatprep.mubr.bf16.mxu0 0
      %2860 = vmatmul.mubr.bf16.gmra.mrb[0].mxu0 %v2751
      %v2861 = vpop.f32.mrb[0].mxu0
      %v2862 = vadd.f32 0.0, %v2861
      %v2863 = vpop.f32.mrb[0].mxu0
      %v2864 = vpop.f32.mrb[0].mxu0
      %v2865 = vadd.f32 0.0, %v2864
      %v2866 = vpop.f32.mrb[0].mxu0
      %2867 = vmatprep.mubr.bf16.mxu0 0
      %2868 = vmatmul.mubr.bf16.gmra.mrb[0].mxu0 %v2754
      %v2869 = vpop.f32.mrb[0].mxu0
      %v2870 = vadd.f32 0.0, %v2869
      %v2871 = vpop.f32.mrb[0].mxu0
      %v2872 = vpop.f32.mrb[0].mxu0
      %v2873 = vadd.f32 0.0, %v2872
      %v2874 = vpop.f32.mrb[0].mxu0
      %2875 = vmatprep.mubr.bf16.mxu0 0
      %2876 = vmatmul.mubr.bf16.gmra.mrb[0].mxu0 %v2757
      %v2877 = vpop.f32.mrb[0].mxu0
      %v2878 = vadd.f32 0.0, %v2877
      %v2879 = vpop.f32.mrb[0].mxu0
      %v2880 = vpop.f32.mrb[0].mxu0
      %v2881 = vadd.f32 0.0, %v2880
      %v2882 = vpop.f32.mrb[0].mxu0
      %2883 = vmatprep.mubr.bf16.mxu0 0
      %2884 = vmatmul.mubr.bf16.gmra.mrb[0].mxu0 %v2760
      %v2885 = vpop.f32.mrb[0].mxu0
      %v2886 = vadd.f32 0.0, %v2885
      %v2887 = vpop.f32.mrb[0].mxu0
      %v2888 = vpop.f32.mrb[0].mxu0
      %v2889 = vadd.f32 0.0, %v2888
      %v2890 = vpop.f32.mrb[0].mxu0
      %2891 = vmatprep.mubr.bf16.mxu0 0
      %2892 = vmatmul.mubr.bf16.gmra.mrb[0].mxu0 %v2763
      %v2893 = vpop.f32.mrb[0].mxu0
      %v2894 = vadd.f32 0.0, %v2893
      %v2895 = vpop.f32.mrb[0].mxu0
      %v2896 = vpop.f32.mrb[0].mxu0
      %v2897 = vadd.f32 0.0, %v2896
      %v2898 = vpop.f32.mrb[0].mxu0
      %2899 = vmatprep.mubr.bf16.mxu0 0
      %2900 = vmatmul.mubr.bf16.gmra.mrb[0].mxu0 %v2766
      %v2901 = vpop.f32.mrb[0].mxu0
      %v2902 = vadd.f32 0.0, %v2901
      %v2903 = vpop.f32.mrb[0].mxu0
      %v2904 = vpop.f32.mrb[0].mxu0
      %v2905 = vadd.f32 0.0, %v2904
      %v2906 = vpop.f32.mrb[0].mxu0
      %2907 = vmatprep.mubr.bf16.mxu0 0
      %2908 = vmatmul.mubr.bf16.gmra.mrb[0].mxu0 %v2769
      %v2909 = vpop.f32.mrb[0].mxu0
      %v2910 = vadd.f32 0.0, %v2909
      %v2911 = vpop.f32.mrb[0].mxu0
      %v2912 = vpop.f32.mrb[0].mxu0
      %v2913 = vadd.f32 0.0, %v2912
      %v2914 = vpop.f32.mrb[0].mxu0
      %2915 = vmatprep.mubr.bf16.mxu0 0
      %2916 = vmatmul.mubr.bf16.gmra.mrb[0].mxu0 %v2772
      %v2917 = vpop.f32.mrb[0].mxu0
      %v2918 = vadd.f32 0.0, %v2917
      %v2919 = vpop.f32.mrb[0].mxu0
      %v2920 = vpop.f32.mrb[0].mxu0
      %v2921 = vadd.f32 0.0, %v2920
      %v2922 = vpop.f32.mrb[0].mxu0
      %2923 = vmatprep.mubr.bf16.mxu0 0
      %2924 = vmatmul.mubr.bf16.gmra.mrb[0].mxu0 %v2775
      %v2925 = vpop.f32.mrb[0].mxu0
      %v2926 = vadd.f32 0.0, %v2925
      %v2927 = vpop.f32.mrb[0].mxu0
      %v2928 = vpop.f32.mrb[0].mxu0
      %v2929 = vadd.f32 0.0, %v2928
      %v2930 = vpop.f32.mrb[0].mxu0
      %2931 = vmatprep.mubr.bf16.mxu0 0
      %2932 = vmatmul.mubr.bf16.gmra.mrb[0].mxu0 %v2778
      %v2933 = vpop.f32.mrb[0].mxu0
      %v2934 = vadd.f32 0.0, %v2933
      %v2935 = vpop.f32.mrb[0].mxu0
      %v2936 = vpop.f32.mrb[0].mxu0
      %v2937 = vadd.f32 0.0, %v2936
      %v2938 = vpop.f32.mrb[0].mxu0
      %2939 = vmatprep.mubr.bf16.mxu0 0
      %2940 = vmatmul.mubr.bf16.gmra.mrb[0].mxu0 %v2781
      %v2941 = vpop.f32.mrb[0].mxu0
      %v2942 = vadd.f32 0.0, %v2941
      %v2943 = vpop.f32.mrb[0].mxu0
      %v2944 = vpop.f32.mrb[0].mxu0
      %v2945 = vadd.f32 0.0, %v2944
      %v2946 = vpop.f32.mrb[0].mxu0
      %2947 = vmatprep.mubr.bf16.mxu0 0
      %2948 = vmatmul.mubr.bf16.gmra.mrb[0].mxu0 %v2784
      %v2949 = vpop.f32.mrb[0].mxu0
      %v2950 = vadd.f32 0.0, %v2949
      %v2951 = vpop.f32.mrb[0].mxu0
      %v2952 = vpop.f32.mrb[0].mxu0
      %v2953 = vadd.f32 0.0, %v2952
      %v2954 = vpop.f32.mrb[0].mxu0
      %2955 = vmatprep.mubr.bf16.mxu0 0
      %2956 = vmatmul.mubr.bf16.gmra.mrb[0].mxu0 %v2787
      %v2957 = vpop.f32.mrb[0].mxu0
      %v2958 = vadd.f32 0.0, %v2957
      %v2959 = vpop.f32.mrb[0].mxu0
      %v2960 = vpop.f32.mrb[0].mxu0
      %v2961 = vadd.f32 0.0, %v2960
      %v2962 = vpop.f32.mrb[0].mxu0
      %2963 = vmatprep.mubr.bf16.mxu0 0
      %2964 = vmatmul.mubr.bf16.gmra.mrb[0].mxu0 %v2790
      %v2965 = vpop.f32.mrb[0].mxu0
      %v2966 = vadd.f32 0.0, %v2965
      %v2967 = vpop.f32.mrb[0].mxu0
      %v2968 = vpop.f32.mrb[0].mxu0
      %v2969 = vadd.f32 0.0, %v2968
      %v2970 = vpop.f32.mrb[0].mxu0
      %2971 = vdwg.mxu0
      %v2972 = vadd.f32 %v2533, %v2830
      %v2973 = vadd.f32 %v2534, %v2833
      %v2974 = vadd.f32 %v2535, %v2838
      %v2975 = vadd.f32 %v2536, %v2841
      %v2976 = vadd.f32 %v2537, %v2846
      %v2977 = vadd.f32 %v2538, %v2849
      %v2978 = vadd.f32 %v2539, %v2854
      %v2979 = vadd.f32 %v2540, %v2857
      %v2980 = vadd.f32 %v2541, %v2862
      %v2981 = vadd.f32 %v2542, %v2865
      %v2982 = vadd.f32 %v2543, %v2870
      %v2983 = vadd.f32 %v2544, %v2873
      %v2984 = vadd.f32 %v2545, %v2878
      %v2985 = vadd.f32 %v2546, %v2881
      %v2986 = vadd.f32 %v2547, %v2886
      %v2987 = vadd.f32 %v2548, %v2889
      %v2988 = vadd.f32 %v2549, %v2894
      %v2989 = vadd.f32 %v2550, %v2897
      %v2990 = vadd.f32 %v2551, %v2902
      %v2991 = vadd.f32 %v2552, %v2905
      %v2992 = vadd.f32 %v2553, %v2910
      %v2993 = vadd.f32 %v2554, %v2913
      %v2994 = vadd.f32 %v2555, %v2918
      %v2995 = vadd.f32 %v2556, %v2921
      %v2996 = vadd.f32 %v2557, %v2926
      %v2997 = vadd.f32 %v2558, %v2929
      %v2998 = vadd.f32 %v2559, %v2934
      %v2999 = vadd.f32 %v2560, %v2937
      %v3000 = vadd.f32 %v2561, %v2942
      %v3001 = vadd.f32 %v2562, %v2945
      %v3002 = vadd.f32 %v2563, %v2950
      %v3003 = vadd.f32 %v2564, %v2953
      %v3004 = vadd.f32 %v2565, %v2958
      %v3005 = vadd.f32 %v2566, %v2961
      %v3006 = vadd.f32 %v2567, %v2966
      %v3007 = vadd.f32 %v2568, %v2969
      %v3008 = vld [vmem:[%s301 + $0xa0] sm:$0x7]
      %s3009 = scalar_lea.vmem %s1, 28
      %v3010 = vld [vmem:[%s3009] sm:$0xf]
      %v3012 = vunpack.c.l.b16 %v3008
      %v3013 = vpack.c.b16 %v3012, %v3012
      %vm3014 = vsmask.f32 5376
      %v3016 = vshrl.u32 %v2682, 16
      %v3018 = vrot.slane %v3016, 2
      %v3019 = vshll.u32 %v2682, 16
      %v3021 = vrot.slane %v3019, 3
      %v3022 = vor.u32 %v3018, %v3021
      %v3024 = vshrl.u32 %v2683, 16
      %v3026 = vrot.slane %v3024, 2
      %v3027 = vshll.u32 %v2683, 16
      %v3029 = vrot.slane %v3027, 3
      %v3030 = vor.u32 %v3026, %v3029
      %v3031 = vsel %vm3014, %v3022, %v3030
      %v3033 = vshrl.u32 %v2684, 16
      %v3035 = vrot.slane %v3033, 2
      %v3036 = vshll.u32 %v2684, 16
      %v3038 = vrot.slane %v3036, 3
      %v3039 = vor.u32 %v3035, %v3038
      %v3040 = vsel %vm3014, %v3030, %v3039
      %v3042 = vshrl.u32 %v2685, 16
      %v3044 = vrot.slane %v3042, 2
      %v3045 = vshll.u32 %v2685, 16
      %v3047 = vrot.slane %v3045, 3
      %v3048 = vor.u32 %v3044, %v3047
      %v3049 = vsel %vm3014, %v3039, %v3048
      %v3051 = vshrl.u32 %v2686, 16
      %v3053 = vrot.slane %v3051, 2
      %v3054 = vshll.u32 %v2686, 16
      %v3056 = vrot.slane %v3054, 3
      %v3057 = vor.u32 %v3053, %v3056
      %v3058 = vsel %vm3014, %v3048, %v3057
      %v3060 = vshrl.u32 %v2687, 16
      %v3062 = vrot.slane %v3060, 2
      %v3063 = vshll.u32 %v2687, 16
      %v3065 = vrot.slane %v3063, 3
      %v3066 = vor.u32 %v3062, %v3065
      %v3067 = vsel %vm3014, %v3057, %v3066
      %v3069 = vshrl.u32 %v2688, 16
      %v3071 = vrot.slane %v3069, 2
      %v3072 = vshll.u32 %v2688, 16
      %v3074 = vrot.slane %v3072, 3
      %v3075 = vor.u32 %v3071, %v3074
      %v3076 = vsel %vm3014, %v3066, %v3075
      %v3078 = vshrl.u32 %v2689, 16
      %v3080 = vrot.slane %v3078, 2
      %v3081 = vshll.u32 %v2689, 16
      %v3083 = vrot.slane %v3081, 3
      %v3084 = vor.u32 %v3080, %v3083
      %v3085 = vsel %vm3014, %v3075, %v3084
      %v3087 = vshrl.u32 %v2690, 16
      %v3089 = vrot.slane %v3087, 2
      %v3090 = vshll.u32 %v2690, 16
      %v3092 = vrot.slane %v3090, 3
      %v3093 = vor.u32 %v3089, %v3092
      %v3094 = vsel %vm3014, %v3084, %v3093
      %v3096 = vshrl.u32 %v2691, 16
      %v3098 = vrot.slane %v3096, 2
      %v3099 = vshll.u32 %v2691, 16
      %v3101 = vrot.slane %v3099, 3
      %v3102 = vor.u32 %v3098, %v3101
      %v3103 = vsel %vm3014, %v3093, %v3102
      %v3105 = vshrl.u32 %v2692, 16
      %v3107 = vrot.slane %v3105, 2
      %v3108 = vshll.u32 %v2692, 16
      %v3110 = vrot.slane %v3108, 3
      %v3111 = vor.u32 %v3107, %v3110
      %v3112 = vsel %vm3014, %v3102, %v3111
      %v3114 = vshrl.u32 %v2693, 16
      %v3116 = vrot.slane %v3114, 2
      %v3117 = vshll.u32 %v2693, 16
      %v3119 = vrot.slane %v3117, 3
      %v3120 = vor.u32 %v3116, %v3119
      %v3121 = vsel %vm3014, %v3111, %v3120
      %v3123 = vshrl.u32 %v2694, 16
      %v3125 = vrot.slane %v3123, 2
      %v3126 = vshll.u32 %v2694, 16
      %v3128 = vrot.slane %v3126, 3
      %v3129 = vor.u32 %v3125, %v3128
      %v3130 = vsel %vm3014, %v3120, %v3129
      %v3132 = vshrl.u32 %v2695, 16
      %v3134 = vrot.slane %v3132, 2
      %v3135 = vshll.u32 %v2695, 16
      %v3137 = vrot.slane %v3135, 3
      %v3138 = vor.u32 %v3134, %v3137
      %v3139 = vsel %vm3014, %v3129, %v3138
      %v3141 = vshrl.u32 %v2696, 16
      %v3143 = vrot.slane %v3141, 2
      %v3144 = vshll.u32 %v2696, 16
      %v3146 = vrot.slane %v3144, 3
      %v3147 = vor.u32 %v3143, %v3146
      %v3148 = vsel %vm3014, %v3138, %v3147
      %v3150 = vshrl.u32 %v2697, 16
      %v3152 = vrot.slane %v3150, 2
      %v3153 = vshll.u32 %v2697, 16
      %v3155 = vrot.slane %v3153, 3
      %v3156 = vor.u32 %v3152, %v3155
      %v3157 = vsel %vm3014, %v3147, %v3156
      %v3159 = vshrl.u32 %v2698, 16
      %v3161 = vrot.slane %v3159, 2
      %v3162 = vshll.u32 %v2698, 16
      %v3164 = vrot.slane %v3162, 3
      %v3165 = vor.u32 %v3161, %v3164
      %v3166 = vsel %vm3014, %v3156, %v3165
      %v3168 = vshrl.u32 %v2699, 16
      %v3170 = vrot.slane %v3168, 2
      %v3171 = vshll.u32 %v2699, 16
      %v3173 = vrot.slane %v3171, 3
      %v3174 = vor.u32 %v3170, %v3173
      %v3175 = vsel %vm3014, %v3165, %v3174
      %v3177 = vshrl.u32 %v3013, 16
      %v3179 = vrot.slane %v3177, 2
      %v3180 = vshll.u32 %v3013, 16
      %v3182 = vrot.slane %v3180, 3
      %v3183 = vor.u32 %v3179, %v3182
      %v3184 = vsel %vm3014, %v3174, %v3183
      %v3186 = vsel %vm603, %v3031, 0
      %v3189 = vsel %vm603, %v3040, 0
      %v3192 = vsel %vm603, %v3049, 0
      %v3195 = vsel %vm603, %v3058, 0
      %v3198 = vsel %vm603, %v3067, 0
      %v3201 = vsel %vm603, %v3076, 0
      %v3204 = vsel %vm603, %v3085, 0
      %v3207 = vsel %vm603, %v3094, 0
      %v3210 = vsel %vm603, %v3103, 0
      %v3213 = vsel %vm603, %v3112, 0
      %v3216 = vsel %vm603, %v3121, 0
      %v3219 = vsel %vm603, %v3130, 0
      %v3222 = vsel %vm603, %v3139, 0
      %v3225 = vsel %vm603, %v3148, 0
      %v3228 = vsel %vm603, %v3157, 0
      %v3231 = vsel %vm603, %v3166, 0
      %v3234 = vsel %vm603, %v3175, 0
      %v3237 = vsel %vm603, %v3184, 0
      %v3240 = vsel %vm658, %v3010, 0
      %3242 = vmatprep.subr.bf16.mxu0 0
      %3243 = vmatpush1.bf16.msra.mxu0 %v3240
      %3244 = vmatprep.subr.bf16.mxu0 0
      %3245 = vmatpush1.bf16.msra.mxu0 0
      %3246 = vmatprep.subr.bf16.mxu0 0
      %3247 = vmatpush1.bf16.msra.mxu0 0
      %3248 = vmatprep.subr.bf16.mxu0 0
      %3249 = vmatpush1.bf16.msra.mxu0 0
      %3250 = vmatprep.subr.bf16.mxu0 0
      %3251 = vmatpush1.bf16.msra.mxu0 0
      %3252 = vmatprep.subr.bf16.mxu0 0
      %3253 = vmatpush1.bf16.msra.mxu0 0
      %3254 = vmatprep.subr.bf16.mxu0 0
      %3255 = vmatpush1.bf16.msra.mxu0 0
      %3256 = vmatprep.subr.bf16.mxu0 0
      %3257 = vmatpush1.bf16.msra.mxu0 0
      %3258 = vmatprep.subr.bf16.mxu0 0
      %3259 = vmatpush1.bf16.msra.mxu0 0
      %3260 = vmatprep.subr.bf16.mxu0 0
      %3261 = vmatpush1.bf16.msra.mxu0 0
      %3262 = vmatprep.subr.bf16.mxu0 0
      %3263 = vmatpush1.bf16.msra.mxu0 0
      %3264 = vmatprep.subr.bf16.mxu0 0
      %3265 = vmatpush1.bf16.msra.mxu0 0
      %3266 = vmatprep.subr.bf16.mxu0 0
      %3267 = vmatpush1.bf16.msra.mxu0 0
      %3268 = vmatprep.subr.bf16.mxu0 0
      %3269 = vmatpush1.bf16.msra.mxu0 0
      %3270 = vmatprep.subr.bf16.mxu0 0
      %3271 = vmatpush1.bf16.msra.mxu0 0
      %3272 = vmatprep.subr.bf16.mxu0 0
      %3273 = vmatpush1.bf16.msra.mxu0 0
      %3274 = vmatprep.mubr.bf16.mxu0 0
      %3275 = vmatmul.mubr.bf16.gmra.mrb[0].mxu0 %v3186
      %v3276 = vpop.f32.mrb[0].mxu0
      %v3277 = vadd.f32 0.0, %v3276
      %v3278 = vpop.f32.mrb[0].mxu0
      %v3279 = vpop.f32.mrb[0].mxu0
      %v3280 = vadd.f32 0.0, %v3279
      %v3281 = vpop.f32.mrb[0].mxu0
      %3282 = vmatprep.mubr.bf16.mxu0 0
      %3283 = vmatmul.mubr.bf16.gmra.mrb[0].mxu0 %v3189
      %v3284 = vpop.f32.mrb[0].mxu0
      %v3285 = vadd.f32 0.0, %v3284
      %v3286 = vpop.f32.mrb[0].mxu0
      %v3287 = vpop.f32.mrb[0].mxu0
      %v3288 = vadd.f32 0.0, %v3287
      %v3289 = vpop.f32.mrb[0].mxu0
      %3290 = vmatprep.mubr.bf16.mxu0 0
      %3291 = vmatmul.mubr.bf16.gmra.mrb[0].mxu0 %v3192
      %v3292 = vpop.f32.mrb[0].mxu0
      %v3293 = vadd.f32 0.0, %v3292
      %v3294 = vpop.f32.mrb[0].mxu0
      %v3295 = vpop.f32.mrb[0].mxu0
      %v3296 = vadd.f32 0.0, %v3295
      %v3297 = vpop.f32.mrb[0].mxu0
      %3298 = vmatprep.mubr.bf16.mxu0 0
      %3299 = vmatmul.mubr.bf16.gmra.mrb[0].mxu0 %v3195
      %v3300 = vpop.f32.mrb[0].mxu0
      %v3301 = vadd.f32 0.0, %v3300
      %v3302 = vpop.f32.mrb[0].mxu0
      %v3303 = vpop.f32.mrb[0].mxu0
      %v3304 = vadd.f32 0.0, %v3303
      %v3305 = vpop.f32.mrb[0].mxu0
      %3306 = vmatprep.mubr.bf16.mxu0 0
      %3307 = vmatmul.mubr.bf16.gmra.mrb[0].mxu0 %v3198
      %v3308 = vpop.f32.mrb[0].mxu0
      %v3309 = vadd.f32 0.0, %v3308
      %v3310 = vpop.f32.mrb[0].mxu0
      %v3311 = vpop.f32.mrb[0].mxu0
      %v3312 = vadd.f32 0.0, %v3311
      %v3313 = vpop.f32.mrb[0].mxu0
      %3314 = vmatprep.mubr.bf16.mxu0 0
      %3315 = vmatmul.mubr.bf16.gmra.mrb[0].mxu0 %v3201
      %v3316 = vpop.f32.mrb[0].mxu0
      %v3317 = vadd.f32 0.0, %v3316
      %v3318 = vpop.f32.mrb[0].mxu0
      %v3319 = vpop.f32.mrb[0].mxu0
      %v3320 = vadd.f32 0.0, %v3319
      %v3321 = vpop.f32.mrb[0].mxu0
      %3322 = vmatprep.mubr.bf16.mxu0 0
      %3323 = vmatmul.mubr.bf16.gmra.mrb[0].mxu0 %v3204
      %v3324 = vpop.f32.mrb[0].mxu0
      %v3325 = vadd.f32 0.0, %v3324
      %v3326 = vpop.f32.mrb[0].mxu0
      %v3327 = vpop.f32.mrb[0].mxu0
      %v3328 = vadd.f32 0.0, %v3327
      %v3329 = vpop.f32.mrb[0].mxu0
      %3330 = vmatprep.mubr.bf16.mxu0 0
      %3331 = vmatmul.mubr.bf16.gmra.mrb[0].mxu0 %v3207
      %v3332 = vpop.f32.mrb[0].mxu0
      %v3333 = vadd.f32 0.0, %v3332
      %v3334 = vpop.f32.mrb[0].mxu0
      %v3335 = vpop.f32.mrb[0].mxu0
      %v3336 = vadd.f32 0.0, %v3335
      %v3337 = vpop.f32.mrb[0].mxu0
      %3338 = vmatprep.mubr.bf16.mxu0 0
      %3339 = vmatmul.mubr.bf16.gmra.mrb[0].mxu0 %v3210
      %v3340 = vpop.f32.mrb[0].mxu0
      %v3341 = vadd.f32 0.0, %v3340
      %v3342 = vpop.f32.mrb[0].mxu0
      %v3343 = vpop.f32.mrb[0].mxu0
      %v3344 = vadd.f32 0.0, %v3343
      %v3345 = vpop.f32.mrb[0].mxu0
      %3346 = vmatprep.mubr.bf16.mxu0 0
      %3347 = vmatmul.mubr.bf16.gmra.mrb[0].mxu0 %v3213
      %v3348 = vpop.f32.mrb[0].mxu0
      %v3349 = vadd.f32 0.0, %v3348
      %v3350 = vpop.f32.mrb[0].mxu0
      %v3351 = vpop.f32.mrb[0].mxu0
      %v3352 = vadd.f32 0.0, %v3351
      %v3353 = vpop.f32.mrb[0].mxu0
      %3354 = vmatprep.mubr.bf16.mxu0 0
      %3355 = vmatmul.mubr.bf16.gmra.mrb[0].mxu0 %v3216
      %v3356 = vpop.f32.mrb[0].mxu0
      %v3357 = vadd.f32 0.0, %v3356
      %v3358 = vpop.f32.mrb[0].mxu0
      %v3359 = vpop.f32.mrb[0].mxu0
      %v3360 = vadd.f32 0.0, %v3359
      %v3361 = vpop.f32.mrb[0].mxu0
      %3362 = vmatprep.mubr.bf16.mxu0 0
      %3363 = vmatmul.mubr.bf16.gmra.mrb[0].mxu0 %v3219
      %v3364 = vpop.f32.mrb[0].mxu0
      %v3365 = vadd.f32 0.0, %v3364
      %v3366 = vpop.f32.mrb[0].mxu0
      %v3367 = vpop.f32.mrb[0].mxu0
      %v3368 = vadd.f32 0.0, %v3367
      %v3369 = vpop.f32.mrb[0].mxu0
      %3370 = vmatprep.mubr.bf16.mxu0 0
      %3371 = vmatmul.mubr.bf16.gmra.mrb[0].mxu0 %v3222
      %v3372 = vpop.f32.mrb[0].mxu0
      %v3373 = vadd.f32 0.0, %v3372
      %v3374 = vpop.f32.mrb[0].mxu0
      %v3375 = vpop.f32.mrb[0].mxu0
      %v3376 = vadd.f32 0.0, %v3375
      %v3377 = vpop.f32.mrb[0].mxu0
      %3378 = vmatprep.mubr.bf16.mxu0 0
      %3379 = vmatmul.mubr.bf16.gmra.mrb[0].mxu0 %v3225
      %v3380 = vpop.f32.mrb[0].mxu0
      %v3381 = vadd.f32 0.0, %v3380
      %v3382 = vpop.f32.mrb[0].mxu0
      %v3383 = vpop.f32.mrb[0].mxu0
      %v3384 = vadd.f32 0.0, %v3383
      %v3385 = vpop.f32.mrb[0].mxu0
      %3386 = vmatprep.mubr.bf16.mxu0 0
      %3387 = vmatmul.mubr.bf16.gmra.mrb[0].mxu0 %v3228
      %v3388 = vpop.f32.mrb[0].mxu0
      %v3389 = vadd.f32 0.0, %v3388
      %v3390 = vpop.f32.mrb[0].mxu0
      %v3391 = vpop.f32.mrb[0].mxu0
      %v3392 = vadd.f32 0.0, %v3391
      %v3393 = vpop.f32.mrb[0].mxu0
      %3394 = vmatprep.mubr.bf16.mxu0 0
      %3395 = vmatmul.mubr.bf16.gmra.mrb[0].mxu0 %v3231
      %v3396 = vpop.f32.mrb[0].mxu0
      %v3397 = vadd.f32 0.0, %v3396
      %v3398 = vpop.f32.mrb[0].mxu0
      %v3399 = vpop.f32.mrb[0].mxu0
      %v3400 = vadd.f32 0.0, %v3399
      %v3401 = vpop.f32.mrb[0].mxu0
      %3402 = vmatprep.mubr.bf16.mxu0 0
      %3403 = vmatmul.mubr.bf16.gmra.mrb[0].mxu0 %v3234
      %v3404 = vpop.f32.mrb[0].mxu0
      %v3405 = vadd.f32 0.0, %v3404
      %v3406 = vpop.f32.mrb[0].mxu0
      %v3407 = vpop.f32.mrb[0].mxu0
      %v3408 = vadd.f32 0.0, %v3407
      %v3409 = vpop.f32.mrb[0].mxu0
      %3410 = vmatprep.mubr.bf16.mxu0 0
      %3411 = vmatmul.mubr.bf16.gmra.mrb[0].mxu0 %v3237
      %v3412 = vpop.f32.mrb[0].mxu0
      %v3413 = vadd.f32 0.0, %v3412
      %v3414 = vpop.f32.mrb[0].mxu0
      %v3415 = vpop.f32.mrb[0].mxu0
      %v3416 = vadd.f32 0.0, %v3415
      %v3417 = vpop.f32.mrb[0].mxu0
      %3418 = vdwg.mxu0
      %v3419 = vadd.f32 %v2972, %v3277
      %v3420 = vadd.f32 %v2973, %v3280
      %v3421 = vadd.f32 %v2974, %v3285
      %v3422 = vadd.f32 %v2975, %v3288
      %v3423 = vadd.f32 %v2976, %v3293
      %v3424 = vadd.f32 %v2977, %v3296
      %v3425 = vadd.f32 %v2978, %v3301
      %v3426 = vadd.f32 %v2979, %v3304
      %v3427 = vadd.f32 %v2980, %v3309
      %v3428 = vadd.f32 %v2981, %v3312
      %v3429 = vadd.f32 %v2982, %v3317
      %v3430 = vadd.f32 %v2983, %v3320
      %v3431 = vadd.f32 %v2984, %v3325
      %v3432 = vadd.f32 %v2985, %v3328
      %v3433 = vadd.f32 %v2986, %v3333
      %v3434 = vadd.f32 %v2987, %v3336
      %v3435 = vadd.f32 %v2988, %v3341
      %v3436 = vadd.f32 %v2989, %v3344
      %v3437 = vadd.f32 %v2990, %v3349
      %v3438 = vadd.f32 %v2991, %v3352
      %v3439 = vadd.f32 %v2992, %v3357
      %v3440 = vadd.f32 %v2993, %v3360
      %v3441 = vadd.f32 %v2994, %v3365
      %v3442 = vadd.f32 %v2995, %v3368
      %v3443 = vadd.f32 %v2996, %v3373
      %v3444 = vadd.f32 %v2997, %v3376
      %v3445 = vadd.f32 %v2998, %v3381
      %v3446 = vadd.f32 %v2999, %v3384
      %v3447 = vadd.f32 %v3000, %v3389
      %v3448 = vadd.f32 %v3001, %v3392
      %v3449 = vadd.f32 %v3002, %v3397
      %v3450 = vadd.f32 %v3003, %v3400
      %v3451 = vadd.f32 %v3004, %v3405
      %v3452 = vadd.f32 %v3005, %v3408
      %v3453 = vadd.f32 %v3006, %v3413
      %v3454 = vadd.f32 %v3007, %v3416
      %v3455 = vld [vmem:[%s301 + $0x10] sm:$0x8]
      %s3456 = scalar_lea.vmem %s1, 32
      %v3457 = vld [vmem:[%s3456] sm:$0xf]
      %v3459 = vunpack.c.l.b16 %v3455
      %v3460 = vpack.c.b16 %v2646, %v3459
      %vm3461 = vcmask 1044480
      %v3462 = vrot.slane %v3460, 3
      %v3463 = vrot.slane %v2683, 3
      %v3464 = vsel %vm3461, %v3462, %v3463
      %v3465 = vrot.slane %v2684, 3
      %v3466 = vsel %vm3461, %v3463, %v3465
      %v3467 = vrot.slane %v2685, 3
      %v3468 = vsel %vm3461, %v3465, %v3467
      %v3469 = vrot.slane %v2686, 3
      %v3470 = vsel %vm3461, %v3467, %v3469
      %v3471 = vrot.slane %v2687, 3
      %v3472 = vsel %vm3461, %v3469, %v3471
      %v3473 = vrot.slane %v2688, 3
      %v3474 = vsel %vm3461, %v3471, %v3473
      %v3475 = vrot.slane %v2689, 3
      %v3476 = vsel %vm3461, %v3473, %v3475
      %v3477 = vrot.slane %v2690, 3
      %v3478 = vsel %vm3461, %v3475, %v3477
      %v3479 = vrot.slane %v2691, 3
      %v3480 = vsel %vm3461, %v3477, %v3479
      %v3481 = vrot.slane %v2692, 3
      %v3482 = vsel %vm3461, %v3479, %v3481
      %v3483 = vrot.slane %v2693, 3
      %v3484 = vsel %vm3461, %v3481, %v3483
      %v3485 = vrot.slane %v2694, 3
      %v3486 = vsel %vm3461, %v3483, %v3485
      %v3487 = vrot.slane %v2695, 3
      %v3488 = vsel %vm3461, %v3485, %v3487
      %v3489 = vrot.slane %v2696, 3
      %v3490 = vsel %vm3461, %v3487, %v3489
      %v3491 = vrot.slane %v2697, 3
      %v3492 = vsel %vm3461, %v3489, %v3491
      %v3493 = vrot.slane %v2698, 3
      %v3494 = vsel %vm3461, %v3491, %v3493
      %v3495 = vrot.slane %v2699, 3
      %v3496 = vsel %vm3461, %v3493, %v3495
      %v3497 = vrot.slane %v3013, 3
      %v3498 = vsel %vm3461, %v3495, %v3497
      %v3500 = vsel %vm603, %v3464, 0
      %v3503 = vsel %vm603, %v3466, 0
      %v3506 = vsel %vm603, %v3468, 0
      %v3509 = vsel %vm603, %v3470, 0
      %v3512 = vsel %vm603, %v3472, 0
      %v3515 = vsel %vm603, %v3474, 0
      %v3518 = vsel %vm603, %v3476, 0
      %v3521 = vsel %vm603, %v3478, 0
      %v3524 = vsel %vm603, %v3480, 0
      %v3527 = vsel %vm603, %v3482, 0
      %v3530 = vsel %vm603, %v3484, 0
      %v3533 = vsel %vm603, %v3486, 0
      %v3536 = vsel %vm603, %v3488, 0
      %v3539 = vsel %vm603, %v3490, 0
      %v3542 = vsel %vm603, %v3492, 0
      %v3545 = vsel %vm603, %v3494, 0
      %v3548 = vsel %vm603, %v3496, 0
      %v3551 = vsel %vm603, %v3498, 0
      %v3554 = vsel %vm658, %v3457, 0
      %3556 = vmatprep.subr.bf16.mxu0 0
      %3557 = vmatpush1.bf16.msra.mxu0 %v3554
      %3558 = vmatprep.subr.bf16.mxu0 0
      %3559 = vmatpush1.bf16.msra.mxu0 0
      %3560 = vmatprep.subr.bf16.mxu0 0
      %3561 = vmatpush1.bf16.msra.mxu0 0
      %3562 = vmatprep.subr.bf16.mxu0 0
      %3563 = vmatpush1.bf16.msra.mxu0 0
      %3564 = vmatprep.subr.bf16.mxu0 0
      %3565 = vmatpush1.bf16.msra.mxu0 0
      %3566 = vmatprep.subr.bf16.mxu0 0
      %3567 = vmatpush1.bf16.msra.mxu0 0
      %3568 = vmatprep.subr.bf16.mxu0 0
      %3569 = vmatpush1.bf16.msra.mxu0 0
      %3570 = vmatprep.subr.bf16.mxu0 0
      %3571 = vmatpush1.bf16.msra.mxu0 0
      %3572 = vmatprep.subr.bf16.mxu0 0
      %3573 = vmatpush1.bf16.msra.mxu0 0
      %3574 = vmatprep.subr.bf16.mxu0 0
      %3575 = vmatpush1.bf16.msra.mxu0 0
      %3576 = vmatprep.subr.bf16.mxu0 0
      %3577 = vmatpush1.bf16.msra.mxu0 0
      %3578 = vmatprep.subr.bf16.mxu0 0
      %3579 = vmatpush1.bf16.msra.mxu0 0
      %3580 = vmatprep.subr.bf16.mxu0 0
      %3581 = vmatpush1.bf16.msra.mxu0 0
      %3582 = vmatprep.subr.bf16.mxu0 0
      %3583 = vmatpush1.bf16.msra.mxu0 0
      %3584 = vmatprep.subr.bf16.mxu0 0
      %3585 = vmatpush1.bf16.msra.mxu0 0
      %3586 = vmatprep.subr.bf16.mxu0 0
      %3587 = vmatpush1.bf16.msra.mxu0 0
      %3588 = vmatprep.mubr.bf16.mxu0 0
      %3589 = vmatmul.mubr.bf16.gmra.mrb[0].mxu0 %v3500
      %v3590 = vpop.f32.mrb[0].mxu0
      %v3591 = vadd.f32 0.0, %v3590
      %v3592 = vpop.f32.mrb[0].mxu0
      %v3593 = vpop.f32.mrb[0].mxu0
      %v3594 = vadd.f32 0.0, %v3593
      %v3595 = vpop.f32.mrb[0].mxu0
      %3596 = vmatprep.mubr.bf16.mxu0 0
      %3597 = vmatmul.mubr.bf16.gmra.mrb[0].mxu0 %v3503
      %v3598 = vpop.f32.mrb[0].mxu0
      %v3599 = vadd.f32 0.0, %v3598
      %v3600 = vpop.f32.mrb[0].mxu0
      %v3601 = vpop.f32.mrb[0].mxu0
      %v3602 = vadd.f32 0.0, %v3601
      %v3603 = vpop.f32.mrb[0].mxu0
      %3604 = vmatprep.mubr.bf16.mxu0 0
      %3605 = vmatmul.mubr.bf16.gmra.mrb[0].mxu0 %v3506
      %v3606 = vpop.f32.mrb[0].mxu0
      %v3607 = vadd.f32 0.0, %v3606
      %v3608 = vpop.f32.mrb[0].mxu0
      %v3609 = vpop.f32.mrb[0].mxu0
      %v3610 = vadd.f32 0.0, %v3609
      %v3611 = vpop.f32.mrb[0].mxu0
      %3612 = vmatprep.mubr.bf16.mxu0 0
      %3613 = vmatmul.mubr.bf16.gmra.mrb[0].mxu0 %v3509
      %v3614 = vpop.f32.mrb[0].mxu0
      %v3615 = vadd.f32 0.0, %v3614
      %v3616 = vpop.f32.mrb[0].mxu0
      %v3617 = vpop.f32.mrb[0].mxu0
      %v3618 = vadd.f32 0.0, %v3617
      %v3619 = vpop.f32.mrb[0].mxu0
      %3620 = vmatprep.mubr.bf16.mxu0 0
      %3621 = vmatmul.mubr.bf16.gmra.mrb[0].mxu0 %v3512
      %v3622 = vpop.f32.mrb[0].mxu0
      %v3623 = vadd.f32 0.0, %v3622
      %v3624 = vpop.f32.mrb[0].mxu0
      %v3625 = vpop.f32.mrb[0].mxu0
      %v3626 = vadd.f32 0.0, %v3625
      %v3627 = vpop.f32.mrb[0].mxu0
      %3628 = vmatprep.mubr.bf16.mxu0 0
      %3629 = vmatmul.mubr.bf16.gmra.mrb[0].mxu0 %v3515
      %v3630 = vpop.f32.mrb[0].mxu0
      %v3631 = vadd.f32 0.0, %v3630
      %v3632 = vpop.f32.mrb[0].mxu0
      %v3633 = vpop.f32.mrb[0].mxu0
      %v3634 = vadd.f32 0.0, %v3633
      %v3635 = vpop.f32.mrb[0].mxu0
      %3636 = vmatprep.mubr.bf16.mxu0 0
      %3637 = vmatmul.mubr.bf16.gmra.mrb[0].mxu0 %v3518
      %v3638 = vpop.f32.mrb[0].mxu0
      %v3639 = vadd.f32 0.0, %v3638
      %v3640 = vpop.f32.mrb[0].mxu0
      %v3641 = vpop.f32.mrb[0].mxu0
      %v3642 = vadd.f32 0.0, %v3641
      %v3643 = vpop.f32.mrb[0].mxu0
      %3644 = vmatprep.mubr.bf16.mxu0 0
      %3645 = vmatmul.mubr.bf16.gmra.mrb[0].mxu0 %v3521
      %v3646 = vpop.f32.mrb[0].mxu0
      %v3647 = vadd.f32 0.0, %v3646
      %v3648 = vpop.f32.mrb[0].mxu0
      %v3649 = vpop.f32.mrb[0].mxu0
      %v3650 = vadd.f32 0.0, %v3649
      %v3651 = vpop.f32.mrb[0].mxu0
      %3652 = vmatprep.mubr.bf16.mxu0 0
      %3653 = vmatmul.mubr.bf16.gmra.mrb[0].mxu0 %v3524
      %v3654 = vpop.f32.mrb[0].mxu0
      %v3655 = vadd.f32 0.0, %v3654
      %v3656 = vpop.f32.mrb[0].mxu0
      %v3657 = vpop.f32.mrb[0].mxu0
      %v3658 = vadd.f32 0.0, %v3657
      %v3659 = vpop.f32.mrb[0].mxu0
      %3660 = vmatprep.mubr.bf16.mxu0 0
      %3661 = vmatmul.mubr.bf16.gmra.mrb[0].mxu0 %v3527
      %v3662 = vpop.f32.mrb[0].mxu0
      %v3663 = vadd.f32 0.0, %v3662
      %v3664 = vpop.f32.mrb[0].mxu0
      %v3665 = vpop.f32.mrb[0].mxu0
      %v3666 = vadd.f32 0.0, %v3665
      %v3667 = vpop.f32.mrb[0].mxu0
      %3668 = vmatprep.mubr.bf16.mxu0 0
      %3669 = vmatmul.mubr.bf16.gmra.mrb[0].mxu0 %v3530
      %v3670 = vpop.f32.mrb[0].mxu0
      %v3671 = vadd.f32 0.0, %v3670
      %v3672 = vpop.f32.mrb[0].mxu0
      %v3673 = vpop.f32.mrb[0].mxu0
      %v3674 = vadd.f32 0.0, %v3673
      %v3675 = vpop.f32.mrb[0].mxu0
      %3676 = vmatprep.mubr.bf16.mxu0 0
      %3677 = vmatmul.mubr.bf16.gmra.mrb[0].mxu0 %v3533
      %v3678 = vpop.f32.mrb[0].mxu0
      %v3679 = vadd.f32 0.0, %v3678
      %v3680 = vpop.f32.mrb[0].mxu0
      %v3681 = vpop.f32.mrb[0].mxu0
      %v3682 = vadd.f32 0.0, %v3681
      %v3683 = vpop.f32.mrb[0].mxu0
      %3684 = vmatprep.mubr.bf16.mxu0 0
      %3685 = vmatmul.mubr.bf16.gmra.mrb[0].mxu0 %v3536
      %v3686 = vpop.f32.mrb[0].mxu0
      %v3687 = vadd.f32 0.0, %v3686
      %v3688 = vpop.f32.mrb[0].mxu0
      %v3689 = vpop.f32.mrb[0].mxu0
      %v3690 = vadd.f32 0.0, %v3689
      %v3691 = vpop.f32.mrb[0].mxu0
      %3692 = vmatprep.mubr.bf16.mxu0 0
      %3693 = vmatmul.mubr.bf16.gmra.mrb[0].mxu0 %v3539
      %v3694 = vpop.f32.mrb[0].mxu0
      %v3695 = vadd.f32 0.0, %v3694
      %v3696 = vpop.f32.mrb[0].mxu0
      %v3697 = vpop.f32.mrb[0].mxu0
      %v3698 = vadd.f32 0.0, %v3697
      %v3699 = vpop.f32.mrb[0].mxu0
      %3700 = vmatprep.mubr.bf16.mxu0 0
      %3701 = vmatmul.mubr.bf16.gmra.mrb[0].mxu0 %v3542
      %v3702 = vpop.f32.mrb[0].mxu0
      %v3703 = vadd.f32 0.0, %v3702
      %v3704 = vpop.f32.mrb[0].mxu0
      %v3705 = vpop.f32.mrb[0].mxu0
      %v3706 = vadd.f32 0.0, %v3705
      %v3707 = vpop.f32.mrb[0].mxu0
      %3708 = vmatprep.mubr.bf16.mxu0 0
      %3709 = vmatmul.mubr.bf16.gmra.mrb[0].mxu0 %v3545
      %v3710 = vpop.f32.mrb[0].mxu0
      %v3711 = vadd.f32 0.0, %v3710
      %v3712 = vpop.f32.mrb[0].mxu0
      %v3713 = vpop.f32.mrb[0].mxu0
      %v3714 = vadd.f32 0.0, %v3713
      %v3715 = vpop.f32.mrb[0].mxu0
      %3716 = vmatprep.mubr.bf16.mxu0 0
      %3717 = vmatmul.mubr.bf16.gmra.mrb[0].mxu0 %v3548
      %v3718 = vpop.f32.mrb[0].mxu0
      %v3719 = vadd.f32 0.0, %v3718
      %v3720 = vpop.f32.mrb[0].mxu0
      %v3721 = vpop.f32.mrb[0].mxu0
      %v3722 = vadd.f32 0.0, %v3721
      %v3723 = vpop.f32.mrb[0].mxu0
      %3724 = vmatprep.mubr.bf16.mxu0 0
      %3725 = vmatmul.mubr.bf16.gmra.mrb[0].mxu0 %v3551
      %v3726 = vpop.f32.mrb[0].mxu0
      %v3727 = vadd.f32 0.0, %v3726
      %v3728 = vpop.f32.mrb[0].mxu0
      %v3729 = vpop.f32.mrb[0].mxu0
      %v3730 = vadd.f32 0.0, %v3729
      %v3731 = vpop.f32.mrb[0].mxu0
      %3732 = vdwg.mxu0
      %v3733 = vadd.f32 %v3419, %v3591
      %v3734 = vadd.f32 %v3420, %v3594
      %v3735 = vadd.f32 %v3421, %v3599
      %v3736 = vadd.f32 %v3422, %v3602
      %v3737 = vadd.f32 %v3423, %v3607
      %v3738 = vadd.f32 %v3424, %v3610
      %v3739 = vadd.f32 %v3425, %v3615
      %v3740 = vadd.f32 %v3426, %v3618
      %v3741 = vadd.f32 %v3427, %v3623
      %v3742 = vadd.f32 %v3428, %v3626
      %v3743 = vadd.f32 %v3429, %v3631
      %v3744 = vadd.f32 %v3430, %v3634
      %v3745 = vadd.f32 %v3431, %v3639
      %v3746 = vadd.f32 %v3432, %v3642
      %v3747 = vadd.f32 %v3433, %v3647
      %v3748 = vadd.f32 %v3434, %v3650
      %v3749 = vadd.f32 %v3435, %v3655
      %v3750 = vadd.f32 %v3436, %v3658
      %v3751 = vadd.f32 %v3437, %v3663
      %v3752 = vadd.f32 %v3438, %v3666
      %v3753 = vadd.f32 %v3439, %v3671
      %v3754 = vadd.f32 %v3440, %v3674
      %v3755 = vadd.f32 %v3441, %v3679
      %v3756 = vadd.f32 %v3442, %v3682
      %v3757 = vadd.f32 %v3443, %v3687
      %v3758 = vadd.f32 %v3444, %v3690
      %v3759 = vadd.f32 %v3445, %v3695
      %v3760 = vadd.f32 %v3446, %v3698
      %v3761 = vadd.f32 %v3447, %v3703
      %v3762 = vadd.f32 %v3448, %v3706
      %v3763 = vadd.f32 %v3449, %v3711
      %v3764 = vadd.f32 %v3450, %v3714
      %v3765 = vadd.f32 %v3451, %v3719
      %v3766 = vadd.f32 %v3452, %v3722
      %v3767 = vadd.f32 %v3453, %v3727
      %v3768 = vadd.f32 %v3454, %v3730
      %v3769 = vpack.c.bf16 %v3734, %v3733
      %v3770 = vpack.c.bf16 %v3736, %v3735
      %v3771 = vpack.c.bf16 %v3738, %v3737
      %v3772 = vpack.c.bf16 %v3740, %v3739
      %v3773 = vpack.c.bf16 %v3742, %v3741
      %v3774 = vpack.c.bf16 %v3744, %v3743
      %v3775 = vpack.c.bf16 %v3746, %v3745
      %v3776 = vpack.c.bf16 %v3748, %v3747
      %v3777 = vpack.c.bf16 %v3750, %v3749
      %v3778 = vpack.c.bf16 %v3752, %v3751
      %v3779 = vpack.c.bf16 %v3754, %v3753
      %v3780 = vpack.c.bf16 %v3756, %v3755
      %v3781 = vpack.c.bf16 %v3758, %v3757
      %v3782 = vpack.c.bf16 %v3760, %v3759
      %v3783 = vpack.c.bf16 %v3762, %v3761
      %v3784 = vpack.c.bf16 %v3764, %v3763
      %v3785 = vpack.c.bf16 %v3766, %v3765
      %v3786 = vpack.c.bf16 %v3768, %v3767
      %v3805 = vunpack.c.l.b16 %v3769
      %v3806 = vunpack.c.h.b16 %v3769
      %v3807 = vunpack.c.l.b16 %v3770
      %v3808 = vunpack.c.h.b16 %v3770
      %v3809 = vunpack.c.l.b16 %v3771
      %v3810 = vunpack.c.h.b16 %v3771
      %v3811 = vunpack.c.l.b16 %v3772
      %v3812 = vunpack.c.h.b16 %v3772
      %v3813 = vunpack.c.l.b16 %v3773
      %v3814 = vunpack.c.h.b16 %v3773
      %v3815 = vunpack.c.l.b16 %v3774
      %v3816 = vunpack.c.h.b16 %v3774
      %v3817 = vunpack.c.l.b16 %v3775
      %v3818 = vunpack.c.h.b16 %v3775
      %v3819 = vunpack.c.l.b16 %v3776
      %v3820 = vunpack.c.h.b16 %v3776
      %v3821 = vunpack.c.l.b16 %v3777
      %v3822 = vunpack.c.h.b16 %v3777
      %v3823 = vunpack.c.l.b16 %v3778
      %v3824 = vunpack.c.h.b16 %v3778
      %v3825 = vunpack.c.l.b16 %v3779
      %v3826 = vunpack.c.h.b16 %v3779
      %v3827 = vunpack.c.l.b16 %v3780
      %v3828 = vunpack.c.h.b16 %v3780
      %v3829 = vunpack.c.l.b16 %v3781
      %v3830 = vunpack.c.h.b16 %v3781
      %v3831 = vunpack.c.l.b16 %v3782
      %v3832 = vunpack.c.h.b16 %v3782
      %v3833 = vunpack.c.l.b16 %v3783
      %v3834 = vunpack.c.h.b16 %v3783
      %v3835 = vunpack.c.l.b16 %v3784
      %v3836 = vunpack.c.h.b16 %v3784
      %v3837 = vunpack.c.l.b16 %v3785
      %v3838 = vunpack.c.h.b16 %v3785
      %v3839 = vunpack.c.l.b16 %v3786
      %v3840 = vunpack.c.h.b16 %v3786
      %v3841 = vpack.c.b16 %v3805, %v3805
      %v3842 = vpack.c.b16 %v3806, %v3806
      %v3843 = vpack.c.b16 %v3807, %v3807
      %v3844 = vpack.c.b16 %v3808, %v3808
      %v3845 = vpack.c.b16 %v3809, %v3809
      %v3846 = vpack.c.b16 %v3810, %v3810
      %v3847 = vpack.c.b16 %v3811, %v3811
      %v3848 = vpack.c.b16 %v3812, %v3812
      %v3849 = vpack.c.b16 %v3813, %v3813
      %v3850 = vpack.c.b16 %v3814, %v3814
      %v3851 = vpack.c.b16 %v3815, %v3815
      %v3852 = vpack.c.b16 %v3816, %v3816
      %v3853 = vpack.c.b16 %v3817, %v3817
      %v3854 = vpack.c.b16 %v3818, %v3818
      %v3855 = vpack.c.b16 %v3819, %v3819
      %v3856 = vpack.c.b16 %v3820, %v3820
      %v3857 = vpack.c.b16 %v3821, %v3821
      %v3858 = vpack.c.b16 %v3822, %v3822
      %v3859 = vpack.c.b16 %v3823, %v3823
      %v3860 = vpack.c.b16 %v3824, %v3824
      %v3861 = vpack.c.b16 %v3825, %v3825
      %v3862 = vpack.c.b16 %v3826, %v3826
      %v3863 = vpack.c.b16 %v3827, %v3827
      %v3864 = vpack.c.b16 %v3828, %v3828
      %v3865 = vpack.c.b16 %v3829, %v3829
      %v3866 = vpack.c.b16 %v3830, %v3830
      %v3867 = vpack.c.b16 %v3831, %v3831
      %v3868 = vpack.c.b16 %v3832, %v3832
      %v3869 = vpack.c.b16 %v3833, %v3833
      %v3870 = vpack.c.b16 %v3834, %v3834
      %v3871 = vpack.c.b16 %v3835, %v3835
      %v3872 = vpack.c.b16 %v3836, %v3836
      %v3873 = vpack.c.b16 %v3837, %v3837
      %v3874 = vpack.c.b16 %v3838, %v3838
      %v3875 = vpack.c.b16 %v3839, %v3839
      %v3876 = vpack.c.b16 %v3840, %v3840
      %3913 = vst [vmem:[%s311] sm:$0xf] %v3841
      %3914 = vst [vmem:[%s311 + $0x4] sm:$0xf] %v3842
      %3915 = vst [vmem:[%s311 + $0x8] sm:$0xf] %v3843
      %3916 = vst [vmem:[%s311 + $0xc] sm:$0xf] %v3844
      %3917 = vst [vmem:[%s311 + $0x10] sm:$0xf] %v3845
      %3918 = vst [vmem:[%s311 + $0x14] sm:$0xf] %v3846
      %3919 = vst [vmem:[%s311 + $0x18] sm:$0xf] %v3847
      %3920 = vst [vmem:[%s311 + $0x1c] sm:$0xf] %v3848
      %3921 = vst [vmem:[%s311 + $0x20] sm:$0xf] %v3849
      %3922 = vst [vmem:[%s311 + $0x24] sm:$0xf] %v3850
      %3923 = vst [vmem:[%s311 + $0x28] sm:$0xf] %v3851
      %3924 = vst [vmem:[%s311 + $0x2c] sm:$0xf] %v3852
      %3925 = vst [vmem:[%s311 + $0x30] sm:$0xf] %v3853
      %3926 = vst [vmem:[%s311 + $0x34] sm:$0xf] %v3854
      %3927 = vst [vmem:[%s311 + $0x38] sm:$0xf] %v3855
      %3928 = vst [vmem:[%s311 + $0x3c] sm:$0xf] %v3856
      %3929 = vst [vmem:[%s311 + $0x40] sm:$0xf] %v3857
      %3930 = vst [vmem:[%s311 + $0x44] sm:$0xf] %v3858
      %3931 = vst [vmem:[%s311 + $0x48] sm:$0xf] %v3859
      %3932 = vst [vmem:[%s311 + $0x4c] sm:$0xf] %v3860
      %3933 = vst [vmem:[%s311 + $0x50] sm:$0xf] %v3861
      %3934 = vst [vmem:[%s311 + $0x54] sm:$0xf] %v3862
      %3935 = vst [vmem:[%s311 + $0x58] sm:$0xf] %v3863
      %3936 = vst [vmem:[%s311 + $0x5c] sm:$0xf] %v3864
      %3937 = vst [vmem:[%s311 + $0x60] sm:$0xf] %v3865
      %3938 = vst [vmem:[%s311 + $0x64] sm:$0xf] %v3866
      %3939 = vst [vmem:[%s311 + $0x68] sm:$0xf] %v3867
      %3940 = vst [vmem:[%s311 + $0x6c] sm:$0xf] %v3868
      %3941 = vst [vmem:[%s311 + $0x70] sm:$0xf] %v3869
      %3942 = vst [vmem:[%s311 + $0x74] sm:$0xf] %v3870
      %3943 = vst [vmem:[%s311 + $0x78] sm:$0xf] %v3871
      %3944 = vst [vmem:[%s311 + $0x7c] sm:$0xf] %v3872
      %3945 = vst [vmem:[%s311 + $0x80] sm:$0xf] %v3873
      %3946 = vst [vmem:[%s311 + $0x84] sm:$0xf] %v3874
      %3947 = vst [vmem:[%s311 + $0x88] sm:$0xf] %v3875
      %3948 = vst [vmem:[%s311 + $0x8c] sm:$0xf] %v3876
      %v3949 = vld [vmem:[%s4] sm:$0xff]
      %v3950 = vld [vmem:[%s4 + $0x8] sm:$0xff]
      %v3951 = vld [vmem:[%s4 + $0x10] sm:$0xff]
      %v3952 = vld [vmem:[%s4 + $0x18] sm:$0xff]
      %v3953 = vld [vmem:[%s4 + $0x20] sm:$0xff]
      %v3954 = vld [vmem:[%s4 + $0x28] sm:$0xff]
      %v3955 = vld [vmem:[%s4 + $0x30] sm:$0xff]
      %v3956 = vld [vmem:[%s4 + $0x38] sm:$0xff]
      %v3957 = vld [vmem:[%s4 + $0x40] sm:$0xff]
      %v3958 = vld [vmem:[%s4 + $0x48] sm:$0xff]
      %v3959 = vld [vmem:[%s4 + $0x50] sm:$0xff]
      %v3960 = vld [vmem:[%s4 + $0x58] sm:$0xff]
      %v3961 = vld [vmem:[%s4 + $0x60] sm:$0xff]
      %v3962 = vld [vmem:[%s4 + $0x68] sm:$0xff]
      %v3963 = vld [vmem:[%s4 + $0x70] sm:$0xff]
      %v3964 = vld [vmem:[%s4 + $0x78] sm:$0xff]
      %v3965 = vld [vmem:[%s4 + $0x80] sm:$0xff]
      %v3966 = vld [vmem:[%s4 + $0x88] sm:$0xff]
      %v3967 = vld [vmem:[%s4 + $0x90] sm:$0xff]
      %v3968 = vld [vmem:[%s4 + $0x98] sm:$0xff]
      %v3969 = vld [vmem:[%s4 + $0xa0] sm:$0xff]
      %v3970 = vld [vmem:[%s4 + $0xa8] sm:$0xff]
      %v3971 = vld [vmem:[%s4 + $0xb0] sm:$0xff]
      %v3972 = vld [vmem:[%s4 + $0xb8] sm:$0xff]
      %v3973 = vld [vmem:[%s4 + $0xc0] sm:$0xff]
      %v3974 = vld [vmem:[%s4 + $0xc8] sm:$0xff]
      %v3975 = vld [vmem:[%s4 + $0xd0] sm:$0xff]
      %v3976 = vld [vmem:[%s4 + $0xd8] sm:$0xff]
      %v3977 = vld [vmem:[%s4 + $0xe0] sm:$0xff]
      %v3978 = vld [vmem:[%s4 + $0xe8] sm:$0xff]
      %v3979 = vld [vmem:[%s4 + $0xf0] sm:$0xff]
      %v3980 = vld [vmem:[%s4 + $0xf8] sm:$0xff]
      %v3981 = vld [vmem:[%s4 + $0x100] sm:$0xff]
      %v3982 = vld [vmem:[%s4 + $0x108] sm:$0xff]
      %v3983 = vld [vmem:[%s4 + $0x110] sm:$0xff]
      %v3984 = vld [vmem:[%s4 + $0x118] sm:$0xff]
      %3986 = vset.pattern.permute.xlu0 0
      %3987 = vperm.xlu0 %3986, %v3949
      %v3988 = vpop.permute.xlu0 %3987
      %3991 = vset.pattern.permute.xlu0 0
      %3992 = vperm.xlu0 %3991, %v3950
      %v3993 = vpop.permute.xlu0 %3992
      %3996 = vset.pattern.permute.xlu0 0
      %3997 = vperm.xlu0 %3996, %v3951
      %v3998 = vpop.permute.xlu0 %3997
      %4001 = vset.pattern.permute.xlu0 0
      %4002 = vperm.xlu0 %4001, %v3952
      %v4003 = vpop.permute.xlu0 %4002
      %4006 = vset.pattern.permute.xlu0 0
      %4007 = vperm.xlu0 %4006, %v3953
      %v4008 = vpop.permute.xlu0 %4007
      %4011 = vset.pattern.permute.xlu0 0
      %4012 = vperm.xlu0 %4011, %v3954
      %v4013 = vpop.permute.xlu0 %4012
      %4016 = vset.pattern.permute.xlu0 0
      %4017 = vperm.xlu0 %4016, %v3955
      %v4018 = vpop.permute.xlu0 %4017
      %4021 = vset.pattern.permute.xlu0 0
      %4022 = vperm.xlu0 %4021, %v3956
      %v4023 = vpop.permute.xlu0 %4022
      %4026 = vset.pattern.permute.xlu0 0
      %4027 = vperm.xlu0 %4026, %v3957
      %v4028 = vpop.permute.xlu0 %4027
      %4031 = vset.pattern.permute.xlu0 0
      %4032 = vperm.xlu0 %4031, %v3958
      %v4033 = vpop.permute.xlu0 %4032
      %4036 = vset.pattern.permute.xlu0 0
      %4037 = vperm.xlu0 %4036, %v3959
      %v4038 = vpop.permute.xlu0 %4037
      %4041 = vset.pattern.permute.xlu0 0
      %4042 = vperm.xlu0 %4041, %v3960
      %v4043 = vpop.permute.xlu0 %4042
      %4046 = vset.pattern.permute.xlu0 0
      %4047 = vperm.xlu0 %4046, %v3961
      %v4048 = vpop.permute.xlu0 %4047
      %4051 = vset.pattern.permute.xlu0 0
      %4052 = vperm.xlu0 %4051, %v3962
      %v4053 = vpop.permute.xlu0 %4052
      %4056 = vset.pattern.permute.xlu0 0
      %4057 = vperm.xlu0 %4056, %v3963
      %v4058 = vpop.permute.xlu0 %4057
      %4061 = vset.pattern.permute.xlu0 0
      %4062 = vperm.xlu0 %4061, %v3964
      %v4063 = vpop.permute.xlu0 %4062
      %4066 = vset.pattern.permute.xlu0 0
      %4067 = vperm.xlu0 %4066, %v3965
      %v4068 = vpop.permute.xlu0 %4067
      %4071 = vset.pattern.permute.xlu0 0
      %4072 = vperm.xlu0 %4071, %v3966
      %v4073 = vpop.permute.xlu0 %4072
      %4076 = vset.pattern.permute.xlu0 0
      %4077 = vperm.xlu0 %4076, %v3967
      %v4078 = vpop.permute.xlu0 %4077
      %4081 = vset.pattern.permute.xlu0 0
      %4082 = vperm.xlu0 %4081, %v3968
      %v4083 = vpop.permute.xlu0 %4082
      %4086 = vset.pattern.permute.xlu0 0
      %4087 = vperm.xlu0 %4086, %v3969
      %v4088 = vpop.permute.xlu0 %4087
      %4091 = vset.pattern.permute.xlu0 0
      %4092 = vperm.xlu0 %4091, %v3970
      %v4093 = vpop.permute.xlu0 %4092
      %4096 = vset.pattern.permute.xlu0 0
      %4097 = vperm.xlu0 %4096, %v3971
      %v4098 = vpop.permute.xlu0 %4097
      %4101 = vset.pattern.permute.xlu0 0
      %4102 = vperm.xlu0 %4101, %v3972
      %v4103 = vpop.permute.xlu0 %4102
      %4106 = vset.pattern.permute.xlu0 0
      %4107 = vperm.xlu0 %4106, %v3973
      %v4108 = vpop.permute.xlu0 %4107
      %4111 = vset.pattern.permute.xlu0 0
      %4112 = vperm.xlu0 %4111, %v3974
      %v4113 = vpop.permute.xlu0 %4112
      %4116 = vset.pattern.permute.xlu0 0
      %4117 = vperm.xlu0 %4116, %v3975
      %v4118 = vpop.permute.xlu0 %4117
      %4121 = vset.pattern.permute.xlu0 0
      %4122 = vperm.xlu0 %4121, %v3976
      %v4123 = vpop.permute.xlu0 %4122
      %4126 = vset.pattern.permute.xlu0 0
      %4127 = vperm.xlu0 %4126, %v3977
      %v4128 = vpop.permute.xlu0 %4127
      %4131 = vset.pattern.permute.xlu0 0
      %4132 = vperm.xlu0 %4131, %v3978
      %v4133 = vpop.permute.xlu0 %4132
      %4136 = vset.pattern.permute.xlu0 0
      %4137 = vperm.xlu0 %4136, %v3979
      %v4138 = vpop.permute.xlu0 %4137
      %4141 = vset.pattern.permute.xlu0 0
      %4142 = vperm.xlu0 %4141, %v3980
      %v4143 = vpop.permute.xlu0 %4142
      %4146 = vset.pattern.permute.xlu0 0
      %4147 = vperm.xlu0 %4146, %v3981
      %v4148 = vpop.permute.xlu0 %4147
      %4151 = vset.pattern.permute.xlu0 0
      %4152 = vperm.xlu0 %4151, %v3982
      %v4153 = vpop.permute.xlu0 %4152
      %4156 = vset.pattern.permute.xlu0 0
      %4157 = vperm.xlu0 %4156, %v3983
      %v4158 = vpop.permute.xlu0 %4157
      %4161 = vset.pattern.permute.xlu0 0
      %4162 = vperm.xlu0 %4161, %v3984
      %v4163 = vpop.permute.xlu0 %4162
      %v4165 = vmul.f32 %v3733, %v3988
      %v4166 = vmul.f32 %v3734, %v3993
      %v4167 = vmul.f32 %v3735, %v3998
      %v4168 = vmul.f32 %v3736, %v4003
      %v4169 = vmul.f32 %v3737, %v4008
      %v4170 = vmul.f32 %v3738, %v4013
      %v4171 = vmul.f32 %v3739, %v4018
      %v4172 = vmul.f32 %v3740, %v4023
      %v4173 = vmul.f32 %v3741, %v4028
      %v4174 = vmul.f32 %v3742, %v4033
      %v4175 = vmul.f32 %v3743, %v4038
      %v4176 = vmul.f32 %v3744, %v4043
      %v4177 = vmul.f32 %v3745, %v4048
      %v4178 = vmul.f32 %v3746, %v4053
      %v4179 = vmul.f32 %v3747, %v4058
      %v4180 = vmul.f32 %v3748, %v4063
      %v4181 = vmul.f32 %v3749, %v4068
      %v4182 = vmul.f32 %v3750, %v4073
      %v4183 = vmul.f32 %v3751, %v4078
      %v4184 = vmul.f32 %v3752, %v4083
      %v4185 = vmul.f32 %v3753, %v4088
      %v4186 = vmul.f32 %v3754, %v4093
      %v4187 = vmul.f32 %v3755, %v4098
      %v4188 = vmul.f32 %v3756, %v4103
      %v4189 = vmul.f32 %v3757, %v4108
      %v4190 = vmul.f32 %v3758, %v4113
      %v4191 = vmul.f32 %v3759, %v4118
      %v4192 = vmul.f32 %v3760, %v4123
      %v4193 = vmul.f32 %v3761, %v4128
      %v4194 = vmul.f32 %v3762, %v4133
      %v4195 = vmul.f32 %v3763, %v4138
      %v4196 = vmul.f32 %v3764, %v4143
      %v4197 = vmul.f32 %v3765, %v4148
      %v4198 = vmul.f32 %v3766, %v4153
      %v4199 = vmul.f32 %v3767, %v4158
      %v4200 = vmul.f32 %v3768, %v4163
      %v4201 = vadd.f32 %v4165, %v4166
      %v4202 = vadd.f32 %v4201, %v4167
      %v4203 = vadd.f32 %v4202, %v4168
      %v4204 = vadd.f32 %v4203, %v4169
      %v4205 = vadd.f32 %v4204, %v4170
      %v4206 = vadd.f32 %v4205, %v4171
      %v4207 = vadd.f32 %v4206, %v4172
      %v4208 = vadd.f32 %v4207, %v4173
      %v4209 = vadd.f32 %v4208, %v4174
      %v4210 = vadd.f32 %v4209, %v4175
      %v4211 = vadd.f32 %v4210, %v4176
      %v4212 = vadd.f32 %v4211, %v4177
      %v4213 = vadd.f32 %v4212, %v4178
      %v4214 = vadd.f32 %v4213, %v4179
      %v4215 = vadd.f32 %v4214, %v4180
      %v4216 = vadd.f32 %v4215, %v4181
      %v4217 = vadd.f32 %v4216, %v4182
      %v4218 = vadd.f32 %v4217, %v4183
      %v4219 = vadd.f32 %v4218, %v4184
      %v4220 = vadd.f32 %v4219, %v4185
      %v4221 = vadd.f32 %v4220, %v4186
      %v4222 = vadd.f32 %v4221, %v4187
      %v4223 = vadd.f32 %v4222, %v4188
      %v4224 = vadd.f32 %v4223, %v4189
      %v4225 = vadd.f32 %v4224, %v4190
      %v4226 = vadd.f32 %v4225, %v4191
      %v4227 = vadd.f32 %v4226, %v4192
      %v4228 = vadd.f32 %v4227, %v4193
      %v4229 = vadd.f32 %v4228, %v4194
      %v4230 = vadd.f32 %v4229, %v4195
      %v4231 = vadd.f32 %v4230, %v4196
      %v4232 = vadd.f32 %v4231, %v4197
      %v4233 = vadd.f32 %v4232, %v4198
      %v4234 = vadd.f32 %v4233, %v4199
      %v4235 = vadd.f32 %v4234, %v4200
      %v4236 = vrot.slane %v4235, 4
      %v4237 = vadd.f32 %v4235, %v4236
      %v4238 = vrot.slane %v4237, 2
      %v4239 = vadd.f32 %v4237, %v4238
      %v4240 = vrot.slane %v4239, 1
      %v4241 = vadd.f32 %v4239, %v4240
      %v4242 = vmul.f32 %v4165, %v3733
      %v4243 = vmul.f32 %v4166, %v3734
      %v4244 = vmul.f32 %v4167, %v3735
      %v4245 = vmul.f32 %v4168, %v3736
      %v4246 = vmul.f32 %v4169, %v3737
      %v4247 = vmul.f32 %v4170, %v3738
      %v4248 = vmul.f32 %v4171, %v3739
      %v4249 = vmul.f32 %v4172, %v3740
      %v4250 = vmul.f32 %v4173, %v3741
      %v4251 = vmul.f32 %v4174, %v3742
      %v4252 = vmul.f32 %v4175, %v3743
      %v4253 = vmul.f32 %v4176, %v3744
      %v4254 = vmul.f32 %v4177, %v3745
      %v4255 = vmul.f32 %v4178, %v3746
      %v4256 = vmul.f32 %v4179, %v3747
      %v4257 = vmul.f32 %v4180, %v3748
      %v4258 = vmul.f32 %v4181, %v3749
      %v4259 = vmul.f32 %v4182, %v3750
      %v4260 = vmul.f32 %v4183, %v3751
      %v4261 = vmul.f32 %v4184, %v3752
      %v4262 = vmul.f32 %v4185, %v3753
      %v4263 = vmul.f32 %v4186, %v3754
      %v4264 = vmul.f32 %v4187, %v3755
      %v4265 = vmul.f32 %v4188, %v3756
      %v4266 = vmul.f32 %v4189, %v3757
      %v4267 = vmul.f32 %v4190, %v3758
      %v4268 = vmul.f32 %v4191, %v3759
      %v4269 = vmul.f32 %v4192, %v3760
      %v4270 = vmul.f32 %v4193, %v3761
      %v4271 = vmul.f32 %v4194, %v3762
      %v4272 = vmul.f32 %v4195, %v3763
      %v4273 = vmul.f32 %v4196, %v3764
      %v4274 = vmul.f32 %v4197, %v3765
      %v4275 = vmul.f32 %v4198, %v3766
      %v4276 = vmul.f32 %v4199, %v3767
      %v4277 = vmul.f32 %v4200, %v3768
      %v4278 = vadd.f32 %v4242, %v4243
      %v4279 = vadd.f32 %v4278, %v4244
      %v4280 = vadd.f32 %v4279, %v4245
      %v4281 = vadd.f32 %v4280, %v4246
      %v4282 = vadd.f32 %v4281, %v4247
      %v4283 = vadd.f32 %v4282, %v4248
      %v4284 = vadd.f32 %v4283, %v4249
      %v4285 = vadd.f32 %v4284, %v4250
      %v4286 = vadd.f32 %v4285, %v4251
      %v4287 = vadd.f32 %v4286, %v4252
      %v4288 = vadd.f32 %v4287, %v4253
      %v4289 = vadd.f32 %v4288, %v4254
      %v4290 = vadd.f32 %v4289, %v4255
      %v4291 = vadd.f32 %v4290, %v4256
      %v4292 = vadd.f32 %v4291, %v4257
      %v4293 = vadd.f32 %v4292, %v4258
      %v4294 = vadd.f32 %v4293, %v4259
      %v4295 = vadd.f32 %v4294, %v4260
      %v4296 = vadd.f32 %v4295, %v4261
      %v4297 = vadd.f32 %v4296, %v4262
      %v4298 = vadd.f32 %v4297, %v4263
      %v4299 = vadd.f32 %v4298, %v4264
      %v4300 = vadd.f32 %v4299, %v4265
      %v4301 = vadd.f32 %v4300, %v4266
      %v4302 = vadd.f32 %v4301, %v4267
      %v4303 = vadd.f32 %v4302, %v4268
      %v4304 = vadd.f32 %v4303, %v4269
      %v4305 = vadd.f32 %v4304, %v4270
      %v4306 = vadd.f32 %v4305, %v4271
      %v4307 = vadd.f32 %v4306, %v4272
      %v4308 = vadd.f32 %v4307, %v4273
      %v4309 = vadd.f32 %v4308, %v4274
      %v4310 = vadd.f32 %v4309, %v4275
      %v4311 = vadd.f32 %v4310, %v4276
      %v4312 = vadd.f32 %v4311, %v4277
      %v4313 = vrot.slane %v4312, 4
      %v4314 = vadd.f32 %v4312, %v4313
      %v4315 = vrot.slane %v4314, 2
      %v4316 = vadd.f32 %v4314, %v4315
      %v4317 = vrot.slane %v4316, 1
      %v4318 = vadd.f32 %v4316, %v4317
      %vm4319 = vcmask 1040384
      %v4320 = vsel %vm4319, %v4241, %v4318
      %4321 = vst [vmem:[%s315] sm:$0x3] %v4320
      %v4322 = vld [vmem:[%s306] sm:$0xf]
      %v4323 = vld [vmem:[%s306 + $0x4] sm:$0xf]
      %v4324 = vld [vmem:[%s306 + $0x8] sm:$0xf]
      %v4325 = vld [vmem:[%s306 + $0xc] sm:$0xf]
      %v4326 = vld [vmem:[%s306 + $0x10] sm:$0xf]
      %v4327 = vld [vmem:[%s306 + $0x14] sm:$0xf]
      %v4328 = vld [vmem:[%s306 + $0x18] sm:$0xf]
      %v4329 = vld [vmem:[%s306 + $0x1c] sm:$0xf]
      %v4330 = vld [vmem:[%s306 + $0x20] sm:$0xf]
      %v4331 = vld [vmem:[%s306 + $0x24] sm:$0xf]
      %v4332 = vld [vmem:[%s306 + $0x28] sm:$0xf]
      %v4333 = vld [vmem:[%s306 + $0x2c] sm:$0xf]
      %v4334 = vld [vmem:[%s306 + $0x30] sm:$0xf]
      %v4335 = vld [vmem:[%s306 + $0x34] sm:$0xf]
      %v4336 = vld [vmem:[%s306 + $0x38] sm:$0xf]
      %v4337 = vld [vmem:[%s306 + $0x3c] sm:$0xf]
      %v4338 = vld [vmem:[%s306 + $0x40] sm:$0xf]
      %v4339 = vld [vmem:[%s306 + $0x44] sm:$0xf]
      %v4340 = vld [vmem:[%s306 + $0x48] sm:$0xf]
      %v4341 = vld [vmem:[%s306 + $0x4c] sm:$0xf]
      %v4342 = vld [vmem:[%s306 + $0x50] sm:$0xf]
      %v4343 = vld [vmem:[%s306 + $0x54] sm:$0xf]
      %v4344 = vld [vmem:[%s306 + $0x58] sm:$0xf]
      %v4345 = vld [vmem:[%s306 + $0x5c] sm:$0xf]
      %v4346 = vld [vmem:[%s306 + $0x60] sm:$0xf]
      %v4347 = vld [vmem:[%s306 + $0x64] sm:$0xf]
      %v4348 = vld [vmem:[%s306 + $0x68] sm:$0xf]
      %v4349 = vld [vmem:[%s306 + $0x6c] sm:$0xf]
      %v4350 = vld [vmem:[%s306 + $0x70] sm:$0xf]
      %v4351 = vld [vmem:[%s306 + $0x74] sm:$0xf]
      %v4352 = vld [vmem:[%s306 + $0x78] sm:$0xf]
      %v4353 = vld [vmem:[%s306 + $0x7c] sm:$0xf]
      %v4354 = vld [vmem:[%s306 + $0x80] sm:$0xf]
      %v4355 = vld [vmem:[%s306 + $0x84] sm:$0xf]
      %v4356 = vld [vmem:[%s306 + $0x88] sm:$0xf]
      %v4357 = vld [vmem:[%s306 + $0x8c] sm:$0xf]
      %v4358 = vld [vmem:[%s3] sm:$0x3]
      %v4395 = vunpack.c.l.b16 %v4322
      %v4396 = vunpack.c.l.b16 %v4323
      %v4397 = vunpack.c.l.b16 %v4324
      %v4398 = vunpack.c.l.b16 %v4325
      %v4399 = vunpack.c.l.b16 %v4326
      %v4400 = vunpack.c.l.b16 %v4327
      %v4401 = vunpack.c.l.b16 %v4328
      %v4402 = vunpack.c.l.b16 %v4329
      %v4403 = vunpack.c.l.b16 %v4330
      %v4404 = vunpack.c.l.b16 %v4331
      %v4405 = vunpack.c.l.b16 %v4332
      %v4406 = vunpack.c.l.b16 %v4333
      %v4407 = vunpack.c.l.b16 %v4334
      %v4408 = vunpack.c.l.b16 %v4335
      %v4409 = vunpack.c.l.b16 %v4336
      %v4410 = vunpack.c.l.b16 %v4337
      %v4411 = vunpack.c.l.b16 %v4338
      %v4412 = vunpack.c.l.b16 %v4339
      %v4413 = vunpack.c.l.b16 %v4340
      %v4414 = vunpack.c.l.b16 %v4341
      %v4415 = vunpack.c.l.b16 %v4342
      %v4416 = vunpack.c.l.b16 %v4343
      %v4417 = vunpack.c.l.b16 %v4344
      %v4418 = vunpack.c.l.b16 %v4345
      %v4419 = vunpack.c.l.b16 %v4346
      %v4420 = vunpack.c.l.b16 %v4347
      %v4421 = vunpack.c.l.b16 %v4348
      %v4422 = vunpack.c.l.b16 %v4349
      %v4423 = vunpack.c.l.b16 %v4350
      %v4424 = vunpack.c.l.b16 %v4351
      %v4425 = vunpack.c.l.b16 %v4352
      %v4426 = vunpack.c.l.b16 %v4353
      %v4427 = vunpack.c.l.b16 %v4354
      %v4428 = vunpack.c.l.b16 %v4355
      %v4429 = vunpack.c.l.b16 %v4356
      %v4430 = vunpack.c.l.b16 %v4357
      %v4431 = vpack.c.b16 %v4396, %v4395
      %v4432 = vpack.c.b16 %v4398, %v4397
      %v4433 = vpack.c.b16 %v4400, %v4399
      %v4434 = vpack.c.b16 %v4402, %v4401
      %v4435 = vpack.c.b16 %v4404, %v4403
      %v4436 = vpack.c.b16 %v4406, %v4405
      %v4437 = vpack.c.b16 %v4408, %v4407
      %v4438 = vpack.c.b16 %v4410, %v4409
      %v4439 = vpack.c.b16 %v4412, %v4411
      %v4440 = vpack.c.b16 %v4414, %v4413
      %v4441 = vpack.c.b16 %v4416, %v4415
      %v4442 = vpack.c.b16 %v4418, %v4417
      %v4443 = vpack.c.b16 %v4420, %v4419
      %v4444 = vpack.c.b16 %v4422, %v4421
      %v4445 = vpack.c.b16 %v4424, %v4423
      %v4446 = vpack.c.b16 %v4426, %v4425
      %v4447 = vpack.c.b16 %v4428, %v4427
      %v4448 = vpack.c.b16 %v4430, %v4429
      %vm4449 = vcmask 31744
      %v4451 = vsel %vm4449, %v4431, 0
      %v4454 = vsel %vm4449, %v4432, 0
      %v4457 = vsel %vm4449, %v4433, 0
      %v4460 = vsel %vm4449, %v4434, 0
      %v4463 = vsel %vm4449, %v4435, 0
      %v4466 = vsel %vm4449, %v4436, 0
      %v4469 = vsel %vm4449, %v4437, 0
      %v4472 = vsel %vm4449, %v4438, 0
      %v4475 = vsel %vm4449, %v4439, 0
      %v4478 = vsel %vm4449, %v4440, 0
      %v4481 = vsel %vm4449, %v4441, 0
      %v4484 = vsel %vm4449, %v4442, 0
      %v4487 = vsel %vm4449, %v4443, 0
      %v4490 = vsel %vm4449, %v4444, 0
      %v4493 = vsel %vm4449, %v4445, 0
      %v4496 = vsel %vm4449, %v4446, 0
      %v4499 = vsel %vm4449, %v4447, 0
      %v4502 = vsel %vm4449, %v4448, 0
      %vm4504 = vcmask 1041408
      %v4506 = vsel %vm4504, %v4358, 0
      %4508 = vmatprep.subr.bf16.mxu0 0
      %4509 = vmatpush1.bf16.msra.mxu0 %v4506
      %4510 = vmatprep.subr.bf16.mxu0 0
      %4511 = vmatpush1.bf16.msra.mxu0 0
      %4512 = vmatprep.subr.bf16.mxu0 0
      %4513 = vmatpush1.bf16.msra.mxu0 0
      %4514 = vmatprep.subr.bf16.mxu0 0
      %4515 = vmatpush1.bf16.msra.mxu0 0
      %4516 = vmatprep.subr.bf16.mxu0 0
      %4517 = vmatpush1.bf16.msra.mxu0 0
      %4518 = vmatprep.subr.bf16.mxu0 0
      %4519 = vmatpush1.bf16.msra.mxu0 0
      %4520 = vmatprep.subr.bf16.mxu0 0
      %4521 = vmatpush1.bf16.msra.mxu0 0
      %4522 = vmatprep.subr.bf16.mxu0 0
      %4523 = vmatpush1.bf16.msra.mxu0 0
      %4524 = vmatprep.subr.bf16.mxu0 0
      %4525 = vmatpush1.bf16.msra.mxu0 0
      %4526 = vmatprep.subr.bf16.mxu0 0
      %4527 = vmatpush1.bf16.msra.mxu0 0
      %4528 = vmatprep.subr.bf16.mxu0 0
      %4529 = vmatpush1.bf16.msra.mxu0 0
      %4530 = vmatprep.subr.bf16.mxu0 0
      %4531 = vmatpush1.bf16.msra.mxu0 0
      %4532 = vmatprep.subr.bf16.mxu0 0
      %4533 = vmatpush1.bf16.msra.mxu0 0
      %4534 = vmatprep.subr.bf16.mxu0 0
      %4535 = vmatpush1.bf16.msra.mxu0 0
      %4536 = vmatprep.subr.bf16.mxu0 0
      %4537 = vmatpush1.bf16.msra.mxu0 0
      %4538 = vmatprep.subr.bf16.mxu0 0
      %4539 = vmatpush1.bf16.msra.mxu0 0
      %4540 = vmatprep.mubr.bf16.mxu0 0
      %4541 = vmatmul.mubr.bf16.gmra.mrb[0].mxu0 %v4451
      %v4542 = vpop.f32.mrb[0].mxu0
      %v4543 = vadd.f32 0.0, %v4542
      %v4544 = vpop.f32.mrb[0].mxu0
      %v4545 = vpop.f32.mrb[0].mxu0
      %v4546 = vadd.f32 0.0, %v4545
      %v4547 = vpop.f32.mrb[0].mxu0
      %4548 = vmatprep.mubr.bf16.mxu0 0
      %4549 = vmatmul.mubr.bf16.gmra.mrb[0].mxu0 %v4454
      %v4550 = vpop.f32.mrb[0].mxu0
      %v4551 = vadd.f32 0.0, %v4550
      %v4552 = vpop.f32.mrb[0].mxu0
      %v4553 = vpop.f32.mrb[0].mxu0
      %v4554 = vadd.f32 0.0, %v4553
      %v4555 = vpop.f32.mrb[0].mxu0
      %4556 = vmatprep.mubr.bf16.mxu0 0
      %4557 = vmatmul.mubr.bf16.gmra.mrb[0].mxu0 %v4457
      %v4558 = vpop.f32.mrb[0].mxu0
      %v4559 = vadd.f32 0.0, %v4558
      %v4560 = vpop.f32.mrb[0].mxu0
      %v4561 = vpop.f32.mrb[0].mxu0
      %v4562 = vadd.f32 0.0, %v4561
      %v4563 = vpop.f32.mrb[0].mxu0
      %4564 = vmatprep.mubr.bf16.mxu0 0
      %4565 = vmatmul.mubr.bf16.gmra.mrb[0].mxu0 %v4460
      %v4566 = vpop.f32.mrb[0].mxu0
      %v4567 = vadd.f32 0.0, %v4566
      %v4568 = vpop.f32.mrb[0].mxu0
      %v4569 = vpop.f32.mrb[0].mxu0
      %v4570 = vadd.f32 0.0, %v4569
      %v4571 = vpop.f32.mrb[0].mxu0
      %4572 = vmatprep.mubr.bf16.mxu0 0
      %4573 = vmatmul.mubr.bf16.gmra.mrb[0].mxu0 %v4463
      %v4574 = vpop.f32.mrb[0].mxu0
      %v4575 = vadd.f32 0.0, %v4574
      %v4576 = vpop.f32.mrb[0].mxu0
      %v4577 = vpop.f32.mrb[0].mxu0
      %v4578 = vadd.f32 0.0, %v4577
      %v4579 = vpop.f32.mrb[0].mxu0
      %4580 = vmatprep.mubr.bf16.mxu0 0
      %4581 = vmatmul.mubr.bf16.gmra.mrb[0].mxu0 %v4466
      %v4582 = vpop.f32.mrb[0].mxu0
      %v4583 = vadd.f32 0.0, %v4582
      %v4584 = vpop.f32.mrb[0].mxu0
      %v4585 = vpop.f32.mrb[0].mxu0
      %v4586 = vadd.f32 0.0, %v4585
      %v4587 = vpop.f32.mrb[0].mxu0
      %4588 = vmatprep.mubr.bf16.mxu0 0
      %4589 = vmatmul.mubr.bf16.gmra.mrb[0].mxu0 %v4469
      %v4590 = vpop.f32.mrb[0].mxu0
      %v4591 = vadd.f32 0.0, %v4590
      %v4592 = vpop.f32.mrb[0].mxu0
      %v4593 = vpop.f32.mrb[0].mxu0
      %v4594 = vadd.f32 0.0, %v4593
      %v4595 = vpop.f32.mrb[0].mxu0
      %4596 = vmatprep.mubr.bf16.mxu0 0
      %4597 = vmatmul.mubr.bf16.gmra.mrb[0].mxu0 %v4472
      %v4598 = vpop.f32.mrb[0].mxu0
      %v4599 = vadd.f32 0.0, %v4598
      %v4600 = vpop.f32.mrb[0].mxu0
      %v4601 = vpop.f32.mrb[0].mxu0
      %v4602 = vadd.f32 0.0, %v4601
      %v4603 = vpop.f32.mrb[0].mxu0
      %4604 = vmatprep.mubr.bf16.mxu0 0
      %4605 = vmatmul.mubr.bf16.gmra.mrb[0].mxu0 %v4475
      %v4606 = vpop.f32.mrb[0].mxu0
      %v4607 = vadd.f32 0.0, %v4606
      %v4608 = vpop.f32.mrb[0].mxu0
      %v4609 = vpop.f32.mrb[0].mxu0
      %v4610 = vadd.f32 0.0, %v4609
      %v4611 = vpop.f32.mrb[0].mxu0
      %4612 = vmatprep.mubr.bf16.mxu0 0
      %4613 = vmatmul.mubr.bf16.gmra.mrb[0].mxu0 %v4478
      %v4614 = vpop.f32.mrb[0].mxu0
      %v4615 = vadd.f32 0.0, %v4614
      %v4616 = vpop.f32.mrb[0].mxu0
      %v4617 = vpop.f32.mrb[0].mxu0
      %v4618 = vadd.f32 0.0, %v4617
      %v4619 = vpop.f32.mrb[0].mxu0
      %4620 = vmatprep.mubr.bf16.mxu0 0
      %4621 = vmatmul.mubr.bf16.gmra.mrb[0].mxu0 %v4481
      %v4622 = vpop.f32.mrb[0].mxu0
      %v4623 = vadd.f32 0.0, %v4622
      %v4624 = vpop.f32.mrb[0].mxu0
      %v4625 = vpop.f32.mrb[0].mxu0
      %v4626 = vadd.f32 0.0, %v4625
      %v4627 = vpop.f32.mrb[0].mxu0
      %4628 = vmatprep.mubr.bf16.mxu0 0
      %4629 = vmatmul.mubr.bf16.gmra.mrb[0].mxu0 %v4484
      %v4630 = vpop.f32.mrb[0].mxu0
      %v4631 = vadd.f32 0.0, %v4630
      %v4632 = vpop.f32.mrb[0].mxu0
      %v4633 = vpop.f32.mrb[0].mxu0
      %v4634 = vadd.f32 0.0, %v4633
      %v4635 = vpop.f32.mrb[0].mxu0
      %4636 = vmatprep.mubr.bf16.mxu0 0
      %4637 = vmatmul.mubr.bf16.gmra.mrb[0].mxu0 %v4487
      %v4638 = vpop.f32.mrb[0].mxu0
      %v4639 = vadd.f32 0.0, %v4638
      %v4640 = vpop.f32.mrb[0].mxu0
      %v4641 = vpop.f32.mrb[0].mxu0
      %v4642 = vadd.f32 0.0, %v4641
      %v4643 = vpop.f32.mrb[0].mxu0
      %4644 = vmatprep.mubr.bf16.mxu0 0
      %4645 = vmatmul.mubr.bf16.gmra.mrb[0].mxu0 %v4490
      %v4646 = vpop.f32.mrb[0].mxu0
      %v4647 = vadd.f32 0.0, %v4646
      %v4648 = vpop.f32.mrb[0].mxu0
      %v4649 = vpop.f32.mrb[0].mxu0
      %v4650 = vadd.f32 0.0, %v4649
      %v4651 = vpop.f32.mrb[0].mxu0
      %4652 = vmatprep.mubr.bf16.mxu0 0
      %4653 = vmatmul.mubr.bf16.gmra.mrb[0].mxu0 %v4493
      %v4654 = vpop.f32.mrb[0].mxu0
      %v4655 = vadd.f32 0.0, %v4654
      %v4656 = vpop.f32.mrb[0].mxu0
      %v4657 = vpop.f32.mrb[0].mxu0
      %v4658 = vadd.f32 0.0, %v4657
      %v4659 = vpop.f32.mrb[0].mxu0
      %4660 = vmatprep.mubr.bf16.mxu0 0
      %4661 = vmatmul.mubr.bf16.gmra.mrb[0].mxu0 %v4496
      %v4662 = vpop.f32.mrb[0].mxu0
      %v4663 = vadd.f32 0.0, %v4662
      %v4664 = vpop.f32.mrb[0].mxu0
      %v4665 = vpop.f32.mrb[0].mxu0
      %v4666 = vadd.f32 0.0, %v4665
      %v4667 = vpop.f32.mrb[0].mxu0
      %4668 = vmatprep.mubr.bf16.mxu0 0
      %4669 = vmatmul.mubr.bf16.gmra.mrb[0].mxu0 %v4499
      %v4670 = vpop.f32.mrb[0].mxu0
      %v4671 = vadd.f32 0.0, %v4670
      %v4672 = vpop.f32.mrb[0].mxu0
      %v4673 = vpop.f32.mrb[0].mxu0
      %v4674 = vadd.f32 0.0, %v4673
      %v4675 = vpop.f32.mrb[0].mxu0
      %4676 = vmatprep.mubr.bf16.mxu0 0
      %4677 = vmatmul.mubr.bf16.gmra.mrb[0].mxu0 %v4502
      %v4678 = vpop.f32.mrb[0].mxu0
      %v4679 = vadd.f32 0.0, %v4678
      %v4680 = vpop.f32.mrb[0].mxu0
      %v4681 = vpop.f32.mrb[0].mxu0
      %v4682 = vadd.f32 0.0, %v4681
      %v4683 = vpop.f32.mrb[0].mxu0
      %4684 = vdwg.mxu0
      %v4685 = vmul.f32 %v4543, %v3988
      %v4686 = vmul.f32 %v4546, %v3993
      %v4687 = vmul.f32 %v4551, %v3998
      %v4688 = vmul.f32 %v4554, %v4003
      %v4689 = vmul.f32 %v4559, %v4008
      %v4690 = vmul.f32 %v4562, %v4013
      %v4691 = vmul.f32 %v4567, %v4018
      %v4692 = vmul.f32 %v4570, %v4023
      %v4693 = vmul.f32 %v4575, %v4028
      %v4694 = vmul.f32 %v4578, %v4033
      %v4695 = vmul.f32 %v4583, %v4038
      %v4696 = vmul.f32 %v4586, %v4043
      %v4697 = vmul.f32 %v4591, %v4048
      %v4698 = vmul.f32 %v4594, %v4053
      %v4699 = vmul.f32 %v4599, %v4058
      %v4700 = vmul.f32 %v4602, %v4063
      %v4701 = vmul.f32 %v4607, %v4068
      %v4702 = vmul.f32 %v4610, %v4073
      %v4703 = vmul.f32 %v4615, %v4078
      %v4704 = vmul.f32 %v4618, %v4083
      %v4705 = vmul.f32 %v4623, %v4088
      %v4706 = vmul.f32 %v4626, %v4093
      %v4707 = vmul.f32 %v4631, %v4098
      %v4708 = vmul.f32 %v4634, %v4103
      %v4709 = vmul.f32 %v4639, %v4108
      %v4710 = vmul.f32 %v4642, %v4113
      %v4711 = vmul.f32 %v4647, %v4118
      %v4712 = vmul.f32 %v4650, %v4123
      %v4713 = vmul.f32 %v4655, %v4128
      %v4714 = vmul.f32 %v4658, %v4133
      %v4715 = vmul.f32 %v4663, %v4138
      %v4716 = vmul.f32 %v4666, %v4143
      %v4717 = vmul.f32 %v4671, %v4148
      %v4718 = vmul.f32 %v4674, %v4153
      %v4719 = vmul.f32 %v4679, %v4158
      %v4720 = vmul.f32 %v4682, %v4163
      %v4721 = vadd.f32 %v4685, %v4686
      %v4722 = vadd.f32 %v4721, %v4687
      %v4723 = vadd.f32 %v4722, %v4688
      %v4724 = vadd.f32 %v4723, %v4689
      %v4725 = vadd.f32 %v4724, %v4690
      %v4726 = vadd.f32 %v4725, %v4691
      %v4727 = vadd.f32 %v4726, %v4692
      %v4728 = vadd.f32 %v4727, %v4693
      %v4729 = vadd.f32 %v4728, %v4694
      %v4730 = vadd.f32 %v4729, %v4695
      %v4731 = vadd.f32 %v4730, %v4696
      %v4732 = vadd.f32 %v4731, %v4697
      %v4733 = vadd.f32 %v4732, %v4698
      %v4734 = vadd.f32 %v4733, %v4699
      %v4735 = vadd.f32 %v4734, %v4700
      %v4736 = vadd.f32 %v4735, %v4701
      %v4737 = vadd.f32 %v4736, %v4702
      %v4738 = vadd.f32 %v4737, %v4703
      %v4739 = vadd.f32 %v4738, %v4704
      %v4740 = vadd.f32 %v4739, %v4705
      %v4741 = vadd.f32 %v4740, %v4706
      %v4742 = vadd.f32 %v4741, %v4707
      %v4743 = vadd.f32 %v4742, %v4708
      %v4744 = vadd.f32 %v4743, %v4709
      %v4745 = vadd.f32 %v4744, %v4710
      %v4746 = vadd.f32 %v4745, %v4711
      %v4747 = vadd.f32 %v4746, %v4712
      %v4748 = vadd.f32 %v4747, %v4713
      %v4749 = vadd.f32 %v4748, %v4714
      %v4750 = vadd.f32 %v4749, %v4715
      %v4751 = vadd.f32 %v4750, %v4716
      %v4752 = vadd.f32 %v4751, %v4717
      %v4753 = vadd.f32 %v4752, %v4718
      %v4754 = vadd.f32 %v4753, %v4719
      %v4755 = vadd.f32 %v4754, %v4720
      %v4756 = vrot.slane %v4755, 4
      %v4757 = vadd.f32 %v4755, %v4756
      %v4758 = vrot.slane %v4757, 2
      %v4759 = vadd.f32 %v4757, %v4758
      %v4760 = vrot.slane %v4759, 1
      %v4761 = vadd.f32 %v4759, %v4760
      %v4762 = vmul.f32 %v4685, %v4543
      %v4763 = vmul.f32 %v4686, %v4546
      %v4764 = vmul.f32 %v4687, %v4551
      %v4765 = vmul.f32 %v4688, %v4554
      %v4766 = vmul.f32 %v4689, %v4559
      %v4767 = vmul.f32 %v4690, %v4562
      %v4768 = vmul.f32 %v4691, %v4567
      %v4769 = vmul.f32 %v4692, %v4570
      %v4770 = vmul.f32 %v4693, %v4575
      %v4771 = vmul.f32 %v4694, %v4578
      %v4772 = vmul.f32 %v4695, %v4583
      %v4773 = vmul.f32 %v4696, %v4586
      %v4774 = vmul.f32 %v4697, %v4591
      %v4775 = vmul.f32 %v4698, %v4594
      %v4776 = vmul.f32 %v4699, %v4599
      %v4777 = vmul.f32 %v4700, %v4602
      %v4778 = vmul.f32 %v4701, %v4607
      %v4779 = vmul.f32 %v4702, %v4610
      %v4780 = vmul.f32 %v4703, %v4615
      %v4781 = vmul.f32 %v4704, %v4618
      %v4782 = vmul.f32 %v4705, %v4623
      %v4783 = vmul.f32 %v4706, %v4626
      %v4784 = vmul.f32 %v4707, %v4631
      %v4785 = vmul.f32 %v4708, %v4634
      %v4786 = vmul.f32 %v4709, %v4639
      %v4787 = vmul.f32 %v4710, %v4642
      %v4788 = vmul.f32 %v4711, %v4647
      %v4789 = vmul.f32 %v4712, %v4650
      %v4790 = vmul.f32 %v4713, %v4655
      %v4791 = vmul.f32 %v4714, %v4658
      %v4792 = vmul.f32 %v4715, %v4663
      %v4793 = vmul.f32 %v4716, %v4666
      %v4794 = vmul.f32 %v4717, %v4671
      %v4795 = vmul.f32 %v4718, %v4674
      %v4796 = vmul.f32 %v4719, %v4679
      %v4797 = vmul.f32 %v4720, %v4682
      %v4798 = vadd.f32 %v4762, %v4763
      %v4799 = vadd.f32 %v4798, %v4764
      %v4800 = vadd.f32 %v4799, %v4765
      %v4801 = vadd.f32 %v4800, %v4766
      %v4802 = vadd.f32 %v4801, %v4767
      %v4803 = vadd.f32 %v4802, %v4768
      %v4804 = vadd.f32 %v4803, %v4769
      %v4805 = vadd.f32 %v4804, %v4770
      %v4806 = vadd.f32 %v4805, %v4771
      %v4807 = vadd.f32 %v4806, %v4772
      %v4808 = vadd.f32 %v4807, %v4773
      %v4809 = vadd.f32 %v4808, %v4774
      %v4810 = vadd.f32 %v4809, %v4775
      %v4811 = vadd.f32 %v4810, %v4776
      %v4812 = vadd.f32 %v4811, %v4777
      %v4813 = vadd.f32 %v4812, %v4778
      %v4814 = vadd.f32 %v4813, %v4779
      %v4815 = vadd.f32 %v4814, %v4780
      %v4816 = vadd.f32 %v4815, %v4781
      %v4817 = vadd.f32 %v4816, %v4782
      %v4818 = vadd.f32 %v4817, %v4783
      %v4819 = vadd.f32 %v4818, %v4784
      %v4820 = vadd.f32 %v4819, %v4785
      %v4821 = vadd.f32 %v4820, %v4786
      %v4822 = vadd.f32 %v4821, %v4787
      %v4823 = vadd.f32 %v4822, %v4788
      %v4824 = vadd.f32 %v4823, %v4789
      %v4825 = vadd.f32 %v4824, %v4790
      %v4826 = vadd.f32 %v4825, %v4791
      %v4827 = vadd.f32 %v4826, %v4792
      %v4828 = vadd.f32 %v4827, %v4793
      %v4829 = vadd.f32 %v4828, %v4794
      %v4830 = vadd.f32 %v4829, %v4795
      %v4831 = vadd.f32 %v4830, %v4796
      %v4832 = vadd.f32 %v4831, %v4797
      %v4833 = vrot.slane %v4832, 4
      %v4834 = vadd.f32 %v4832, %v4833
      %v4835 = vrot.slane %v4834, 2
      %v4836 = vadd.f32 %v4834, %v4835
      %v4837 = vrot.slane %v4836, 1
      %v4838 = vadd.f32 %v4836, %v4837
      %v4839 = vsel %vm4319, %v4761, %v4838
      %4840 = vst [vmem:[%s319] sm:$0x3] %v4839
      %p4841 = scmp.lt.s32.totalorder %s19, 1
      %s4842 = scalar_select %p4841, %s19, 1
      %s4843 = smul.addr %s4842, 36
      %s4844 = smul.addr %s4843, 4
      %s4845 = scalar_lea.vmem %s5, %s4844
      %p4846 = scmp.lt.s32.totalorder %s19, 1
      %s4847 = scalar_select %p4846, %s19, 1
      %s4848 = smul.addr %s4847, 2
      %s4849 = scalar_lea.vmem %s6, %s4848
      %p4850 = scmp.lt.s32.totalorder %s19, 1
      %s4851 = scalar_select %p4850, %s19, 1
      %s4852 = smul.addr %s4851, 2
      %s4853 = scalar_lea.vmem %s7, %s4852
      // Predicated region
      $region41: #{basic_block_forward.4} parent=39 // pred_check
        %p4854 = pneg %p152
      $region42: #{basic_block_forward.4} parent=39 // pred_check_branch
        %4856 = sbr.rel (%p4854) target = $region44
      $region43: #{basic_block_forward.4} parent=39 // pred_region
        _
      $region44: #{basic_block_forward.4} parent=39 // pred_fallthru
        _
      // Predicated region
      $region45: #{basic_block_forward.4} parent=39 // pred_check
        %p4857 = pneg %p178
      $region46: #{basic_block_forward.4} parent=39 // pred_check_branch
        %4859 = sbr.rel (%p4857) target = $region48
      $region47: #{basic_block_forward.4} parent=39 // pred_region
        _
      $region48: #{basic_block_forward.4} parent=39 // pred_fallthru
        _
      // Predicated region
      $region49: #{basic_block_forward.4} parent=39 // pred_check
        %p4860 = pneg %p204
      $region50: #{basic_block_forward.4} parent=39 // pred_check_branch
        %4862 = sbr.rel (%p4860) target = $region52
      $region51: #{basic_block_forward.4} parent=39 // pred_region
        _
      $region52: #{basic_block_forward.4} parent=39 // pred_fallthru
        _
    $region40: #{basic_block_forward.4} parent=5 // pred_fallthru
      _
    %p4863 = scmp.le.s32.totalorder 2, %s14
    // Predicated region
    $region53: #{basic_block_forward.4} parent=5 // pred_check
      %p4864 = pneg %p4863
    $region54: #{basic_block_forward.4} parent=5 // pred_check_branch
      %4866 = sbr.rel (%p4864) target = $region56
    $region55: #{basic_block_forward.4} parent=5 // pred_region
      %s4867 = ssub.s32 %s14, 2
      // Predicated region
      $region57: #{basic_block_forward.4} parent=55 // pred_check
        %p4868 = pneg %p158
      $region58: #{basic_block_forward.4} parent=55 // pred_check_branch
        %4870 = sbr.rel (%p4868) target = $region60
      $region59: #{basic_block_forward.4} parent=55 // pred_region
        %p4871 = scmp.lt.s32.totalorder %s20, 1
        %s4872 = scalar_select %p4871, %s20, 1
        %s4873 = smul.addr %s4872, 36
        %s4874 = smul.addr %s4873, 4
        %s4875 = scalar_lea.vmem %s5, %s4874
      $region60: #{basic_block_forward.4} parent=55 // pred_fallthru
        _
      // Predicated region
      $region61: #{basic_block_forward.4} parent=55 // pred_check
        %p4876 = pneg %p184
      $region62: #{basic_block_forward.4} parent=55 // pred_check_branch
        %4878 = sbr.rel (%p4876) target = $region64
      $region63: #{basic_block_forward.4} parent=55 // pred_region
        %p4879 = scmp.lt.s32.totalorder %s20, 1
        %s4880 = scalar_select %p4879, %s20, 1
        %s4881 = smul.addr %s4880, 2
        %s4882 = scalar_lea.vmem %s6, %s4881
      $region64: #{basic_block_forward.4} parent=55 // pred_fallthru
        _
      // Predicated region
      $region65: #{basic_block_forward.4} parent=55 // pred_check
        %p4883 = pneg %p210
      $region66: #{basic_block_forward.4} parent=55 // pred_check_branch
        %4885 = sbr.rel (%p4883) target = $region68
      $region67: #{basic_block_forward.4} parent=55 // pred_region
        %p4886 = scmp.lt.s32.totalorder %s20, 1
        %s4887 = scalar_select %p4886, %s20, 1
        %s4888 = smul.addr %s4887, 2
        %s4889 = scalar_lea.vmem %s7, %s4888
      $region68: #{basic_block_forward.4} parent=55 // pred_fallthru
        _
    $region56: #{basic_block_forward.4} parent=5 // pred_fallthru
      _
  $region6: #{basic_block_forward.4} parent=0 // loop_footer
    %s18 = sadd.s32 1, %s14
  $region7: #{basic_block_forward.4} parent=0 // loop_footer_branch
    %13 = sbr.rel target = $region3
  $region8: #{basic_block_forward.4} parent=0 // loop_exit
    _

</llo_original>
